<compile_context>
chip_gen: v6e
topology: v6e:2x2x1
jax: 0.10.0
libtpu: 0.0.40
codegen_flags: <defaults>
</compile_context>

<pallas_src>
import functools

import numpy as np
import jax
import jax.numpy as jnp
from jax.experimental import pallas as pl
from jax.experimental.pallas import tpu as pltpu

LAYER1_FILTERS = 4
LAYER1_KERNEL = 3
LAYER1_NEG_SLOPE = 0.05
LAYER2_FILTERS = 8
LAYER2_KERNEL = 5
LAYER2_NEG_SLOPE = 0.10
FC2_NEURONS = 32
NUM_CLASSES = 10
BN_EPS = 1e-5
LANES = 128


def _round_up(v, m):
    return ((v + m - 1) // m) * m


def _geometry(h, w):
    # Tile-alignment requirements for the in-kernel reshapes (hold for 16x16).
    assert h % 4 == 0 and w % 4 == 0
    assert w % 8 == 0 and (w // 2) % 8 == 0, "W and W/2 must be sublane aligned"
    pad2 = LAYER2_KERNEL // 2
    h2, w2 = h // 2, w // 2
    n_pos = (h // 4) * (w // 4)
    assert (h2 * w2) % 8 == 0 and n_pos % 8 == 0
    return dict(
        h1=h, w1=w,
        h2=h2, w2=w2,
        hp2=h2 + 2 * pad2,                    # dim-0 of the padded grid: no 8-align needed
        wp2=_round_up(w2 + 2 * pad2, 8),      # sublane dim: must stay 8-aligned
        n_pos=n_pos,
    )


# --------------------------------------------------------------------------
# Fused Pallas kernel (one grid step == one batch sample)
# --------------------------------------------------------------------------
def _fused_kernel(xp_ref, w1_ref, t1_ref, sp1_ref,
                  w2_ref, t2_ref, sp2_ref,
                  wfc1_ref, bfc1_ref, wfc2_ref, bfc2_ref,
                  out_ref, x2p_ref, *, geo, k1, k2, ns1, ns2):
    h1, w1 = geo['h1'], geo['w1']
    h2, w2 = geo['h2'], geo['w2']
    hp2, wp2 = geo['hp2'], geo['wp2']
    n_pos = geo['n_pos']
    n_grid1 = hp2 * wp2

    # ---- layer1: 3x3 conv (Cin=1) as k1*k1 shifted broadcast-FMAs (VPU).
    #      BN scale is folded into the weights; BN shift (+conv bias) is the
    #      accumulator's initial value -> no separate affine pass.
    acc1 = jnp.broadcast_to(t1_ref[...].reshape(1, 1, LANES), (h1, w1, LANES))
    for t in range(k1 * k1):
        di, dj = t // k1, t % k1
        xs = xp_ref[0, pl.ds(di, h1), pl.ds(dj, w1), :]       # (h1, w1, 1)
        acc1 = acc1 + xs * w1_ref[pl.ds(t, 1), :]             # -> (h1, w1, 128)
    a1 = jnp.where(acc1 >= 0.0, acc1, ns1 * acc1)             # LeakyReLU
    a1 = a1.reshape(h1 * w1, LANES)                           # rows = (h, w)

    # ---- pool1 (2x2/stride 2) fused with zero-padding for conv2: ONE 0/1
    #      selection matmul (4 window offsets stacked in the lhs rows, single
    #      MXU weight load) + tile-aligned reshape + elementwise max tree.
    g = jnp.dot(sp1_ref[...], a1, preferred_element_type=jnp.float32)
    g = g.reshape(4, n_grid1, LANES)
    x2p = jnp.maximum(jnp.maximum(g[0], g[1]), jnp.maximum(g[2], g[3]))
    x2p_ref[...] = x2p.reshape(hp2, wp2, LANES)               # padded conv2 input

    # ---- layer2: 5x5 conv as k2*k2 shifted (rows, Cin) x (Cin, Cout) MXU
    #      matmuls, f32 accumulation; BN scale folded into w2, shift in init.
    acc2 = jnp.broadcast_to(t2_ref[...], (h2 * w2, LANES))
    for t in range(k2 * k2):
        di, dj = t // k2, t % k2
        xs = x2p_ref[pl.ds(di, h2), pl.ds(dj, w2), :].reshape(h2 * w2, LANES)
        acc2 = acc2 + jnp.dot(xs, w2_ref[t], preferred_element_type=jnp.float32)
    a2 = jnp.where(acc2 >= 0.0, acc2, ns2 * acc2)             # (h2*w2, 128)

    # ---- pool2 (2x2/stride 2), single merged selector matmul, rows ordered
    #      by flatten position.
    q = jnp.dot(sp2_ref[...], a2, preferred_element_type=jnp.float32)
    q = q.reshape(4, n_pos, LANES)
    p2 = jnp.maximum(jnp.maximum(q[0], q[1]), jnp.maximum(q[2], q[3]))

    # ---- fc1 (+bias) with weights pre-permuted to (position, channel, out),
    #      so the (pool2-row, channel-lane) layout feeds fc1 directly.
    # TODO(synk): nn.Dropout(p=0.5) is identity in eval mode; training-mode
    # stochastic masking is not implemented here.
    hvec = bfc1_ref[...]                                       # (1, 128)
    for qi in range(n_pos):
        hvec = hvec + jnp.dot(p2[qi:qi + 1, :], wfc1_ref[qi],
                              preferred_element_type=jnp.float32)

    # ---- fc2 (+bias); lane-dense (padded to 128) unmasked output store.
    o = jnp.dot(hvec, wfc2_ref[...], preferred_element_type=jnp.float32)
    o = o + bfc2_ref[...]
    out_ref[...] = jnp.broadcast_to(o, (1, 8, LANES))


# --------------------------------------------------------------------------
# One-time parameter repacking (folded BN, padded/permuted weights, selectors)
# --------------------------------------------------------------------------
def pack_params(params, h, w):
    geo = _geometry(h, w)
    f32 = np.float32
    _np = lambda a: np.asarray(a, dtype=f32)

    # Fold BatchNorm (eval) into per-channel scale/shift; scale goes into the
    # conv weights, shift (which also absorbs the conv bias) stays separate.
    def _fold(gamma, beta, mean, var, bias):
        scale = _np(gamma) / np.sqrt(_np(var) + BN_EPS)
        shift = _np(beta) + scale * (_np(bias) - _np(mean))
        return scale, shift

    s1, t1 = _fold(params['bn1_gamma'], params['bn1_beta'], params['bn1_mean'],
                   params['bn1_var'], params['b1'])
    s2, t2 = _fold(params['bn2_gamma'], params['bn2_beta'], params['bn2_mean'],
                   params['bn2_var'], params['b2'])

    # conv1 taps: (k1*k1, 128), row t = di*k1 + dj, cols = output channels,
    # BN scale pre-multiplied.
    w1 = _np(params['w1'])                                   # (C1, 1, k1, k1)
    w1p = np.zeros((LAYER1_KERNEL ** 2, LANES), f32)
    w1p[:, :LAYER1_FILTERS] = (w1[:, 0].transpose(1, 2, 0)
                               .reshape(LAYER1_KERNEL ** 2, LAYER1_FILTERS)
                               * s1[None, :])

    # conv2 taps: (k2*k2, 128, 128), [t, cin, cout], BN scale pre-multiplied.
    w2 = _np(params['w2'])                                   # (C2, C1, k2, k2)
    w2p = np.zeros((LAYER2_KERNEL ** 2, LANES, LANES), f32)
    w2p[:, :LAYER1_FILTERS, :LAYER2_FILTERS] = (
        w2.transpose(2, 3, 1, 0).reshape(LAYER2_KERNEL ** 2, LAYER1_FILTERS,
                                         LAYER2_FILTERS) * s2[None, None, :])

    def _pad_row(vec, nch):
        out = np.zeros((1, LANES), f32)
        out[0, :nch] = vec
        return out

    t1p = _pad_row(t1, LAYER1_FILTERS)
    t2p = _pad_row(t2, LAYER2_FILTERS)

    # 0/1 pool selectors, 4 window offsets stacked along the row dim so each
    # pool is a single matmul.  The pool-1 selector also scatters pooled rows
    # into conv2's zero-padded (hp2, wp2) grid.
    def _pool_selector(h_in, w_in, h_grid, w_grid, pad):
        sel = np.zeros((4, h_grid * w_grid, h_in * w_in), f32)
        for g, off in enumerate((0, 1, w_in, w_in + 1)):
            for i in range(h_in // 2):
                for j in range(w_in // 2):
                    dst = (i + pad) * w_grid + (j + pad)
                    sel[g, dst, (2 * i) * w_in + 2 * j + off] = 1.0
        return sel.reshape(4 * h_grid * w_grid, h_in * w_in)

    pad2 = LAYER2_KERNEL // 2
    sp1 = _pool_selector(geo['h1'], geo['w1'], geo['hp2'], geo['wp2'], pad2)
    sp2 = _pool_selector(geo['h2'], geo['w2'], geo['h2'] // 2, geo['w2'] // 2, 0)

    # fc1 weights re-packed to (position, channel, out): PyTorch flattens
    # (C, H, W) so torch row index = c*n_pos + position.
    n_pos = geo['n_pos']
    fc1_w = _np(params['fc1_w'])                             # (C2*n_pos, FC2)
    wfc1p = np.zeros((n_pos, LANES, LANES), f32)
    wfc1p[:, :LAYER2_FILTERS, :FC2_NEURONS] = fc1_w.reshape(
        LAYER2_FILTERS, n_pos, FC2_NEURONS).transpose(1, 0, 2)
    bfc1p = _pad_row(_np(params['fc1_b']), FC2_NEURONS)

    wfc2p = np.zeros((LANES, LANES), f32)
    wfc2p[:FC2_NEURONS, :NUM_CLASSES] = _np(params['fc2_w'])
    bfc2p = _pad_row(_np(params['fc2_b']), NUM_CLASSES)

    packed = dict(w1=w1p, t1=t1p, sp1=sp1, w2=w2p, t2=t2p, sp2=sp2,
                  wfc1=wfc1p, bfc1=bfc1p, wfc2=wfc2p, bfc2=bfc2p)
    return {k: jnp.asarray(v) for k, v in packed.items()}


# --------------------------------------------------------------------------
# Forward wrapper
# --------------------------------------------------------------------------
@jax.jit
def convnet_forward(x_nchw, packed):
    n, _, h, w = x_nchw.shape
    geo = _geometry(h, w)
    pad1 = LAYER1_KERNEL // 2

    # NCHW (PyTorch) -> NHWC + spatial zero-pad for the 'same' 3x3 conv.
    xp = jnp.pad(jnp.transpose(x_nchw, (0, 2, 3, 1)),
                 ((0, 0), (pad1, pad1), (pad1, pad1), (0, 0)))

    kern = functools.partial(_fused_kernel, geo=geo, k1=LAYER1_KERNEL,
                             k2=LAYER2_KERNEL, ns1=LAYER1_NEG_SLOPE,
                             ns2=LAYER2_NEG_SLOPE)

    consts = (packed['w1'], packed['t1'], packed['sp1'],
              packed['w2'], packed['t2'], packed['sp2'],
              packed['wfc1'], packed['bfc1'], packed['wfc2'], packed['bfc2'])

    def _const_spec(a):
        zeros = (0,) * a.ndim
        return pl.BlockSpec(a.shape, lambda i, _z=zeros: _z)

    in_specs = [pl.BlockSpec((1, h + 2 * pad1, w + 2 * pad1, 1),
                             lambda i: (i, 0, 0, 0))]
    in_specs += [_const_spec(a) for a in consts]

    out = pl.pallas_call(
        kern,
        out_shape=jax.ShapeDtypeStruct((n, 8, LANES), jnp.float32),
        grid=(n,),
        in_specs=in_specs,
        out_specs=pl.BlockSpec((1, 8, LANES), lambda i: (i, 0, 0)),
        scratch_shapes=[pltpu.VMEM((geo['hp2'], geo['wp2'], LANES), jnp.float32)],
        compiler_params=pltpu.CompilerParams(
            dimension_semantics=("parallel",),
            vmem_limit_bytes=32 * 1024 * 1024),
    )(xp, *consts)
    return out[:, 0, :NUM_CLASSES]


# --------------------------------------------------------------------------
# Deterministic synthetic parameters
# --------------------------------------------------------------------------
def init_params(key, h, w):
    ks = jax.random.split(key, 16)

    def n(k, shape, s=0.1):
        return s * jax.random.normal(k, shape, dtype=jnp.float32)

    p = {}
    p['w1'] = n(ks[0], (LAYER1_FILTERS, 1, LAYER1_KERNEL, LAYER1_KERNEL))
    p['b1'] = n(ks[1], (LAYER1_FILTERS,))
    p['bn1_gamma'] = 1.0 + n(ks[2], (LAYER1_FILTERS,))
    p['bn1_beta'] = n(ks[3], (LAYER1_FILTERS,))
    p['bn1_mean'] = n(ks[4], (LAYER1_FILTERS,))
    p['bn1_var'] = 1.0 + jnp.abs(n(ks[5], (LAYER1_FILTERS,)))
    p['w2'] = n(ks[6], (LAYER2_FILTERS, LAYER1_FILTERS, LAYER2_KERNEL, LAYER2_KERNEL))
    p['b2'] = n(ks[7], (LAYER2_FILTERS,))
    p['bn2_gamma'] = 1.0 + n(ks[8], (LAYER2_FILTERS,))
    p['bn2_beta'] = n(ks[9], (LAYER2_FILTERS,))
    p['bn2_mean'] = n(ks[10], (LAYER2_FILTERS,))
    p['bn2_var'] = 1.0 + jnp.abs(n(ks[11], (LAYER2_FILTERS,)))
    fc1_in = LAYER2_FILTERS * (h // 4) * (w // 4)   # layer3_fc1_neurons analogue
    p['fc1_w'] = n(ks[12], (fc1_in, FC2_NEURONS))
    p['fc1_b'] = n(ks[13], (FC2_NEURONS,))
    p['fc2_w'] = n(ks[14], (FC2_NEURONS, NUM_CLASSES))
    p['fc2_b'] = n(ks[15], (NUM_CLASSES,))
    return p


# --------------------------------------------------------------------------
# Pure-JAX reference (semantics check)
# --------------------------------------------------------------------------
def reference_forward(x_nchw, p):
    def conv(x, w, b, k):
        pad = k // 2
        y = jax.lax.conv_general_dilated(
            x, w, window_strides=(1, 1), padding=((pad, pad), (pad, pad)),
            dimension_numbers=('NCHW', 'OIHW', 'NCHW'))
        return y + b[None, :, None, None]

    def bn(x, g, bt, m, v):
        return ((x - m[None, :, None, None])
                / jnp.sqrt(v[None, :, None, None] + BN_EPS)
                * g[None, :, None, None] + bt[None, :, None, None])

    def lrelu(x, s):
        return jnp.where(x >= 0, x, s * x)

    def pool(x):
        n, c, h, w = x.shape
        return x.reshape(n, c, h // 2, 2, w // 2, 2).max(axis=(3, 5))

    x = conv(x_nchw, p['w1'], p['b1'], LAYER1_KERNEL)
    x = pool(lrelu(bn(x, p['bn1_gamma'], p['bn1_beta'], p['bn1_mean'], p['bn1_var']),
                   LAYER1_NEG_SLOPE))
    x = conv(x, p['w2'], p['b2'], LAYER2_KERNEL)
    x = pool(lrelu(bn(x, p['bn2_gamma'], p['bn2_beta'], p['bn2_mean'], p['bn2_var']),
                   LAYER2_NEG_SLOPE))
    x = x.reshape(x.shape[0], -1)
    x = x @ p['fc1_w'] + p['fc1_b']
    x = x @ p['fc2_w'] + p['fc2_b']
    return x


if __name__ == "__main__":
    key = jax.random.PRNGKey(0)
    kx, kp = jax.random.split(key)
    N, H, W = 2, 16, 16                       # small MNIST-like NCHW input
    x = jax.random.normal(kx, (N, 1, H, W), dtype=jnp.float32)
    params = init_params(kp, H, W)
    packed = pack_params(params, H, W)        # one-time weight repack

    out = convnet_forward(x, packed)
    out = jax.block_until_ready(out)

    ref = reference_forward(x, params)
    assert out.shape == (N, NUM_CLASSES)
    assert bool(jnp.all(jnp.isfinite(out)))
    err = float(jnp.max(jnp.abs(out - ref)))
    assert err < 5e-3, err
    print("KERNEL_OK")
</pallas_src>

<mosaic_0001>
module attributes {stable_mosaic.version = 11 : i64} {
  func.func @_fused_kernel(%arg0: i32, %arg1: memref<1x18x18x1xf32, #tpu.memory_space<vmem>>, %arg2: memref<9x128xf32, #tpu.memory_space<vmem>>, %arg3: memref<1x128xf32, #tpu.memory_space<vmem>>, %arg4: memref<768x256xf32, #tpu.memory_space<vmem>>, %arg5: memref<25x128x128xf32, #tpu.memory_space<vmem>>, %arg6: memref<1x128xf32, #tpu.memory_space<vmem>>, %arg7: memref<64x64xf32, #tpu.memory_space<vmem>>, %arg8: memref<16x128x128xf32, #tpu.memory_space<vmem>>, %arg9: memref<1x128xf32, #tpu.memory_space<vmem>>, %arg10: memref<128x128xf32, #tpu.memory_space<vmem>>, %arg11: memref<1x128xf32, #tpu.memory_space<vmem>>, %arg12: memref<1x8x128xf32, #tpu.memory_space<vmem>>, %arg13: memref<12x16x128xf32, #tpu.memory_space<vmem>>) attributes {dimension_semantics = [#tpu.dimension_semantics<parallel>], iteration_bounds = array<i64: 2>, scalar_prefetch = 0 : i64, scratch_operands = 1 : i64, tpu.core_type = #tpu.core_type<tc>, window_params = [{transform_indices = @transform_0, window_bounds = array<i64: 1, 18, 18, 1>}, {pipeline_mode = #tpu.pipeline_mode<synchronous>, transform_indices = @transform_1, window_bounds = array<i64: 9, 128>}, {pipeline_mode = #tpu.pipeline_mode<synchronous>, transform_indices = @transform_2, window_bounds = array<i64: 1, 128>}, {pipeline_mode = #tpu.pipeline_mode<synchronous>, transform_indices = @transform_3, window_bounds = array<i64: 768, 256>}, {pipeline_mode = #tpu.pipeline_mode<synchronous>, transform_indices = @transform_4, window_bounds = array<i64: 25, 128, 128>}, {pipeline_mode = #tpu.pipeline_mode<synchronous>, transform_indices = @transform_5, window_bounds = array<i64: 1, 128>}, {pipeline_mode = #tpu.pipeline_mode<synchronous>, transform_indices = @transform_6, window_bounds = array<i64: 64, 64>}, {pipeline_mode = #tpu.pipeline_mode<synchronous>, transform_indices = @transform_7, window_bounds = array<i64: 16, 128, 128>}, {pipeline_mode = #tpu.pipeline_mode<synchronous>, transform_indices = @transform_8, window_bounds = array<i64: 1, 128>}, {pipeline_mode = #tpu.pipeline_mode<synchronous>, transform_indices = @transform_9, window_bounds = array<i64: 128, 128>}, {pipeline_mode = #tpu.pipeline_mode<synchronous>, transform_indices = @transform_10, window_bounds = array<i64: 1, 128>}, {transform_indices = @transform_11, window_bounds = array<i64: 1, 8, 128>}]} {
    %c0 = arith.constant 0 : index
    %c0_0 = arith.constant 0 : index
    %0 = vector.load %arg3[%c0, %c0_0] : memref<1x128xf32, #tpu.memory_space<vmem>>, vector<1x128xf32>
    %1 = vector.shape_cast %0 : vector<1x128xf32> to vector<1x1x128xf32>
    %2 = vector.shape_cast %1 : vector<1x1x128xf32> to vector<1x1x128xf32>
    %3 = vector.broadcast %2 : vector<1x1x128xf32> to vector<16x16x128xf32>
    %c0_1 = arith.constant 0 : index
    %c0_2 = arith.constant 0 : index
    %c0_3 = arith.constant 0 : index
    %c0_4 = arith.constant 0 : index
    %4 = vector.load %arg1[%c0_1, %c0_2, %c0_3, %c0_4] : memref<1x18x18x1xf32, #tpu.memory_space<vmem>>, vector<1x16x16x1xf32>
    %5 = vector.shape_cast %4 : vector<1x16x16x1xf32> to vector<16x16x1xf32>
    %c0_5 = arith.constant 0 : index
    %c0_6 = arith.constant 0 : index
    %6 = vector.load %arg2[%c0_5, %c0_6] : memref<9x128xf32, #tpu.memory_space<vmem>>, vector<1x128xf32>
    %7 = vector.shape_cast %6 : vector<1x128xf32> to vector<1x1x128xf32>
    %8 = vector.broadcast %5 : vector<16x16x1xf32> to vector<16x16x128xf32>
    %9 = vector.broadcast %7 : vector<1x1x128xf32> to vector<16x16x128xf32>
    %10 = arith.mulf %8, %9 : vector<16x16x128xf32>
    %11 = arith.addf %3, %10 : vector<16x16x128xf32>
    %c0_7 = arith.constant 0 : index
    %c0_8 = arith.constant 0 : index
    %c1 = arith.constant 1 : index
    %c0_9 = arith.constant 0 : index
    %12 = vector.load %arg1[%c0_7, %c0_8, %c1, %c0_9] : memref<1x18x18x1xf32, #tpu.memory_space<vmem>>, vector<1x16x16x1xf32>
    %13 = vector.shape_cast %12 : vector<1x16x16x1xf32> to vector<16x16x1xf32>
    %c1_10 = arith.constant 1 : index
    %c0_11 = arith.constant 0 : index
    %14 = vector.load %arg2[%c1_10, %c0_11] : memref<9x128xf32, #tpu.memory_space<vmem>>, vector<1x128xf32>
    %15 = vector.shape_cast %14 : vector<1x128xf32> to vector<1x1x128xf32>
    %16 = vector.broadcast %13 : vector<16x16x1xf32> to vector<16x16x128xf32>
    %17 = vector.broadcast %15 : vector<1x1x128xf32> to vector<16x16x128xf32>
    %18 = arith.mulf %16, %17 : vector<16x16x128xf32>
    %19 = arith.addf %11, %18 : vector<16x16x128xf32>
    %c0_12 = arith.constant 0 : index
    %c0_13 = arith.constant 0 : index
    %c2 = arith.constant 2 : index
    %c0_14 = arith.constant 0 : index
    %20 = vector.load %arg1[%c0_12, %c0_13, %c2, %c0_14] : memref<1x18x18x1xf32, #tpu.memory_space<vmem>>, vector<1x16x16x1xf32>
    %21 = vector.shape_cast %20 : vector<1x16x16x1xf32> to vector<16x16x1xf32>
    %c2_15 = arith.constant 2 : index
    %c0_16 = arith.constant 0 : index
    %22 = vector.load %arg2[%c2_15, %c0_16] : memref<9x128xf32, #tpu.memory_space<vmem>>, vector<1x128xf32>
    %23 = vector.shape_cast %22 : vector<1x128xf32> to vector<1x1x128xf32>
    %24 = vector.broadcast %21 : vector<16x16x1xf32> to vector<16x16x128xf32>
    %25 = vector.broadcast %23 : vector<1x1x128xf32> to vector<16x16x128xf32>
    %26 = arith.mulf %24, %25 : vector<16x16x128xf32>
    %27 = arith.addf %19, %26 : vector<16x16x128xf32>
    %c0_17 = arith.constant 0 : index
    %c1_18 = arith.constant 1 : index
    %c0_19 = arith.constant 0 : index
    %c0_20 = arith.constant 0 : index
    %28 = vector.load %arg1[%c0_17, %c1_18, %c0_19, %c0_20] : memref<1x18x18x1xf32, #tpu.memory_space<vmem>>, vector<1x16x16x1xf32>
    %29 = vector.shape_cast %28 : vector<1x16x16x1xf32> to vector<16x16x1xf32>
    %c3 = arith.constant 3 : index
    %c0_21 = arith.constant 0 : index
    %30 = vector.load %arg2[%c3, %c0_21] : memref<9x128xf32, #tpu.memory_space<vmem>>, vector<1x128xf32>
    %31 = vector.shape_cast %30 : vector<1x128xf32> to vector<1x1x128xf32>
    %32 = vector.broadcast %29 : vector<16x16x1xf32> to vector<16x16x128xf32>
    %33 = vector.broadcast %31 : vector<1x1x128xf32> to vector<16x16x128xf32>
    %34 = arith.mulf %32, %33 : vector<16x16x128xf32>
    %35 = arith.addf %27, %34 : vector<16x16x128xf32>
    %c0_22 = arith.constant 0 : index
    %c1_23 = arith.constant 1 : index
    %c1_24 = arith.constant 1 : index
    %c0_25 = arith.constant 0 : index
    %36 = vector.load %arg1[%c0_22, %c1_23, %c1_24, %c0_25] : memref<1x18x18x1xf32, #tpu.memory_space<vmem>>, vector<1x16x16x1xf32>
    %37 = vector.shape_cast %36 : vector<1x16x16x1xf32> to vector<16x16x1xf32>
    %c4 = arith.constant 4 : index
    %c0_26 = arith.constant 0 : index
    %38 = vector.load %arg2[%c4, %c0_26] : memref<9x128xf32, #tpu.memory_space<vmem>>, vector<1x128xf32>
    %39 = vector.shape_cast %38 : vector<1x128xf32> to vector<1x1x128xf32>
    %40 = vector.broadcast %37 : vector<16x16x1xf32> to vector<16x16x128xf32>
    %41 = vector.broadcast %39 : vector<1x1x128xf32> to vector<16x16x128xf32>
    %42 = arith.mulf %40, %41 : vector<16x16x128xf32>
    %43 = arith.addf %35, %42 : vector<16x16x128xf32>
    %c0_27 = arith.constant 0 : index
    %c1_28 = arith.constant 1 : index
    %c2_29 = arith.constant 2 : index
    %c0_30 = arith.constant 0 : index
    %44 = vector.load %arg1[%c0_27, %c1_28, %c2_29, %c0_30] : memref<1x18x18x1xf32, #tpu.memory_space<vmem>>, vector<1x16x16x1xf32>
    %45 = vector.shape_cast %44 : vector<1x16x16x1xf32> to vector<16x16x1xf32>
    %c5 = arith.constant 5 : index
    %c0_31 = arith.constant 0 : index
    %46 = vector.load %arg2[%c5, %c0_31] : memref<9x128xf32, #tpu.memory_space<vmem>>, vector<1x128xf32>
    %47 = vector.shape_cast %46 : vector<1x128xf32> to vector<1x1x128xf32>
    %48 = vector.broadcast %45 : vector<16x16x1xf32> to vector<16x16x128xf32>
    %49 = vector.broadcast %47 : vector<1x1x128xf32> to vector<16x16x128xf32>
    %50 = arith.mulf %48, %49 : vector<16x16x128xf32>
    %51 = arith.addf %43, %50 : vector<16x16x128xf32>
    %c0_32 = arith.constant 0 : index
    %c2_33 = arith.constant 2 : index
    %c0_34 = arith.constant 0 : index
    %c0_35 = arith.constant 0 : index
    %52 = vector.load %arg1[%c0_32, %c2_33, %c0_34, %c0_35] : memref<1x18x18x1xf32, #tpu.memory_space<vmem>>, vector<1x16x16x1xf32>
    %53 = vector.shape_cast %52 : vector<1x16x16x1xf32> to vector<16x16x1xf32>
    %c6 = arith.constant 6 : index
    %c0_36 = arith.constant 0 : index
    %54 = vector.load %arg2[%c6, %c0_36] : memref<9x128xf32, #tpu.memory_space<vmem>>, vector<1x128xf32>
    %55 = vector.shape_cast %54 : vector<1x128xf32> to vector<1x1x128xf32>
    %56 = vector.broadcast %53 : vector<16x16x1xf32> to vector<16x16x128xf32>
    %57 = vector.broadcast %55 : vector<1x1x128xf32> to vector<16x16x128xf32>
    %58 = arith.mulf %56, %57 : vector<16x16x128xf32>
    %59 = arith.addf %51, %58 : vector<16x16x128xf32>
    %c0_37 = arith.constant 0 : index
    %c2_38 = arith.constant 2 : index
    %c1_39 = arith.constant 1 : index
    %c0_40 = arith.constant 0 : index
    %60 = vector.load %arg1[%c0_37, %c2_38, %c1_39, %c0_40] : memref<1x18x18x1xf32, #tpu.memory_space<vmem>>, vector<1x16x16x1xf32>
    %61 = vector.shape_cast %60 : vector<1x16x16x1xf32> to vector<16x16x1xf32>
    %c7 = arith.constant 7 : index
    %c0_41 = arith.constant 0 : index
    %62 = vector.load %arg2[%c7, %c0_41] : memref<9x128xf32, #tpu.memory_space<vmem>>, vector<1x128xf32>
    %63 = vector.shape_cast %62 : vector<1x128xf32> to vector<1x1x128xf32>
    %64 = vector.broadcast %61 : vector<16x16x1xf32> to vector<16x16x128xf32>
    %65 = vector.broadcast %63 : vector<1x1x128xf32> to vector<16x16x128xf32>
    %66 = arith.mulf %64, %65 : vector<16x16x128xf32>
    %67 = arith.addf %59, %66 : vector<16x16x128xf32>
    %c0_42 = arith.constant 0 : index
    %c2_43 = arith.constant 2 : index
    %c2_44 = arith.constant 2 : index
    %c0_45 = arith.constant 0 : index
    %68 = vector.load %arg1[%c0_42, %c2_43, %c2_44, %c0_45] : memref<1x18x18x1xf32, #tpu.memory_space<vmem>>, vector<1x16x16x1xf32>
    %69 = vector.shape_cast %68 : vector<1x16x16x1xf32> to vector<16x16x1xf32>
    %c8 = arith.constant 8 : index
    %c0_46 = arith.constant 0 : index
    %70 = vector.load %arg2[%c8, %c0_46] : memref<9x128xf32, #tpu.memory_space<vmem>>, vector<1x128xf32>
    %71 = vector.shape_cast %70 : vector<1x128xf32> to vector<1x1x128xf32>
    %72 = vector.broadcast %69 : vector<16x16x1xf32> to vector<16x16x128xf32>
    %73 = vector.broadcast %71 : vector<1x1x128xf32> to vector<16x16x128xf32>
    %74 = arith.mulf %72, %73 : vector<16x16x128xf32>
    %75 = arith.addf %67, %74 : vector<16x16x128xf32>
    %cst = arith.constant 0.000000e+00 : f32
    %76 = vector.broadcast %cst : f32 to vector<16x16x128xf32>
    %77 = arith.cmpf oge, %75, %76 : vector<16x16x128xf32>
    %cst_47 = arith.constant 5.000000e-02 : f32
    %78 = vector.broadcast %cst_47 : f32 to vector<16x16x128xf32>
    %79 = arith.mulf %78, %75 : vector<16x16x128xf32>
    %80 = arith.select %77, %75, %79 : vector<16x16x128xi1>, vector<16x16x128xf32>
    %81 = vector.shape_cast %80 : vector<16x16x128xf32> to vector<256x128xf32>
    %c0_48 = arith.constant 0 : index
    %c0_49 = arith.constant 0 : index
    %82 = vector.load %arg4[%c0_48, %c0_49] : memref<768x256xf32, #tpu.memory_space<vmem>>, vector<768x256xf32>
    %cst_50 = arith.constant dense<0.000000e+00> : vector<768x128xf32>
    %83 = tpu.matmul %82, %81, %cst_50 {dimension_numbers = #tpu.dot_dimension_numbers<[1], [0], [0], [1], [0, 0, 1, 1], [], []>} : vector<768x256xf32>, vector<256x128xf32>, vector<768x128xf32> -> vector<768x128xf32>
    %84 = vector.shape_cast %83 : vector<768x128xf32> to vector<4x192x128xf32>
    %85 = vector.extract_strided_slice %84 {offsets = [0, 0, 0], sizes = [1, 192, 128], strides = [1, 1, 1]} : vector<4x192x128xf32> to vector<1x192x128xf32>
    %86 = vector.shape_cast %85 : vector<1x192x128xf32> to vector<192x128xf32>
    %87 = vector.extract_strided_slice %84 {offsets = [1, 0, 0], sizes = [1, 192, 128], strides = [1, 1, 1]} : vector<4x192x128xf32> to vector<1x192x128xf32>
    %88 = vector.shape_cast %87 : vector<1x192x128xf32> to vector<192x128xf32>
    %89 = arith.maximumf %86, %88 : vector<192x128xf32>
    %90 = vector.extract_strided_slice %84 {offsets = [2, 0, 0], sizes = [1, 192, 128], strides = [1, 1, 1]} : vector<4x192x128xf32> to vector<1x192x128xf32>
    %91 = vector.shape_cast %90 : vector<1x192x128xf32> to vector<192x128xf32>
    %92 = vector.extract_strided_slice %84 {offsets = [3, 0, 0], sizes = [1, 192, 128], strides = [1, 1, 1]} : vector<4x192x128xf32> to vector<1x192x128xf32>
    %93 = vector.shape_cast %92 : vector<1x192x128xf32> to vector<192x128xf32>
    %94 = arith.maximumf %91, %93 : vector<192x128xf32>
    %95 = arith.maximumf %89, %94 : vector<192x128xf32>
    %96 = vector.shape_cast %95 : vector<192x128xf32> to vector<12x16x128xf32>
    %c0_51 = arith.constant 0 : index
    %c0_52 = arith.constant 0 : index
    %c0_53 = arith.constant 0 : index
    %97 = vector.load %arg13[%c0_51, %c0_52, %c0_53] : memref<12x16x128xf32, #tpu.memory_space<vmem>>, vector<12x16x128xf32>
    tpu.vector_store %arg13[%c0_51, %c0_52, %c0_53], %96 {strides = array<i32>} : memref<12x16x128xf32, #tpu.memory_space<vmem>>, vector<12x16x128xf32>,
    %c0_54 = arith.constant 0 : index
    %c0_55 = arith.constant 0 : index
    %98 = vector.load %arg6[%c0_54, %c0_55] : memref<1x128xf32, #tpu.memory_space<vmem>>, vector<1x128xf32>
    %99 = vector.shape_cast %98 : vector<1x128xf32> to vector<1x128xf32>
    %100 = vector.broadcast %99 : vector<1x128xf32> to vector<64x128xf32>
    %c0_56 = arith.constant 0 : index
    %c0_57 = arith.constant 0 : index
    %c0_58 = arith.constant 0 : index
    %101 = vector.load %arg13[%c0_56, %c0_57, %c0_58] : memref<12x16x128xf32, #tpu.memory_space<vmem>>, vector<8x8x128xf32>
    %102 = vector.shape_cast %101 : vector<8x8x128xf32> to vector<64x128xf32>
    %c0_59 = arith.constant 0 : index
    %c0_60 = arith.constant 0 : index
    %c0_61 = arith.constant 0 : index
    %103 = vector.load %arg5[%c0_59, %c0_60, %c0_61] : memref<25x128x128xf32, #tpu.memory_space<vmem>>, vector<1x128x128xf32>
    %104 = vector.shape_cast %103 : vector<1x128x128xf32> to vector<128x128xf32>
    %cst_62 = arith.constant dense<0.000000e+00> : vector<64x128xf32>
    %105 = tpu.matmul %102, %104, %cst_62 {dimension_numbers = #tpu.dot_dimension_numbers<[1], [0], [0], [1], [0, 0, 1, 1], [], []>} : vector<64x128xf32>, vector<128x128xf32>, vector<64x128xf32> -> vector<64x128xf32>
    %106 = arith.addf %100, %105 : vector<64x128xf32>
    %c0_63 = arith.constant 0 : index
    %c1_64 = arith.constant 1 : index
    %c0_65 = arith.constant 0 : index
    %107 = vector.load %arg13[%c0_63, %c1_64, %c0_65] : memref<12x16x128xf32, #tpu.memory_space<vmem>>, vector<8x8x128xf32>
    %108 = vector.shape_cast %107 : vector<8x8x128xf32> to vector<64x128xf32>
    %c1_66 = arith.constant 1 : index
    %c0_67 = arith.constant 0 : index
    %c0_68 = arith.constant 0 : index
    %109 = vector.load %arg5[%c1_66, %c0_67, %c0_68] : memref<25x128x128xf32, #tpu.memory_space<vmem>>, vector<1x128x128xf32>
    %110 = vector.shape_cast %109 : vector<1x128x128xf32> to vector<128x128xf32>
    %cst_69 = arith.constant dense<0.000000e+00> : vector<64x128xf32>
    %111 = tpu.matmul %108, %110, %cst_69 {dimension_numbers = #tpu.dot_dimension_numbers<[1], [0], [0], [1], [0, 0, 1, 1], [], []>} : vector<64x128xf32>, vector<128x128xf32>, vector<64x128xf32> -> vector<64x128xf32>
    %112 = arith.addf %106, %111 : vector<64x128xf32>
    %c0_70 = arith.constant 0 : index
    %c2_71 = arith.constant 2 : index
    %c0_72 = arith.constant 0 : index
    %113 = vector.load %arg13[%c0_70, %c2_71, %c0_72] : memref<12x16x128xf32, #tpu.memory_space<vmem>>, vector<8x8x128xf32>
    %114 = vector.shape_cast %113 : vector<8x8x128xf32> to vector<64x128xf32>
    %c2_73 = arith.constant 2 : index
    %c0_74 = arith.constant 0 : index
    %c0_75 = arith.constant 0 : index
    %115 = vector.load %arg5[%c2_73, %c0_74, %c0_75] : memref<25x128x128xf32, #tpu.memory_space<vmem>>, vector<1x128x128xf32>
    %116 = vector.shape_cast %115 : vector<1x128x128xf32> to vector<128x128xf32>
    %cst_76 = arith.constant dense<0.000000e+00> : vector<64x128xf32>
    %117 = tpu.matmul %114, %116, %cst_76 {dimension_numbers = #tpu.dot_dimension_numbers<[1], [0], [0], [1], [0, 0, 1, 1], [], []>} : vector<64x128xf32>, vector<128x128xf32>, vector<64x128xf32> -> vector<64x128xf32>
    %118 = arith.addf %112, %117 : vector<64x128xf32>
    %c0_77 = arith.constant 0 : index
    %c3_78 = arith.constant 3 : index
    %c0_79 = arith.constant 0 : index
    %119 = vector.load %arg13[%c0_77, %c3_78, %c0_79] : memref<12x16x128xf32, #tpu.memory_space<vmem>>, vector<8x8x128xf32>
    %120 = vector.shape_cast %119 : vector<8x8x128xf32> to vector<64x128xf32>
    %c3_80 = arith.constant 3 : index
    %c0_81 = arith.constant 0 : index
    %c0_82 = arith.constant 0 : index
    %121 = vector.load %arg5[%c3_80, %c0_81, %c0_82] : memref<25x128x128xf32, #tpu.memory_space<vmem>>, vector<1x128x128xf32>
    %122 = vector.shape_cast %121 : vector<1x128x128xf32> to vector<128x128xf32>
    %cst_83 = arith.constant dense<0.000000e+00> : vector<64x128xf32>
    %123 = tpu.matmul %120, %122, %cst_83 {dimension_numbers = #tpu.dot_dimension_numbers<[1], [0], [0], [1], [0, 0, 1, 1], [], []>} : vector<64x128xf32>, vector<128x128xf32>, vector<64x128xf32> -> vector<64x128xf32>
    %124 = arith.addf %118, %123 : vector<64x128xf32>
    %c0_84 = arith.constant 0 : index
    %c4_85 = arith.constant 4 : index
    %c0_86 = arith.constant 0 : index
    %125 = vector.load %arg13[%c0_84, %c4_85, %c0_86] : memref<12x16x128xf32, #tpu.memory_space<vmem>>, vector<8x8x128xf32>
    %126 = vector.shape_cast %125 : vector<8x8x128xf32> to vector<64x128xf32>
    %c4_87 = arith.constant 4 : index
    %c0_88 = arith.constant 0 : index
    %c0_89 = arith.constant 0 : index
    %127 = vector.load %arg5[%c4_87, %c0_88, %c0_89] : memref<25x128x128xf32, #tpu.memory_space<vmem>>, vector<1x128x128xf32>
    %128 = vector.shape_cast %127 : vector<1x128x128xf32> to vector<128x128xf32>
    %cst_90 = arith.constant dense<0.000000e+00> : vector<64x128xf32>
    %129 = tpu.matmul %126, %128, %cst_90 {dimension_numbers = #tpu.dot_dimension_numbers<[1], [0], [0], [1], [0, 0, 1, 1], [], []>} : vector<64x128xf32>, vector<128x128xf32>, vector<64x128xf32> -> vector<64x128xf32>
    %130 = arith.addf %124, %129 : vector<64x128xf32>
    %c1_91 = arith.constant 1 : index
    %c0_92 = arith.constant 0 : index
    %c0_93 = arith.constant 0 : index
    %131 = vector.load %arg13[%c1_91, %c0_92, %c0_93] : memref<12x16x128xf32, #tpu.memory_space<vmem>>, vector<8x8x128xf32>
    %132 = vector.shape_cast %131 : vector<8x8x128xf32> to vector<64x128xf32>
    %c5_94 = arith.constant 5 : index
    %c0_95 = arith.constant 0 : index
    %c0_96 = arith.constant 0 : index
    %133 = vector.load %arg5[%c5_94, %c0_95, %c0_96] : memref<25x128x128xf32, #tpu.memory_space<vmem>>, vector<1x128x128xf32>
    %134 = vector.shape_cast %133 : vector<1x128x128xf32> to vector<128x128xf32>
    %cst_97 = arith.constant dense<0.000000e+00> : vector<64x128xf32>
    %135 = tpu.matmul %132, %134, %cst_97 {dimension_numbers = #tpu.dot_dimension_numbers<[1], [0], [0], [1], [0, 0, 1, 1], [], []>} : vector<64x128xf32>, vector<128x128xf32>, vector<64x128xf32> -> vector<64x128xf32>
    %136 = arith.addf %130, %135 : vector<64x128xf32>
    %c1_98 = arith.constant 1 : index
    %c1_99 = arith.constant 1 : index
    %c0_100 = arith.constant 0 : index
    %137 = vector.load %arg13[%c1_98, %c1_99, %c0_100] : memref<12x16x128xf32, #tpu.memory_space<vmem>>, vector<8x8x128xf32>
    %138 = vector.shape_cast %137 : vector<8x8x128xf32> to vector<64x128xf32>
    %c6_101 = arith.constant 6 : index
    %c0_102 = arith.constant 0 : index
    %c0_103 = arith.constant 0 : index
    %139 = vector.load %arg5[%c6_101, %c0_102, %c0_103] : memref<25x128x128xf32, #tpu.memory_space<vmem>>, vector<1x128x128xf32>
    %140 = vector.shape_cast %139 : vector<1x128x128xf32> to vector<128x128xf32>
    %cst_104 = arith.constant dense<0.000000e+00> : vector<64x128xf32>
    %141 = tpu.matmul %138, %140, %cst_104 {dimension_numbers = #tpu.dot_dimension_numbers<[1], [0], [0], [1], [0, 0, 1, 1], [], []>} : vector<64x128xf32>, vector<128x128xf32>, vector<64x128xf32> -> vector<64x128xf32>
    %142 = arith.addf %136, %141 : vector<64x128xf32>
    %c1_105 = arith.constant 1 : index
    %c2_106 = arith.constant 2 : index
    %c0_107 = arith.constant 0 : index
    %143 = vector.load %arg13[%c1_105, %c2_106, %c0_107] : memref<12x16x128xf32, #tpu.memory_space<vmem>>, vector<8x8x128xf32>
    %144 = vector.shape_cast %143 : vector<8x8x128xf32> to vector<64x128xf32>
    %c7_108 = arith.constant 7 : index
    %c0_109 = arith.constant 0 : index
    %c0_110 = arith.constant 0 : index
    %145 = vector.load %arg5[%c7_108, %c0_109, %c0_110] : memref<25x128x128xf32, #tpu.memory_space<vmem>>, vector<1x128x128xf32>
    %146 = vector.shape_cast %145 : vector<1x128x128xf32> to vector<128x128xf32>
    %cst_111 = arith.constant dense<0.000000e+00> : vector<64x128xf32>
    %147 = tpu.matmul %144, %146, %cst_111 {dimension_numbers = #tpu.dot_dimension_numbers<[1], [0], [0], [1], [0, 0, 1, 1], [], []>} : vector<64x128xf32>, vector<128x128xf32>, vector<64x128xf32> -> vector<64x128xf32>
    %148 = arith.addf %142, %147 : vector<64x128xf32>
    %c1_112 = arith.constant 1 : index
    %c3_113 = arith.constant 3 : index
    %c0_114 = arith.constant 0 : index
    %149 = vector.load %arg13[%c1_112, %c3_113, %c0_114] : memref<12x16x128xf32, #tpu.memory_space<vmem>>, vector<8x8x128xf32>
    %150 = vector.shape_cast %149 : vector<8x8x128xf32> to vector<64x128xf32>
    %c8_115 = arith.constant 8 : index
    %c0_116 = arith.constant 0 : index
    %c0_117 = arith.constant 0 : index
    %151 = vector.load %arg5[%c8_115, %c0_116, %c0_117] : memref<25x128x128xf32, #tpu.memory_space<vmem>>, vector<1x128x128xf32>
    %152 = vector.shape_cast %151 : vector<1x128x128xf32> to vector<128x128xf32>
    %cst_118 = arith.constant dense<0.000000e+00> : vector<64x128xf32>
    %153 = tpu.matmul %150, %152, %cst_118 {dimension_numbers = #tpu.dot_dimension_numbers<[1], [0], [0], [1], [0, 0, 1, 1], [], []>} : vector<64x128xf32>, vector<128x128xf32>, vector<64x128xf32> -> vector<64x128xf32>
    %154 = arith.addf %148, %153 : vector<64x128xf32>
    %c1_119 = arith.constant 1 : index
    %c4_120 = arith.constant 4 : index
    %c0_121 = arith.constant 0 : index
    %155 = vector.load %arg13[%c1_119, %c4_120, %c0_121] : memref<12x16x128xf32, #tpu.memory_space<vmem>>, vector<8x8x128xf32>
    %156 = vector.shape_cast %155 : vector<8x8x128xf32> to vector<64x128xf32>
    %c9 = arith.constant 9 : index
    %c0_122 = arith.constant 0 : index
    %c0_123 = arith.constant 0 : index
    %157 = vector.load %arg5[%c9, %c0_122, %c0_123] : memref<25x128x128xf32, #tpu.memory_space<vmem>>, vector<1x128x128xf32>
    %158 = vector.shape_cast %157 : vector<1x128x128xf32> to vector<128x128xf32>
    %cst_124 = arith.constant dense<0.000000e+00> : vector<64x128xf32>
    %159 = tpu.matmul %156, %158, %cst_124 {dimension_numbers = #tpu.dot_dimension_numbers<[1], [0], [0], [1], [0, 0, 1, 1], [], []>} : vector<64x128xf32>, vector<128x128xf32>, vector<64x128xf32> -> vector<64x128xf32>
    %160 = arith.addf %154, %159 : vector<64x128xf32>
    %c2_125 = arith.constant 2 : index
    %c0_126 = arith.constant 0 : index
    %c0_127 = arith.constant 0 : index
    %161 = vector.load %arg13[%c2_125, %c0_126, %c0_127] : memref<12x16x128xf32, #tpu.memory_space<vmem>>, vector<8x8x128xf32>
    %162 = vector.shape_cast %161 : vector<8x8x128xf32> to vector<64x128xf32>
    %c10 = arith.constant 10 : index
    %c0_128 = arith.constant 0 : index
    %c0_129 = arith.constant 0 : index
    %163 = vector.load %arg5[%c10, %c0_128, %c0_129] : memref<25x128x128xf32, #tpu.memory_space<vmem>>, vector<1x128x128xf32>
    %164 = vector.shape_cast %163 : vector<1x128x128xf32> to vector<128x128xf32>
    %cst_130 = arith.constant dense<0.000000e+00> : vector<64x128xf32>
    %165 = tpu.matmul %162, %164, %cst_130 {dimension_numbers = #tpu.dot_dimension_numbers<[1], [0], [0], [1], [0, 0, 1, 1], [], []>} : vector<64x128xf32>, vector<128x128xf32>, vector<64x128xf32> -> vector<64x128xf32>
    %166 = arith.addf %160, %165 : vector<64x128xf32>
    %c2_131 = arith.constant 2 : index
    %c1_132 = arith.constant 1 : index
    %c0_133 = arith.constant 0 : index
    %167 = vector.load %arg13[%c2_131, %c1_132, %c0_133] : memref<12x16x128xf32, #tpu.memory_space<vmem>>, vector<8x8x128xf32>
    %168 = vector.shape_cast %167 : vector<8x8x128xf32> to vector<64x128xf32>
    %c11 = arith.constant 11 : index
    %c0_134 = arith.constant 0 : index
    %c0_135 = arith.constant 0 : index
    %169 = vector.load %arg5[%c11, %c0_134, %c0_135] : memref<25x128x128xf32, #tpu.memory_space<vmem>>, vector<1x128x128xf32>
    %170 = vector.shape_cast %169 : vector<1x128x128xf32> to vector<128x128xf32>
    %cst_136 = arith.constant dense<0.000000e+00> : vector<64x128xf32>
    %171 = tpu.matmul %168, %170, %cst_136 {dimension_numbers = #tpu.dot_dimension_numbers<[1], [0], [0], [1], [0, 0, 1, 1], [], []>} : vector<64x128xf32>, vector<128x128xf32>, vector<64x128xf32> -> vector<64x128xf32>
    %172 = arith.addf %166, %171 : vector<64x128xf32>
    %c2_137 = arith.constant 2 : index
    %c2_138 = arith.constant 2 : index
    %c0_139 = arith.constant 0 : index
    %173 = vector.load %arg13[%c2_137, %c2_138, %c0_139] : memref<12x16x128xf32, #tpu.memory_space<vmem>>, vector<8x8x128xf32>
    %174 = vector.shape_cast %173 : vector<8x8x128xf32> to vector<64x128xf32>
    %c12 = arith.constant 12 : index
    %c0_140 = arith.constant 0 : index
    %c0_141 = arith.constant 0 : index
    %175 = vector.load %arg5[%c12, %c0_140, %c0_141] : memref<25x128x128xf32, #tpu.memory_space<vmem>>, vector<1x128x128xf32>
    %176 = vector.shape_cast %175 : vector<1x128x128xf32> to vector<128x128xf32>
    %cst_142 = arith.constant dense<0.000000e+00> : vector<64x128xf32>
    %177 = tpu.matmul %174, %176, %cst_142 {dimension_numbers = #tpu.dot_dimension_numbers<[1], [0], [0], [1], [0, 0, 1, 1], [], []>} : vector<64x128xf32>, vector<128x128xf32>, vector<64x128xf32> -> vector<64x128xf32>
    %178 = arith.addf %172, %177 : vector<64x128xf32>
    %c2_143 = arith.constant 2 : index
    %c3_144 = arith.constant 3 : index
    %c0_145 = arith.constant 0 : index
    %179 = vector.load %arg13[%c2_143, %c3_144, %c0_145] : memref<12x16x128xf32, #tpu.memory_space<vmem>>, vector<8x8x128xf32>
    %180 = vector.shape_cast %179 : vector<8x8x128xf32> to vector<64x128xf32>
    %c13 = arith.constant 13 : index
    %c0_146 = arith.constant 0 : index
    %c0_147 = arith.constant 0 : index
    %181 = vector.load %arg5[%c13, %c0_146, %c0_147] : memref<25x128x128xf32, #tpu.memory_space<vmem>>, vector<1x128x128xf32>
    %182 = vector.shape_cast %181 : vector<1x128x128xf32> to vector<128x128xf32>
    %cst_148 = arith.constant dense<0.000000e+00> : vector<64x128xf32>
    %183 = tpu.matmul %180, %182, %cst_148 {dimension_numbers = #tpu.dot_dimension_numbers<[1], [0], [0], [1], [0, 0, 1, 1], [], []>} : vector<64x128xf32>, vector<128x128xf32>, vector<64x128xf32> -> vector<64x128xf32>
    %184 = arith.addf %178, %183 : vector<64x128xf32>
    %c2_149 = arith.constant 2 : index
    %c4_150 = arith.constant 4 : index
    %c0_151 = arith.constant 0 : index
    %185 = vector.load %arg13[%c2_149, %c4_150, %c0_151] : memref<12x16x128xf32, #tpu.memory_space<vmem>>, vector<8x8x128xf32>
    %186 = vector.shape_cast %185 : vector<8x8x128xf32> to vector<64x128xf32>
    %c14 = arith.constant 14 : index
    %c0_152 = arith.constant 0 : index
    %c0_153 = arith.constant 0 : index
    %187 = vector.load %arg5[%c14, %c0_152, %c0_153] : memref<25x128x128xf32, #tpu.memory_space<vmem>>, vector<1x128x128xf32>
    %188 = vector.shape_cast %187 : vector<1x128x128xf32> to vector<128x128xf32>
    %cst_154 = arith.constant dense<0.000000e+00> : vector<64x128xf32>
    %189 = tpu.matmul %186, %188, %cst_154 {dimension_numbers = #tpu.dot_dimension_numbers<[1], [0], [0], [1], [0, 0, 1, 1], [], []>} : vector<64x128xf32>, vector<128x128xf32>, vector<64x128xf32> -> vector<64x128xf32>
    %190 = arith.addf %184, %189 : vector<64x128xf32>
    %c3_155 = arith.constant 3 : index
    %c0_156 = arith.constant 0 : index
    %c0_157 = arith.constant 0 : index
    %191 = vector.load %arg13[%c3_155, %c0_156, %c0_157] : memref<12x16x128xf32, #tpu.memory_space<vmem>>, vector<8x8x128xf32>
    %192 = vector.shape_cast %191 : vector<8x8x128xf32> to vector<64x128xf32>
    %c15 = arith.constant 15 : index
    %c0_158 = arith.constant 0 : index
    %c0_159 = arith.constant 0 : index
    %193 = vector.load %arg5[%c15, %c0_158, %c0_159] : memref<25x128x128xf32, #tpu.memory_space<vmem>>, vector<1x128x128xf32>
    %194 = vector.shape_cast %193 : vector<1x128x128xf32> to vector<128x128xf32>
    %cst_160 = arith.constant dense<0.000000e+00> : vector<64x128xf32>
    %195 = tpu.matmul %192, %194, %cst_160 {dimension_numbers = #tpu.dot_dimension_numbers<[1], [0], [0], [1], [0, 0, 1, 1], [], []>} : vector<64x128xf32>, vector<128x128xf32>, vector<64x128xf32> -> vector<64x128xf32>
    %196 = arith.addf %190, %195 : vector<64x128xf32>
    %c3_161 = arith.constant 3 : index
    %c1_162 = arith.constant 1 : index
    %c0_163 = arith.constant 0 : index
    %197 = vector.load %arg13[%c3_161, %c1_162, %c0_163] : memref<12x16x128xf32, #tpu.memory_space<vmem>>, vector<8x8x128xf32>
    %198 = vector.shape_cast %197 : vector<8x8x128xf32> to vector<64x128xf32>
    %c16 = arith.constant 16 : index
    %c0_164 = arith.constant 0 : index
    %c0_165 = arith.constant 0 : index
    %199 = vector.load %arg5[%c16, %c0_164, %c0_165] : memref<25x128x128xf32, #tpu.memory_space<vmem>>, vector<1x128x128xf32>
    %200 = vector.shape_cast %199 : vector<1x128x128xf32> to vector<128x128xf32>
    %cst_166 = arith.constant dense<0.000000e+00> : vector<64x128xf32>
    %201 = tpu.matmul %198, %200, %cst_166 {dimension_numbers = #tpu.dot_dimension_numbers<[1], [0], [0], [1], [0, 0, 1, 1], [], []>} : vector<64x128xf32>, vector<128x128xf32>, vector<64x128xf32> -> vector<64x128xf32>
    %202 = arith.addf %196, %201 : vector<64x128xf32>
    %c3_167 = arith.constant 3 : index
    %c2_168 = arith.constant 2 : index
    %c0_169 = arith.constant 0 : index
    %203 = vector.load %arg13[%c3_167, %c2_168, %c0_169] : memref<12x16x128xf32, #tpu.memory_space<vmem>>, vector<8x8x128xf32>
    %204 = vector.shape_cast %203 : vector<8x8x128xf32> to vector<64x128xf32>
    %c17 = arith.constant 17 : index
    %c0_170 = arith.constant 0 : index
    %c0_171 = arith.constant 0 : index
    %205 = vector.load %arg5[%c17, %c0_170, %c0_171] : memref<25x128x128xf32, #tpu.memory_space<vmem>>, vector<1x128x128xf32>
    %206 = vector.shape_cast %205 : vector<1x128x128xf32> to vector<128x128xf32>
    %cst_172 = arith.constant dense<0.000000e+00> : vector<64x128xf32>
    %207 = tpu.matmul %204, %206, %cst_172 {dimension_numbers = #tpu.dot_dimension_numbers<[1], [0], [0], [1], [0, 0, 1, 1], [], []>} : vector<64x128xf32>, vector<128x128xf32>, vector<64x128xf32> -> vector<64x128xf32>
    %208 = arith.addf %202, %207 : vector<64x128xf32>
    %c3_173 = arith.constant 3 : index
    %c3_174 = arith.constant 3 : index
    %c0_175 = arith.constant 0 : index
    %209 = vector.load %arg13[%c3_173, %c3_174, %c0_175] : memref<12x16x128xf32, #tpu.memory_space<vmem>>, vector<8x8x128xf32>
    %210 = vector.shape_cast %209 : vector<8x8x128xf32> to vector<64x128xf32>
    %c18 = arith.constant 18 : index
    %c0_176 = arith.constant 0 : index
    %c0_177 = arith.constant 0 : index
    %211 = vector.load %arg5[%c18, %c0_176, %c0_177] : memref<25x128x128xf32, #tpu.memory_space<vmem>>, vector<1x128x128xf32>
    %212 = vector.shape_cast %211 : vector<1x128x128xf32> to vector<128x128xf32>
    %cst_178 = arith.constant dense<0.000000e+00> : vector<64x128xf32>
    %213 = tpu.matmul %210, %212, %cst_178 {dimension_numbers = #tpu.dot_dimension_numbers<[1], [0], [0], [1], [0, 0, 1, 1], [], []>} : vector<64x128xf32>, vector<128x128xf32>, vector<64x128xf32> -> vector<64x128xf32>
    %214 = arith.addf %208, %213 : vector<64x128xf32>
    %c3_179 = arith.constant 3 : index
    %c4_180 = arith.constant 4 : index
    %c0_181 = arith.constant 0 : index
    %215 = vector.load %arg13[%c3_179, %c4_180, %c0_181] : memref<12x16x128xf32, #tpu.memory_space<vmem>>, vector<8x8x128xf32>
    %216 = vector.shape_cast %215 : vector<8x8x128xf32> to vector<64x128xf32>
    %c19 = arith.constant 19 : index
    %c0_182 = arith.constant 0 : index
    %c0_183 = arith.constant 0 : index
    %217 = vector.load %arg5[%c19, %c0_182, %c0_183] : memref<25x128x128xf32, #tpu.memory_space<vmem>>, vector<1x128x128xf32>
    %218 = vector.shape_cast %217 : vector<1x128x128xf32> to vector<128x128xf32>
    %cst_184 = arith.constant dense<0.000000e+00> : vector<64x128xf32>
    %219 = tpu.matmul %216, %218, %cst_184 {dimension_numbers = #tpu.dot_dimension_numbers<[1], [0], [0], [1], [0, 0, 1, 1], [], []>} : vector<64x128xf32>, vector<128x128xf32>, vector<64x128xf32> -> vector<64x128xf32>
    %220 = arith.addf %214, %219 : vector<64x128xf32>
    %c4_185 = arith.constant 4 : index
    %c0_186 = arith.constant 0 : index
    %c0_187 = arith.constant 0 : index
    %221 = vector.load %arg13[%c4_185, %c0_186, %c0_187] : memref<12x16x128xf32, #tpu.memory_space<vmem>>, vector<8x8x128xf32>
    %222 = vector.shape_cast %221 : vector<8x8x128xf32> to vector<64x128xf32>
    %c20 = arith.constant 20 : index
    %c0_188 = arith.constant 0 : index
    %c0_189 = arith.constant 0 : index
    %223 = vector.load %arg5[%c20, %c0_188, %c0_189] : memref<25x128x128xf32, #tpu.memory_space<vmem>>, vector<1x128x128xf32>
    %224 = vector.shape_cast %223 : vector<1x128x128xf32> to vector<128x128xf32>
    %cst_190 = arith.constant dense<0.000000e+00> : vector<64x128xf32>
    %225 = tpu.matmul %222, %224, %cst_190 {dimension_numbers = #tpu.dot_dimension_numbers<[1], [0], [0], [1], [0, 0, 1, 1], [], []>} : vector<64x128xf32>, vector<128x128xf32>, vector<64x128xf32> -> vector<64x128xf32>
    %226 = arith.addf %220, %225 : vector<64x128xf32>
    %c4_191 = arith.constant 4 : index
    %c1_192 = arith.constant 1 : index
    %c0_193 = arith.constant 0 : index
    %227 = vector.load %arg13[%c4_191, %c1_192, %c0_193] : memref<12x16x128xf32, #tpu.memory_space<vmem>>, vector<8x8x128xf32>
    %228 = vector.shape_cast %227 : vector<8x8x128xf32> to vector<64x128xf32>
    %c21 = arith.constant 21 : index
    %c0_194 = arith.constant 0 : index
    %c0_195 = arith.constant 0 : index
    %229 = vector.load %arg5[%c21, %c0_194, %c0_195] : memref<25x128x128xf32, #tpu.memory_space<vmem>>, vector<1x128x128xf32>
    %230 = vector.shape_cast %229 : vector<1x128x128xf32> to vector<128x128xf32>
    %cst_196 = arith.constant dense<0.000000e+00> : vector<64x128xf32>
    %231 = tpu.matmul %228, %230, %cst_196 {dimension_numbers = #tpu.dot_dimension_numbers<[1], [0], [0], [1], [0, 0, 1, 1], [], []>} : vector<64x128xf32>, vector<128x128xf32>, vector<64x128xf32> -> vector<64x128xf32>
    %232 = arith.addf %226, %231 : vector<64x128xf32>
    %c4_197 = arith.constant 4 : index
    %c2_198 = arith.constant 2 : index
    %c0_199 = arith.constant 0 : index
    %233 = vector.load %arg13[%c4_197, %c2_198, %c0_199] : memref<12x16x128xf32, #tpu.memory_space<vmem>>, vector<8x8x128xf32>
    %234 = vector.shape_cast %233 : vector<8x8x128xf32> to vector<64x128xf32>
    %c22 = arith.constant 22 : index
    %c0_200 = arith.constant 0 : index
    %c0_201 = arith.constant 0 : index
    %235 = vector.load %arg5[%c22, %c0_200, %c0_201] : memref<25x128x128xf32, #tpu.memory_space<vmem>>, vector<1x128x128xf32>
    %236 = vector.shape_cast %235 : vector<1x128x128xf32> to vector<128x128xf32>
    %cst_202 = arith.constant dense<0.000000e+00> : vector<64x128xf32>
    %237 = tpu.matmul %234, %236, %cst_202 {dimension_numbers = #tpu.dot_dimension_numbers<[1], [0], [0], [1], [0, 0, 1, 1], [], []>} : vector<64x128xf32>, vector<128x128xf32>, vector<64x128xf32> -> vector<64x128xf32>
    %238 = arith.addf %232, %237 : vector<64x128xf32>
    %c4_203 = arith.constant 4 : index
    %c3_204 = arith.constant 3 : index
    %c0_205 = arith.constant 0 : index
    %239 = vector.load %arg13[%c4_203, %c3_204, %c0_205] : memref<12x16x128xf32, #tpu.memory_space<vmem>>, vector<8x8x128xf32>
    %240 = vector.shape_cast %239 : vector<8x8x128xf32> to vector<64x128xf32>
    %c23 = arith.constant 23 : index
    %c0_206 = arith.constant 0 : index
    %c0_207 = arith.constant 0 : index
    %241 = vector.load %arg5[%c23, %c0_206, %c0_207] : memref<25x128x128xf32, #tpu.memory_space<vmem>>, vector<1x128x128xf32>
    %242 = vector.shape_cast %241 : vector<1x128x128xf32> to vector<128x128xf32>
    %cst_208 = arith.constant dense<0.000000e+00> : vector<64x128xf32>
    %243 = tpu.matmul %240, %242, %cst_208 {dimension_numbers = #tpu.dot_dimension_numbers<[1], [0], [0], [1], [0, 0, 1, 1], [], []>} : vector<64x128xf32>, vector<128x128xf32>, vector<64x128xf32> -> vector<64x128xf32>
    %244 = arith.addf %238, %243 : vector<64x128xf32>
    %c4_209 = arith.constant 4 : index
    %c4_210 = arith.constant 4 : index
    %c0_211 = arith.constant 0 : index
    %245 = vector.load %arg13[%c4_209, %c4_210, %c0_211] : memref<12x16x128xf32, #tpu.memory_space<vmem>>, vector<8x8x128xf32>
    %246 = vector.shape_cast %245 : vector<8x8x128xf32> to vector<64x128xf32>
    %c24 = arith.constant 24 : index
    %c0_212 = arith.constant 0 : index
    %c0_213 = arith.constant 0 : index
    %247 = vector.load %arg5[%c24, %c0_212, %c0_213] : memref<25x128x128xf32, #tpu.memory_space<vmem>>, vector<1x128x128xf32>
    %248 = vector.shape_cast %247 : vector<1x128x128xf32> to vector<128x128xf32>
    %cst_214 = arith.constant dense<0.000000e+00> : vector<64x128xf32>
    %249 = tpu.matmul %246, %248, %cst_214 {dimension_numbers = #tpu.dot_dimension_numbers<[1], [0], [0], [1], [0, 0, 1, 1], [], []>} : vector<64x128xf32>, vector<128x128xf32>, vector<64x128xf32> -> vector<64x128xf32>
    %250 = arith.addf %244, %249 : vector<64x128xf32>
    %cst_215 = arith.constant 0.000000e+00 : f32
    %251 = vector.broadcast %cst_215 : f32 to vector<64x128xf32>
    %252 = arith.cmpf oge, %250, %251 : vector<64x128xf32>
    %cst_216 = arith.constant 1.000000e-01 : f32
    %253 = vector.broadcast %cst_216 : f32 to vector<64x128xf32>
    %254 = arith.mulf %253, %250 : vector<64x128xf32>
    %255 = arith.select %252, %250, %254 : vector<64x128xi1>, vector<64x128xf32>
    %c0_217 = arith.constant 0 : index
    %c0_218 = arith.constant 0 : index
    %256 = vector.load %arg7[%c0_217, %c0_218] : memref<64x64xf32, #tpu.memory_space<vmem>>, vector<64x64xf32>
    %cst_219 = arith.constant dense<0.000000e+00> : vector<64x128xf32>
    %257 = tpu.matmul %256, %255, %cst_219 {dimension_numbers = #tpu.dot_dimension_numbers<[1], [0], [0], [1], [0, 0, 1, 1], [], []>} : vector<64x64xf32>, vector<64x128xf32>, vector<64x128xf32> -> vector<64x128xf32>
    %258 = vector.shape_cast %257 : vector<64x128xf32> to vector<4x16x128xf32>
    %259 = vector.extract_strided_slice %258 {offsets = [0, 0, 0], sizes = [1, 16, 128], strides = [1, 1, 1]} : vector<4x16x128xf32> to vector<1x16x128xf32>
    %260 = vector.shape_cast %259 : vector<1x16x128xf32> to vector<16x128xf32>
    %261 = vector.extract_strided_slice %258 {offsets = [1, 0, 0], sizes = [1, 16, 128], strides = [1, 1, 1]} : vector<4x16x128xf32> to vector<1x16x128xf32>
    %262 = vector.shape_cast %261 : vector<1x16x128xf32> to vector<16x128xf32>
    %263 = arith.maximumf %260, %262 : vector<16x128xf32>
    %264 = vector.extract_strided_slice %258 {offsets = [2, 0, 0], sizes = [1, 16, 128], strides = [1, 1, 1]} : vector<4x16x128xf32> to vector<1x16x128xf32>
    %265 = vector.shape_cast %264 : vector<1x16x128xf32> to vector<16x128xf32>
    %266 = vector.extract_strided_slice %258 {offsets = [3, 0, 0], sizes = [1, 16, 128], strides = [1, 1, 1]} : vector<4x16x128xf32> to vector<1x16x128xf32>
    %267 = vector.shape_cast %266 : vector<1x16x128xf32> to vector<16x128xf32>
    %268 = arith.maximumf %265, %267 : vector<16x128xf32>
    %269 = arith.maximumf %263, %268 : vector<16x128xf32>
    %c0_220 = arith.constant 0 : index
    %c0_221 = arith.constant 0 : index
    %270 = vector.load %arg9[%c0_220, %c0_221] : memref<1x128xf32, #tpu.memory_space<vmem>>, vector<1x128xf32>
    %271 = vector.extract_strided_slice %269 {offsets = [0, 0], sizes = [1, 128], strides = [1, 1]} : vector<16x128xf32> to vector<1x128xf32>
    %c0_222 = arith.constant 0 : index
    %c0_223 = arith.constant 0 : index
    %c0_224 = arith.constant 0 : index
    %272 = vector.load %arg8[%c0_222, %c0_223, %c0_224] : memref<16x128x128xf32, #tpu.memory_space<vmem>>, vector<1x128x128xf32>
    %273 = vector.shape_cast %272 : vector<1x128x128xf32> to vector<128x128xf32>
    %cst_225 = arith.constant dense<0.000000e+00> : vector<1x128xf32>
    %274 = tpu.matmul %271, %273, %cst_225 {dimension_numbers = #tpu.dot_dimension_numbers<[1], [0], [0], [1], [0, 0, 1, 1], [], []>} : vector<1x128xf32>, vector<128x128xf32>, vector<1x128xf32> -> vector<1x128xf32>
    %275 = arith.addf %270, %274 : vector<1x128xf32>
    %276 = vector.extract_strided_slice %269 {offsets = [1, 0], sizes = [1, 128], strides = [1, 1]} : vector<16x128xf32> to vector<1x128xf32>
    %c1_226 = arith.constant 1 : index
    %c0_227 = arith.constant 0 : index
    %c0_228 = arith.constant 0 : index
    %277 = vector.load %arg8[%c1_226, %c0_227, %c0_228] : memref<16x128x128xf32, #tpu.memory_space<vmem>>, vector<1x128x128xf32>
    %278 = vector.shape_cast %277 : vector<1x128x128xf32> to vector<128x128xf32>
    %cst_229 = arith.constant dense<0.000000e+00> : vector<1x128xf32>
    %279 = tpu.matmul %276, %278, %cst_229 {dimension_numbers = #tpu.dot_dimension_numbers<[1], [0], [0], [1], [0, 0, 1, 1], [], []>} : vector<1x128xf32>, vector<128x128xf32>, vector<1x128xf32> -> vector<1x128xf32>
    %280 = arith.addf %275, %279 : vector<1x128xf32>
    %281 = vector.extract_strided_slice %269 {offsets = [2, 0], sizes = [1, 128], strides = [1, 1]} : vector<16x128xf32> to vector<1x128xf32>
    %c2_230 = arith.constant 2 : index
    %c0_231 = arith.constant 0 : index
    %c0_232 = arith.constant 0 : index
    %282 = vector.load %arg8[%c2_230, %c0_231, %c0_232] : memref<16x128x128xf32, #tpu.memory_space<vmem>>, vector<1x128x128xf32>
    %283 = vector.shape_cast %282 : vector<1x128x128xf32> to vector<128x128xf32>
    %cst_233 = arith.constant dense<0.000000e+00> : vector<1x128xf32>
    %284 = tpu.matmul %281, %283, %cst_233 {dimension_numbers = #tpu.dot_dimension_numbers<[1], [0], [0], [1], [0, 0, 1, 1], [], []>} : vector<1x128xf32>, vector<128x128xf32>, vector<1x128xf32> -> vector<1x128xf32>
    %285 = arith.addf %280, %284 : vector<1x128xf32>
    %286 = vector.extract_strided_slice %269 {offsets = [3, 0], sizes = [1, 128], strides = [1, 1]} : vector<16x128xf32> to vector<1x128xf32>
    %c3_234 = arith.constant 3 : index
    %c0_235 = arith.constant 0 : index
    %c0_236 = arith.constant 0 : index
    %287 = vector.load %arg8[%c3_234, %c0_235, %c0_236] : memref<16x128x128xf32, #tpu.memory_space<vmem>>, vector<1x128x128xf32>
    %288 = vector.shape_cast %287 : vector<1x128x128xf32> to vector<128x128xf32>
    %cst_237 = arith.constant dense<0.000000e+00> : vector<1x128xf32>
    %289 = tpu.matmul %286, %288, %cst_237 {dimension_numbers = #tpu.dot_dimension_numbers<[1], [0], [0], [1], [0, 0, 1, 1], [], []>} : vector<1x128xf32>, vector<128x128xf32>, vector<1x128xf32> -> vector<1x128xf32>
    %290 = arith.addf %285, %289 : vector<1x128xf32>
    %291 = vector.extract_strided_slice %269 {offsets = [4, 0], sizes = [1, 128], strides = [1, 1]} : vector<16x128xf32> to vector<1x128xf32>
    %c4_238 = arith.constant 4 : index
    %c0_239 = arith.constant 0 : index
    %c0_240 = arith.constant 0 : index
    %292 = vector.load %arg8[%c4_238, %c0_239, %c0_240] : memref<16x128x128xf32, #tpu.memory_space<vmem>>, vector<1x128x128xf32>
    %293 = vector.shape_cast %292 : vector<1x128x128xf32> to vector<128x128xf32>
    %cst_241 = arith.constant dense<0.000000e+00> : vector<1x128xf32>
    %294 = tpu.matmul %291, %293, %cst_241 {dimension_numbers = #tpu.dot_dimension_numbers<[1], [0], [0], [1], [0, 0, 1, 1], [], []>} : vector<1x128xf32>, vector<128x128xf32>, vector<1x128xf32> -> vector<1x128xf32>
    %295 = arith.addf %290, %294 : vector<1x128xf32>
    %296 = vector.extract_strided_slice %269 {offsets = [5, 0], sizes = [1, 128], strides = [1, 1]} : vector<16x128xf32> to vector<1x128xf32>
    %c5_242 = arith.constant 5 : index
    %c0_243 = arith.constant 0 : index
    %c0_244 = arith.constant 0 : index
    %297 = vector.load %arg8[%c5_242, %c0_243, %c0_244] : memref<16x128x128xf32, #tpu.memory_space<vmem>>, vector<1x128x128xf32>
    %298 = vector.shape_cast %297 : vector<1x128x128xf32> to vector<128x128xf32>
    %cst_245 = arith.constant dense<0.000000e+00> : vector<1x128xf32>
    %299 = tpu.matmul %296, %298, %cst_245 {dimension_numbers = #tpu.dot_dimension_numbers<[1], [0], [0], [1], [0, 0, 1, 1], [], []>} : vector<1x128xf32>, vector<128x128xf32>, vector<1x128xf32> -> vector<1x128xf32>
    %300 = arith.addf %295, %299 : vector<1x128xf32>
    %301 = vector.extract_strided_slice %269 {offsets = [6, 0], sizes = [1, 128], strides = [1, 1]} : vector<16x128xf32> to vector<1x128xf32>
    %c6_246 = arith.constant 6 : index
    %c0_247 = arith.constant 0 : index
    %c0_248 = arith.constant 0 : index
    %302 = vector.load %arg8[%c6_246, %c0_247, %c0_248] : memref<16x128x128xf32, #tpu.memory_space<vmem>>, vector<1x128x128xf32>
    %303 = vector.shape_cast %302 : vector<1x128x128xf32> to vector<128x128xf32>
    %cst_249 = arith.constant dense<0.000000e+00> : vector<1x128xf32>
    %304 = tpu.matmul %301, %303, %cst_249 {dimension_numbers = #tpu.dot_dimension_numbers<[1], [0], [0], [1], [0, 0, 1, 1], [], []>} : vector<1x128xf32>, vector<128x128xf32>, vector<1x128xf32> -> vector<1x128xf32>
    %305 = arith.addf %300, %304 : vector<1x128xf32>
    %306 = vector.extract_strided_slice %269 {offsets = [7, 0], sizes = [1, 128], strides = [1, 1]} : vector<16x128xf32> to vector<1x128xf32>
    %c7_250 = arith.constant 7 : index
    %c0_251 = arith.constant 0 : index
    %c0_252 = arith.constant 0 : index
    %307 = vector.load %arg8[%c7_250, %c0_251, %c0_252] : memref<16x128x128xf32, #tpu.memory_space<vmem>>, vector<1x128x128xf32>
    %308 = vector.shape_cast %307 : vector<1x128x128xf32> to vector<128x128xf32>
    %cst_253 = arith.constant dense<0.000000e+00> : vector<1x128xf32>
    %309 = tpu.matmul %306, %308, %cst_253 {dimension_numbers = #tpu.dot_dimension_numbers<[1], [0], [0], [1], [0, 0, 1, 1], [], []>} : vector<1x128xf32>, vector<128x128xf32>, vector<1x128xf32> -> vector<1x128xf32>
    %310 = arith.addf %305, %309 : vector<1x128xf32>
    %311 = vector.extract_strided_slice %269 {offsets = [8, 0], sizes = [1, 128], strides = [1, 1]} : vector<16x128xf32> to vector<1x128xf32>
    %c8_254 = arith.constant 8 : index
    %c0_255 = arith.constant 0 : index
    %c0_256 = arith.constant 0 : index
    %312 = vector.load %arg8[%c8_254, %c0_255, %c0_256] : memref<16x128x128xf32, #tpu.memory_space<vmem>>, vector<1x128x128xf32>
    %313 = vector.shape_cast %312 : vector<1x128x128xf32> to vector<128x128xf32>
    %cst_257 = arith.constant dense<0.000000e+00> : vector<1x128xf32>
    %314 = tpu.matmul %311, %313, %cst_257 {dimension_numbers = #tpu.dot_dimension_numbers<[1], [0], [0], [1], [0, 0, 1, 1], [], []>} : vector<1x128xf32>, vector<128x128xf32>, vector<1x128xf32> -> vector<1x128xf32>
    %315 = arith.addf %310, %314 : vector<1x128xf32>
    %316 = vector.extract_strided_slice %269 {offsets = [9, 0], sizes = [1, 128], strides = [1, 1]} : vector<16x128xf32> to vector<1x128xf32>
    %c9_258 = arith.constant 9 : index
    %c0_259 = arith.constant 0 : index
    %c0_260 = arith.constant 0 : index
    %317 = vector.load %arg8[%c9_258, %c0_259, %c0_260] : memref<16x128x128xf32, #tpu.memory_space<vmem>>, vector<1x128x128xf32>
    %318 = vector.shape_cast %317 : vector<1x128x128xf32> to vector<128x128xf32>
    %cst_261 = arith.constant dense<0.000000e+00> : vector<1x128xf32>
    %319 = tpu.matmul %316, %318, %cst_261 {dimension_numbers = #tpu.dot_dimension_numbers<[1], [0], [0], [1], [0, 0, 1, 1], [], []>} : vector<1x128xf32>, vector<128x128xf32>, vector<1x128xf32> -> vector<1x128xf32>
    %320 = arith.addf %315, %319 : vector<1x128xf32>
    %321 = vector.extract_strided_slice %269 {offsets = [10, 0], sizes = [1, 128], strides = [1, 1]} : vector<16x128xf32> to vector<1x128xf32>
    %c10_262 = arith.constant 10 : index
    %c0_263 = arith.constant 0 : index
    %c0_264 = arith.constant 0 : index
    %322 = vector.load %arg8[%c10_262, %c0_263, %c0_264] : memref<16x128x128xf32, #tpu.memory_space<vmem>>, vector<1x128x128xf32>
    %323 = vector.shape_cast %322 : vector<1x128x128xf32> to vector<128x128xf32>
    %cst_265 = arith.constant dense<0.000000e+00> : vector<1x128xf32>
    %324 = tpu.matmul %321, %323, %cst_265 {dimension_numbers = #tpu.dot_dimension_numbers<[1], [0], [0], [1], [0, 0, 1, 1], [], []>} : vector<1x128xf32>, vector<128x128xf32>, vector<1x128xf32> -> vector<1x128xf32>
    %325 = arith.addf %320, %324 : vector<1x128xf32>
    %326 = vector.extract_strided_slice %269 {offsets = [11, 0], sizes = [1, 128], strides = [1, 1]} : vector<16x128xf32> to vector<1x128xf32>
    %c11_266 = arith.constant 11 : index
    %c0_267 = arith.constant 0 : index
    %c0_268 = arith.constant 0 : index
    %327 = vector.load %arg8[%c11_266, %c0_267, %c0_268] : memref<16x128x128xf32, #tpu.memory_space<vmem>>, vector<1x128x128xf32>
    %328 = vector.shape_cast %327 : vector<1x128x128xf32> to vector<128x128xf32>
    %cst_269 = arith.constant dense<0.000000e+00> : vector<1x128xf32>
    %329 = tpu.matmul %326, %328, %cst_269 {dimension_numbers = #tpu.dot_dimension_numbers<[1], [0], [0], [1], [0, 0, 1, 1], [], []>} : vector<1x128xf32>, vector<128x128xf32>, vector<1x128xf32> -> vector<1x128xf32>
    %330 = arith.addf %325, %329 : vector<1x128xf32>
    %331 = vector.extract_strided_slice %269 {offsets = [12, 0], sizes = [1, 128], strides = [1, 1]} : vector<16x128xf32> to vector<1x128xf32>
    %c12_270 = arith.constant 12 : index
    %c0_271 = arith.constant 0 : index
    %c0_272 = arith.constant 0 : index
    %332 = vector.load %arg8[%c12_270, %c0_271, %c0_272] : memref<16x128x128xf32, #tpu.memory_space<vmem>>, vector<1x128x128xf32>
    %333 = vector.shape_cast %332 : vector<1x128x128xf32> to vector<128x128xf32>
    %cst_273 = arith.constant dense<0.000000e+00> : vector<1x128xf32>
    %334 = tpu.matmul %331, %333, %cst_273 {dimension_numbers = #tpu.dot_dimension_numbers<[1], [0], [0], [1], [0, 0, 1, 1], [], []>} : vector<1x128xf32>, vector<128x128xf32>, vector<1x128xf32> -> vector<1x128xf32>
    %335 = arith.addf %330, %334 : vector<1x128xf32>
    %336 = vector.extract_strided_slice %269 {offsets = [13, 0], sizes = [1, 128], strides = [1, 1]} : vector<16x128xf32> to vector<1x128xf32>
    %c13_274 = arith.constant 13 : index
    %c0_275 = arith.constant 0 : index
    %c0_276 = arith.constant 0 : index
    %337 = vector.load %arg8[%c13_274, %c0_275, %c0_276] : memref<16x128x128xf32, #tpu.memory_space<vmem>>, vector<1x128x128xf32>
    %338 = vector.shape_cast %337 : vector<1x128x128xf32> to vector<128x128xf32>
    %cst_277 = arith.constant dense<0.000000e+00> : vector<1x128xf32>
    %339 = tpu.matmul %336, %338, %cst_277 {dimension_numbers = #tpu.dot_dimension_numbers<[1], [0], [0], [1], [0, 0, 1, 1], [], []>} : vector<1x128xf32>, vector<128x128xf32>, vector<1x128xf32> -> vector<1x128xf32>
    %340 = arith.addf %335, %339 : vector<1x128xf32>
    %341 = vector.extract_strided_slice %269 {offsets = [14, 0], sizes = [1, 128], strides = [1, 1]} : vector<16x128xf32> to vector<1x128xf32>
    %c14_278 = arith.constant 14 : index
    %c0_279 = arith.constant 0 : index
    %c0_280 = arith.constant 0 : index
    %342 = vector.load %arg8[%c14_278, %c0_279, %c0_280] : memref<16x128x128xf32, #tpu.memory_space<vmem>>, vector<1x128x128xf32>
    %343 = vector.shape_cast %342 : vector<1x128x128xf32> to vector<128x128xf32>
    %cst_281 = arith.constant dense<0.000000e+00> : vector<1x128xf32>
    %344 = tpu.matmul %341, %343, %cst_281 {dimension_numbers = #tpu.dot_dimension_numbers<[1], [0], [0], [1], [0, 0, 1, 1], [], []>} : vector<1x128xf32>, vector<128x128xf32>, vector<1x128xf32> -> vector<1x128xf32>
    %345 = arith.addf %340, %344 : vector<1x128xf32>
    %346 = vector.extract_strided_slice %269 {offsets = [15, 0], sizes = [1, 128], strides = [1, 1]} : vector<16x128xf32> to vector<1x128xf32>
    %c15_282 = arith.constant 15 : index
    %c0_283 = arith.constant 0 : index
    %c0_284 = arith.constant 0 : index
    %347 = vector.load %arg8[%c15_282, %c0_283, %c0_284] : memref<16x128x128xf32, #tpu.memory_space<vmem>>, vector<1x128x128xf32>
    %348 = vector.shape_cast %347 : vector<1x128x128xf32> to vector<128x128xf32>
    %cst_285 = arith.constant dense<0.000000e+00> : vector<1x128xf32>
    %349 = tpu.matmul %346, %348, %cst_285 {dimension_numbers = #tpu.dot_dimension_numbers<[1], [0], [0], [1], [0, 0, 1, 1], [], []>} : vector<1x128xf32>, vector<128x128xf32>, vector<1x128xf32> -> vector<1x128xf32>
    %350 = arith.addf %345, %349 : vector<1x128xf32>
    %c0_286 = arith.constant 0 : index
    %c0_287 = arith.constant 0 : index
    %351 = vector.load %arg10[%c0_286, %c0_287] : memref<128x128xf32, #tpu.memory_space<vmem>>, vector<128x128xf32>
    %cst_288 = arith.constant dense<0.000000e+00> : vector<1x128xf32>
    %352 = tpu.matmul %350, %351, %cst_288 {dimension_numbers = #tpu.dot_dimension_numbers<[1], [0], [0], [1], [0, 0, 1, 1], [], []>} : vector<1x128xf32>, vector<128x128xf32>, vector<1x128xf32> -> vector<1x128xf32>
    %c0_289 = arith.constant 0 : index
    %c0_290 = arith.constant 0 : index
    %353 = vector.load %arg11[%c0_289, %c0_290] : memref<1x128xf32, #tpu.memory_space<vmem>>, vector<1x128xf32>
    %354 = arith.addf %352, %353 : vector<1x128xf32>
    %355 = vector.shape_cast %354 : vector<1x128xf32> to vector<1x1x128xf32>
    %356 = vector.broadcast %355 : vector<1x1x128xf32> to vector<1x8x128xf32>
    %c0_291 = arith.constant 0 : index
    %c0_292 = arith.constant 0 : index
    %c0_293 = arith.constant 0 : index
    %357 = vector.load %arg12[%c0_291, %c0_292, %c0_293] : memref<1x8x128xf32, #tpu.memory_space<vmem>>, vector<1x8x128xf32>
    tpu.vector_store %arg12[%c0_291, %c0_292, %c0_293], %356 {strides = array<i32>} : memref<1x8x128xf32, #tpu.memory_space<vmem>>, vector<1x8x128xf32>,
    return
  }
  func.func @transform_0(%arg0: i32) -> (i32, i32, i32, i32) {
    %c0_i32 = arith.constant 0 : i32
    %c0_i32_0 = arith.constant 0 : i32
    %c0_i32_1 = arith.constant 0 : i32
    %c0_i32_2 = arith.constant 0 : i32
    return %arg0, %c0_i32, %c0_i32_0, %c0_i32_1 : i32, i32, i32, i32
  }
  func.func @transform_1(%arg0: i32) -> (i32, i32) {
    %c0_i32 = arith.constant 0 : i32
    %c0_i32_0 = arith.constant 0 : i32
    %c0_i32_1 = arith.constant 0 : i32
    return %c0_i32, %c0_i32_0 : i32, i32
  }
  func.func @transform_2(%arg0: i32) -> (i32, i32) {
    %c0_i32 = arith.constant 0 : i32
    %c0_i32_0 = arith.constant 0 : i32
    %c0_i32_1 = arith.constant 0 : i32
    return %c0_i32, %c0_i32_0 : i32, i32
  }
  func.func @transform_3(%arg0: i32) -> (i32, i32) {
    %c0_i32 = arith.constant 0 : i32
    %c0_i32_0 = arith.constant 0 : i32
    %c0_i32_1 = arith.constant 0 : i32
    return %c0_i32, %c0_i32_0 : i32, i32
  }
  func.func @transform_4(%arg0: i32) -> (i32, i32, i32) {
    %c0_i32 = arith.constant 0 : i32
    %c0_i32_0 = arith.constant 0 : i32
    %c0_i32_1 = arith.constant 0 : i32
    %c0_i32_2 = arith.constant 0 : i32
    return %c0_i32, %c0_i32_0, %c0_i32_1 : i32, i32, i32
  }
  func.func @transform_5(%arg0: i32) -> (i32, i32) {
    %c0_i32 = arith.constant 0 : i32
    %c0_i32_0 = arith.constant 0 : i32
    %c0_i32_1 = arith.constant 0 : i32
    return %c0_i32, %c0_i32_0 : i32, i32
  }
  func.func @transform_6(%arg0: i32) -> (i32, i32) {
    %c0_i32 = arith.constant 0 : i32
    %c0_i32_0 = arith.constant 0 : i32
    %c0_i32_1 = arith.constant 0 : i32
    return %c0_i32, %c0_i32_0 : i32, i32
  }
  func.func @transform_7(%arg0: i32) -> (i32, i32, i32) {
    %c0_i32 = arith.constant 0 : i32
    %c0_i32_0 = arith.constant 0 : i32
    %c0_i32_1 = arith.constant 0 : i32
    %c0_i32_2 = arith.constant 0 : i32
    return %c0_i32, %c0_i32_0, %c0_i32_1 : i32, i32, i32
  }
  func.func @transform_8(%arg0: i32) -> (i32, i32) {
    %c0_i32 = arith.constant 0 : i32
    %c0_i32_0 = arith.constant 0 : i32
    %c0_i32_1 = arith.constant 0 : i32
    return %c0_i32, %c0_i32_0 : i32, i32
  }
  func.func @transform_9(%arg0: i32) -> (i32, i32) {
    %c0_i32 = arith.constant 0 : i32
    %c0_i32_0 = arith.constant 0 : i32
    %c0_i32_1 = arith.constant 0 : i32
    return %c0_i32, %c0_i32_0 : i32, i32
  }
  func.func @transform_10(%arg0: i32) -> (i32, i32) {
    %c0_i32 = arith.constant 0 : i32
    %c0_i32_0 = arith.constant 0 : i32
    %c0_i32_1 = arith.constant 0 : i32
    return %c0_i32, %c0_i32_0 : i32, i32
  }
  func.func @transform_11(%arg0: i32) -> (i32, i32, i32) {
    %c0_i32 = arith.constant 0 : i32
    %c0_i32_0 = arith.constant 0 : i32
    %c0_i32_1 = arith.constant 0 : i32
    return %arg0, %c0_i32, %c0_i32_0 : i32, i32, i32
  }
}

</mosaic_0001>

<llo_original>
// kernel: convnet_forward.1
$region0: #{convnet_forward.1}
  #allocation0 [shape = 'u32[]', space=smem, size = 0x4, offset = 0x4, fixed_abs, tag = 'smem constant byte address 0x4 - core index']
  #allocation1 [shape = 'u32[144,128]{1,0:T(1,128)}', space=vmem, size = 0x12000, scoped, tag = 'internal scratch']
  #allocation2 [shape = 'f32[12,16,128]{2,1,0:T(8,128)}', space=vmem, size = 0x18000, scoped, tag = 'scratch operand']
  %s0 = inlined_call_operand.vmem [shape: f32[2,18,18,1], index: 0, kind: input, shape index: {}]
  %s1 = inlined_call_operand.hbm [shape: f32[9,128], index: 1, kind: input, shape index: {}]
  %s2 = inlined_call_operand.hbm [shape: f32[1,128], index: 2, kind: input, shape index: {}]
  %s3 = inlined_call_operand.vmem [shape: f32[768,256], index: 3, kind: input, shape index: {}]
  %s4 = inlined_call_operand.hbm [shape: f32[25,128,128], index: 4, kind: input, shape index: {}]
  %s5 = inlined_call_operand.hbm [shape: f32[1,128], index: 5, kind: input, shape index: {}]
  %s6 = inlined_call_operand.hbm [shape: f32[64,64], index: 6, kind: input, shape index: {}]
  %s7 = inlined_call_operand.hbm [shape: f32[16,128,128], index: 7, kind: input, shape index: {}]
  %s8 = inlined_call_operand.hbm [shape: f32[1,128], index: 8, kind: input, shape index: {}]
  %s9 = inlined_call_operand.hbm [shape: f32[128,128], index: 9, kind: input, shape index: {}]
  %s10 = inlined_call_operand.hbm [shape: f32[1,128], index: 10, kind: input, shape index: {}]
  %s11 = inlined_call_operand.vmem [shape: f32[2,8,128], index: 11, kind: output, shape index: {}]
  %s12 = sld [smem:[#allocation0]]
  $region113: #{convnet_forward.1} parent=0
    _
  %s14 = ssub.s32 1, %s12
  %s15 = scalar_select 0, %s14, %s12
  $region1: #{convnet_forward.1} parent=0
    #allocation3 [shape = 'u8[8192]{0}', space=vmem, size = 0x2000, scoped, tag = 'input window, operand 1, single buffered']
    #allocation4 [shape = 's32[2]{0}', space=sflag, size = 0x8, scoped, tag = 'scoped memory for convnet_forward.1']
    #allocation5 [shape = 'u8[512]{0}', space=vmem, size = 0x400, scoped, tag = 'input window, operand 2, single buffered']
    #allocation6 [shape = 's32[1]{0}', space=sflag, size = 0x4, scoped, tag = 'scoped memory for convnet_forward.1']
    #allocation7 [shape = 'u8[1638400]{0}', space=vmem, size = 0x190000, scoped, tag = 'input window, operand 4, single buffered']
    #allocation8 [shape = 'u8[512]{0}', space=vmem, size = 0x400, scoped, tag = 'input window, operand 5, single buffered']
    #allocation9 [shape = 's32[1]{0}', space=sflag, size = 0x4, scoped, tag = 'scoped memory for convnet_forward.1']
    #allocation10 [shape = 'u8[32768]{0}', space=vmem, size = 0x8000, scoped, tag = 'input window, operand 6, single buffered']
    #allocation11 [shape = 'u8[1048576]{0}', space=vmem, size = 0x100000, scoped, tag = 'input window, operand 7, single buffered']
    #allocation12 [shape = 's32[1]{0}', space=sflag, size = 0x4, scoped, tag = 'scoped memory for convnet_forward.1']
    #allocation13 [shape = 'u8[512]{0}', space=vmem, size = 0x400, scoped, tag = 'input window, operand 8, single buffered']
    #allocation14 [shape = 'u8[65536]{0}', space=vmem, size = 0x10000, scoped, tag = 'input window, operand 9, single buffered']
    #allocation15 [shape = 's32[1]{0}', space=sflag, size = 0x4, scoped, tag = 'scoped memory for convnet_forward.1']
    #allocation16 [shape = 'u8[512]{0}', space=vmem, size = 0x400, scoped, tag = 'input window, operand 10, single buffered']
    %16 = vsyncpa [#allocation4], 0
    %17 = vsyncpa [#allocation6], 0
    %18 = vsyncpa [#allocation9], 0
    %19 = vsyncpa [#allocation12], 0
    %20 = vsyncpa [#allocation15], 0
    loop: start=0, step=1, limit=4
    $region2: #{convnet_forward.1} parent=1 // loop_pre_header
      _
    $region3: #{convnet_forward.1} parent=1 // loop_header
      %s22 = sphi 0, %s26
      %p23 = scmp.ge.s32.totalorder %s22, 4
      %s32 = sphi 0, %s34
      %s35 = sphi 0, %s32
      %s36 = sphi 0, %s35
      %s52 = sphi 0, %s36
      %s56 = sphi 0, %s56
      %s58 = sphi 0, %s56
      %s59 = sphi 0, %s58
      %s73 = sphi 0, %s59
      %s77 = sphi 0, %s77
      %s79 = sphi 0, %s77
      %s80 = sphi 0, %s79
      %s94 = sphi 0, %s80
      %s98 = sphi 0, %s98
      %s100 = sphi 0, %s98
      %s101 = sphi 0, %s100
      %s115 = sphi 0, %s101
      %s119 = sphi 0, %s119
      %s121 = sphi 0, %s119
      %s122 = sphi 0, %s121
      %s136 = sphi 0, %s122
      %s140 = sphi 0, %s140
      %s142 = sphi 0, %s140
      %s143 = sphi 0, %s142
      %s157 = sphi 0, %s143
      %s161 = sphi 0, %s161
      %s163 = sphi 0, %s161
      %s164 = sphi 0, %s163
      %s178 = sphi 0, %s164
      %s182 = sphi 0, %s182
      %s184 = sphi 0, %s182
      %s185 = sphi 0, %s184
      %s199 = sphi 0, %s185
      %s203 = sphi 0, %s203
      %s205 = sphi 0, %s203
      %s206 = sphi 0, %s205
      %s220 = sphi 0, %s206
      %s224 = sphi 0, %s224
      %s226 = sphi 0, %s224
      %s227 = sphi 0, %s226
      %s241 = sphi 0, %s227
      %s245 = sphi 0, %s245
      %s247 = sphi 0, %s245
      %s248 = sphi 0, %s247
      %s262 = sphi 0, %s248
      %s268 = sphi 0, %s270
      %s271 = sphi 0, %s268
      %s272 = sphi 0, %s271
      %s288 = sphi 0, %s272
    $region4: #{convnet_forward.1} parent=1 // loop_header_branch
      %25 = sbr.rel (%p23) target = $region8
    $region5: #{convnet_forward.1} parent=1 // loop_body
      %s27 = ssub.s32 %s22, 1
      %s28 = ssub.s32 %s22, 2
      %s29 = sadd.s32 %s22, 1
      %s30 = ssub.s32 %s22, %s29
      %p31 = scmp.eq.s32.totalorder %s30, 0
      %s33 = sadd.s32 %s32, 1
      %s34 = scalar_select %p31, %s32, %s33
      %p37 = pneg %p31
      %p38 = scmp.eq.s32.totalorder %s22, 1
      %p39 = por %p37, %p38
      %p40 = scmp.ne.s32.totalorder %s32, %s35
      %p41 = scmp.eq.s32.totalorder %s22, 0
      %p42 = por %p40, %p41
      %p43 = scmp.ne.s32.totalorder %s32, %s35
      %p44 = scmp.eq.s32.totalorder %s27, 1
      %p45 = por %p43, %p44
      %p46 = scmp.ne.s32.totalorder %s35, %s36
      %p47 = scmp.eq.s32.totalorder %s27, 0
      %p48 = por %p46, %p47
      %p49 = scmp.ne.s32.totalorder %s35, %s36
      %p50 = scmp.eq.s32.totalorder %s28, 1
      %p51 = por %p49, %p50
      %p53 = scmp.ne.s32.totalorder %s36, %s52
      %p54 = scmp.eq.s32.totalorder %s28, 0
      %p55 = por %p53, %p54
      %s57 = sadd.s32 %s56, 1
      %p60 = scmp.eq.s32.totalorder %s22, 1
      %p61 = scmp.ne.s32.totalorder %s56, %s58
      %p62 = scmp.eq.s32.totalorder %s22, 0
      %p63 = por %p61, %p62
      %p64 = scmp.ne.s32.totalorder %s56, %s58
      %p65 = scmp.eq.s32.totalorder %s27, 1
      %p66 = por %p64, %p65
      %p67 = scmp.ne.s32.totalorder %s58, %s59
      %p68 = scmp.eq.s32.totalorder %s27, 0
      %p69 = por %p67, %p68
      %p70 = scmp.ne.s32.totalorder %s58, %s59
      %p71 = scmp.eq.s32.totalorder %s28, 1
      %p72 = por %p70, %p71
      %p74 = scmp.ne.s32.totalorder %s59, %s73
      %p75 = scmp.eq.s32.totalorder %s28, 0
      %p76 = por %p74, %p75
      %s78 = sadd.s32 %s77, 1
      %p81 = scmp.eq.s32.totalorder %s22, 1
      %p82 = scmp.ne.s32.totalorder %s77, %s79
      %p83 = scmp.eq.s32.totalorder %s22, 0
      %p84 = por %p82, %p83
      %p85 = scmp.ne.s32.totalorder %s77, %s79
      %p86 = scmp.eq.s32.totalorder %s27, 1
      %p87 = por %p85, %p86
      %p88 = scmp.ne.s32.totalorder %s79, %s80
      %p89 = scmp.eq.s32.totalorder %s27, 0
      %p90 = por %p88, %p89
      %p91 = scmp.ne.s32.totalorder %s79, %s80
      %p92 = scmp.eq.s32.totalorder %s28, 1
      %p93 = por %p91, %p92
      %p95 = scmp.ne.s32.totalorder %s80, %s94
      %p96 = scmp.eq.s32.totalorder %s28, 0
      %p97 = por %p95, %p96
      %s99 = sadd.s32 %s98, 1
      %p102 = scmp.eq.s32.totalorder %s22, 1
      %p103 = scmp.ne.s32.totalorder %s98, %s100
      %p104 = scmp.eq.s32.totalorder %s22, 0
      %p105 = por %p103, %p104
      %p106 = scmp.ne.s32.totalorder %s98, %s100
      %p107 = scmp.eq.s32.totalorder %s27, 1
      %p108 = por %p106, %p107
      %p109 = scmp.ne.s32.totalorder %s100, %s101
      %p110 = scmp.eq.s32.totalorder %s27, 0
      %p111 = por %p109, %p110
      %p112 = scmp.ne.s32.totalorder %s100, %s101
      %p113 = scmp.eq.s32.totalorder %s28, 1
      %p114 = por %p112, %p113
      %p116 = scmp.ne.s32.totalorder %s101, %s115
      %p117 = scmp.eq.s32.totalorder %s28, 0
      %p118 = por %p116, %p117
      %s120 = sadd.s32 %s119, 1
      %p123 = scmp.eq.s32.totalorder %s22, 1
      %p124 = scmp.ne.s32.totalorder %s119, %s121
      %p125 = scmp.eq.s32.totalorder %s22, 0
      %p126 = por %p124, %p125
      %p127 = scmp.ne.s32.totalorder %s119, %s121
      %p128 = scmp.eq.s32.totalorder %s27, 1
      %p129 = por %p127, %p128
      %p130 = scmp.ne.s32.totalorder %s121, %s122
      %p131 = scmp.eq.s32.totalorder %s27, 0
      %p132 = por %p130, %p131
      %p133 = scmp.ne.s32.totalorder %s121, %s122
      %p134 = scmp.eq.s32.totalorder %s28, 1
      %p135 = por %p133, %p134
      %p137 = scmp.ne.s32.totalorder %s122, %s136
      %p138 = scmp.eq.s32.totalorder %s28, 0
      %p139 = por %p137, %p138
      %s141 = sadd.s32 %s140, 1
      %p144 = scmp.eq.s32.totalorder %s22, 1
      %p145 = scmp.ne.s32.totalorder %s140, %s142
      %p146 = scmp.eq.s32.totalorder %s22, 0
      %p147 = por %p145, %p146
      %p148 = scmp.ne.s32.totalorder %s140, %s142
      %p149 = scmp.eq.s32.totalorder %s27, 1
      %p150 = por %p148, %p149
      %p151 = scmp.ne.s32.totalorder %s142, %s143
      %p152 = scmp.eq.s32.totalorder %s27, 0
      %p153 = por %p151, %p152
      %p154 = scmp.ne.s32.totalorder %s142, %s143
      %p155 = scmp.eq.s32.totalorder %s28, 1
      %p156 = por %p154, %p155
      %p158 = scmp.ne.s32.totalorder %s143, %s157
      %p159 = scmp.eq.s32.totalorder %s28, 0
      %p160 = por %p158, %p159
      %s162 = sadd.s32 %s161, 1
      %p165 = scmp.eq.s32.totalorder %s22, 1
      %p166 = scmp.ne.s32.totalorder %s161, %s163
      %p167 = scmp.eq.s32.totalorder %s22, 0
      %p168 = por %p166, %p167
      %p169 = scmp.ne.s32.totalorder %s161, %s163
      %p170 = scmp.eq.s32.totalorder %s27, 1
      %p171 = por %p169, %p170
      %p172 = scmp.ne.s32.totalorder %s163, %s164
      %p173 = scmp.eq.s32.totalorder %s27, 0
      %p174 = por %p172, %p173
      %p175 = scmp.ne.s32.totalorder %s163, %s164
      %p176 = scmp.eq.s32.totalorder %s28, 1
      %p177 = por %p175, %p176
      %p179 = scmp.ne.s32.totalorder %s164, %s178
      %p180 = scmp.eq.s32.totalorder %s28, 0
      %p181 = por %p179, %p180
      %s183 = sadd.s32 %s182, 1
      %p186 = scmp.eq.s32.totalorder %s22, 1
      %p187 = scmp.ne.s32.totalorder %s182, %s184
      %p188 = scmp.eq.s32.totalorder %s22, 0
      %p189 = por %p187, %p188
      %p190 = scmp.ne.s32.totalorder %s182, %s184
      %p191 = scmp.eq.s32.totalorder %s27, 1
      %p192 = por %p190, %p191
      %p193 = scmp.ne.s32.totalorder %s184, %s185
      %p194 = scmp.eq.s32.totalorder %s27, 0
      %p195 = por %p193, %p194
      %p196 = scmp.ne.s32.totalorder %s184, %s185
      %p197 = scmp.eq.s32.totalorder %s28, 1
      %p198 = por %p196, %p197
      %p200 = scmp.ne.s32.totalorder %s185, %s199
      %p201 = scmp.eq.s32.totalorder %s28, 0
      %p202 = por %p200, %p201
      %s204 = sadd.s32 %s203, 1
      %p207 = scmp.eq.s32.totalorder %s22, 1
      %p208 = scmp.ne.s32.totalorder %s203, %s205
      %p209 = scmp.eq.s32.totalorder %s22, 0
      %p210 = por %p208, %p209
      %p211 = scmp.ne.s32.totalorder %s203, %s205
      %p212 = scmp.eq.s32.totalorder %s27, 1
      %p213 = por %p211, %p212
      %p214 = scmp.ne.s32.totalorder %s205, %s206
      %p215 = scmp.eq.s32.totalorder %s27, 0
      %p216 = por %p214, %p215
      %p217 = scmp.ne.s32.totalorder %s205, %s206
      %p218 = scmp.eq.s32.totalorder %s28, 1
      %p219 = por %p217, %p218
      %p221 = scmp.ne.s32.totalorder %s206, %s220
      %p222 = scmp.eq.s32.totalorder %s28, 0
      %p223 = por %p221, %p222
      %s225 = sadd.s32 %s224, 1
      %p228 = scmp.eq.s32.totalorder %s22, 1
      %p229 = scmp.ne.s32.totalorder %s224, %s226
      %p230 = scmp.eq.s32.totalorder %s22, 0
      %p231 = por %p229, %p230
      %p232 = scmp.ne.s32.totalorder %s224, %s226
      %p233 = scmp.eq.s32.totalorder %s27, 1
      %p234 = por %p232, %p233
      %p235 = scmp.ne.s32.totalorder %s226, %s227
      %p236 = scmp.eq.s32.totalorder %s27, 0
      %p237 = por %p235, %p236
      %p238 = scmp.ne.s32.totalorder %s226, %s227
      %p239 = scmp.eq.s32.totalorder %s28, 1
      %p240 = por %p238, %p239
      %p242 = scmp.ne.s32.totalorder %s227, %s241
      %p243 = scmp.eq.s32.totalorder %s28, 0
      %p244 = por %p242, %p243
      %s246 = sadd.s32 %s245, 1
      %p249 = scmp.eq.s32.totalorder %s22, 1
      %p250 = scmp.ne.s32.totalorder %s245, %s247
      %p251 = scmp.eq.s32.totalorder %s22, 0
      %p252 = por %p250, %p251
      %p253 = scmp.ne.s32.totalorder %s245, %s247
      %p254 = scmp.eq.s32.totalorder %s27, 1
      %p255 = por %p253, %p254
      %p256 = scmp.ne.s32.totalorder %s247, %s248
      %p257 = scmp.eq.s32.totalorder %s27, 0
      %p258 = por %p256, %p257
      %p259 = scmp.ne.s32.totalorder %s247, %s248
      %p260 = scmp.eq.s32.totalorder %s28, 1
      %p261 = por %p259, %p260
      %p263 = scmp.ne.s32.totalorder %s248, %s262
      %p264 = scmp.eq.s32.totalorder %s28, 0
      %p265 = por %p263, %p264
      %s266 = ssub.s32 %s22, %s29
      %p267 = scmp.eq.s32.totalorder %s266, 0
      %s269 = sadd.s32 %s268, 1
      %s270 = scalar_select %p267, %s268, %s269
      %p273 = pneg %p267
      %p274 = scmp.eq.s32.totalorder %s22, 1
      %p275 = por %p273, %p274
      %p276 = scmp.ne.s32.totalorder %s268, %s271
      %p277 = scmp.eq.s32.totalorder %s22, 0
      %p278 = por %p276, %p277
      %p279 = scmp.ne.s32.totalorder %s268, %s271
      %p280 = scmp.eq.s32.totalorder %s27, 1
      %p281 = por %p279, %p280
      %p282 = scmp.ne.s32.totalorder %s271, %s272
      %p283 = scmp.eq.s32.totalorder %s27, 0
      %p284 = por %p282, %p283
      %p285 = scmp.ne.s32.totalorder %s271, %s272
      %p286 = scmp.eq.s32.totalorder %s28, 1
      %p287 = por %p285, %p286
      %p289 = scmp.ne.s32.totalorder %s272, %s288
      %p290 = scmp.eq.s32.totalorder %s28, 0
      %p291 = por %p289, %p290
      %p292 = scmp.le.s32.totalorder 1, %s22
      %p293 = scmp.lt.s32.totalorder %s22, 3
      %p294 = pnand %p292, %p293
      %p295 = pneg %p294
      // Predicated region
      $region9: #{convnet_forward.1} parent=5 // pred_check
        _
      $region10: #{convnet_forward.1} parent=5 // pred_check_branch
        %297 = sbr.rel (%p294) target = $region12
      $region11: #{convnet_forward.1} parent=5 // pred_region
        %s298 = ssub.s32 %s22, 1
        // Predicated region
        $region13: #{convnet_forward.1} parent=11 // pred_check
          %p299 = pneg %p69
        $region14: #{convnet_forward.1} parent=11 // pred_check_branch
          %301 = sbr.rel (%p299) target = $region16
        $region15: #{convnet_forward.1} parent=11 // pred_region
          %s303 = ssub.s32 256, 256
          %304 = vsyncadd [#allocation4], %s303
          %s305 = sshll.u32 [#allocation3], 4
          %s306 = int_to_ptr.vmem [resolvable:$true] %s305
          %311 = dma.hbm_to_vmem [thread:$0]  %s1, 256, %s306, [#allocation4], 128, 128, 8
        $region16: #{convnet_forward.1} parent=11 // pred_fallthru
          _
        // Predicated region
        $region17: #{convnet_forward.1} parent=11 // pred_check
          %p312 = pneg %p90
        $region18: #{convnet_forward.1} parent=11 // pred_check_branch
          %314 = sbr.rel (%p312) target = $region20
        $region19: #{convnet_forward.1} parent=11 // pred_region
          %s316 = ssub.s32 16, 16
          %317 = vsyncadd [#allocation6], %s316
          %s319 = sshll.u32 [#allocation5], 4
          %s320 = int_to_ptr.vmem [resolvable:$true] %s319
          %322 = dma.hbm_to_vmem [thread:$0]  %s2, 16, %s320, [#allocation6]
        $region20: #{convnet_forward.1} parent=11 // pred_fallthru
          _
        // Predicated region
        $region21: #{convnet_forward.1} parent=11 // pred_check
          %p323 = pneg %p111
        $region22: #{convnet_forward.1} parent=11 // pred_check_branch
          %325 = sbr.rel (%p323) target = $region24
        $region23: #{convnet_forward.1} parent=11 // pred_region
          _
        $region24: #{convnet_forward.1} parent=11 // pred_fallthru
          _
        // Predicated region
        $region25: #{convnet_forward.1} parent=11 // pred_check
          %p326 = pneg %p132
        $region26: #{convnet_forward.1} parent=11 // pred_check_branch
          %328 = sbr.rel (%p326) target = $region28
        $region27: #{convnet_forward.1} parent=11 // pred_region
          %s330 = ssub.s32 51200, 51200
          %331 = vsyncadd [#allocation6], %s330
          %s332 = sshll.u32 [#allocation7], 4
          %s333 = int_to_ptr.vmem [resolvable:$true] %s332
          %338 = dma.hbm_to_vmem [thread:$0]  %s4, 51200, %s333, [#allocation6], 128, 128, 8
        $region28: #{convnet_forward.1} parent=11 // pred_fallthru
          _
        // Predicated region
        $region29: #{convnet_forward.1} parent=11 // pred_check
          %p339 = pneg %p153
        $region30: #{convnet_forward.1} parent=11 // pred_check_branch
          %341 = sbr.rel (%p339) target = $region32
        $region31: #{convnet_forward.1} parent=11 // pred_region
          %s343 = ssub.s32 16, 16
          %344 = vsyncadd [#allocation9], %s343
          %s346 = sshll.u32 [#allocation8], 4
          %s347 = int_to_ptr.vmem [resolvable:$true] %s346
          %349 = dma.hbm_to_vmem [thread:$0]  %s5, 16, %s347, [#allocation9]
        $region32: #{convnet_forward.1} parent=11 // pred_fallthru
          _
        // Predicated region
        $region33: #{convnet_forward.1} parent=11 // pred_check
          %p350 = pneg %p174
        $region34: #{convnet_forward.1} parent=11 // pred_check_branch
          %352 = sbr.rel (%p350) target = $region36
        $region35: #{convnet_forward.1} parent=11 // pred_region
          %s354 = ssub.s32 1024, 1024
          %355 = vsyncadd [#allocation9], %s354
          %s356 = sshll.u32 [#allocation10], 4
          %s357 = int_to_ptr.vmem [resolvable:$true] %s356
          %362 = dma.hbm_to_vmem [thread:$0]  %s6, 1024, %s357, [#allocation9], 128, 128, 8
        $region36: #{convnet_forward.1} parent=11 // pred_fallthru
          _
        // Predicated region
        $region37: #{convnet_forward.1} parent=11 // pred_check
          %p363 = pneg %p195
        $region38: #{convnet_forward.1} parent=11 // pred_check_branch
          %365 = sbr.rel (%p363) target = $region40
        $region39: #{convnet_forward.1} parent=11 // pred_region
          %s367 = ssub.s32 32768, 32768
          %368 = vsyncadd [#allocation12], %s367
          %s369 = sshll.u32 [#allocation11], 4
          %s370 = int_to_ptr.vmem [resolvable:$true] %s369
          %375 = dma.hbm_to_vmem [thread:$0]  %s7, 32768, %s370, [#allocation12], 128, 128, 8
        $region40: #{convnet_forward.1} parent=11 // pred_fallthru
          _
        // Predicated region
        $region41: #{convnet_forward.1} parent=11 // pred_check
          %p376 = pneg %p216
        $region42: #{convnet_forward.1} parent=11 // pred_check_branch
          %378 = sbr.rel (%p376) target = $region44
        $region43: #{convnet_forward.1} parent=11 // pred_region
          %s380 = ssub.s32 16, 16
          %381 = vsyncadd [#allocation12], %s380
          %s383 = sshll.u32 [#allocation13], 4
          %s384 = int_to_ptr.vmem [resolvable:$true] %s383
          %386 = dma.hbm_to_vmem [thread:$0]  %s8, 16, %s384, [#allocation12]
        $region44: #{convnet_forward.1} parent=11 // pred_fallthru
          _
        // Predicated region
        $region45: #{convnet_forward.1} parent=11 // pred_check
          %p387 = pneg %p237
        $region46: #{convnet_forward.1} parent=11 // pred_check_branch
          %389 = sbr.rel (%p387) target = $region48
        $region47: #{convnet_forward.1} parent=11 // pred_region
          %s391 = ssub.s32 2048, 2048
          %392 = vsyncadd [#allocation15], %s391
          %s393 = sshll.u32 [#allocation14], 4
          %s394 = int_to_ptr.vmem [resolvable:$true] %s393
          %399 = dma.hbm_to_vmem [thread:$0]  %s9, 2048, %s394, [#allocation15], 128, 128, 8
        $region48: #{convnet_forward.1} parent=11 // pred_fallthru
          _
        // Predicated region
        $region49: #{convnet_forward.1} parent=11 // pred_check
          %p400 = pneg %p258
        $region50: #{convnet_forward.1} parent=11 // pred_check_branch
          %402 = sbr.rel (%p400) target = $region52
        $region51: #{convnet_forward.1} parent=11 // pred_region
          %s404 = ssub.s32 16, 16
          %405 = vsyncadd [#allocation15], %s404
          %s407 = sshll.u32 [#allocation16], 4
          %s408 = int_to_ptr.vmem [resolvable:$true] %s407
          %410 = dma.hbm_to_vmem [thread:$0]  %s10, 16, %s408, [#allocation15]
        $region52: #{convnet_forward.1} parent=11 // pred_fallthru
          _
      $region12: #{convnet_forward.1} parent=5 // pred_fallthru
        _
      %p411 = scmp.lt.s32.totalorder %s22, 2
      // Predicated region
      $region53: #{convnet_forward.1} parent=5 // pred_check
        %p412 = pneg %p411
      $region54: #{convnet_forward.1} parent=5 // pred_check_branch
        %414 = sbr.rel (%p412) target = $region56
      $region55: #{convnet_forward.1} parent=5 // pred_region
        // Predicated region
        $region57: #{convnet_forward.1} parent=55 // pred_check
          %p415 = pneg %p42
        $region58: #{convnet_forward.1} parent=55 // pred_check_branch
          %417 = sbr.rel (%p415) target = $region60
        $region59: #{convnet_forward.1} parent=55 // pred_region
          %p418 = scmp.lt.s32.totalorder %s22, 1
          %s419 = scalar_select %p418, %s22, 1
          %s420 = smul.addr %s419, 54
          %s421 = smul.addr %s420, 8
          %s422 = scalar_lea.vmem %s0, %s421
        $region60: #{convnet_forward.1} parent=55 // pred_fallthru
          _
      $region56: #{convnet_forward.1} parent=5 // pred_fallthru
        _
      %p423 = scmp.le.s32.totalorder 1, %s22
      %p424 = scmp.lt.s32.totalorder %s22, 3
      %p425 = pnand %p423, %p424
      %p426 = pneg %p425
      // Predicated region
      $region61: #{convnet_forward.1} parent=5 // pred_check
        _
      $region62: #{convnet_forward.1} parent=5 // pred_check_branch
        %428 = sbr.rel (%p425) target = $region64
      $region63: #{convnet_forward.1} parent=5 // pred_region
        %s429 = ssub.s32 %s22, 1
        // Predicated region
        $region65: #{convnet_forward.1} parent=63 // pred_check
          %p430 = pneg %p69
        $region66: #{convnet_forward.1} parent=63 // pred_check_branch
          %432 = sbr.rel (%p430) target = $region68
        $region67: #{convnet_forward.1} parent=63 // pred_region
          %433 = dma.done [#allocation4], 256
        $region68: #{convnet_forward.1} parent=63 // pred_fallthru
          _
        // Predicated region
        $region69: #{convnet_forward.1} parent=63 // pred_check
          %p434 = pneg %p90
        $region70: #{convnet_forward.1} parent=63 // pred_check_branch
          %436 = sbr.rel (%p434) target = $region72
        $region71: #{convnet_forward.1} parent=63 // pred_region
          %437 = dma.done [#allocation6], 16
        $region72: #{convnet_forward.1} parent=63 // pred_fallthru
          _
        // Predicated region
        $region73: #{convnet_forward.1} parent=63 // pred_check
          %p438 = pneg %p132
        $region74: #{convnet_forward.1} parent=63 // pred_check_branch
          %440 = sbr.rel (%p438) target = $region76
        $region75: #{convnet_forward.1} parent=63 // pred_region
          %441 = dma.done [#allocation6], 51200
        $region76: #{convnet_forward.1} parent=63 // pred_fallthru
          _
        // Predicated region
        $region77: #{convnet_forward.1} parent=63 // pred_check
          %p442 = pneg %p153
        $region78: #{convnet_forward.1} parent=63 // pred_check_branch
          %444 = sbr.rel (%p442) target = $region80
        $region79: #{convnet_forward.1} parent=63 // pred_region
          %445 = dma.done [#allocation9], 16
        $region80: #{convnet_forward.1} parent=63 // pred_fallthru
          _
        // Predicated region
        $region81: #{convnet_forward.1} parent=63 // pred_check
          %p446 = pneg %p174
        $region82: #{convnet_forward.1} parent=63 // pred_check_branch
          %448 = sbr.rel (%p446) target = $region84
        $region83: #{convnet_forward.1} parent=63 // pred_region
          %449 = dma.done [#allocation9], 1024
        $region84: #{convnet_forward.1} parent=63 // pred_fallthru
          _
        // Predicated region
        $region85: #{convnet_forward.1} parent=63 // pred_check
          %p450 = pneg %p195
        $region86: #{convnet_forward.1} parent=63 // pred_check_branch
          %452 = sbr.rel (%p450) target = $region88
        $region87: #{convnet_forward.1} parent=63 // pred_region
          %453 = dma.done [#allocation12], 32768
        $region88: #{convnet_forward.1} parent=63 // pred_fallthru
          _
        // Predicated region
        $region89: #{convnet_forward.1} parent=63 // pred_check
          %p454 = pneg %p216
        $region90: #{convnet_forward.1} parent=63 // pred_check_branch
          %456 = sbr.rel (%p454) target = $region92
        $region91: #{convnet_forward.1} parent=63 // pred_region
          %457 = dma.done [#allocation12], 16
        $region92: #{convnet_forward.1} parent=63 // pred_fallthru
          _
        // Predicated region
        $region93: #{convnet_forward.1} parent=63 // pred_check
          %p458 = pneg %p237
        $region94: #{convnet_forward.1} parent=63 // pred_check_branch
          %460 = sbr.rel (%p458) target = $region96
        $region95: #{convnet_forward.1} parent=63 // pred_region
          %461 = dma.done [#allocation15], 2048
        $region96: #{convnet_forward.1} parent=63 // pred_fallthru
          _
        // Predicated region
        $region97: #{convnet_forward.1} parent=63 // pred_check
          %p462 = pneg %p258
        $region98: #{convnet_forward.1} parent=63 // pred_check_branch
          %464 = sbr.rel (%p462) target = $region100
        $region99: #{convnet_forward.1} parent=63 // pred_region
          %465 = dma.done [#allocation15], 16
        $region100: #{convnet_forward.1} parent=63 // pred_fallthru
          _
        %p466 = scmp.lt.s32.totalorder %s27, 1
        %s467 = scalar_select %p466, %s27, 1
        %s468 = smul.addr %s467, 54
        %s469 = smul.addr %s468, 8
        %s470 = scalar_lea.vmem %s0, %s469
        %p471 = pneg %p48
        %p472 = pneg %p45
        %p473 = pneg %p69
        %p474 = pneg %p66
        %p475 = pneg %p90
        %p476 = pneg %p87
        %p477 = pneg %p111
        %p478 = pneg %p108
        %p479 = pneg %p132
        %p480 = pneg %p129
        %p481 = pneg %p153
        %p482 = pneg %p150
        %p483 = pneg %p174
        %p484 = pneg %p171
        %p485 = pneg %p195
        %p486 = pneg %p192
        %p487 = pneg %p216
        %p488 = pneg %p213
        %p489 = pneg %p237
        %p490 = pneg %p234
        %p491 = pneg %p258
        %p492 = pneg %p255
        %p493 = pneg %p284
        %p494 = pneg %p281
        %p495 = scmp.lt.s32.totalorder %s27, 1
        %s496 = scalar_select %p495, %s27, 1
        %s497 = smul.addr %s496, 8
        %s498 = scalar_lea.vmem %s11, %s497
        %p499 = scmp.lt.s32.totalorder %s27, 1
        %s500 = scalar_select %p499, %s27, 1
        %s501 = smul.addr %s500, 54
        %s502 = smul.addr %s501, 8
        %s503 = scalar_lea.vmem %s0, %s502
        %p504 = scmp.lt.s32.totalorder %s27, 1
        %s505 = scalar_select %p504, %s27, 1
        %s506 = smul.addr %s505, 8
        %s507 = scalar_lea.vmem %s11, %s506
        %v508 = vld [vmem:[#allocation5] sm:$0x1]
        %v510 = vlaneseq
        %v511 = vshrl.u32 %v510, 7
        %v512 = vsub.s32 0, %v511
        %v513 = vrot.slane %v508, %v512
        %v515 = vld [vmem:[%s503] sm:$0xff]
        %v516 = vld [vmem:[%s503 + $0x8] sm:$0xff]
        %v517 = vld [vmem:[%s503 + $0x18] sm:$0xff]
        %v518 = vld [vmem:[%s503 + $0x20] sm:$0xff]
        %v519 = vld [vmem:[%s503 + $0x30] sm:$0xff]
        %v520 = vld [vmem:[%s503 + $0x38] sm:$0xff]
        %v521 = vld [vmem:[%s503 + $0x48] sm:$0xff]
        %v522 = vld [vmem:[%s503 + $0x50] sm:$0xff]
        %v523 = vld [vmem:[%s503 + $0x60] sm:$0xff]
        %v524 = vld [vmem:[%s503 + $0x68] sm:$0xff]
        %v525 = vld [vmem:[%s503 + $0x78] sm:$0xff]
        %v526 = vld [vmem:[%s503 + $0x80] sm:$0xff]
        %v527 = vld [vmem:[%s503 + $0x90] sm:$0xff]
        %v528 = vld [vmem:[%s503 + $0x98] sm:$0xff]
        %v529 = vld [vmem:[%s503 + $0xa8] sm:$0xff]
        %v530 = vld [vmem:[%s503 + $0xb0] sm:$0xff]
        %v531 = vld [vmem:[%s503 + $0xc0] sm:$0xff]
        %v532 = vld [vmem:[%s503 + $0xc8] sm:$0xff]
        %v533 = vld [vmem:[%s503 + $0xd8] sm:$0xff]
        %v534 = vld [vmem:[%s503 + $0xe0] sm:$0xff]
        %v535 = vld [vmem:[%s503 + $0xf0] sm:$0xff]
        %v536 = vld [vmem:[%s503 + $0xf8] sm:$0xff]
        %v537 = vld [vmem:[%s503 + $0x108] sm:$0xff]
        %v538 = vld [vmem:[%s503 + $0x110] sm:$0xff]
        %v539 = vld [vmem:[%s503 + $0x120] sm:$0xff]
        %v540 = vld [vmem:[%s503 + $0x128] sm:$0xff]
        %v541 = vld [vmem:[%s503 + $0x138] sm:$0xff]
        %v542 = vld [vmem:[%s503 + $0x140] sm:$0xff]
        %v543 = vld [vmem:[%s503 + $0x150] sm:$0xff]
        %v544 = vld [vmem:[%s503 + $0x158] sm:$0xff]
        %v545 = vld [vmem:[%s503 + $0x168] sm:$0xff]
        %v546 = vld [vmem:[%s503 + $0x170] sm:$0xff]
        %v547 = vld [vmem:[#allocation3] sm:$0x1]
        %549 = vset.pattern.permute.xlu0 0
        %550 = vperm.xlu0 %549, %v515
        %v551 = vpop.permute.xlu0 %550
        %554 = vset.pattern.permute.xlu0 0
        %555 = vperm.xlu0 %554, %v516
        %v556 = vpop.permute.xlu0 %555
        %559 = vset.pattern.permute.xlu0 0
        %560 = vperm.xlu0 %559, %v517
        %v561 = vpop.permute.xlu0 %560
        %564 = vset.pattern.permute.xlu0 0
        %565 = vperm.xlu0 %564, %v518
        %v566 = vpop.permute.xlu0 %565
        %569 = vset.pattern.permute.xlu0 0
        %570 = vperm.xlu0 %569, %v519
        %v571 = vpop.permute.xlu0 %570
        %574 = vset.pattern.permute.xlu0 0
        %575 = vperm.xlu0 %574, %v520
        %v576 = vpop.permute.xlu0 %575
        %579 = vset.pattern.permute.xlu0 0
        %580 = vperm.xlu0 %579, %v521
        %v581 = vpop.permute.xlu0 %580
        %584 = vset.pattern.permute.xlu0 0
        %585 = vperm.xlu0 %584, %v522
        %v586 = vpop.permute.xlu0 %585
        %589 = vset.pattern.permute.xlu0 0
        %590 = vperm.xlu0 %589, %v523
        %v591 = vpop.permute.xlu0 %590
        %594 = vset.pattern.permute.xlu0 0
        %595 = vperm.xlu0 %594, %v524
        %v596 = vpop.permute.xlu0 %595
        %599 = vset.pattern.permute.xlu0 0
        %600 = vperm.xlu0 %599, %v525
        %v601 = vpop.permute.xlu0 %600
        %604 = vset.pattern.permute.xlu0 0
        %605 = vperm.xlu0 %604, %v526
        %v606 = vpop.permute.xlu0 %605
        %609 = vset.pattern.permute.xlu0 0
        %610 = vperm.xlu0 %609, %v527
        %v611 = vpop.permute.xlu0 %610
        %614 = vset.pattern.permute.xlu0 0
        %615 = vperm.xlu0 %614, %v528
        %v616 = vpop.permute.xlu0 %615
        %619 = vset.pattern.permute.xlu0 0
        %620 = vperm.xlu0 %619, %v529
        %v621 = vpop.permute.xlu0 %620
        %624 = vset.pattern.permute.xlu0 0
        %625 = vperm.xlu0 %624, %v530
        %v626 = vpop.permute.xlu0 %625
        %629 = vset.pattern.permute.xlu0 0
        %630 = vperm.xlu0 %629, %v531
        %v631 = vpop.permute.xlu0 %630
        %634 = vset.pattern.permute.xlu0 0
        %635 = vperm.xlu0 %634, %v532
        %v636 = vpop.permute.xlu0 %635
        %639 = vset.pattern.permute.xlu0 0
        %640 = vperm.xlu0 %639, %v533
        %v641 = vpop.permute.xlu0 %640
        %644 = vset.pattern.permute.xlu0 0
        %645 = vperm.xlu0 %644, %v534
        %v646 = vpop.permute.xlu0 %645
        %649 = vset.pattern.permute.xlu0 0
        %650 = vperm.xlu0 %649, %v535
        %v651 = vpop.permute.xlu0 %650
        %654 = vset.pattern.permute.xlu0 0
        %655 = vperm.xlu0 %654, %v536
        %v656 = vpop.permute.xlu0 %655
        %659 = vset.pattern.permute.xlu0 0
        %660 = vperm.xlu0 %659, %v537
        %v661 = vpop.permute.xlu0 %660
        %664 = vset.pattern.permute.xlu0 0
        %665 = vperm.xlu0 %664, %v538
        %v666 = vpop.permute.xlu0 %665
        %669 = vset.pattern.permute.xlu0 0
        %670 = vperm.xlu0 %669, %v539
        %v671 = vpop.permute.xlu0 %670
        %674 = vset.pattern.permute.xlu0 0
        %675 = vperm.xlu0 %674, %v540
        %v676 = vpop.permute.xlu0 %675
        %679 = vset.pattern.permute.xlu0 0
        %680 = vperm.xlu0 %679, %v541
        %v681 = vpop.permute.xlu0 %680
        %684 = vset.pattern.permute.xlu0 0
        %685 = vperm.xlu0 %684, %v542
        %v686 = vpop.permute.xlu0 %685
        %689 = vset.pattern.permute.xlu0 0
        %690 = vperm.xlu0 %689, %v543
        %v691 = vpop.permute.xlu0 %690
        %694 = vset.pattern.permute.xlu0 0
        %695 = vperm.xlu0 %694, %v544
        %v696 = vpop.permute.xlu0 %695
        %699 = vset.pattern.permute.xlu0 0
        %700 = vperm.xlu0 %699, %v545
        %v701 = vpop.permute.xlu0 %700
        %704 = vset.pattern.permute.xlu0 0
        %705 = vperm.xlu0 %704, %v546
        %v706 = vpop.permute.xlu0 %705
        %v708 = vlaneseq
        %v709 = vshrl.u32 %v708, 7
        %v710 = vsub.s32 0, %v709
        %v711 = vrot.slane %v547, %v710
        %v712 = vmul.f32 %v551, %v711
        %v713 = vmul.f32 %v556, %v711
        %v714 = vmul.f32 %v561, %v711
        %v715 = vmul.f32 %v566, %v711
        %v716 = vmul.f32 %v571, %v711
        %v717 = vmul.f32 %v576, %v711
        %v718 = vmul.f32 %v581, %v711
        %v719 = vmul.f32 %v586, %v711
        %v720 = vmul.f32 %v591, %v711
        %v721 = vmul.f32 %v596, %v711
        %v722 = vmul.f32 %v601, %v711
        %v723 = vmul.f32 %v606, %v711
        %v724 = vmul.f32 %v611, %v711
        %v725 = vmul.f32 %v616, %v711
        %v726 = vmul.f32 %v621, %v711
        %v727 = vmul.f32 %v626, %v711
        %v728 = vmul.f32 %v631, %v711
        %v729 = vmul.f32 %v636, %v711
        %v730 = vmul.f32 %v641, %v711
        %v731 = vmul.f32 %v646, %v711
        %v732 = vmul.f32 %v651, %v711
        %v733 = vmul.f32 %v656, %v711
        %v734 = vmul.f32 %v661, %v711
        %v735 = vmul.f32 %v666, %v711
        %v736 = vmul.f32 %v671, %v711
        %v737 = vmul.f32 %v676, %v711
        %v738 = vmul.f32 %v681, %v711
        %v739 = vmul.f32 %v686, %v711
        %v740 = vmul.f32 %v691, %v711
        %v741 = vmul.f32 %v696, %v711
        %v742 = vmul.f32 %v701, %v711
        %v743 = vmul.f32 %v706, %v711
        %v744 = vadd.f32 %v513, %v712
        %v745 = vadd.f32 %v513, %v713
        %v746 = vadd.f32 %v513, %v714
        %v747 = vadd.f32 %v513, %v715
        %v748 = vadd.f32 %v513, %v716
        %v749 = vadd.f32 %v513, %v717
        %v750 = vadd.f32 %v513, %v718
        %v751 = vadd.f32 %v513, %v719
        %v752 = vadd.f32 %v513, %v720
        %v753 = vadd.f32 %v513, %v721
        %v754 = vadd.f32 %v513, %v722
        %v755 = vadd.f32 %v513, %v723
        %v756 = vadd.f32 %v513, %v724
        %v757 = vadd.f32 %v513, %v725
        %v758 = vadd.f32 %v513, %v726
        %v759 = vadd.f32 %v513, %v727
        %v760 = vadd.f32 %v513, %v728
        %v761 = vadd.f32 %v513, %v729
        %v762 = vadd.f32 %v513, %v730
        %v763 = vadd.f32 %v513, %v731
        %v764 = vadd.f32 %v513, %v732
        %v765 = vadd.f32 %v513, %v733
        %v766 = vadd.f32 %v513, %v734
        %v767 = vadd.f32 %v513, %v735
        %v768 = vadd.f32 %v513, %v736
        %v769 = vadd.f32 %v513, %v737
        %v770 = vadd.f32 %v513, %v738
        %v771 = vadd.f32 %v513, %v739
        %v772 = vadd.f32 %v513, %v740
        %v773 = vadd.f32 %v513, %v741
        %v774 = vadd.f32 %v513, %v742
        %v775 = vadd.f32 %v513, %v743
        %v776 = vld [vmem:[%s503 + $0x1] sm:$0xff]
        %v777 = vld [vmem:[%s503 + $0x9] sm:$0xff]
        %v778 = vld [vmem:[%s503 + $0x19] sm:$0xff]
        %v779 = vld [vmem:[%s503 + $0x21] sm:$0xff]
        %v780 = vld [vmem:[%s503 + $0x31] sm:$0xff]
        %v781 = vld [vmem:[%s503 + $0x39] sm:$0xff]
        %v782 = vld [vmem:[%s503 + $0x49] sm:$0xff]
        %v783 = vld [vmem:[%s503 + $0x51] sm:$0xff]
        %v784 = vld [vmem:[%s503 + $0x61] sm:$0xff]
        %v785 = vld [vmem:[%s503 + $0x69] sm:$0xff]
        %v786 = vld [vmem:[%s503 + $0x79] sm:$0xff]
        %v787 = vld [vmem:[%s503 + $0x81] sm:$0xff]
        %v788 = vld [vmem:[%s503 + $0x91] sm:$0xff]
        %v789 = vld [vmem:[%s503 + $0x99] sm:$0xff]
        %v790 = vld [vmem:[%s503 + $0xa9] sm:$0xff]
        %v791 = vld [vmem:[%s503 + $0xb1] sm:$0xff]
        %v792 = vld [vmem:[%s503 + $0xc1] sm:$0xff]
        %v793 = vld [vmem:[%s503 + $0xc9] sm:$0xff]
        %v794 = vld [vmem:[%s503 + $0xd9] sm:$0xff]
        %v795 = vld [vmem:[%s503 + $0xe1] sm:$0xff]
        %v796 = vld [vmem:[%s503 + $0xf1] sm:$0xff]
        %v797 = vld [vmem:[%s503 + $0xf9] sm:$0xff]
        %v798 = vld [vmem:[%s503 + $0x109] sm:$0xff]
        %v799 = vld [vmem:[%s503 + $0x111] sm:$0xff]
        %v800 = vld [vmem:[%s503 + $0x121] sm:$0xff]
        %v801 = vld [vmem:[%s503 + $0x129] sm:$0xff]
        %v802 = vld [vmem:[%s503 + $0x139] sm:$0xff]
        %v803 = vld [vmem:[%s503 + $0x141] sm:$0xff]
        %v804 = vld [vmem:[%s503 + $0x151] sm:$0xff]
        %v805 = vld [vmem:[%s503 + $0x159] sm:$0xff]
        %v806 = vld [vmem:[%s503 + $0x169] sm:$0xff]
        %v807 = vld [vmem:[%s503 + $0x171] sm:$0xff]
        %v808 = vld [vmem:[#allocation3 + $0x1] sm:$0x1]
        %810 = vset.pattern.permute.xlu0 0
        %811 = vperm.xlu0 %810, %v776
        %v812 = vpop.permute.xlu0 %811
        %815 = vset.pattern.permute.xlu0 0
        %816 = vperm.xlu0 %815, %v777
        %v817 = vpop.permute.xlu0 %816
        %820 = vset.pattern.permute.xlu0 0
        %821 = vperm.xlu0 %820, %v778
        %v822 = vpop.permute.xlu0 %821
        %825 = vset.pattern.permute.xlu0 0
        %826 = vperm.xlu0 %825, %v779
        %v827 = vpop.permute.xlu0 %826
        %830 = vset.pattern.permute.xlu0 0
        %831 = vperm.xlu0 %830, %v780
        %v832 = vpop.permute.xlu0 %831
        %835 = vset.pattern.permute.xlu0 0
        %836 = vperm.xlu0 %835, %v781
        %v837 = vpop.permute.xlu0 %836
        %840 = vset.pattern.permute.xlu0 0
        %841 = vperm.xlu0 %840, %v782
        %v842 = vpop.permute.xlu0 %841
        %845 = vset.pattern.permute.xlu0 0
        %846 = vperm.xlu0 %845, %v783
        %v847 = vpop.permute.xlu0 %846
        %850 = vset.pattern.permute.xlu0 0
        %851 = vperm.xlu0 %850, %v784
        %v852 = vpop.permute.xlu0 %851
        %855 = vset.pattern.permute.xlu0 0
        %856 = vperm.xlu0 %855, %v785
        %v857 = vpop.permute.xlu0 %856
        %860 = vset.pattern.permute.xlu0 0
        %861 = vperm.xlu0 %860, %v786
        %v862 = vpop.permute.xlu0 %861
        %865 = vset.pattern.permute.xlu0 0
        %866 = vperm.xlu0 %865, %v787
        %v867 = vpop.permute.xlu0 %866
        %870 = vset.pattern.permute.xlu0 0
        %871 = vperm.xlu0 %870, %v788
        %v872 = vpop.permute.xlu0 %871
        %875 = vset.pattern.permute.xlu0 0
        %876 = vperm.xlu0 %875, %v789
        %v877 = vpop.permute.xlu0 %876
        %880 = vset.pattern.permute.xlu0 0
        %881 = vperm.xlu0 %880, %v790
        %v882 = vpop.permute.xlu0 %881
        %885 = vset.pattern.permute.xlu0 0
        %886 = vperm.xlu0 %885, %v791
        %v887 = vpop.permute.xlu0 %886
        %890 = vset.pattern.permute.xlu0 0
        %891 = vperm.xlu0 %890, %v792
        %v892 = vpop.permute.xlu0 %891
        %895 = vset.pattern.permute.xlu0 0
        %896 = vperm.xlu0 %895, %v793
        %v897 = vpop.permute.xlu0 %896
        %900 = vset.pattern.permute.xlu0 0
        %901 = vperm.xlu0 %900, %v794
        %v902 = vpop.permute.xlu0 %901
        %905 = vset.pattern.permute.xlu0 0
        %906 = vperm.xlu0 %905, %v795
        %v907 = vpop.permute.xlu0 %906
        %910 = vset.pattern.permute.xlu0 0
        %911 = vperm.xlu0 %910, %v796
        %v912 = vpop.permute.xlu0 %911
        %915 = vset.pattern.permute.xlu0 0
        %916 = vperm.xlu0 %915, %v797
        %v917 = vpop.permute.xlu0 %916
        %920 = vset.pattern.permute.xlu0 0
        %921 = vperm.xlu0 %920, %v798
        %v922 = vpop.permute.xlu0 %921
        %925 = vset.pattern.permute.xlu0 0
        %926 = vperm.xlu0 %925, %v799
        %v927 = vpop.permute.xlu0 %926
        %930 = vset.pattern.permute.xlu0 0
        %931 = vperm.xlu0 %930, %v800
        %v932 = vpop.permute.xlu0 %931
        %935 = vset.pattern.permute.xlu0 0
        %936 = vperm.xlu0 %935, %v801
        %v937 = vpop.permute.xlu0 %936
        %940 = vset.pattern.permute.xlu0 0
        %941 = vperm.xlu0 %940, %v802
        %v942 = vpop.permute.xlu0 %941
        %945 = vset.pattern.permute.xlu0 0
        %946 = vperm.xlu0 %945, %v803
        %v947 = vpop.permute.xlu0 %946
        %950 = vset.pattern.permute.xlu0 0
        %951 = vperm.xlu0 %950, %v804
        %v952 = vpop.permute.xlu0 %951
        %955 = vset.pattern.permute.xlu0 0
        %956 = vperm.xlu0 %955, %v805
        %v957 = vpop.permute.xlu0 %956
        %960 = vset.pattern.permute.xlu0 0
        %961 = vperm.xlu0 %960, %v806
        %v962 = vpop.permute.xlu0 %961
        %965 = vset.pattern.permute.xlu0 0
        %966 = vperm.xlu0 %965, %v807
        %v967 = vpop.permute.xlu0 %966
        %v969 = vlaneseq
        %v970 = vshrl.u32 %v969, 7
        %v971 = vsub.s32 0, %v970
        %v972 = vrot.slane %v808, %v971
        %v973 = vmul.f32 %v812, %v972
        %v974 = vmul.f32 %v817, %v972
        %v975 = vmul.f32 %v822, %v972
        %v976 = vmul.f32 %v827, %v972
        %v977 = vmul.f32 %v832, %v972
        %v978 = vmul.f32 %v837, %v972
        %v979 = vmul.f32 %v842, %v972
        %v980 = vmul.f32 %v847, %v972
        %v981 = vmul.f32 %v852, %v972
        %v982 = vmul.f32 %v857, %v972
        %v983 = vmul.f32 %v862, %v972
        %v984 = vmul.f32 %v867, %v972
        %v985 = vmul.f32 %v872, %v972
        %v986 = vmul.f32 %v877, %v972
        %v987 = vmul.f32 %v882, %v972
        %v988 = vmul.f32 %v887, %v972
        %v989 = vmul.f32 %v892, %v972
        %v990 = vmul.f32 %v897, %v972
        %v991 = vmul.f32 %v902, %v972
        %v992 = vmul.f32 %v907, %v972
        %v993 = vmul.f32 %v912, %v972
        %v994 = vmul.f32 %v917, %v972
        %v995 = vmul.f32 %v922, %v972
        %v996 = vmul.f32 %v927, %v972
        %v997 = vmul.f32 %v932, %v972
        %v998 = vmul.f32 %v937, %v972
        %v999 = vmul.f32 %v942, %v972
        %v1000 = vmul.f32 %v947, %v972
        %v1001 = vmul.f32 %v952, %v972
        %v1002 = vmul.f32 %v957, %v972
        %v1003 = vmul.f32 %v962, %v972
        %v1004 = vmul.f32 %v967, %v972
        %v1005 = vadd.f32 %v744, %v973
        %v1006 = vadd.f32 %v745, %v974
        %v1007 = vadd.f32 %v746, %v975
        %v1008 = vadd.f32 %v747, %v976
        %v1009 = vadd.f32 %v748, %v977
        %v1010 = vadd.f32 %v749, %v978
        %v1011 = vadd.f32 %v750, %v979
        %v1012 = vadd.f32 %v751, %v980
        %v1013 = vadd.f32 %v752, %v981
        %v1014 = vadd.f32 %v753, %v982
        %v1015 = vadd.f32 %v754, %v983
        %v1016 = vadd.f32 %v755, %v984
        %v1017 = vadd.f32 %v756, %v985
        %v1018 = vadd.f32 %v757, %v986
        %v1019 = vadd.f32 %v758, %v987
        %v1020 = vadd.f32 %v759, %v988
        %v1021 = vadd.f32 %v760, %v989
        %v1022 = vadd.f32 %v761, %v990
        %v1023 = vadd.f32 %v762, %v991
        %v1024 = vadd.f32 %v763, %v992
        %v1025 = vadd.f32 %v764, %v993
        %v1026 = vadd.f32 %v765, %v994
        %v1027 = vadd.f32 %v766, %v995
        %v1028 = vadd.f32 %v767, %v996
        %v1029 = vadd.f32 %v768, %v997
        %v1030 = vadd.f32 %v769, %v998
        %v1031 = vadd.f32 %v770, %v999
        %v1032 = vadd.f32 %v771, %v1000
        %v1033 = vadd.f32 %v772, %v1001
        %v1034 = vadd.f32 %v773, %v1002
        %v1035 = vadd.f32 %v774, %v1003
        %v1036 = vadd.f32 %v775, %v1004
        %v1037 = vld [vmem:[%s503 + $0x2] sm:$0xff]
        %v1038 = vld [vmem:[%s503 + $0xa] sm:$0xff]
        %v1039 = vld [vmem:[%s503 + $0x1a] sm:$0xff]
        %v1040 = vld [vmem:[%s503 + $0x22] sm:$0xff]
        %v1041 = vld [vmem:[%s503 + $0x32] sm:$0xff]
        %v1042 = vld [vmem:[%s503 + $0x3a] sm:$0xff]
        %v1043 = vld [vmem:[%s503 + $0x4a] sm:$0xff]
        %v1044 = vld [vmem:[%s503 + $0x52] sm:$0xff]
        %v1045 = vld [vmem:[%s503 + $0x62] sm:$0xff]
        %v1046 = vld [vmem:[%s503 + $0x6a] sm:$0xff]
        %v1047 = vld [vmem:[%s503 + $0x7a] sm:$0xff]
        %v1048 = vld [vmem:[%s503 + $0x82] sm:$0xff]
        %v1049 = vld [vmem:[%s503 + $0x92] sm:$0xff]
        %v1050 = vld [vmem:[%s503 + $0x9a] sm:$0xff]
        %v1051 = vld [vmem:[%s503 + $0xaa] sm:$0xff]
        %v1052 = vld [vmem:[%s503 + $0xb2] sm:$0xff]
        %v1053 = vld [vmem:[%s503 + $0xc2] sm:$0xff]
        %v1054 = vld [vmem:[%s503 + $0xca] sm:$0xff]
        %v1055 = vld [vmem:[%s503 + $0xda] sm:$0xff]
        %v1056 = vld [vmem:[%s503 + $0xe2] sm:$0xff]
        %v1057 = vld [vmem:[%s503 + $0xf2] sm:$0xff]
        %v1058 = vld [vmem:[%s503 + $0xfa] sm:$0xff]
        %v1059 = vld [vmem:[%s503 + $0x10a] sm:$0xff]
        %v1060 = vld [vmem:[%s503 + $0x112] sm:$0xff]
        %v1061 = vld [vmem:[%s503 + $0x122] sm:$0xff]
        %v1062 = vld [vmem:[%s503 + $0x12a] sm:$0xff]
        %v1063 = vld [vmem:[%s503 + $0x13a] sm:$0xff]
        %v1064 = vld [vmem:[%s503 + $0x142] sm:$0xff]
        %v1065 = vld [vmem:[%s503 + $0x152] sm:$0xff]
        %v1066 = vld [vmem:[%s503 + $0x15a] sm:$0xff]
        %v1067 = vld [vmem:[%s503 + $0x16a] sm:$0xff]
        %v1068 = vld [vmem:[%s503 + $0x172] sm:$0xff]
        %v1069 = vld [vmem:[#allocation3 + $0x2] sm:$0x1]
        %1071 = vset.pattern.permute.xlu0 0
        %1072 = vperm.xlu0 %1071, %v1037
        %v1073 = vpop.permute.xlu0 %1072
        %1076 = vset.pattern.permute.xlu0 0
        %1077 = vperm.xlu0 %1076, %v1038
        %v1078 = vpop.permute.xlu0 %1077
        %1081 = vset.pattern.permute.xlu0 0
        %1082 = vperm.xlu0 %1081, %v1039
        %v1083 = vpop.permute.xlu0 %1082
        %1086 = vset.pattern.permute.xlu0 0
        %1087 = vperm.xlu0 %1086, %v1040
        %v1088 = vpop.permute.xlu0 %1087
        %1091 = vset.pattern.permute.xlu0 0
        %1092 = vperm.xlu0 %1091, %v1041
        %v1093 = vpop.permute.xlu0 %1092
        %1096 = vset.pattern.permute.xlu0 0
        %1097 = vperm.xlu0 %1096, %v1042
        %v1098 = vpop.permute.xlu0 %1097
        %1101 = vset.pattern.permute.xlu0 0
        %1102 = vperm.xlu0 %1101, %v1043
        %v1103 = vpop.permute.xlu0 %1102
        %1106 = vset.pattern.permute.xlu0 0
        %1107 = vperm.xlu0 %1106, %v1044
        %v1108 = vpop.permute.xlu0 %1107
        %1111 = vset.pattern.permute.xlu0 0
        %1112 = vperm.xlu0 %1111, %v1045
        %v1113 = vpop.permute.xlu0 %1112
        %1116 = vset.pattern.permute.xlu0 0
        %1117 = vperm.xlu0 %1116, %v1046
        %v1118 = vpop.permute.xlu0 %1117
        %1121 = vset.pattern.permute.xlu0 0
        %1122 = vperm.xlu0 %1121, %v1047
        %v1123 = vpop.permute.xlu0 %1122
        %1126 = vset.pattern.permute.xlu0 0
        %1127 = vperm.xlu0 %1126, %v1048
        %v1128 = vpop.permute.xlu0 %1127
        %1131 = vset.pattern.permute.xlu0 0
        %1132 = vperm.xlu0 %1131, %v1049
        %v1133 = vpop.permute.xlu0 %1132
        %1136 = vset.pattern.permute.xlu0 0
        %1137 = vperm.xlu0 %1136, %v1050
        %v1138 = vpop.permute.xlu0 %1137
        %1141 = vset.pattern.permute.xlu0 0
        %1142 = vperm.xlu0 %1141, %v1051
        %v1143 = vpop.permute.xlu0 %1142
        %1146 = vset.pattern.permute.xlu0 0
        %1147 = vperm.xlu0 %1146, %v1052
        %v1148 = vpop.permute.xlu0 %1147
        %1151 = vset.pattern.permute.xlu0 0
        %1152 = vperm.xlu0 %1151, %v1053
        %v1153 = vpop.permute.xlu0 %1152
        %1156 = vset.pattern.permute.xlu0 0
        %1157 = vperm.xlu0 %1156, %v1054
        %v1158 = vpop.permute.xlu0 %1157
        %1161 = vset.pattern.permute.xlu0 0
        %1162 = vperm.xlu0 %1161, %v1055
        %v1163 = vpop.permute.xlu0 %1162
        %1166 = vset.pattern.permute.xlu0 0
        %1167 = vperm.xlu0 %1166, %v1056
        %v1168 = vpop.permute.xlu0 %1167
        %1171 = vset.pattern.permute.xlu0 0
        %1172 = vperm.xlu0 %1171, %v1057
        %v1173 = vpop.permute.xlu0 %1172
        %1176 = vset.pattern.permute.xlu0 0
        %1177 = vperm.xlu0 %1176, %v1058
        %v1178 = vpop.permute.xlu0 %1177
        %1181 = vset.pattern.permute.xlu0 0
        %1182 = vperm.xlu0 %1181, %v1059
        %v1183 = vpop.permute.xlu0 %1182
        %1186 = vset.pattern.permute.xlu0 0
        %1187 = vperm.xlu0 %1186, %v1060
        %v1188 = vpop.permute.xlu0 %1187
        %1191 = vset.pattern.permute.xlu0 0
        %1192 = vperm.xlu0 %1191, %v1061
        %v1193 = vpop.permute.xlu0 %1192
        %1196 = vset.pattern.permute.xlu0 0
        %1197 = vperm.xlu0 %1196, %v1062
        %v1198 = vpop.permute.xlu0 %1197
        %1201 = vset.pattern.permute.xlu0 0
        %1202 = vperm.xlu0 %1201, %v1063
        %v1203 = vpop.permute.xlu0 %1202
        %1206 = vset.pattern.permute.xlu0 0
        %1207 = vperm.xlu0 %1206, %v1064
        %v1208 = vpop.permute.xlu0 %1207
        %1211 = vset.pattern.permute.xlu0 0
        %1212 = vperm.xlu0 %1211, %v1065
        %v1213 = vpop.permute.xlu0 %1212
        %1216 = vset.pattern.permute.xlu0 0
        %1217 = vperm.xlu0 %1216, %v1066
        %v1218 = vpop.permute.xlu0 %1217
        %1221 = vset.pattern.permute.xlu0 0
        %1222 = vperm.xlu0 %1221, %v1067
        %v1223 = vpop.permute.xlu0 %1222
        %1226 = vset.pattern.permute.xlu0 0
        %1227 = vperm.xlu0 %1226, %v1068
        %v1228 = vpop.permute.xlu0 %1227
        %v1230 = vlaneseq
        %v1231 = vshrl.u32 %v1230, 7
        %v1232 = vsub.s32 0, %v1231
        %v1233 = vrot.slane %v1069, %v1232
        %v1234 = vmul.f32 %v1073, %v1233
        %v1235 = vmul.f32 %v1078, %v1233
        %v1236 = vmul.f32 %v1083, %v1233
        %v1237 = vmul.f32 %v1088, %v1233
        %v1238 = vmul.f32 %v1093, %v1233
        %v1239 = vmul.f32 %v1098, %v1233
        %v1240 = vmul.f32 %v1103, %v1233
        %v1241 = vmul.f32 %v1108, %v1233
        %v1242 = vmul.f32 %v1113, %v1233
        %v1243 = vmul.f32 %v1118, %v1233
        %v1244 = vmul.f32 %v1123, %v1233
        %v1245 = vmul.f32 %v1128, %v1233
        %v1246 = vmul.f32 %v1133, %v1233
        %v1247 = vmul.f32 %v1138, %v1233
        %v1248 = vmul.f32 %v1143, %v1233
        %v1249 = vmul.f32 %v1148, %v1233
        %v1250 = vmul.f32 %v1153, %v1233
        %v1251 = vmul.f32 %v1158, %v1233
        %v1252 = vmul.f32 %v1163, %v1233
        %v1253 = vmul.f32 %v1168, %v1233
        %v1254 = vmul.f32 %v1173, %v1233
        %v1255 = vmul.f32 %v1178, %v1233
        %v1256 = vmul.f32 %v1183, %v1233
        %v1257 = vmul.f32 %v1188, %v1233
        %v1258 = vmul.f32 %v1193, %v1233
        %v1259 = vmul.f32 %v1198, %v1233
        %v1260 = vmul.f32 %v1203, %v1233
        %v1261 = vmul.f32 %v1208, %v1233
        %v1262 = vmul.f32 %v1213, %v1233
        %v1263 = vmul.f32 %v1218, %v1233
        %v1264 = vmul.f32 %v1223, %v1233
        %v1265 = vmul.f32 %v1228, %v1233
        %v1266 = vadd.f32 %v1005, %v1234
        %v1267 = vadd.f32 %v1006, %v1235
        %v1268 = vadd.f32 %v1007, %v1236
        %v1269 = vadd.f32 %v1008, %v1237
        %v1270 = vadd.f32 %v1009, %v1238
        %v1271 = vadd.f32 %v1010, %v1239
        %v1272 = vadd.f32 %v1011, %v1240
        %v1273 = vadd.f32 %v1012, %v1241
        %v1274 = vadd.f32 %v1013, %v1242
        %v1275 = vadd.f32 %v1014, %v1243
        %v1276 = vadd.f32 %v1015, %v1244
        %v1277 = vadd.f32 %v1016, %v1245
        %v1278 = vadd.f32 %v1017, %v1246
        %v1279 = vadd.f32 %v1018, %v1247
        %v1280 = vadd.f32 %v1019, %v1248
        %v1281 = vadd.f32 %v1020, %v1249
        %v1282 = vadd.f32 %v1021, %v1250
        %v1283 = vadd.f32 %v1022, %v1251
        %v1284 = vadd.f32 %v1023, %v1252
        %v1285 = vadd.f32 %v1024, %v1253
        %v1286 = vadd.f32 %v1025, %v1254
        %v1287 = vadd.f32 %v1026, %v1255
        %v1288 = vadd.f32 %v1027, %v1256
        %v1289 = vadd.f32 %v1028, %v1257
        %v1290 = vadd.f32 %v1029, %v1258
        %v1291 = vadd.f32 %v1030, %v1259
        %v1292 = vadd.f32 %v1031, %v1260
        %v1293 = vadd.f32 %v1032, %v1261
        %v1294 = vadd.f32 %v1033, %v1262
        %v1295 = vadd.f32 %v1034, %v1263
        %v1296 = vadd.f32 %v1035, %v1264
        %v1297 = vadd.f32 %v1036, %v1265
        %s1298 = scalar_lea.vmem %s503, 24
        %v1299 = vld [vmem:[%s1298] sm:$0xff]
        %v1300 = vld [vmem:[%s1298 + $0x8] sm:$0xff]
        %v1301 = vld [vmem:[%s1298 + $0x18] sm:$0xff]
        %v1302 = vld [vmem:[%s1298 + $0x20] sm:$0xff]
        %v1303 = vld [vmem:[%s1298 + $0x30] sm:$0xff]
        %v1304 = vld [vmem:[%s1298 + $0x38] sm:$0xff]
        %v1305 = vld [vmem:[%s1298 + $0x48] sm:$0xff]
        %v1306 = vld [vmem:[%s1298 + $0x50] sm:$0xff]
        %v1307 = vld [vmem:[%s1298 + $0x60] sm:$0xff]
        %v1308 = vld [vmem:[%s1298 + $0x68] sm:$0xff]
        %v1309 = vld [vmem:[%s1298 + $0x78] sm:$0xff]
        %v1310 = vld [vmem:[%s1298 + $0x80] sm:$0xff]
        %v1311 = vld [vmem:[%s1298 + $0x90] sm:$0xff]
        %v1312 = vld [vmem:[%s1298 + $0x98] sm:$0xff]
        %v1313 = vld [vmem:[%s1298 + $0xa8] sm:$0xff]
        %v1314 = vld [vmem:[%s1298 + $0xb0] sm:$0xff]
        %v1315 = vld [vmem:[%s1298 + $0xc0] sm:$0xff]
        %v1316 = vld [vmem:[%s1298 + $0xc8] sm:$0xff]
        %v1317 = vld [vmem:[%s1298 + $0xd8] sm:$0xff]
        %v1318 = vld [vmem:[%s1298 + $0xe0] sm:$0xff]
        %v1319 = vld [vmem:[%s1298 + $0xf0] sm:$0xff]
        %v1320 = vld [vmem:[%s1298 + $0xf8] sm:$0xff]
        %v1321 = vld [vmem:[%s1298 + $0x108] sm:$0xff]
        %v1322 = vld [vmem:[%s1298 + $0x110] sm:$0xff]
        %v1323 = vld [vmem:[%s1298 + $0x120] sm:$0xff]
        %v1324 = vld [vmem:[%s1298 + $0x128] sm:$0xff]
        %v1325 = vld [vmem:[%s1298 + $0x138] sm:$0xff]
        %v1326 = vld [vmem:[%s1298 + $0x140] sm:$0xff]
        %v1327 = vld [vmem:[%s1298 + $0x150] sm:$0xff]
        %v1328 = vld [vmem:[%s1298 + $0x158] sm:$0xff]
        %v1329 = vld [vmem:[%s1298 + $0x168] sm:$0xff]
        %v1330 = vld [vmem:[%s1298 + $0x170] sm:$0xff]
        %v1331 = vld [vmem:[#allocation3 + $0x3] sm:$0x1]
        %1333 = vset.pattern.permute.xlu0 0
        %1334 = vperm.xlu0 %1333, %v1299
        %v1335 = vpop.permute.xlu0 %1334
        %1338 = vset.pattern.permute.xlu0 0
        %1339 = vperm.xlu0 %1338, %v1300
        %v1340 = vpop.permute.xlu0 %1339
        %1343 = vset.pattern.permute.xlu0 0
        %1344 = vperm.xlu0 %1343, %v1301
        %v1345 = vpop.permute.xlu0 %1344
        %1348 = vset.pattern.permute.xlu0 0
        %1349 = vperm.xlu0 %1348, %v1302
        %v1350 = vpop.permute.xlu0 %1349
        %1353 = vset.pattern.permute.xlu0 0
        %1354 = vperm.xlu0 %1353, %v1303
        %v1355 = vpop.permute.xlu0 %1354
        %1358 = vset.pattern.permute.xlu0 0
        %1359 = vperm.xlu0 %1358, %v1304
        %v1360 = vpop.permute.xlu0 %1359
        %1363 = vset.pattern.permute.xlu0 0
        %1364 = vperm.xlu0 %1363, %v1305
        %v1365 = vpop.permute.xlu0 %1364
        %1368 = vset.pattern.permute.xlu0 0
        %1369 = vperm.xlu0 %1368, %v1306
        %v1370 = vpop.permute.xlu0 %1369
        %1373 = vset.pattern.permute.xlu0 0
        %1374 = vperm.xlu0 %1373, %v1307
        %v1375 = vpop.permute.xlu0 %1374
        %1378 = vset.pattern.permute.xlu0 0
        %1379 = vperm.xlu0 %1378, %v1308
        %v1380 = vpop.permute.xlu0 %1379
        %1383 = vset.pattern.permute.xlu0 0
        %1384 = vperm.xlu0 %1383, %v1309
        %v1385 = vpop.permute.xlu0 %1384
        %1388 = vset.pattern.permute.xlu0 0
        %1389 = vperm.xlu0 %1388, %v1310
        %v1390 = vpop.permute.xlu0 %1389
        %1393 = vset.pattern.permute.xlu0 0
        %1394 = vperm.xlu0 %1393, %v1311
        %v1395 = vpop.permute.xlu0 %1394
        %1398 = vset.pattern.permute.xlu0 0
        %1399 = vperm.xlu0 %1398, %v1312
        %v1400 = vpop.permute.xlu0 %1399
        %1403 = vset.pattern.permute.xlu0 0
        %1404 = vperm.xlu0 %1403, %v1313
        %v1405 = vpop.permute.xlu0 %1404
        %1408 = vset.pattern.permute.xlu0 0
        %1409 = vperm.xlu0 %1408, %v1314
        %v1410 = vpop.permute.xlu0 %1409
        %1413 = vset.pattern.permute.xlu0 0
        %1414 = vperm.xlu0 %1413, %v1315
        %v1415 = vpop.permute.xlu0 %1414
        %1418 = vset.pattern.permute.xlu0 0
        %1419 = vperm.xlu0 %1418, %v1316
        %v1420 = vpop.permute.xlu0 %1419
        %1423 = vset.pattern.permute.xlu0 0
        %1424 = vperm.xlu0 %1423, %v1317
        %v1425 = vpop.permute.xlu0 %1424
        %1428 = vset.pattern.permute.xlu0 0
        %1429 = vperm.xlu0 %1428, %v1318
        %v1430 = vpop.permute.xlu0 %1429
        %1433 = vset.pattern.permute.xlu0 0
        %1434 = vperm.xlu0 %1433, %v1319
        %v1435 = vpop.permute.xlu0 %1434
        %1438 = vset.pattern.permute.xlu0 0
        %1439 = vperm.xlu0 %1438, %v1320
        %v1440 = vpop.permute.xlu0 %1439
        %1443 = vset.pattern.permute.xlu0 0
        %1444 = vperm.xlu0 %1443, %v1321
        %v1445 = vpop.permute.xlu0 %1444
        %1448 = vset.pattern.permute.xlu0 0
        %1449 = vperm.xlu0 %1448, %v1322
        %v1450 = vpop.permute.xlu0 %1449
        %1453 = vset.pattern.permute.xlu0 0
        %1454 = vperm.xlu0 %1453, %v1323
        %v1455 = vpop.permute.xlu0 %1454
        %1458 = vset.pattern.permute.xlu0 0
        %1459 = vperm.xlu0 %1458, %v1324
        %v1460 = vpop.permute.xlu0 %1459
        %1463 = vset.pattern.permute.xlu0 0
        %1464 = vperm.xlu0 %1463, %v1325
        %v1465 = vpop.permute.xlu0 %1464
        %1468 = vset.pattern.permute.xlu0 0
        %1469 = vperm.xlu0 %1468, %v1326
        %v1470 = vpop.permute.xlu0 %1469
        %1473 = vset.pattern.permute.xlu0 0
        %1474 = vperm.xlu0 %1473, %v1327
        %v1475 = vpop.permute.xlu0 %1474
        %1478 = vset.pattern.permute.xlu0 0
        %1479 = vperm.xlu0 %1478, %v1328
        %v1480 = vpop.permute.xlu0 %1479
        %1483 = vset.pattern.permute.xlu0 0
        %1484 = vperm.xlu0 %1483, %v1329
        %v1485 = vpop.permute.xlu0 %1484
        %1488 = vset.pattern.permute.xlu0 0
        %1489 = vperm.xlu0 %1488, %v1330
        %v1490 = vpop.permute.xlu0 %1489
        %v1492 = vlaneseq
        %v1493 = vshrl.u32 %v1492, 7
        %v1494 = vsub.s32 0, %v1493
        %v1495 = vrot.slane %v1331, %v1494
        %v1496 = vmul.f32 %v1335, %v1495
        %v1497 = vmul.f32 %v1340, %v1495
        %v1498 = vmul.f32 %v1345, %v1495
        %v1499 = vmul.f32 %v1350, %v1495
        %v1500 = vmul.f32 %v1355, %v1495
        %v1501 = vmul.f32 %v1360, %v1495
        %v1502 = vmul.f32 %v1365, %v1495
        %v1503 = vmul.f32 %v1370, %v1495
        %v1504 = vmul.f32 %v1375, %v1495
        %v1505 = vmul.f32 %v1380, %v1495
        %v1506 = vmul.f32 %v1385, %v1495
        %v1507 = vmul.f32 %v1390, %v1495
        %v1508 = vmul.f32 %v1395, %v1495
        %v1509 = vmul.f32 %v1400, %v1495
        %v1510 = vmul.f32 %v1405, %v1495
        %v1511 = vmul.f32 %v1410, %v1495
        %v1512 = vmul.f32 %v1415, %v1495
        %v1513 = vmul.f32 %v1420, %v1495
        %v1514 = vmul.f32 %v1425, %v1495
        %v1515 = vmul.f32 %v1430, %v1495
        %v1516 = vmul.f32 %v1435, %v1495
        %v1517 = vmul.f32 %v1440, %v1495
        %v1518 = vmul.f32 %v1445, %v1495
        %v1519 = vmul.f32 %v1450, %v1495
        %v1520 = vmul.f32 %v1455, %v1495
        %v1521 = vmul.f32 %v1460, %v1495
        %v1522 = vmul.f32 %v1465, %v1495
        %v1523 = vmul.f32 %v1470, %v1495
        %v1524 = vmul.f32 %v1475, %v1495
        %v1525 = vmul.f32 %v1480, %v1495
        %v1526 = vmul.f32 %v1485, %v1495
        %v1527 = vmul.f32 %v1490, %v1495
        %v1528 = vadd.f32 %v1266, %v1496
        %v1529 = vadd.f32 %v1267, %v1497
        %v1530 = vadd.f32 %v1268, %v1498
        %v1531 = vadd.f32 %v1269, %v1499
        %v1532 = vadd.f32 %v1270, %v1500
        %v1533 = vadd.f32 %v1271, %v1501
        %v1534 = vadd.f32 %v1272, %v1502
        %v1535 = vadd.f32 %v1273, %v1503
        %v1536 = vadd.f32 %v1274, %v1504
        %v1537 = vadd.f32 %v1275, %v1505
        %v1538 = vadd.f32 %v1276, %v1506
        %v1539 = vadd.f32 %v1277, %v1507
        %v1540 = vadd.f32 %v1278, %v1508
        %v1541 = vadd.f32 %v1279, %v1509
        %v1542 = vadd.f32 %v1280, %v1510
        %v1543 = vadd.f32 %v1281, %v1511
        %v1544 = vadd.f32 %v1282, %v1512
        %v1545 = vadd.f32 %v1283, %v1513
        %v1546 = vadd.f32 %v1284, %v1514
        %v1547 = vadd.f32 %v1285, %v1515
        %v1548 = vadd.f32 %v1286, %v1516
        %v1549 = vadd.f32 %v1287, %v1517
        %v1550 = vadd.f32 %v1288, %v1518
        %v1551 = vadd.f32 %v1289, %v1519
        %v1552 = vadd.f32 %v1290, %v1520
        %v1553 = vadd.f32 %v1291, %v1521
        %v1554 = vadd.f32 %v1292, %v1522
        %v1555 = vadd.f32 %v1293, %v1523
        %v1556 = vadd.f32 %v1294, %v1524
        %v1557 = vadd.f32 %v1295, %v1525
        %v1558 = vadd.f32 %v1296, %v1526
        %v1559 = vadd.f32 %v1297, %v1527
        %v1560 = vld [vmem:[%s1298 + $0x1] sm:$0xff]
        %v1561 = vld [vmem:[%s1298 + $0x9] sm:$0xff]
        %v1562 = vld [vmem:[%s1298 + $0x19] sm:$0xff]
        %v1563 = vld [vmem:[%s1298 + $0x21] sm:$0xff]
        %v1564 = vld [vmem:[%s1298 + $0x31] sm:$0xff]
        %v1565 = vld [vmem:[%s1298 + $0x39] sm:$0xff]
        %v1566 = vld [vmem:[%s1298 + $0x49] sm:$0xff]
        %v1567 = vld [vmem:[%s1298 + $0x51] sm:$0xff]
        %v1568 = vld [vmem:[%s1298 + $0x61] sm:$0xff]
        %v1569 = vld [vmem:[%s1298 + $0x69] sm:$0xff]
        %v1570 = vld [vmem:[%s1298 + $0x79] sm:$0xff]
        %v1571 = vld [vmem:[%s1298 + $0x81] sm:$0xff]
        %v1572 = vld [vmem:[%s1298 + $0x91] sm:$0xff]
        %v1573 = vld [vmem:[%s1298 + $0x99] sm:$0xff]
        %v1574 = vld [vmem:[%s1298 + $0xa9] sm:$0xff]
        %v1575 = vld [vmem:[%s1298 + $0xb1] sm:$0xff]
        %v1576 = vld [vmem:[%s1298 + $0xc1] sm:$0xff]
        %v1577 = vld [vmem:[%s1298 + $0xc9] sm:$0xff]
        %v1578 = vld [vmem:[%s1298 + $0xd9] sm:$0xff]
        %v1579 = vld [vmem:[%s1298 + $0xe1] sm:$0xff]
        %v1580 = vld [vmem:[%s1298 + $0xf1] sm:$0xff]
        %v1581 = vld [vmem:[%s1298 + $0xf9] sm:$0xff]
        %v1582 = vld [vmem:[%s1298 + $0x109] sm:$0xff]
        %v1583 = vld [vmem:[%s1298 + $0x111] sm:$0xff]
        %v1584 = vld [vmem:[%s1298 + $0x121] sm:$0xff]
        %v1585 = vld [vmem:[%s1298 + $0x129] sm:$0xff]
        %v1586 = vld [vmem:[%s1298 + $0x139] sm:$0xff]
        %v1587 = vld [vmem:[%s1298 + $0x141] sm:$0xff]
        %v1588 = vld [vmem:[%s1298 + $0x151] sm:$0xff]
        %v1589 = vld [vmem:[%s1298 + $0x159] sm:$0xff]
        %v1590 = vld [vmem:[%s1298 + $0x169] sm:$0xff]
        %v1591 = vld [vmem:[%s1298 + $0x171] sm:$0xff]
        %v1592 = vld [vmem:[#allocation3 + $0x4] sm:$0x1]
        %1594 = vset.pattern.permute.xlu0 0
        %1595 = vperm.xlu0 %1594, %v1560
        %v1596 = vpop.permute.xlu0 %1595
        %1599 = vset.pattern.permute.xlu0 0
        %1600 = vperm.xlu0 %1599, %v1561
        %v1601 = vpop.permute.xlu0 %1600
        %1604 = vset.pattern.permute.xlu0 0
        %1605 = vperm.xlu0 %1604, %v1562
        %v1606 = vpop.permute.xlu0 %1605
        %1609 = vset.pattern.permute.xlu0 0
        %1610 = vperm.xlu0 %1609, %v1563
        %v1611 = vpop.permute.xlu0 %1610
        %1614 = vset.pattern.permute.xlu0 0
        %1615 = vperm.xlu0 %1614, %v1564
        %v1616 = vpop.permute.xlu0 %1615
        %1619 = vset.pattern.permute.xlu0 0
        %1620 = vperm.xlu0 %1619, %v1565
        %v1621 = vpop.permute.xlu0 %1620
        %1624 = vset.pattern.permute.xlu0 0
        %1625 = vperm.xlu0 %1624, %v1566
        %v1626 = vpop.permute.xlu0 %1625
        %1629 = vset.pattern.permute.xlu0 0
        %1630 = vperm.xlu0 %1629, %v1567
        %v1631 = vpop.permute.xlu0 %1630
        %1634 = vset.pattern.permute.xlu0 0
        %1635 = vperm.xlu0 %1634, %v1568
        %v1636 = vpop.permute.xlu0 %1635
        %1639 = vset.pattern.permute.xlu0 0
        %1640 = vperm.xlu0 %1639, %v1569
        %v1641 = vpop.permute.xlu0 %1640
        %1644 = vset.pattern.permute.xlu0 0
        %1645 = vperm.xlu0 %1644, %v1570
        %v1646 = vpop.permute.xlu0 %1645
        %1649 = vset.pattern.permute.xlu0 0
        %1650 = vperm.xlu0 %1649, %v1571
        %v1651 = vpop.permute.xlu0 %1650
        %1654 = vset.pattern.permute.xlu0 0
        %1655 = vperm.xlu0 %1654, %v1572
        %v1656 = vpop.permute.xlu0 %1655
        %1659 = vset.pattern.permute.xlu0 0
        %1660 = vperm.xlu0 %1659, %v1573
        %v1661 = vpop.permute.xlu0 %1660
        %1664 = vset.pattern.permute.xlu0 0
        %1665 = vperm.xlu0 %1664, %v1574
        %v1666 = vpop.permute.xlu0 %1665
        %1669 = vset.pattern.permute.xlu0 0
        %1670 = vperm.xlu0 %1669, %v1575
        %v1671 = vpop.permute.xlu0 %1670
        %1674 = vset.pattern.permute.xlu0 0
        %1675 = vperm.xlu0 %1674, %v1576
        %v1676 = vpop.permute.xlu0 %1675
        %1679 = vset.pattern.permute.xlu0 0
        %1680 = vperm.xlu0 %1679, %v1577
        %v1681 = vpop.permute.xlu0 %1680
        %1684 = vset.pattern.permute.xlu0 0
        %1685 = vperm.xlu0 %1684, %v1578
        %v1686 = vpop.permute.xlu0 %1685
        %1689 = vset.pattern.permute.xlu0 0
        %1690 = vperm.xlu0 %1689, %v1579
        %v1691 = vpop.permute.xlu0 %1690
        %1694 = vset.pattern.permute.xlu0 0
        %1695 = vperm.xlu0 %1694, %v1580
        %v1696 = vpop.permute.xlu0 %1695
        %1699 = vset.pattern.permute.xlu0 0
        %1700 = vperm.xlu0 %1699, %v1581
        %v1701 = vpop.permute.xlu0 %1700
        %1704 = vset.pattern.permute.xlu0 0
        %1705 = vperm.xlu0 %1704, %v1582
        %v1706 = vpop.permute.xlu0 %1705
        %1709 = vset.pattern.permute.xlu0 0
        %1710 = vperm.xlu0 %1709, %v1583
        %v1711 = vpop.permute.xlu0 %1710
        %1714 = vset.pattern.permute.xlu0 0
        %1715 = vperm.xlu0 %1714, %v1584
        %v1716 = vpop.permute.xlu0 %1715
        %1719 = vset.pattern.permute.xlu0 0
        %1720 = vperm.xlu0 %1719, %v1585
        %v1721 = vpop.permute.xlu0 %1720
        %1724 = vset.pattern.permute.xlu0 0
        %1725 = vperm.xlu0 %1724, %v1586
        %v1726 = vpop.permute.xlu0 %1725
        %1729 = vset.pattern.permute.xlu0 0
        %1730 = vperm.xlu0 %1729, %v1587
        %v1731 = vpop.permute.xlu0 %1730
        %1734 = vset.pattern.permute.xlu0 0
        %1735 = vperm.xlu0 %1734, %v1588
        %v1736 = vpop.permute.xlu0 %1735
        %1739 = vset.pattern.permute.xlu0 0
        %1740 = vperm.xlu0 %1739, %v1589
        %v1741 = vpop.permute.xlu0 %1740
        %1744 = vset.pattern.permute.xlu0 0
        %1745 = vperm.xlu0 %1744, %v1590
        %v1746 = vpop.permute.xlu0 %1745
        %1749 = vset.pattern.permute.xlu0 0
        %1750 = vperm.xlu0 %1749, %v1591
        %v1751 = vpop.permute.xlu0 %1750
        %v1753 = vlaneseq
        %v1754 = vshrl.u32 %v1753, 7
        %v1755 = vsub.s32 0, %v1754
        %v1756 = vrot.slane %v1592, %v1755
        %v1757 = vmul.f32 %v1596, %v1756
        %v1758 = vmul.f32 %v1601, %v1756
        %v1759 = vmul.f32 %v1606, %v1756
        %v1760 = vmul.f32 %v1611, %v1756
        %v1761 = vmul.f32 %v1616, %v1756
        %v1762 = vmul.f32 %v1621, %v1756
        %v1763 = vmul.f32 %v1626, %v1756
        %v1764 = vmul.f32 %v1631, %v1756
        %v1765 = vmul.f32 %v1636, %v1756
        %v1766 = vmul.f32 %v1641, %v1756
        %v1767 = vmul.f32 %v1646, %v1756
        %v1768 = vmul.f32 %v1651, %v1756
        %v1769 = vmul.f32 %v1656, %v1756
        %v1770 = vmul.f32 %v1661, %v1756
        %v1771 = vmul.f32 %v1666, %v1756
        %v1772 = vmul.f32 %v1671, %v1756
        %v1773 = vmul.f32 %v1676, %v1756
        %v1774 = vmul.f32 %v1681, %v1756
        %v1775 = vmul.f32 %v1686, %v1756
        %v1776 = vmul.f32 %v1691, %v1756
        %v1777 = vmul.f32 %v1696, %v1756
        %v1778 = vmul.f32 %v1701, %v1756
        %v1779 = vmul.f32 %v1706, %v1756
        %v1780 = vmul.f32 %v1711, %v1756
        %v1781 = vmul.f32 %v1716, %v1756
        %v1782 = vmul.f32 %v1721, %v1756
        %v1783 = vmul.f32 %v1726, %v1756
        %v1784 = vmul.f32 %v1731, %v1756
        %v1785 = vmul.f32 %v1736, %v1756
        %v1786 = vmul.f32 %v1741, %v1756
        %v1787 = vmul.f32 %v1746, %v1756
        %v1788 = vmul.f32 %v1751, %v1756
        %v1789 = vadd.f32 %v1528, %v1757
        %v1790 = vadd.f32 %v1529, %v1758
        %v1791 = vadd.f32 %v1530, %v1759
        %v1792 = vadd.f32 %v1531, %v1760
        %v1793 = vadd.f32 %v1532, %v1761
        %v1794 = vadd.f32 %v1533, %v1762
        %v1795 = vadd.f32 %v1534, %v1763
        %v1796 = vadd.f32 %v1535, %v1764
        %v1797 = vadd.f32 %v1536, %v1765
        %v1798 = vadd.f32 %v1537, %v1766
        %v1799 = vadd.f32 %v1538, %v1767
        %v1800 = vadd.f32 %v1539, %v1768
        %v1801 = vadd.f32 %v1540, %v1769
        %v1802 = vadd.f32 %v1541, %v1770
        %v1803 = vadd.f32 %v1542, %v1771
        %v1804 = vadd.f32 %v1543, %v1772
        %v1805 = vadd.f32 %v1544, %v1773
        %v1806 = vadd.f32 %v1545, %v1774
        %v1807 = vadd.f32 %v1546, %v1775
        %v1808 = vadd.f32 %v1547, %v1776
        %v1809 = vadd.f32 %v1548, %v1777
        %v1810 = vadd.f32 %v1549, %v1778
        %v1811 = vadd.f32 %v1550, %v1779
        %v1812 = vadd.f32 %v1551, %v1780
        %v1813 = vadd.f32 %v1552, %v1781
        %v1814 = vadd.f32 %v1553, %v1782
        %v1815 = vadd.f32 %v1554, %v1783
        %v1816 = vadd.f32 %v1555, %v1784
        %v1817 = vadd.f32 %v1556, %v1785
        %v1818 = vadd.f32 %v1557, %v1786
        %v1819 = vadd.f32 %v1558, %v1787
        %v1820 = vadd.f32 %v1559, %v1788
        %v1821 = vld [vmem:[%s1298 + $0x2] sm:$0xff]
        %v1822 = vld [vmem:[%s1298 + $0xa] sm:$0xff]
        %v1823 = vld [vmem:[%s1298 + $0x1a] sm:$0xff]
        %v1824 = vld [vmem:[%s1298 + $0x22] sm:$0xff]
        %v1825 = vld [vmem:[%s1298 + $0x32] sm:$0xff]
        %v1826 = vld [vmem:[%s1298 + $0x3a] sm:$0xff]
        %v1827 = vld [vmem:[%s1298 + $0x4a] sm:$0xff]
        %v1828 = vld [vmem:[%s1298 + $0x52] sm:$0xff]
        %v1829 = vld [vmem:[%s1298 + $0x62] sm:$0xff]
        %v1830 = vld [vmem:[%s1298 + $0x6a] sm:$0xff]
        %v1831 = vld [vmem:[%s1298 + $0x7a] sm:$0xff]
        %v1832 = vld [vmem:[%s1298 + $0x82] sm:$0xff]
        %v1833 = vld [vmem:[%s1298 + $0x92] sm:$0xff]
        %v1834 = vld [vmem:[%s1298 + $0x9a] sm:$0xff]
        %v1835 = vld [vmem:[%s1298 + $0xaa] sm:$0xff]
        %v1836 = vld [vmem:[%s1298 + $0xb2] sm:$0xff]
        %v1837 = vld [vmem:[%s1298 + $0xc2] sm:$0xff]
        %v1838 = vld [vmem:[%s1298 + $0xca] sm:$0xff]
        %v1839 = vld [vmem:[%s1298 + $0xda] sm:$0xff]
        %v1840 = vld [vmem:[%s1298 + $0xe2] sm:$0xff]
        %v1841 = vld [vmem:[%s1298 + $0xf2] sm:$0xff]
        %v1842 = vld [vmem:[%s1298 + $0xfa] sm:$0xff]
        %v1843 = vld [vmem:[%s1298 + $0x10a] sm:$0xff]
        %v1844 = vld [vmem:[%s1298 + $0x112] sm:$0xff]
        %v1845 = vld [vmem:[%s1298 + $0x122] sm:$0xff]
        %v1846 = vld [vmem:[%s1298 + $0x12a] sm:$0xff]
        %v1847 = vld [vmem:[%s1298 + $0x13a] sm:$0xff]
        %v1848 = vld [vmem:[%s1298 + $0x142] sm:$0xff]
        %v1849 = vld [vmem:[%s1298 + $0x152] sm:$0xff]
        %v1850 = vld [vmem:[%s1298 + $0x15a] sm:$0xff]
        %v1851 = vld [vmem:[%s1298 + $0x16a] sm:$0xff]
        %v1852 = vld [vmem:[%s1298 + $0x172] sm:$0xff]
        %v1853 = vld [vmem:[#allocation3 + $0x5] sm:$0x1]
        %1855 = vset.pattern.permute.xlu0 0
        %1856 = vperm.xlu0 %1855, %v1821
        %v1857 = vpop.permute.xlu0 %1856
        %1860 = vset.pattern.permute.xlu0 0
        %1861 = vperm.xlu0 %1860, %v1822
        %v1862 = vpop.permute.xlu0 %1861
        %1865 = vset.pattern.permute.xlu0 0
        %1866 = vperm.xlu0 %1865, %v1823
        %v1867 = vpop.permute.xlu0 %1866
        %1870 = vset.pattern.permute.xlu0 0
        %1871 = vperm.xlu0 %1870, %v1824
        %v1872 = vpop.permute.xlu0 %1871
        %1875 = vset.pattern.permute.xlu0 0
        %1876 = vperm.xlu0 %1875, %v1825
        %v1877 = vpop.permute.xlu0 %1876
        %1880 = vset.pattern.permute.xlu0 0
        %1881 = vperm.xlu0 %1880, %v1826
        %v1882 = vpop.permute.xlu0 %1881
        %1885 = vset.pattern.permute.xlu0 0
        %1886 = vperm.xlu0 %1885, %v1827
        %v1887 = vpop.permute.xlu0 %1886
        %1890 = vset.pattern.permute.xlu0 0
        %1891 = vperm.xlu0 %1890, %v1828
        %v1892 = vpop.permute.xlu0 %1891
        %1895 = vset.pattern.permute.xlu0 0
        %1896 = vperm.xlu0 %1895, %v1829
        %v1897 = vpop.permute.xlu0 %1896
        %1900 = vset.pattern.permute.xlu0 0
        %1901 = vperm.xlu0 %1900, %v1830
        %v1902 = vpop.permute.xlu0 %1901
        %1905 = vset.pattern.permute.xlu0 0
        %1906 = vperm.xlu0 %1905, %v1831
        %v1907 = vpop.permute.xlu0 %1906
        %1910 = vset.pattern.permute.xlu0 0
        %1911 = vperm.xlu0 %1910, %v1832
        %v1912 = vpop.permute.xlu0 %1911
        %1915 = vset.pattern.permute.xlu0 0
        %1916 = vperm.xlu0 %1915, %v1833
        %v1917 = vpop.permute.xlu0 %1916
        %1920 = vset.pattern.permute.xlu0 0
        %1921 = vperm.xlu0 %1920, %v1834
        %v1922 = vpop.permute.xlu0 %1921
        %1925 = vset.pattern.permute.xlu0 0
        %1926 = vperm.xlu0 %1925, %v1835
        %v1927 = vpop.permute.xlu0 %1926
        %1930 = vset.pattern.permute.xlu0 0
        %1931 = vperm.xlu0 %1930, %v1836
        %v1932 = vpop.permute.xlu0 %1931
        %1935 = vset.pattern.permute.xlu0 0
        %1936 = vperm.xlu0 %1935, %v1837
        %v1937 = vpop.permute.xlu0 %1936
        %1940 = vset.pattern.permute.xlu0 0
        %1941 = vperm.xlu0 %1940, %v1838
        %v1942 = vpop.permute.xlu0 %1941
        %1945 = vset.pattern.permute.xlu0 0
        %1946 = vperm.xlu0 %1945, %v1839
        %v1947 = vpop.permute.xlu0 %1946
        %1950 = vset.pattern.permute.xlu0 0
        %1951 = vperm.xlu0 %1950, %v1840
        %v1952 = vpop.permute.xlu0 %1951
        %1955 = vset.pattern.permute.xlu0 0
        %1956 = vperm.xlu0 %1955, %v1841
        %v1957 = vpop.permute.xlu0 %1956
        %1960 = vset.pattern.permute.xlu0 0
        %1961 = vperm.xlu0 %1960, %v1842
        %v1962 = vpop.permute.xlu0 %1961
        %1965 = vset.pattern.permute.xlu0 0
        %1966 = vperm.xlu0 %1965, %v1843
        %v1967 = vpop.permute.xlu0 %1966
        %1970 = vset.pattern.permute.xlu0 0
        %1971 = vperm.xlu0 %1970, %v1844
        %v1972 = vpop.permute.xlu0 %1971
        %1975 = vset.pattern.permute.xlu0 0
        %1976 = vperm.xlu0 %1975, %v1845
        %v1977 = vpop.permute.xlu0 %1976
        %1980 = vset.pattern.permute.xlu0 0
        %1981 = vperm.xlu0 %1980, %v1846
        %v1982 = vpop.permute.xlu0 %1981
        %1985 = vset.pattern.permute.xlu0 0
        %1986 = vperm.xlu0 %1985, %v1847
        %v1987 = vpop.permute.xlu0 %1986
        %1990 = vset.pattern.permute.xlu0 0
        %1991 = vperm.xlu0 %1990, %v1848
        %v1992 = vpop.permute.xlu0 %1991
        %1995 = vset.pattern.permute.xlu0 0
        %1996 = vperm.xlu0 %1995, %v1849
        %v1997 = vpop.permute.xlu0 %1996
        %2000 = vset.pattern.permute.xlu0 0
        %2001 = vperm.xlu0 %2000, %v1850
        %v2002 = vpop.permute.xlu0 %2001
        %2005 = vset.pattern.permute.xlu0 0
        %2006 = vperm.xlu0 %2005, %v1851
        %v2007 = vpop.permute.xlu0 %2006
        %2010 = vset.pattern.permute.xlu0 0
        %2011 = vperm.xlu0 %2010, %v1852
        %v2012 = vpop.permute.xlu0 %2011
        %v2014 = vlaneseq
        %v2015 = vshrl.u32 %v2014, 7
        %v2016 = vsub.s32 0, %v2015
        %v2017 = vrot.slane %v1853, %v2016
        %v2018 = vmul.f32 %v1857, %v2017
        %v2019 = vmul.f32 %v1862, %v2017
        %v2020 = vmul.f32 %v1867, %v2017
        %v2021 = vmul.f32 %v1872, %v2017
        %v2022 = vmul.f32 %v1877, %v2017
        %v2023 = vmul.f32 %v1882, %v2017
        %v2024 = vmul.f32 %v1887, %v2017
        %v2025 = vmul.f32 %v1892, %v2017
        %v2026 = vmul.f32 %v1897, %v2017
        %v2027 = vmul.f32 %v1902, %v2017
        %v2028 = vmul.f32 %v1907, %v2017
        %v2029 = vmul.f32 %v1912, %v2017
        %v2030 = vmul.f32 %v1917, %v2017
        %v2031 = vmul.f32 %v1922, %v2017
        %v2032 = vmul.f32 %v1927, %v2017
        %v2033 = vmul.f32 %v1932, %v2017
        %v2034 = vmul.f32 %v1937, %v2017
        %v2035 = vmul.f32 %v1942, %v2017
        %v2036 = vmul.f32 %v1947, %v2017
        %v2037 = vmul.f32 %v1952, %v2017
        %v2038 = vmul.f32 %v1957, %v2017
        %v2039 = vmul.f32 %v1962, %v2017
        %v2040 = vmul.f32 %v1967, %v2017
        %v2041 = vmul.f32 %v1972, %v2017
        %v2042 = vmul.f32 %v1977, %v2017
        %v2043 = vmul.f32 %v1982, %v2017
        %v2044 = vmul.f32 %v1987, %v2017
        %v2045 = vmul.f32 %v1992, %v2017
        %v2046 = vmul.f32 %v1997, %v2017
        %v2047 = vmul.f32 %v2002, %v2017
        %v2048 = vmul.f32 %v2007, %v2017
        %v2049 = vmul.f32 %v2012, %v2017
        %v2050 = vadd.f32 %v1789, %v2018
        %v2051 = vadd.f32 %v1790, %v2019
        %v2052 = vadd.f32 %v1791, %v2020
        %v2053 = vadd.f32 %v1792, %v2021
        %v2054 = vadd.f32 %v1793, %v2022
        %v2055 = vadd.f32 %v1794, %v2023
        %v2056 = vadd.f32 %v1795, %v2024
        %v2057 = vadd.f32 %v1796, %v2025
        %v2058 = vadd.f32 %v1797, %v2026
        %v2059 = vadd.f32 %v1798, %v2027
        %v2060 = vadd.f32 %v1799, %v2028
        %v2061 = vadd.f32 %v1800, %v2029
        %v2062 = vadd.f32 %v1801, %v2030
        %v2063 = vadd.f32 %v1802, %v2031
        %v2064 = vadd.f32 %v1803, %v2032
        %v2065 = vadd.f32 %v1804, %v2033
        %v2066 = vadd.f32 %v1805, %v2034
        %v2067 = vadd.f32 %v1806, %v2035
        %v2068 = vadd.f32 %v1807, %v2036
        %v2069 = vadd.f32 %v1808, %v2037
        %v2070 = vadd.f32 %v1809, %v2038
        %v2071 = vadd.f32 %v1810, %v2039
        %v2072 = vadd.f32 %v1811, %v2040
        %v2073 = vadd.f32 %v1812, %v2041
        %v2074 = vadd.f32 %v1813, %v2042
        %v2075 = vadd.f32 %v1814, %v2043
        %v2076 = vadd.f32 %v1815, %v2044
        %v2077 = vadd.f32 %v1816, %v2045
        %v2078 = vadd.f32 %v1817, %v2046
        %v2079 = vadd.f32 %v1818, %v2047
        %v2080 = vadd.f32 %v1819, %v2048
        %v2081 = vadd.f32 %v1820, %v2049
        %s2082 = scalar_lea.vmem %s503, 48
        %v2083 = vld [vmem:[%s2082] sm:$0xff]
        %v2084 = vld [vmem:[%s2082 + $0x8] sm:$0xff]
        %v2085 = vld [vmem:[%s2082 + $0x18] sm:$0xff]
        %v2086 = vld [vmem:[%s2082 + $0x20] sm:$0xff]
        %v2087 = vld [vmem:[%s2082 + $0x30] sm:$0xff]
        %v2088 = vld [vmem:[%s2082 + $0x38] sm:$0xff]
        %v2089 = vld [vmem:[%s2082 + $0x48] sm:$0xff]
        %v2090 = vld [vmem:[%s2082 + $0x50] sm:$0xff]
        %v2091 = vld [vmem:[%s2082 + $0x60] sm:$0xff]
        %v2092 = vld [vmem:[%s2082 + $0x68] sm:$0xff]
        %v2093 = vld [vmem:[%s2082 + $0x78] sm:$0xff]
        %v2094 = vld [vmem:[%s2082 + $0x80] sm:$0xff]
        %v2095 = vld [vmem:[%s2082 + $0x90] sm:$0xff]
        %v2096 = vld [vmem:[%s2082 + $0x98] sm:$0xff]
        %v2097 = vld [vmem:[%s2082 + $0xa8] sm:$0xff]
        %v2098 = vld [vmem:[%s2082 + $0xb0] sm:$0xff]
        %v2099 = vld [vmem:[%s2082 + $0xc0] sm:$0xff]
        %v2100 = vld [vmem:[%s2082 + $0xc8] sm:$0xff]
        %v2101 = vld [vmem:[%s2082 + $0xd8] sm:$0xff]
        %v2102 = vld [vmem:[%s2082 + $0xe0] sm:$0xff]
        %v2103 = vld [vmem:[%s2082 + $0xf0] sm:$0xff]
        %v2104 = vld [vmem:[%s2082 + $0xf8] sm:$0xff]
        %v2105 = vld [vmem:[%s2082 + $0x108] sm:$0xff]
        %v2106 = vld [vmem:[%s2082 + $0x110] sm:$0xff]
        %v2107 = vld [vmem:[%s2082 + $0x120] sm:$0xff]
        %v2108 = vld [vmem:[%s2082 + $0x128] sm:$0xff]
        %v2109 = vld [vmem:[%s2082 + $0x138] sm:$0xff]
        %v2110 = vld [vmem:[%s2082 + $0x140] sm:$0xff]
        %v2111 = vld [vmem:[%s2082 + $0x150] sm:$0xff]
        %v2112 = vld [vmem:[%s2082 + $0x158] sm:$0xff]
        %v2113 = vld [vmem:[%s2082 + $0x168] sm:$0xff]
        %v2114 = vld [vmem:[%s2082 + $0x170] sm:$0xff]
        %v2115 = vld [vmem:[#allocation3 + $0x6] sm:$0x1]
        %2117 = vset.pattern.permute.xlu0 0
        %2118 = vperm.xlu0 %2117, %v2083
        %v2119 = vpop.permute.xlu0 %2118
        %2122 = vset.pattern.permute.xlu0 0
        %2123 = vperm.xlu0 %2122, %v2084
        %v2124 = vpop.permute.xlu0 %2123
        %2127 = vset.pattern.permute.xlu0 0
        %2128 = vperm.xlu0 %2127, %v2085
        %v2129 = vpop.permute.xlu0 %2128
        %2132 = vset.pattern.permute.xlu0 0
        %2133 = vperm.xlu0 %2132, %v2086
        %v2134 = vpop.permute.xlu0 %2133
        %2137 = vset.pattern.permute.xlu0 0
        %2138 = vperm.xlu0 %2137, %v2087
        %v2139 = vpop.permute.xlu0 %2138
        %2142 = vset.pattern.permute.xlu0 0
        %2143 = vperm.xlu0 %2142, %v2088
        %v2144 = vpop.permute.xlu0 %2143
        %2147 = vset.pattern.permute.xlu0 0
        %2148 = vperm.xlu0 %2147, %v2089
        %v2149 = vpop.permute.xlu0 %2148
        %2152 = vset.pattern.permute.xlu0 0
        %2153 = vperm.xlu0 %2152, %v2090
        %v2154 = vpop.permute.xlu0 %2153
        %2157 = vset.pattern.permute.xlu0 0
        %2158 = vperm.xlu0 %2157, %v2091
        %v2159 = vpop.permute.xlu0 %2158
        %2162 = vset.pattern.permute.xlu0 0
        %2163 = vperm.xlu0 %2162, %v2092
        %v2164 = vpop.permute.xlu0 %2163
        %2167 = vset.pattern.permute.xlu0 0
        %2168 = vperm.xlu0 %2167, %v2093
        %v2169 = vpop.permute.xlu0 %2168
        %2172 = vset.pattern.permute.xlu0 0
        %2173 = vperm.xlu0 %2172, %v2094
        %v2174 = vpop.permute.xlu0 %2173
        %2177 = vset.pattern.permute.xlu0 0
        %2178 = vperm.xlu0 %2177, %v2095
        %v2179 = vpop.permute.xlu0 %2178
        %2182 = vset.pattern.permute.xlu0 0
        %2183 = vperm.xlu0 %2182, %v2096
        %v2184 = vpop.permute.xlu0 %2183
        %2187 = vset.pattern.permute.xlu0 0
        %2188 = vperm.xlu0 %2187, %v2097
        %v2189 = vpop.permute.xlu0 %2188
        %2192 = vset.pattern.permute.xlu0 0
        %2193 = vperm.xlu0 %2192, %v2098
        %v2194 = vpop.permute.xlu0 %2193
        %2197 = vset.pattern.permute.xlu0 0
        %2198 = vperm.xlu0 %2197, %v2099
        %v2199 = vpop.permute.xlu0 %2198
        %2202 = vset.pattern.permute.xlu0 0
        %2203 = vperm.xlu0 %2202, %v2100
        %v2204 = vpop.permute.xlu0 %2203
        %2207 = vset.pattern.permute.xlu0 0
        %2208 = vperm.xlu0 %2207, %v2101
        %v2209 = vpop.permute.xlu0 %2208
        %2212 = vset.pattern.permute.xlu0 0
        %2213 = vperm.xlu0 %2212, %v2102
        %v2214 = vpop.permute.xlu0 %2213
        %2217 = vset.pattern.permute.xlu0 0
        %2218 = vperm.xlu0 %2217, %v2103
        %v2219 = vpop.permute.xlu0 %2218
        %2222 = vset.pattern.permute.xlu0 0
        %2223 = vperm.xlu0 %2222, %v2104
        %v2224 = vpop.permute.xlu0 %2223
        %2227 = vset.pattern.permute.xlu0 0
        %2228 = vperm.xlu0 %2227, %v2105
        %v2229 = vpop.permute.xlu0 %2228
        %2232 = vset.pattern.permute.xlu0 0
        %2233 = vperm.xlu0 %2232, %v2106
        %v2234 = vpop.permute.xlu0 %2233
        %2237 = vset.pattern.permute.xlu0 0
        %2238 = vperm.xlu0 %2237, %v2107
        %v2239 = vpop.permute.xlu0 %2238
        %2242 = vset.pattern.permute.xlu0 0
        %2243 = vperm.xlu0 %2242, %v2108
        %v2244 = vpop.permute.xlu0 %2243
        %2247 = vset.pattern.permute.xlu0 0
        %2248 = vperm.xlu0 %2247, %v2109
        %v2249 = vpop.permute.xlu0 %2248
        %2252 = vset.pattern.permute.xlu0 0
        %2253 = vperm.xlu0 %2252, %v2110
        %v2254 = vpop.permute.xlu0 %2253
        %2257 = vset.pattern.permute.xlu0 0
        %2258 = vperm.xlu0 %2257, %v2111
        %v2259 = vpop.permute.xlu0 %2258
        %2262 = vset.pattern.permute.xlu0 0
        %2263 = vperm.xlu0 %2262, %v2112
        %v2264 = vpop.permute.xlu0 %2263
        %2267 = vset.pattern.permute.xlu0 0
        %2268 = vperm.xlu0 %2267, %v2113
        %v2269 = vpop.permute.xlu0 %2268
        %2272 = vset.pattern.permute.xlu0 0
        %2273 = vperm.xlu0 %2272, %v2114
        %v2274 = vpop.permute.xlu0 %2273
        %v2276 = vlaneseq
        %v2277 = vshrl.u32 %v2276, 7
        %v2278 = vsub.s32 0, %v2277
        %v2279 = vrot.slane %v2115, %v2278
        %v2280 = vmul.f32 %v2119, %v2279
        %v2281 = vmul.f32 %v2124, %v2279
        %v2282 = vmul.f32 %v2129, %v2279
        %v2283 = vmul.f32 %v2134, %v2279
        %v2284 = vmul.f32 %v2139, %v2279
        %v2285 = vmul.f32 %v2144, %v2279
        %v2286 = vmul.f32 %v2149, %v2279
        %v2287 = vmul.f32 %v2154, %v2279
        %v2288 = vmul.f32 %v2159, %v2279
        %v2289 = vmul.f32 %v2164, %v2279
        %v2290 = vmul.f32 %v2169, %v2279
        %v2291 = vmul.f32 %v2174, %v2279
        %v2292 = vmul.f32 %v2179, %v2279
        %v2293 = vmul.f32 %v2184, %v2279
        %v2294 = vmul.f32 %v2189, %v2279
        %v2295 = vmul.f32 %v2194, %v2279
        %v2296 = vmul.f32 %v2199, %v2279
        %v2297 = vmul.f32 %v2204, %v2279
        %v2298 = vmul.f32 %v2209, %v2279
        %v2299 = vmul.f32 %v2214, %v2279
        %v2300 = vmul.f32 %v2219, %v2279
        %v2301 = vmul.f32 %v2224, %v2279
        %v2302 = vmul.f32 %v2229, %v2279
        %v2303 = vmul.f32 %v2234, %v2279
        %v2304 = vmul.f32 %v2239, %v2279
        %v2305 = vmul.f32 %v2244, %v2279
        %v2306 = vmul.f32 %v2249, %v2279
        %v2307 = vmul.f32 %v2254, %v2279
        %v2308 = vmul.f32 %v2259, %v2279
        %v2309 = vmul.f32 %v2264, %v2279
        %v2310 = vmul.f32 %v2269, %v2279
        %v2311 = vmul.f32 %v2274, %v2279
        %v2312 = vadd.f32 %v2050, %v2280
        %v2313 = vadd.f32 %v2051, %v2281
        %v2314 = vadd.f32 %v2052, %v2282
        %v2315 = vadd.f32 %v2053, %v2283
        %v2316 = vadd.f32 %v2054, %v2284
        %v2317 = vadd.f32 %v2055, %v2285
        %v2318 = vadd.f32 %v2056, %v2286
        %v2319 = vadd.f32 %v2057, %v2287
        %v2320 = vadd.f32 %v2058, %v2288
        %v2321 = vadd.f32 %v2059, %v2289
        %v2322 = vadd.f32 %v2060, %v2290
        %v2323 = vadd.f32 %v2061, %v2291
        %v2324 = vadd.f32 %v2062, %v2292
        %v2325 = vadd.f32 %v2063, %v2293
        %v2326 = vadd.f32 %v2064, %v2294
        %v2327 = vadd.f32 %v2065, %v2295
        %v2328 = vadd.f32 %v2066, %v2296
        %v2329 = vadd.f32 %v2067, %v2297
        %v2330 = vadd.f32 %v2068, %v2298
        %v2331 = vadd.f32 %v2069, %v2299
        %v2332 = vadd.f32 %v2070, %v2300
        %v2333 = vadd.f32 %v2071, %v2301
        %v2334 = vadd.f32 %v2072, %v2302
        %v2335 = vadd.f32 %v2073, %v2303
        %v2336 = vadd.f32 %v2074, %v2304
        %v2337 = vadd.f32 %v2075, %v2305
        %v2338 = vadd.f32 %v2076, %v2306
        %v2339 = vadd.f32 %v2077, %v2307
        %v2340 = vadd.f32 %v2078, %v2308
        %v2341 = vadd.f32 %v2079, %v2309
        %v2342 = vadd.f32 %v2080, %v2310
        %v2343 = vadd.f32 %v2081, %v2311
        %v2344 = vld [vmem:[%s2082 + $0x1] sm:$0xff]
        %v2345 = vld [vmem:[%s2082 + $0x9] sm:$0xff]
        %v2346 = vld [vmem:[%s2082 + $0x19] sm:$0xff]
        %v2347 = vld [vmem:[%s2082 + $0x21] sm:$0xff]
        %v2348 = vld [vmem:[%s2082 + $0x31] sm:$0xff]
        %v2349 = vld [vmem:[%s2082 + $0x39] sm:$0xff]
        %v2350 = vld [vmem:[%s2082 + $0x49] sm:$0xff]
        %v2351 = vld [vmem:[%s2082 + $0x51] sm:$0xff]
        %v2352 = vld [vmem:[%s2082 + $0x61] sm:$0xff]
        %v2353 = vld [vmem:[%s2082 + $0x69] sm:$0xff]
        %v2354 = vld [vmem:[%s2082 + $0x79] sm:$0xff]
        %v2355 = vld [vmem:[%s2082 + $0x81] sm:$0xff]
        %v2356 = vld [vmem:[%s2082 + $0x91] sm:$0xff]
        %v2357 = vld [vmem:[%s2082 + $0x99] sm:$0xff]
        %v2358 = vld [vmem:[%s2082 + $0xa9] sm:$0xff]
        %v2359 = vld [vmem:[%s2082 + $0xb1] sm:$0xff]
        %v2360 = vld [vmem:[%s2082 + $0xc1] sm:$0xff]
        %v2361 = vld [vmem:[%s2082 + $0xc9] sm:$0xff]
        %v2362 = vld [vmem:[%s2082 + $0xd9] sm:$0xff]
        %v2363 = vld [vmem:[%s2082 + $0xe1] sm:$0xff]
        %v2364 = vld [vmem:[%s2082 + $0xf1] sm:$0xff]
        %v2365 = vld [vmem:[%s2082 + $0xf9] sm:$0xff]
        %v2366 = vld [vmem:[%s2082 + $0x109] sm:$0xff]
        %v2367 = vld [vmem:[%s2082 + $0x111] sm:$0xff]
        %v2368 = vld [vmem:[%s2082 + $0x121] sm:$0xff]
        %v2369 = vld [vmem:[%s2082 + $0x129] sm:$0xff]
        %v2370 = vld [vmem:[%s2082 + $0x139] sm:$0xff]
        %v2371 = vld [vmem:[%s2082 + $0x141] sm:$0xff]
        %v2372 = vld [vmem:[%s2082 + $0x151] sm:$0xff]
        %v2373 = vld [vmem:[%s2082 + $0x159] sm:$0xff]
        %v2374 = vld [vmem:[%s2082 + $0x169] sm:$0xff]
        %v2375 = vld [vmem:[%s2082 + $0x171] sm:$0xff]
        %v2376 = vld [vmem:[#allocation3 + $0x7] sm:$0x1]
        %2378 = vset.pattern.permute.xlu0 0
        %2379 = vperm.xlu0 %2378, %v2344
        %v2380 = vpop.permute.xlu0 %2379
        %2383 = vset.pattern.permute.xlu0 0
        %2384 = vperm.xlu0 %2383, %v2345
        %v2385 = vpop.permute.xlu0 %2384
        %2388 = vset.pattern.permute.xlu0 0
        %2389 = vperm.xlu0 %2388, %v2346
        %v2390 = vpop.permute.xlu0 %2389
        %2393 = vset.pattern.permute.xlu0 0
        %2394 = vperm.xlu0 %2393, %v2347
        %v2395 = vpop.permute.xlu0 %2394
        %2398 = vset.pattern.permute.xlu0 0
        %2399 = vperm.xlu0 %2398, %v2348
        %v2400 = vpop.permute.xlu0 %2399
        %2403 = vset.pattern.permute.xlu0 0
        %2404 = vperm.xlu0 %2403, %v2349
        %v2405 = vpop.permute.xlu0 %2404
        %2408 = vset.pattern.permute.xlu0 0
        %2409 = vperm.xlu0 %2408, %v2350
        %v2410 = vpop.permute.xlu0 %2409
        %2413 = vset.pattern.permute.xlu0 0
        %2414 = vperm.xlu0 %2413, %v2351
        %v2415 = vpop.permute.xlu0 %2414
        %2418 = vset.pattern.permute.xlu0 0
        %2419 = vperm.xlu0 %2418, %v2352
        %v2420 = vpop.permute.xlu0 %2419
        %2423 = vset.pattern.permute.xlu0 0
        %2424 = vperm.xlu0 %2423, %v2353
        %v2425 = vpop.permute.xlu0 %2424
        %2428 = vset.pattern.permute.xlu0 0
        %2429 = vperm.xlu0 %2428, %v2354
        %v2430 = vpop.permute.xlu0 %2429
        %2433 = vset.pattern.permute.xlu0 0
        %2434 = vperm.xlu0 %2433, %v2355
        %v2435 = vpop.permute.xlu0 %2434
        %2438 = vset.pattern.permute.xlu0 0
        %2439 = vperm.xlu0 %2438, %v2356
        %v2440 = vpop.permute.xlu0 %2439
        %2443 = vset.pattern.permute.xlu0 0
        %2444 = vperm.xlu0 %2443, %v2357
        %v2445 = vpop.permute.xlu0 %2444
        %2448 = vset.pattern.permute.xlu0 0
        %2449 = vperm.xlu0 %2448, %v2358
        %v2450 = vpop.permute.xlu0 %2449
        %2453 = vset.pattern.permute.xlu0 0
        %2454 = vperm.xlu0 %2453, %v2359
        %v2455 = vpop.permute.xlu0 %2454
        %2458 = vset.pattern.permute.xlu0 0
        %2459 = vperm.xlu0 %2458, %v2360
        %v2460 = vpop.permute.xlu0 %2459
        %2463 = vset.pattern.permute.xlu0 0
        %2464 = vperm.xlu0 %2463, %v2361
        %v2465 = vpop.permute.xlu0 %2464
        %2468 = vset.pattern.permute.xlu0 0
        %2469 = vperm.xlu0 %2468, %v2362
        %v2470 = vpop.permute.xlu0 %2469
        %2473 = vset.pattern.permute.xlu0 0
        %2474 = vperm.xlu0 %2473, %v2363
        %v2475 = vpop.permute.xlu0 %2474
        %2478 = vset.pattern.permute.xlu0 0
        %2479 = vperm.xlu0 %2478, %v2364
        %v2480 = vpop.permute.xlu0 %2479
        %2483 = vset.pattern.permute.xlu0 0
        %2484 = vperm.xlu0 %2483, %v2365
        %v2485 = vpop.permute.xlu0 %2484
        %2488 = vset.pattern.permute.xlu0 0
        %2489 = vperm.xlu0 %2488, %v2366
        %v2490 = vpop.permute.xlu0 %2489
        %2493 = vset.pattern.permute.xlu0 0
        %2494 = vperm.xlu0 %2493, %v2367
        %v2495 = vpop.permute.xlu0 %2494
        %2498 = vset.pattern.permute.xlu0 0
        %2499 = vperm.xlu0 %2498, %v2368
        %v2500 = vpop.permute.xlu0 %2499
        %2503 = vset.pattern.permute.xlu0 0
        %2504 = vperm.xlu0 %2503, %v2369
        %v2505 = vpop.permute.xlu0 %2504
        %2508 = vset.pattern.permute.xlu0 0
        %2509 = vperm.xlu0 %2508, %v2370
        %v2510 = vpop.permute.xlu0 %2509
        %2513 = vset.pattern.permute.xlu0 0
        %2514 = vperm.xlu0 %2513, %v2371
        %v2515 = vpop.permute.xlu0 %2514
        %2518 = vset.pattern.permute.xlu0 0
        %2519 = vperm.xlu0 %2518, %v2372
        %v2520 = vpop.permute.xlu0 %2519
        %2523 = vset.pattern.permute.xlu0 0
        %2524 = vperm.xlu0 %2523, %v2373
        %v2525 = vpop.permute.xlu0 %2524
        %2528 = vset.pattern.permute.xlu0 0
        %2529 = vperm.xlu0 %2528, %v2374
        %v2530 = vpop.permute.xlu0 %2529
        %2533 = vset.pattern.permute.xlu0 0
        %2534 = vperm.xlu0 %2533, %v2375
        %v2535 = vpop.permute.xlu0 %2534
        %v2537 = vlaneseq
        %v2538 = vshrl.u32 %v2537, 7
        %v2539 = vsub.s32 0, %v2538
        %v2540 = vrot.slane %v2376, %v2539
        %v2541 = vmul.f32 %v2380, %v2540
        %v2542 = vmul.f32 %v2385, %v2540
        %v2543 = vmul.f32 %v2390, %v2540
        %v2544 = vmul.f32 %v2395, %v2540
        %v2545 = vmul.f32 %v2400, %v2540
        %v2546 = vmul.f32 %v2405, %v2540
        %v2547 = vmul.f32 %v2410, %v2540
        %v2548 = vmul.f32 %v2415, %v2540
        %v2549 = vmul.f32 %v2420, %v2540
        %v2550 = vmul.f32 %v2425, %v2540
        %v2551 = vmul.f32 %v2430, %v2540
        %v2552 = vmul.f32 %v2435, %v2540
        %v2553 = vmul.f32 %v2440, %v2540
        %v2554 = vmul.f32 %v2445, %v2540
        %v2555 = vmul.f32 %v2450, %v2540
        %v2556 = vmul.f32 %v2455, %v2540
        %v2557 = vmul.f32 %v2460, %v2540
        %v2558 = vmul.f32 %v2465, %v2540
        %v2559 = vmul.f32 %v2470, %v2540
        %v2560 = vmul.f32 %v2475, %v2540
        %v2561 = vmul.f32 %v2480, %v2540
        %v2562 = vmul.f32 %v2485, %v2540
        %v2563 = vmul.f32 %v2490, %v2540
        %v2564 = vmul.f32 %v2495, %v2540
        %v2565 = vmul.f32 %v2500, %v2540
        %v2566 = vmul.f32 %v2505, %v2540
        %v2567 = vmul.f32 %v2510, %v2540
        %v2568 = vmul.f32 %v2515, %v2540
        %v2569 = vmul.f32 %v2520, %v2540
        %v2570 = vmul.f32 %v2525, %v2540
        %v2571 = vmul.f32 %v2530, %v2540
        %v2572 = vmul.f32 %v2535, %v2540
        %v2573 = vadd.f32 %v2312, %v2541
        %v2574 = vadd.f32 %v2313, %v2542
        %v2575 = vadd.f32 %v2314, %v2543
        %v2576 = vadd.f32 %v2315, %v2544
        %v2577 = vadd.f32 %v2316, %v2545
        %v2578 = vadd.f32 %v2317, %v2546
        %v2579 = vadd.f32 %v2318, %v2547
        %v2580 = vadd.f32 %v2319, %v2548
        %v2581 = vadd.f32 %v2320, %v2549
        %v2582 = vadd.f32 %v2321, %v2550
        %v2583 = vadd.f32 %v2322, %v2551
        %v2584 = vadd.f32 %v2323, %v2552
        %v2585 = vadd.f32 %v2324, %v2553
        %v2586 = vadd.f32 %v2325, %v2554
        %v2587 = vadd.f32 %v2326, %v2555
        %v2588 = vadd.f32 %v2327, %v2556
        %v2589 = vadd.f32 %v2328, %v2557
        %v2590 = vadd.f32 %v2329, %v2558
        %v2591 = vadd.f32 %v2330, %v2559
        %v2592 = vadd.f32 %v2331, %v2560
        %v2593 = vadd.f32 %v2332, %v2561
        %v2594 = vadd.f32 %v2333, %v2562
        %v2595 = vadd.f32 %v2334, %v2563
        %v2596 = vadd.f32 %v2335, %v2564
        %v2597 = vadd.f32 %v2336, %v2565
        %v2598 = vadd.f32 %v2337, %v2566
        %v2599 = vadd.f32 %v2338, %v2567
        %v2600 = vadd.f32 %v2339, %v2568
        %v2601 = vadd.f32 %v2340, %v2569
        %v2602 = vadd.f32 %v2341, %v2570
        %v2603 = vadd.f32 %v2342, %v2571
        %v2604 = vadd.f32 %v2343, %v2572
        %v2605 = vld [vmem:[%s2082 + $0x2] sm:$0xff]
        %v2606 = vld [vmem:[%s2082 + $0xa] sm:$0xff]
        %v2607 = vld [vmem:[%s2082 + $0x1a] sm:$0xff]
        %v2608 = vld [vmem:[%s2082 + $0x22] sm:$0xff]
        %v2609 = vld [vmem:[%s2082 + $0x32] sm:$0xff]
        %v2610 = vld [vmem:[%s2082 + $0x3a] sm:$0xff]
        %v2611 = vld [vmem:[%s2082 + $0x4a] sm:$0xff]
        %v2612 = vld [vmem:[%s2082 + $0x52] sm:$0xff]
        %v2613 = vld [vmem:[%s2082 + $0x62] sm:$0xff]
        %v2614 = vld [vmem:[%s2082 + $0x6a] sm:$0xff]
        %v2615 = vld [vmem:[%s2082 + $0x7a] sm:$0xff]
        %v2616 = vld [vmem:[%s2082 + $0x82] sm:$0xff]
        %v2617 = vld [vmem:[%s2082 + $0x92] sm:$0xff]
        %v2618 = vld [vmem:[%s2082 + $0x9a] sm:$0xff]
        %v2619 = vld [vmem:[%s2082 + $0xaa] sm:$0xff]
        %v2620 = vld [vmem:[%s2082 + $0xb2] sm:$0xff]
        %v2621 = vld [vmem:[%s2082 + $0xc2] sm:$0xff]
        %v2622 = vld [vmem:[%s2082 + $0xca] sm:$0xff]
        %v2623 = vld [vmem:[%s2082 + $0xda] sm:$0xff]
        %v2624 = vld [vmem:[%s2082 + $0xe2] sm:$0xff]
        %v2625 = vld [vmem:[%s2082 + $0xf2] sm:$0xff]
        %v2626 = vld [vmem:[%s2082 + $0xfa] sm:$0xff]
        %v2627 = vld [vmem:[%s2082 + $0x10a] sm:$0xff]
        %v2628 = vld [vmem:[%s2082 + $0x112] sm:$0xff]
        %v2629 = vld [vmem:[%s2082 + $0x122] sm:$0xff]
        %v2630 = vld [vmem:[%s2082 + $0x12a] sm:$0xff]
        %v2631 = vld [vmem:[%s2082 + $0x13a] sm:$0xff]
        %v2632 = vld [vmem:[%s2082 + $0x142] sm:$0xff]
        %v2633 = vld [vmem:[%s2082 + $0x152] sm:$0xff]
        %v2634 = vld [vmem:[%s2082 + $0x15a] sm:$0xff]
        %v2635 = vld [vmem:[%s2082 + $0x16a] sm:$0xff]
        %v2636 = vld [vmem:[%s2082 + $0x172] sm:$0xff]
        %v2637 = vld [vmem:[#allocation3 + $0x8] sm:$0x1]
        %2639 = vset.pattern.permute.xlu0 0
        %2640 = vperm.xlu0 %2639, %v2605
        %v2641 = vpop.permute.xlu0 %2640
        %2644 = vset.pattern.permute.xlu0 0
        %2645 = vperm.xlu0 %2644, %v2606
        %v2646 = vpop.permute.xlu0 %2645
        %2649 = vset.pattern.permute.xlu0 0
        %2650 = vperm.xlu0 %2649, %v2607
        %v2651 = vpop.permute.xlu0 %2650
        %2654 = vset.pattern.permute.xlu0 0
        %2655 = vperm.xlu0 %2654, %v2608
        %v2656 = vpop.permute.xlu0 %2655
        %2659 = vset.pattern.permute.xlu0 0
        %2660 = vperm.xlu0 %2659, %v2609
        %v2661 = vpop.permute.xlu0 %2660
        %2664 = vset.pattern.permute.xlu0 0
        %2665 = vperm.xlu0 %2664, %v2610
        %v2666 = vpop.permute.xlu0 %2665
        %2669 = vset.pattern.permute.xlu0 0
        %2670 = vperm.xlu0 %2669, %v2611
        %v2671 = vpop.permute.xlu0 %2670
        %2674 = vset.pattern.permute.xlu0 0
        %2675 = vperm.xlu0 %2674, %v2612
        %v2676 = vpop.permute.xlu0 %2675
        %2679 = vset.pattern.permute.xlu0 0
        %2680 = vperm.xlu0 %2679, %v2613
        %v2681 = vpop.permute.xlu0 %2680
        %2684 = vset.pattern.permute.xlu0 0
        %2685 = vperm.xlu0 %2684, %v2614
        %v2686 = vpop.permute.xlu0 %2685
        %2689 = vset.pattern.permute.xlu0 0
        %2690 = vperm.xlu0 %2689, %v2615
        %v2691 = vpop.permute.xlu0 %2690
        %2694 = vset.pattern.permute.xlu0 0
        %2695 = vperm.xlu0 %2694, %v2616
        %v2696 = vpop.permute.xlu0 %2695
        %2699 = vset.pattern.permute.xlu0 0
        %2700 = vperm.xlu0 %2699, %v2617
        %v2701 = vpop.permute.xlu0 %2700
        %2704 = vset.pattern.permute.xlu0 0
        %2705 = vperm.xlu0 %2704, %v2618
        %v2706 = vpop.permute.xlu0 %2705
        %2709 = vset.pattern.permute.xlu0 0
        %2710 = vperm.xlu0 %2709, %v2619
        %v2711 = vpop.permute.xlu0 %2710
        %2714 = vset.pattern.permute.xlu0 0
        %2715 = vperm.xlu0 %2714, %v2620
        %v2716 = vpop.permute.xlu0 %2715
        %2719 = vset.pattern.permute.xlu0 0
        %2720 = vperm.xlu0 %2719, %v2621
        %v2721 = vpop.permute.xlu0 %2720
        %2724 = vset.pattern.permute.xlu0 0
        %2725 = vperm.xlu0 %2724, %v2622
        %v2726 = vpop.permute.xlu0 %2725
        %2729 = vset.pattern.permute.xlu0 0
        %2730 = vperm.xlu0 %2729, %v2623
        %v2731 = vpop.permute.xlu0 %2730
        %2734 = vset.pattern.permute.xlu0 0
        %2735 = vperm.xlu0 %2734, %v2624
        %v2736 = vpop.permute.xlu0 %2735
        %2739 = vset.pattern.permute.xlu0 0
        %2740 = vperm.xlu0 %2739, %v2625
        %v2741 = vpop.permute.xlu0 %2740
        %2744 = vset.pattern.permute.xlu0 0
        %2745 = vperm.xlu0 %2744, %v2626
        %v2746 = vpop.permute.xlu0 %2745
        %2749 = vset.pattern.permute.xlu0 0
        %2750 = vperm.xlu0 %2749, %v2627
        %v2751 = vpop.permute.xlu0 %2750
        %2754 = vset.pattern.permute.xlu0 0
        %2755 = vperm.xlu0 %2754, %v2628
        %v2756 = vpop.permute.xlu0 %2755
        %2759 = vset.pattern.permute.xlu0 0
        %2760 = vperm.xlu0 %2759, %v2629
        %v2761 = vpop.permute.xlu0 %2760
        %2764 = vset.pattern.permute.xlu0 0
        %2765 = vperm.xlu0 %2764, %v2630
        %v2766 = vpop.permute.xlu0 %2765
        %2769 = vset.pattern.permute.xlu0 0
        %2770 = vperm.xlu0 %2769, %v2631
        %v2771 = vpop.permute.xlu0 %2770
        %2774 = vset.pattern.permute.xlu0 0
        %2775 = vperm.xlu0 %2774, %v2632
        %v2776 = vpop.permute.xlu0 %2775
        %2779 = vset.pattern.permute.xlu0 0
        %2780 = vperm.xlu0 %2779, %v2633
        %v2781 = vpop.permute.xlu0 %2780
        %2784 = vset.pattern.permute.xlu0 0
        %2785 = vperm.xlu0 %2784, %v2634
        %v2786 = vpop.permute.xlu0 %2785
        %2789 = vset.pattern.permute.xlu0 0
        %2790 = vperm.xlu0 %2789, %v2635
        %v2791 = vpop.permute.xlu0 %2790
        %2794 = vset.pattern.permute.xlu0 0
        %2795 = vperm.xlu0 %2794, %v2636
        %v2796 = vpop.permute.xlu0 %2795
        %v2798 = vlaneseq
        %v2799 = vshrl.u32 %v2798, 7
        %v2800 = vsub.s32 0, %v2799
        %v2801 = vrot.slane %v2637, %v2800
        %v2802 = vmul.f32 %v2641, %v2801
        %v2803 = vmul.f32 %v2646, %v2801
        %v2804 = vmul.f32 %v2651, %v2801
        %v2805 = vmul.f32 %v2656, %v2801
        %v2806 = vmul.f32 %v2661, %v2801
        %v2807 = vmul.f32 %v2666, %v2801
        %v2808 = vmul.f32 %v2671, %v2801
        %v2809 = vmul.f32 %v2676, %v2801
        %v2810 = vmul.f32 %v2681, %v2801
        %v2811 = vmul.f32 %v2686, %v2801
        %v2812 = vmul.f32 %v2691, %v2801
        %v2813 = vmul.f32 %v2696, %v2801
        %v2814 = vmul.f32 %v2701, %v2801
        %v2815 = vmul.f32 %v2706, %v2801
        %v2816 = vmul.f32 %v2711, %v2801
        %v2817 = vmul.f32 %v2716, %v2801
        %v2818 = vmul.f32 %v2721, %v2801
        %v2819 = vmul.f32 %v2726, %v2801
        %v2820 = vmul.f32 %v2731, %v2801
        %v2821 = vmul.f32 %v2736, %v2801
        %v2822 = vmul.f32 %v2741, %v2801
        %v2823 = vmul.f32 %v2746, %v2801
        %v2824 = vmul.f32 %v2751, %v2801
        %v2825 = vmul.f32 %v2756, %v2801
        %v2826 = vmul.f32 %v2761, %v2801
        %v2827 = vmul.f32 %v2766, %v2801
        %v2828 = vmul.f32 %v2771, %v2801
        %v2829 = vmul.f32 %v2776, %v2801
        %v2830 = vmul.f32 %v2781, %v2801
        %v2831 = vmul.f32 %v2786, %v2801
        %v2832 = vmul.f32 %v2791, %v2801
        %v2833 = vmul.f32 %v2796, %v2801
        %v2834 = vadd.f32 %v2573, %v2802
        %v2835 = vadd.f32 %v2574, %v2803
        %v2836 = vadd.f32 %v2575, %v2804
        %v2837 = vadd.f32 %v2576, %v2805
        %v2838 = vadd.f32 %v2577, %v2806
        %v2839 = vadd.f32 %v2578, %v2807
        %v2840 = vadd.f32 %v2579, %v2808
        %v2841 = vadd.f32 %v2580, %v2809
        %v2842 = vadd.f32 %v2581, %v2810
        %v2843 = vadd.f32 %v2582, %v2811
        %v2844 = vadd.f32 %v2583, %v2812
        %v2845 = vadd.f32 %v2584, %v2813
        %v2846 = vadd.f32 %v2585, %v2814
        %v2847 = vadd.f32 %v2586, %v2815
        %v2848 = vadd.f32 %v2587, %v2816
        %v2849 = vadd.f32 %v2588, %v2817
        %v2850 = vadd.f32 %v2589, %v2818
        %v2851 = vadd.f32 %v2590, %v2819
        %v2852 = vadd.f32 %v2591, %v2820
        %v2853 = vadd.f32 %v2592, %v2821
        %v2854 = vadd.f32 %v2593, %v2822
        %v2855 = vadd.f32 %v2594, %v2823
        %v2856 = vadd.f32 %v2595, %v2824
        %v2857 = vadd.f32 %v2596, %v2825
        %v2858 = vadd.f32 %v2597, %v2826
        %v2859 = vadd.f32 %v2598, %v2827
        %v2860 = vadd.f32 %v2599, %v2828
        %v2861 = vadd.f32 %v2600, %v2829
        %v2862 = vadd.f32 %v2601, %v2830
        %v2863 = vadd.f32 %v2602, %v2831
        %v2864 = vadd.f32 %v2603, %v2832
        %v2865 = vadd.f32 %v2604, %v2833
        %vm2866 = vcmp.ge.f32.partialorder %v2834, 0.0
        %vm2867 = vcmp.ge.f32.partialorder %v2835, 0.0
        %vm2868 = vcmp.ge.f32.partialorder %v2836, 0.0
        %vm2869 = vcmp.ge.f32.partialorder %v2837, 0.0
        %vm2870 = vcmp.ge.f32.partialorder %v2838, 0.0
        %vm2871 = vcmp.ge.f32.partialorder %v2839, 0.0
        %vm2872 = vcmp.ge.f32.partialorder %v2840, 0.0
        %vm2873 = vcmp.ge.f32.partialorder %v2841, 0.0
        %vm2874 = vcmp.ge.f32.partialorder %v2842, 0.0
        %vm2875 = vcmp.ge.f32.partialorder %v2843, 0.0
        %vm2876 = vcmp.ge.f32.partialorder %v2844, 0.0
        %vm2877 = vcmp.ge.f32.partialorder %v2845, 0.0
        %vm2878 = vcmp.ge.f32.partialorder %v2846, 0.0
        %vm2879 = vcmp.ge.f32.partialorder %v2847, 0.0
        %vm2880 = vcmp.ge.f32.partialorder %v2848, 0.0
        %vm2881 = vcmp.ge.f32.partialorder %v2849, 0.0
        %vm2882 = vcmp.ge.f32.partialorder %v2850, 0.0
        %vm2883 = vcmp.ge.f32.partialorder %v2851, 0.0
        %vm2884 = vcmp.ge.f32.partialorder %v2852, 0.0
        %vm2885 = vcmp.ge.f32.partialorder %v2853, 0.0
        %vm2886 = vcmp.ge.f32.partialorder %v2854, 0.0
        %vm2887 = vcmp.ge.f32.partialorder %v2855, 0.0
        %vm2888 = vcmp.ge.f32.partialorder %v2856, 0.0
        %vm2889 = vcmp.ge.f32.partialorder %v2857, 0.0
        %vm2890 = vcmp.ge.f32.partialorder %v2858, 0.0
        %vm2891 = vcmp.ge.f32.partialorder %v2859, 0.0
        %vm2892 = vcmp.ge.f32.partialorder %v2860, 0.0
        %vm2893 = vcmp.ge.f32.partialorder %v2861, 0.0
        %vm2894 = vcmp.ge.f32.partialorder %v2862, 0.0
        %vm2895 = vcmp.ge.f32.partialorder %v2863, 0.0
        %vm2896 = vcmp.ge.f32.partialorder %v2864, 0.0
        %vm2897 = vcmp.ge.f32.partialorder %v2865, 0.0
        %v2898 = vmul.f32 %v2834, 0.05
        %v2899 = vmul.f32 %v2835, 0.05
        %v2900 = vmul.f32 %v2836, 0.05
        %v2901 = vmul.f32 %v2837, 0.05
        %v2902 = vmul.f32 %v2838, 0.05
        %v2903 = vmul.f32 %v2839, 0.05
        %v2904 = vmul.f32 %v2840, 0.05
        %v2905 = vmul.f32 %v2841, 0.05
        %v2906 = vmul.f32 %v2842, 0.05
        %v2907 = vmul.f32 %v2843, 0.05
        %v2908 = vmul.f32 %v2844, 0.05
        %v2909 = vmul.f32 %v2845, 0.05
        %v2910 = vmul.f32 %v2846, 0.05
        %v2911 = vmul.f32 %v2847, 0.05
        %v2912 = vmul.f32 %v2848, 0.05
        %v2913 = vmul.f32 %v2849, 0.05
        %v2914 = vmul.f32 %v2850, 0.05
        %v2915 = vmul.f32 %v2851, 0.05
        %v2916 = vmul.f32 %v2852, 0.05
        %v2917 = vmul.f32 %v2853, 0.05
        %v2918 = vmul.f32 %v2854, 0.05
        %v2919 = vmul.f32 %v2855, 0.05
        %v2920 = vmul.f32 %v2856, 0.05
        %v2921 = vmul.f32 %v2857, 0.05
        %v2922 = vmul.f32 %v2858, 0.05
        %v2923 = vmul.f32 %v2859, 0.05
        %v2924 = vmul.f32 %v2860, 0.05
        %v2925 = vmul.f32 %v2861, 0.05
        %v2926 = vmul.f32 %v2862, 0.05
        %v2927 = vmul.f32 %v2863, 0.05
        %v2928 = vmul.f32 %v2864, 0.05
        %v2929 = vmul.f32 %v2865, 0.05
        %v2930 = vsel %vm2866, %v2834, %v2898
        %v2931 = vsel %vm2867, %v2835, %v2899
        %v2932 = vsel %vm2868, %v2836, %v2900
        %v2933 = vsel %vm2869, %v2837, %v2901
        %v2934 = vsel %vm2870, %v2838, %v2902
        %v2935 = vsel %vm2871, %v2839, %v2903
        %v2936 = vsel %vm2872, %v2840, %v2904
        %v2937 = vsel %vm2873, %v2841, %v2905
        %v2938 = vsel %vm2874, %v2842, %v2906
        %v2939 = vsel %vm2875, %v2843, %v2907
        %v2940 = vsel %vm2876, %v2844, %v2908
        %v2941 = vsel %vm2877, %v2845, %v2909
        %v2942 = vsel %vm2878, %v2846, %v2910
        %v2943 = vsel %vm2879, %v2847, %v2911
        %v2944 = vsel %vm2880, %v2848, %v2912
        %v2945 = vsel %vm2881, %v2849, %v2913
        %v2946 = vsel %vm2882, %v2850, %v2914
        %v2947 = vsel %vm2883, %v2851, %v2915
        %v2948 = vsel %vm2884, %v2852, %v2916
        %v2949 = vsel %vm2885, %v2853, %v2917
        %v2950 = vsel %vm2886, %v2854, %v2918
        %v2951 = vsel %vm2887, %v2855, %v2919
        %v2952 = vsel %vm2888, %v2856, %v2920
        %v2953 = vsel %vm2889, %v2857, %v2921
        %v2954 = vsel %vm2890, %v2858, %v2922
        %v2955 = vsel %vm2891, %v2859, %v2923
        %v2956 = vsel %vm2892, %v2860, %v2924
        %v2957 = vsel %vm2893, %v2861, %v2925
        %v2958 = vsel %vm2894, %v2862, %v2926
        %v2959 = vsel %vm2895, %v2863, %v2927
        %v2960 = vsel %vm2896, %v2864, %v2928
        %v2961 = vsel %vm2897, %v2865, %v2929
        %v2962 = vld [vmem:[%s3] sm:$0xff]
        %v2963 = vld [vmem:[%s3 + $0x8] sm:$0xff]
        %v2964 = vld [vmem:[%s3 + $0x10] sm:$0xff]
        %v2965 = vld [vmem:[%s3 + $0x18] sm:$0xff]
        %v2966 = vld [vmem:[%s3 + $0x20] sm:$0xff]
        %v2967 = vld [vmem:[%s3 + $0x28] sm:$0xff]
        %v2968 = vld [vmem:[%s3 + $0x30] sm:$0xff]
        %v2969 = vld [vmem:[%s3 + $0x38] sm:$0xff]
        %v2970 = vld [vmem:[%s3 + $0x40] sm:$0xff]
        %v2971 = vld [vmem:[%s3 + $0x48] sm:$0xff]
        %v2972 = vld [vmem:[%s3 + $0x50] sm:$0xff]
        %v2973 = vld [vmem:[%s3 + $0x58] sm:$0xff]
        %v2974 = vld [vmem:[%s3 + $0x60] sm:$0xff]
        %v2975 = vld [vmem:[%s3 + $0x68] sm:$0xff]
        %v2976 = vld [vmem:[%s3 + $0x70] sm:$0xff]
        %v2977 = vld [vmem:[%s3 + $0x78] sm:$0xff]
        %v2978 = vld [vmem:[%s3 + $0x80] sm:$0xff]
        %v2979 = vld [vmem:[%s3 + $0x88] sm:$0xff]
        %v2980 = vld [vmem:[%s3 + $0x90] sm:$0xff]
        %v2981 = vld [vmem:[%s3 + $0x98] sm:$0xff]
        %v2982 = vld [vmem:[%s3 + $0xa0] sm:$0xff]
        %v2983 = vld [vmem:[%s3 + $0xa8] sm:$0xff]
        %v2984 = vld [vmem:[%s3 + $0xb0] sm:$0xff]
        %v2985 = vld [vmem:[%s3 + $0xb8] sm:$0xff]
        %v2986 = vld [vmem:[%s3 + $0xc0] sm:$0xff]
        %v2987 = vld [vmem:[%s3 + $0xc8] sm:$0xff]
        %v2988 = vld [vmem:[%s3 + $0xd0] sm:$0xff]
        %v2989 = vld [vmem:[%s3 + $0xd8] sm:$0xff]
        %v2990 = vld [vmem:[%s3 + $0xe0] sm:$0xff]
        %v2991 = vld [vmem:[%s3 + $0xe8] sm:$0xff]
        %v2992 = vld [vmem:[%s3 + $0xf0] sm:$0xff]
        %v2993 = vld [vmem:[%s3 + $0xf8] sm:$0xff]
        %v2994 = vld [vmem:[%s3 + $0x100] sm:$0xff]
        %v2995 = vld [vmem:[%s3 + $0x108] sm:$0xff]
        %v2996 = vld [vmem:[%s3 + $0x110] sm:$0xff]
        %v2997 = vld [vmem:[%s3 + $0x118] sm:$0xff]
        %v2998 = vld [vmem:[%s3 + $0x120] sm:$0xff]
        %v2999 = vld [vmem:[%s3 + $0x128] sm:$0xff]
        %v3000 = vld [vmem:[%s3 + $0x130] sm:$0xff]
        %v3001 = vld [vmem:[%s3 + $0x138] sm:$0xff]
        %v3002 = vld [vmem:[%s3 + $0x140] sm:$0xff]
        %v3003 = vld [vmem:[%s3 + $0x148] sm:$0xff]
        %v3004 = vld [vmem:[%s3 + $0x150] sm:$0xff]
        %v3005 = vld [vmem:[%s3 + $0x158] sm:$0xff]
        %v3006 = vld [vmem:[%s3 + $0x160] sm:$0xff]
        %v3007 = vld [vmem:[%s3 + $0x168] sm:$0xff]
        %v3008 = vld [vmem:[%s3 + $0x170] sm:$0xff]
        %v3009 = vld [vmem:[%s3 + $0x178] sm:$0xff]
        %v3010 = vld [vmem:[%s3 + $0x180] sm:$0xff]
        %v3011 = vld [vmem:[%s3 + $0x188] sm:$0xff]
        %v3012 = vld [vmem:[%s3 + $0x190] sm:$0xff]
        %v3013 = vld [vmem:[%s3 + $0x198] sm:$0xff]
        %v3014 = vld [vmem:[%s3 + $0x1a0] sm:$0xff]
        %v3015 = vld [vmem:[%s3 + $0x1a8] sm:$0xff]
        %v3016 = vld [vmem:[%s3 + $0x1b0] sm:$0xff]
        %v3017 = vld [vmem:[%s3 + $0x1b8] sm:$0xff]
        %v3018 = vld [vmem:[%s3 + $0x1c0] sm:$0xff]
        %v3019 = vld [vmem:[%s3 + $0x1c8] sm:$0xff]
        %v3020 = vld [vmem:[%s3 + $0x1d0] sm:$0xff]
        %v3021 = vld [vmem:[%s3 + $0x1d8] sm:$0xff]
        %v3022 = vld [vmem:[%s3 + $0x1e0] sm:$0xff]
        %v3023 = vld [vmem:[%s3 + $0x1e8] sm:$0xff]
        %v3024 = vld [vmem:[%s3 + $0x1f0] sm:$0xff]
        %v3025 = vld [vmem:[%s3 + $0x1f8] sm:$0xff]
        %v3026 = vld [vmem:[%s3 + $0x200] sm:$0xff]
        %v3027 = vld [vmem:[%s3 + $0x208] sm:$0xff]
        %v3028 = vld [vmem:[%s3 + $0x210] sm:$0xff]
        %v3029 = vld [vmem:[%s3 + $0x218] sm:$0xff]
        %v3030 = vld [vmem:[%s3 + $0x220] sm:$0xff]
        %v3031 = vld [vmem:[%s3 + $0x228] sm:$0xff]
        %v3032 = vld [vmem:[%s3 + $0x230] sm:$0xff]
        %v3033 = vld [vmem:[%s3 + $0x238] sm:$0xff]
        %v3034 = vld [vmem:[%s3 + $0x240] sm:$0xff]
        %v3035 = vld [vmem:[%s3 + $0x248] sm:$0xff]
        %v3036 = vld [vmem:[%s3 + $0x250] sm:$0xff]
        %v3037 = vld [vmem:[%s3 + $0x258] sm:$0xff]
        %v3038 = vld [vmem:[%s3 + $0x260] sm:$0xff]
        %v3039 = vld [vmem:[%s3 + $0x268] sm:$0xff]
        %v3040 = vld [vmem:[%s3 + $0x270] sm:$0xff]
        %v3041 = vld [vmem:[%s3 + $0x278] sm:$0xff]
        %v3042 = vld [vmem:[%s3 + $0x280] sm:$0xff]
        %v3043 = vld [vmem:[%s3 + $0x288] sm:$0xff]
        %v3044 = vld [vmem:[%s3 + $0x290] sm:$0xff]
        %v3045 = vld [vmem:[%s3 + $0x298] sm:$0xff]
        %v3046 = vld [vmem:[%s3 + $0x2a0] sm:$0xff]
        %v3047 = vld [vmem:[%s3 + $0x2a8] sm:$0xff]
        %v3048 = vld [vmem:[%s3 + $0x2b0] sm:$0xff]
        %v3049 = vld [vmem:[%s3 + $0x2b8] sm:$0xff]
        %v3050 = vld [vmem:[%s3 + $0x2c0] sm:$0xff]
        %v3051 = vld [vmem:[%s3 + $0x2c8] sm:$0xff]
        %v3052 = vld [vmem:[%s3 + $0x2d0] sm:$0xff]
        %v3053 = vld [vmem:[%s3 + $0x2d8] sm:$0xff]
        %v3054 = vld [vmem:[%s3 + $0x2e0] sm:$0xff]
        %v3055 = vld [vmem:[%s3 + $0x2e8] sm:$0xff]
        %v3056 = vld [vmem:[%s3 + $0x2f0] sm:$0xff]
        %v3057 = vld [vmem:[%s3 + $0x2f8] sm:$0xff]
        %v3058 = vld [vmem:[%s3 + $0x300] sm:$0xff]
        %v3059 = vld [vmem:[%s3 + $0x308] sm:$0xff]
        %v3060 = vld [vmem:[%s3 + $0x310] sm:$0xff]
        %v3061 = vld [vmem:[%s3 + $0x318] sm:$0xff]
        %v3062 = vld [vmem:[%s3 + $0x320] sm:$0xff]
        %v3063 = vld [vmem:[%s3 + $0x328] sm:$0xff]
        %v3064 = vld [vmem:[%s3 + $0x330] sm:$0xff]
        %v3065 = vld [vmem:[%s3 + $0x338] sm:$0xff]
        %v3066 = vld [vmem:[%s3 + $0x340] sm:$0xff]
        %v3067 = vld [vmem:[%s3 + $0x348] sm:$0xff]
        %v3068 = vld [vmem:[%s3 + $0x350] sm:$0xff]
        %v3069 = vld [vmem:[%s3 + $0x358] sm:$0xff]
        %v3070 = vld [vmem:[%s3 + $0x360] sm:$0xff]
        %v3071 = vld [vmem:[%s3 + $0x368] sm:$0xff]
        %v3072 = vld [vmem:[%s3 + $0x370] sm:$0xff]
        %v3073 = vld [vmem:[%s3 + $0x378] sm:$0xff]
        %v3074 = vld [vmem:[%s3 + $0x380] sm:$0xff]
        %v3075 = vld [vmem:[%s3 + $0x388] sm:$0xff]
        %v3076 = vld [vmem:[%s3 + $0x390] sm:$0xff]
        %v3077 = vld [vmem:[%s3 + $0x398] sm:$0xff]
        %v3078 = vld [vmem:[%s3 + $0x3a0] sm:$0xff]
        %v3079 = vld [vmem:[%s3 + $0x3a8] sm:$0xff]
        %v3080 = vld [vmem:[%s3 + $0x3b0] sm:$0xff]
        %v3081 = vld [vmem:[%s3 + $0x3b8] sm:$0xff]
        %v3082 = vld [vmem:[%s3 + $0x3c0] sm:$0xff]
        %v3083 = vld [vmem:[%s3 + $0x3c8] sm:$0xff]
        %v3084 = vld [vmem:[%s3 + $0x3d0] sm:$0xff]
        %v3085 = vld [vmem:[%s3 + $0x3d8] sm:$0xff]
        %v3086 = vld [vmem:[%s3 + $0x3e0] sm:$0xff]
        %v3087 = vld [vmem:[%s3 + $0x3e8] sm:$0xff]
        %v3088 = vld [vmem:[%s3 + $0x3f0] sm:$0xff]
        %v3089 = vld [vmem:[%s3 + $0x3f8] sm:$0xff]
        %v3090 = vld [vmem:[%s3 + $0x400] sm:$0xff]
        %v3091 = vld [vmem:[%s3 + $0x408] sm:$0xff]
        %v3092 = vld [vmem:[%s3 + $0x410] sm:$0xff]
        %v3093 = vld [vmem:[%s3 + $0x418] sm:$0xff]
        %v3094 = vld [vmem:[%s3 + $0x420] sm:$0xff]
        %v3095 = vld [vmem:[%s3 + $0x428] sm:$0xff]
        %v3096 = vld [vmem:[%s3 + $0x430] sm:$0xff]
        %v3097 = vld [vmem:[%s3 + $0x438] sm:$0xff]
        %v3098 = vld [vmem:[%s3 + $0x440] sm:$0xff]
        %v3099 = vld [vmem:[%s3 + $0x448] sm:$0xff]
        %v3100 = vld [vmem:[%s3 + $0x450] sm:$0xff]
        %v3101 = vld [vmem:[%s3 + $0x458] sm:$0xff]
        %v3102 = vld [vmem:[%s3 + $0x460] sm:$0xff]
        %v3103 = vld [vmem:[%s3 + $0x468] sm:$0xff]
        %v3104 = vld [vmem:[%s3 + $0x470] sm:$0xff]
        %v3105 = vld [vmem:[%s3 + $0x478] sm:$0xff]
        %v3106 = vld [vmem:[%s3 + $0x480] sm:$0xff]
        %v3107 = vld [vmem:[%s3 + $0x488] sm:$0xff]
        %v3108 = vld [vmem:[%s3 + $0x490] sm:$0xff]
        %v3109 = vld [vmem:[%s3 + $0x498] sm:$0xff]
        %v3110 = vld [vmem:[%s3 + $0x4a0] sm:$0xff]
        %v3111 = vld [vmem:[%s3 + $0x4a8] sm:$0xff]
        %v3112 = vld [vmem:[%s3 + $0x4b0] sm:$0xff]
        %v3113 = vld [vmem:[%s3 + $0x4b8] sm:$0xff]
        %v3114 = vld [vmem:[%s3 + $0x4c0] sm:$0xff]
        %v3115 = vld [vmem:[%s3 + $0x4c8] sm:$0xff]
        %v3116 = vld [vmem:[%s3 + $0x4d0] sm:$0xff]
        %v3117 = vld [vmem:[%s3 + $0x4d8] sm:$0xff]
        %v3118 = vld [vmem:[%s3 + $0x4e0] sm:$0xff]
        %v3119 = vld [vmem:[%s3 + $0x4e8] sm:$0xff]
        %v3120 = vld [vmem:[%s3 + $0x4f0] sm:$0xff]
        %v3121 = vld [vmem:[%s3 + $0x4f8] sm:$0xff]
        %v3122 = vld [vmem:[%s3 + $0x500] sm:$0xff]
        %v3123 = vld [vmem:[%s3 + $0x508] sm:$0xff]
        %v3124 = vld [vmem:[%s3 + $0x510] sm:$0xff]
        %v3125 = vld [vmem:[%s3 + $0x518] sm:$0xff]
        %v3126 = vld [vmem:[%s3 + $0x520] sm:$0xff]
        %v3127 = vld [vmem:[%s3 + $0x528] sm:$0xff]
        %v3128 = vld [vmem:[%s3 + $0x530] sm:$0xff]
        %v3129 = vld [vmem:[%s3 + $0x538] sm:$0xff]
        %v3130 = vld [vmem:[%s3 + $0x540] sm:$0xff]
        %v3131 = vld [vmem:[%s3 + $0x548] sm:$0xff]
        %v3132 = vld [vmem:[%s3 + $0x550] sm:$0xff]
        %v3133 = vld [vmem:[%s3 + $0x558] sm:$0xff]
        %v3134 = vld [vmem:[%s3 + $0x560] sm:$0xff]
        %v3135 = vld [vmem:[%s3 + $0x568] sm:$0xff]
        %v3136 = vld [vmem:[%s3 + $0x570] sm:$0xff]
        %v3137 = vld [vmem:[%s3 + $0x578] sm:$0xff]
        %v3138 = vld [vmem:[%s3 + $0x580] sm:$0xff]
        %v3139 = vld [vmem:[%s3 + $0x588] sm:$0xff]
        %v3140 = vld [vmem:[%s3 + $0x590] sm:$0xff]
        %v3141 = vld [vmem:[%s3 + $0x598] sm:$0xff]
        %v3142 = vld [vmem:[%s3 + $0x5a0] sm:$0xff]
        %v3143 = vld [vmem:[%s3 + $0x5a8] sm:$0xff]
        %v3144 = vld [vmem:[%s3 + $0x5b0] sm:$0xff]
        %v3145 = vld [vmem:[%s3 + $0x5b8] sm:$0xff]
        %v3146 = vld [vmem:[%s3 + $0x5c0] sm:$0xff]
        %v3147 = vld [vmem:[%s3 + $0x5c8] sm:$0xff]
        %v3148 = vld [vmem:[%s3 + $0x5d0] sm:$0xff]
        %v3149 = vld [vmem:[%s3 + $0x5d8] sm:$0xff]
        %v3150 = vld [vmem:[%s3 + $0x5e0] sm:$0xff]
        %v3151 = vld [vmem:[%s3 + $0x5e8] sm:$0xff]
        %v3152 = vld [vmem:[%s3 + $0x5f0] sm:$0xff]
        %v3153 = vld [vmem:[%s3 + $0x5f8] sm:$0xff]
        %3154 = vmatprep.subr.mxu0 0.0
        %3155 = vmatpush1.msra.mxu0 %v2945
        %3156 = vmatprep.subr.mxu0 0.0
        %3157 = vmatpush1.msra.mxu0 %v2944
        %3158 = vmatprep.subr.mxu0 0.0
        %3159 = vmatpush1.msra.mxu0 %v2943
        %3160 = vmatprep.subr.mxu0 0.0
        %3161 = vmatpush1.msra.mxu0 %v2942
        %3162 = vmatprep.subr.mxu0 0.0
        %3163 = vmatpush1.msra.mxu0 %v2941
        %3164 = vmatprep.subr.mxu0 0.0
        %3165 = vmatpush1.msra.mxu0 %v2940
        %3166 = vmatprep.subr.mxu0 0.0
        %3167 = vmatpush1.msra.mxu0 %v2939
        %3168 = vmatprep.subr.mxu0 0.0
        %3169 = vmatpush1.msra.mxu0 %v2938
        %3170 = vmatprep.subr.mxu0 0.0
        %3171 = vmatpush1.msra.mxu0 %v2937
        %3172 = vmatprep.subr.mxu0 0.0
        %3173 = vmatpush1.msra.mxu0 %v2936
        %3174 = vmatprep.subr.mxu0 0.0
        %3175 = vmatpush1.msra.mxu0 %v2935
        %3176 = vmatprep.subr.mxu0 0.0
        %3177 = vmatpush1.msra.mxu0 %v2934
        %3178 = vmatprep.subr.mxu0 0.0
        %3179 = vmatpush1.msra.mxu0 %v2933
        %3180 = vmatprep.subr.mxu0 0.0
        %3181 = vmatpush1.msra.mxu0 %v2932
        %3182 = vmatprep.subr.mxu0 0.0
        %3183 = vmatpush1.msra.mxu0 %v2931
        %3184 = vmatprep.subr.mxu0 0.0
        %3185 = vmatpush1.msra.mxu0 %v2930
        %3186 = vmatprep.subr.mxu0 0.0
        %3187 = vmatpush2.msra.mxu0 %v2961
        %3188 = vmatprep.subr.mxu0 0.0
        %3189 = vmatpush2.msra.mxu0 %v2960
        %3190 = vmatprep.subr.mxu0 0.0
        %3191 = vmatpush2.msra.mxu0 %v2959
        %3192 = vmatprep.subr.mxu0 0.0
        %3193 = vmatpush2.msra.mxu0 %v2958
        %3194 = vmatprep.subr.mxu0 0.0
        %3195 = vmatpush2.msra.mxu0 %v2957
        %3196 = vmatprep.subr.mxu0 0.0
        %3197 = vmatpush2.msra.mxu0 %v2956
        %3198 = vmatprep.subr.mxu0 0.0
        %3199 = vmatpush2.msra.mxu0 %v2955
        %3200 = vmatprep.subr.mxu0 0.0
        %3201 = vmatpush2.msra.mxu0 %v2954
        %3202 = vmatprep.subr.mxu0 0.0
        %3203 = vmatpush2.msra.mxu0 %v2953
        %3204 = vmatprep.subr.mxu0 0.0
        %3205 = vmatpush2.msra.mxu0 %v2952
        %3206 = vmatprep.subr.mxu0 0.0
        %3207 = vmatpush2.msra.mxu0 %v2951
        %3208 = vmatprep.subr.mxu0 0.0
        %3209 = vmatpush2.msra.mxu0 %v2950
        %3210 = vmatprep.subr.mxu0 0.0
        %3211 = vmatpush2.msra.mxu0 %v2949
        %3212 = vmatprep.subr.mxu0 0.0
        %3213 = vmatpush2.msra.mxu0 %v2948
        %3214 = vmatprep.subr.mxu0 0.0
        %3215 = vmatpush2.msra.mxu0 %v2947
        %3216 = vmatprep.subr.mxu0 0.0
        %3217 = vmatpush2.msra.mxu0 %v2946
        %3218 = vmatprep.mubr.f32.mxu0 %v2963
        %3219 = vmatmul.mubr.f32.gmra.mxu0 %v2962
        %v3220 = vpop.f32.mrf.mxu0
        %v3221 = vadd.f32 0.0, %v3220
        %v3222 = vpop.f32.mrf.mxu0
        %3223 = vmatprep.mubr.f32.mxu0 %v2965
        %3224 = vmatmul.mubr.f32.gmra.mxu0 %v2964
        %v3225 = vpop.f32.mrf.mxu0
        %v3226 = vadd.f32 0.0, %v3225
        %v3227 = vpop.f32.mrf.mxu0
        %3228 = vmatprep.mubr.f32.mxu0 %v2967
        %3229 = vmatmul.mubr.f32.gmra.mxu0 %v2966
        %v3230 = vpop.f32.mrf.mxu0
        %v3231 = vadd.f32 0.0, %v3230
        %v3232 = vpop.f32.mrf.mxu0
        %3233 = vmatprep.mubr.f32.mxu0 %v2969
        %3234 = vmatmul.mubr.f32.gmra.mxu0 %v2968
        %v3235 = vpop.f32.mrf.mxu0
        %v3236 = vadd.f32 0.0, %v3235
        %v3237 = vpop.f32.mrf.mxu0
        %3238 = vmatprep.mubr.f32.mxu0 %v2971
        %3239 = vmatmul.mubr.f32.gmra.mxu0 %v2970
        %v3240 = vpop.f32.mrf.mxu0
        %v3241 = vadd.f32 0.0, %v3240
        %v3242 = vpop.f32.mrf.mxu0
        %3243 = vmatprep.mubr.f32.mxu0 %v2973
        %3244 = vmatmul.mubr.f32.gmra.mxu0 %v2972
        %v3245 = vpop.f32.mrf.mxu0
        %v3246 = vadd.f32 0.0, %v3245
        %v3247 = vpop.f32.mrf.mxu0
        %3248 = vmatprep.mubr.f32.mxu0 %v2975
        %3249 = vmatmul.mubr.f32.gmra.mxu0 %v2974
        %v3250 = vpop.f32.mrf.mxu0
        %v3251 = vadd.f32 0.0, %v3250
        %v3252 = vpop.f32.mrf.mxu0
        %3253 = vmatprep.mubr.f32.mxu0 %v2977
        %3254 = vmatmul.mubr.f32.gmra.mxu0 %v2976
        %v3255 = vpop.f32.mrf.mxu0
        %v3256 = vadd.f32 0.0, %v3255
        %v3257 = vpop.f32.mrf.mxu0
        %3258 = vmatprep.mubr.f32.mxu0 %v2979
        %3259 = vmatmul.mubr.f32.gmra.mxu0 %v2978
        %v3260 = vpop.f32.mrf.mxu0
        %v3261 = vadd.f32 0.0, %v3260
        %v3262 = vpop.f32.mrf.mxu0
        %3263 = vmatprep.mubr.f32.mxu0 %v2981
        %3264 = vmatmul.mubr.f32.gmra.mxu0 %v2980
        %v3265 = vpop.f32.mrf.mxu0
        %v3266 = vadd.f32 0.0, %v3265
        %v3267 = vpop.f32.mrf.mxu0
        %3268 = vmatprep.mubr.f32.mxu0 %v2983
        %3269 = vmatmul.mubr.f32.gmra.mxu0 %v2982
        %v3270 = vpop.f32.mrf.mxu0
        %v3271 = vadd.f32 0.0, %v3270
        %v3272 = vpop.f32.mrf.mxu0
        %3273 = vmatprep.mubr.f32.mxu0 %v2985
        %3274 = vmatmul.mubr.f32.gmra.mxu0 %v2984
        %v3275 = vpop.f32.mrf.mxu0
        %v3276 = vadd.f32 0.0, %v3275
        %v3277 = vpop.f32.mrf.mxu0
        %3278 = vmatprep.mubr.f32.mxu0 %v2987
        %3279 = vmatmul.mubr.f32.gmra.mxu0 %v2986
        %v3280 = vpop.f32.mrf.mxu0
        %v3281 = vadd.f32 0.0, %v3280
        %v3282 = vpop.f32.mrf.mxu0
        %3283 = vmatprep.mubr.f32.mxu0 %v2989
        %3284 = vmatmul.mubr.f32.gmra.mxu0 %v2988
        %v3285 = vpop.f32.mrf.mxu0
        %v3286 = vadd.f32 0.0, %v3285
        %v3287 = vpop.f32.mrf.mxu0
        %3288 = vmatprep.mubr.f32.mxu0 %v2991
        %3289 = vmatmul.mubr.f32.gmra.mxu0 %v2990
        %v3290 = vpop.f32.mrf.mxu0
        %v3291 = vadd.f32 0.0, %v3290
        %v3292 = vpop.f32.mrf.mxu0
        %3293 = vmatprep.mubr.f32.mxu0 %v2993
        %3294 = vmatmul.mubr.f32.gmra.mxu0 %v2992
        %v3295 = vpop.f32.mrf.mxu0
        %v3296 = vadd.f32 0.0, %v3295
        %v3297 = vpop.f32.mrf.mxu0
        %3298 = vmatprep.mubr.f32.mxu0 %v2995
        %3299 = vmatmul.mubr.f32.gmra.mxu0 %v2994
        %v3300 = vpop.f32.mrf.mxu0
        %v3301 = vadd.f32 0.0, %v3300
        %v3302 = vpop.f32.mrf.mxu0
        %3303 = vmatprep.mubr.f32.mxu0 %v2997
        %3304 = vmatmul.mubr.f32.gmra.mxu0 %v2996
        %v3305 = vpop.f32.mrf.mxu0
        %v3306 = vadd.f32 0.0, %v3305
        %v3307 = vpop.f32.mrf.mxu0
        %3308 = vmatprep.mubr.f32.mxu0 %v2999
        %3309 = vmatmul.mubr.f32.gmra.mxu0 %v2998
        %v3310 = vpop.f32.mrf.mxu0
        %v3311 = vadd.f32 0.0, %v3310
        %v3312 = vpop.f32.mrf.mxu0
        %3313 = vmatprep.mubr.f32.mxu0 %v3001
        %3314 = vmatmul.mubr.f32.gmra.mxu0 %v3000
        %v3315 = vpop.f32.mrf.mxu0
        %v3316 = vadd.f32 0.0, %v3315
        %v3317 = vpop.f32.mrf.mxu0
        %3318 = vmatprep.mubr.f32.mxu0 %v3003
        %3319 = vmatmul.mubr.f32.gmra.mxu0 %v3002
        %v3320 = vpop.f32.mrf.mxu0
        %v3321 = vadd.f32 0.0, %v3320
        %v3322 = vpop.f32.mrf.mxu0
        %3323 = vmatprep.mubr.f32.mxu0 %v3005
        %3324 = vmatmul.mubr.f32.gmra.mxu0 %v3004
        %v3325 = vpop.f32.mrf.mxu0
        %v3326 = vadd.f32 0.0, %v3325
        %v3327 = vpop.f32.mrf.mxu0
        %3328 = vmatprep.mubr.f32.mxu0 %v3007
        %3329 = vmatmul.mubr.f32.gmra.mxu0 %v3006
        %v3330 = vpop.f32.mrf.mxu0
        %v3331 = vadd.f32 0.0, %v3330
        %v3332 = vpop.f32.mrf.mxu0
        %3333 = vmatprep.mubr.f32.mxu0 %v3009
        %3334 = vmatmul.mubr.f32.gmra.mxu0 %v3008
        %v3335 = vpop.f32.mrf.mxu0
        %v3336 = vadd.f32 0.0, %v3335
        %v3337 = vpop.f32.mrf.mxu0
        %3338 = vmatprep.mubr.f32.mxu0 %v3011
        %3339 = vmatmul.mubr.f32.gmra.mxu0 %v3010
        %v3340 = vpop.f32.mrf.mxu0
        %v3341 = vadd.f32 0.0, %v3340
        %v3342 = vpop.f32.mrf.mxu0
        %3343 = vmatprep.mubr.f32.mxu0 %v3013
        %3344 = vmatmul.mubr.f32.gmra.mxu0 %v3012
        %v3345 = vpop.f32.mrf.mxu0
        %v3346 = vadd.f32 0.0, %v3345
        %v3347 = vpop.f32.mrf.mxu0
        %3348 = vmatprep.mubr.f32.mxu0 %v3015
        %3349 = vmatmul.mubr.f32.gmra.mxu0 %v3014
        %v3350 = vpop.f32.mrf.mxu0
        %v3351 = vadd.f32 0.0, %v3350
        %v3352 = vpop.f32.mrf.mxu0
        %3353 = vmatprep.mubr.f32.mxu0 %v3017
        %3354 = vmatmul.mubr.f32.gmra.mxu0 %v3016
        %v3355 = vpop.f32.mrf.mxu0
        %v3356 = vadd.f32 0.0, %v3355
        %v3357 = vpop.f32.mrf.mxu0
        %3358 = vmatprep.mubr.f32.mxu0 %v3019
        %3359 = vmatmul.mubr.f32.gmra.mxu0 %v3018
        %v3360 = vpop.f32.mrf.mxu0
        %v3361 = vadd.f32 0.0, %v3360
        %v3362 = vpop.f32.mrf.mxu0
        %3363 = vmatprep.mubr.f32.mxu0 %v3021
        %3364 = vmatmul.mubr.f32.gmra.mxu0 %v3020
        %v3365 = vpop.f32.mrf.mxu0
        %v3366 = vadd.f32 0.0, %v3365
        %v3367 = vpop.f32.mrf.mxu0
        %3368 = vmatprep.mubr.f32.mxu0 %v3023
        %3369 = vmatmul.mubr.f32.gmra.mxu0 %v3022
        %v3370 = vpop.f32.mrf.mxu0
        %v3371 = vadd.f32 0.0, %v3370
        %v3372 = vpop.f32.mrf.mxu0
        %3373 = vmatprep.mubr.f32.mxu0 %v3025
        %3374 = vmatmul.mubr.f32.gmra.mxu0 %v3024
        %v3375 = vpop.f32.mrf.mxu0
        %v3376 = vadd.f32 0.0, %v3375
        %v3377 = vpop.f32.mrf.mxu0
        %3378 = vmatprep.mubr.f32.mxu0 %v3027
        %3379 = vmatmul.mubr.f32.gmra.mxu0 %v3026
        %v3380 = vpop.f32.mrf.mxu0
        %v3381 = vadd.f32 0.0, %v3380
        %v3382 = vpop.f32.mrf.mxu0
        %3383 = vmatprep.mubr.f32.mxu0 %v3029
        %3384 = vmatmul.mubr.f32.gmra.mxu0 %v3028
        %v3385 = vpop.f32.mrf.mxu0
        %v3386 = vadd.f32 0.0, %v3385
        %v3387 = vpop.f32.mrf.mxu0
        %3388 = vmatprep.mubr.f32.mxu0 %v3031
        %3389 = vmatmul.mubr.f32.gmra.mxu0 %v3030
        %v3390 = vpop.f32.mrf.mxu0
        %v3391 = vadd.f32 0.0, %v3390
        %v3392 = vpop.f32.mrf.mxu0
        %3393 = vmatprep.mubr.f32.mxu0 %v3033
        %3394 = vmatmul.mubr.f32.gmra.mxu0 %v3032
        %v3395 = vpop.f32.mrf.mxu0
        %v3396 = vadd.f32 0.0, %v3395
        %v3397 = vpop.f32.mrf.mxu0
        %3398 = vmatprep.mubr.f32.mxu0 %v3035
        %3399 = vmatmul.mubr.f32.gmra.mxu0 %v3034
        %v3400 = vpop.f32.mrf.mxu0
        %v3401 = vadd.f32 0.0, %v3400
        %v3402 = vpop.f32.mrf.mxu0
        %3403 = vmatprep.mubr.f32.mxu0 %v3037
        %3404 = vmatmul.mubr.f32.gmra.mxu0 %v3036
        %v3405 = vpop.f32.mrf.mxu0
        %v3406 = vadd.f32 0.0, %v3405
        %v3407 = vpop.f32.mrf.mxu0
        %3408 = vmatprep.mubr.f32.mxu0 %v3039
        %3409 = vmatmul.mubr.f32.gmra.mxu0 %v3038
        %v3410 = vpop.f32.mrf.mxu0
        %v3411 = vadd.f32 0.0, %v3410
        %v3412 = vpop.f32.mrf.mxu0
        %3413 = vmatprep.mubr.f32.mxu0 %v3041
        %3414 = vmatmul.mubr.f32.gmra.mxu0 %v3040
        %v3415 = vpop.f32.mrf.mxu0
        %v3416 = vadd.f32 0.0, %v3415
        %v3417 = vpop.f32.mrf.mxu0
        %3418 = vmatprep.mubr.f32.mxu0 %v3043
        %3419 = vmatmul.mubr.f32.gmra.mxu0 %v3042
        %v3420 = vpop.f32.mrf.mxu0
        %v3421 = vadd.f32 0.0, %v3420
        %v3422 = vpop.f32.mrf.mxu0
        %3423 = vmatprep.mubr.f32.mxu0 %v3045
        %3424 = vmatmul.mubr.f32.gmra.mxu0 %v3044
        %v3425 = vpop.f32.mrf.mxu0
        %v3426 = vadd.f32 0.0, %v3425
        %v3427 = vpop.f32.mrf.mxu0
        %3428 = vmatprep.mubr.f32.mxu0 %v3047
        %3429 = vmatmul.mubr.f32.gmra.mxu0 %v3046
        %v3430 = vpop.f32.mrf.mxu0
        %v3431 = vadd.f32 0.0, %v3430
        %v3432 = vpop.f32.mrf.mxu0
        %3433 = vmatprep.mubr.f32.mxu0 %v3049
        %3434 = vmatmul.mubr.f32.gmra.mxu0 %v3048
        %v3435 = vpop.f32.mrf.mxu0
        %v3436 = vadd.f32 0.0, %v3435
        %v3437 = vpop.f32.mrf.mxu0
        %3438 = vmatprep.mubr.f32.mxu0 %v3051
        %3439 = vmatmul.mubr.f32.gmra.mxu0 %v3050
        %v3440 = vpop.f32.mrf.mxu0
        %v3441 = vadd.f32 0.0, %v3440
        %v3442 = vpop.f32.mrf.mxu0
        %3443 = vmatprep.mubr.f32.mxu0 %v3053
        %3444 = vmatmul.mubr.f32.gmra.mxu0 %v3052
        %v3445 = vpop.f32.mrf.mxu0
        %v3446 = vadd.f32 0.0, %v3445
        %v3447 = vpop.f32.mrf.mxu0
        %3448 = vmatprep.mubr.f32.mxu0 %v3055
        %3449 = vmatmul.mubr.f32.gmra.mxu0 %v3054
        %v3450 = vpop.f32.mrf.mxu0
        %v3451 = vadd.f32 0.0, %v3450
        %v3452 = vpop.f32.mrf.mxu0
        %3453 = vmatprep.mubr.f32.mxu0 %v3057
        %3454 = vmatmul.mubr.f32.gmra.mxu0 %v3056
        %v3455 = vpop.f32.mrf.mxu0
        %v3456 = vadd.f32 0.0, %v3455
        %v3457 = vpop.f32.mrf.mxu0
        %3458 = vmatprep.mubr.f32.mxu0 %v3059
        %3459 = vmatmul.mubr.f32.gmra.mxu0 %v3058
        %v3460 = vpop.f32.mrf.mxu0
        %v3461 = vadd.f32 0.0, %v3460
        %v3462 = vpop.f32.mrf.mxu0
        %3463 = vmatprep.mubr.f32.mxu0 %v3061
        %3464 = vmatmul.mubr.f32.gmra.mxu0 %v3060
        %v3465 = vpop.f32.mrf.mxu0
        %v3466 = vadd.f32 0.0, %v3465
        %v3467 = vpop.f32.mrf.mxu0
        %3468 = vmatprep.mubr.f32.mxu0 %v3063
        %3469 = vmatmul.mubr.f32.gmra.mxu0 %v3062
        %v3470 = vpop.f32.mrf.mxu0
        %v3471 = vadd.f32 0.0, %v3470
        %v3472 = vpop.f32.mrf.mxu0
        %3473 = vmatprep.mubr.f32.mxu0 %v3065
        %3474 = vmatmul.mubr.f32.gmra.mxu0 %v3064
        %v3475 = vpop.f32.mrf.mxu0
        %v3476 = vadd.f32 0.0, %v3475
        %v3477 = vpop.f32.mrf.mxu0
        %3478 = vmatprep.mubr.f32.mxu0 %v3067
        %3479 = vmatmul.mubr.f32.gmra.mxu0 %v3066
        %v3480 = vpop.f32.mrf.mxu0
        %v3481 = vadd.f32 0.0, %v3480
        %v3482 = vpop.f32.mrf.mxu0
        %3483 = vmatprep.mubr.f32.mxu0 %v3069
        %3484 = vmatmul.mubr.f32.gmra.mxu0 %v3068
        %v3485 = vpop.f32.mrf.mxu0
        %v3486 = vadd.f32 0.0, %v3485
        %v3487 = vpop.f32.mrf.mxu0
        %3488 = vmatprep.mubr.f32.mxu0 %v3071
        %3489 = vmatmul.mubr.f32.gmra.mxu0 %v3070
        %v3490 = vpop.f32.mrf.mxu0
        %v3491 = vadd.f32 0.0, %v3490
        %v3492 = vpop.f32.mrf.mxu0
        %3493 = vmatprep.mubr.f32.mxu0 %v3073
        %3494 = vmatmul.mubr.f32.gmra.mxu0 %v3072
        %v3495 = vpop.f32.mrf.mxu0
        %v3496 = vadd.f32 0.0, %v3495
        %v3497 = vpop.f32.mrf.mxu0
        %3498 = vmatprep.mubr.f32.mxu0 %v3075
        %3499 = vmatmul.mubr.f32.gmra.mxu0 %v3074
        %v3500 = vpop.f32.mrf.mxu0
        %v3501 = vadd.f32 0.0, %v3500
        %v3502 = vpop.f32.mrf.mxu0
        %3503 = vmatprep.mubr.f32.mxu0 %v3077
        %3504 = vmatmul.mubr.f32.gmra.mxu0 %v3076
        %v3505 = vpop.f32.mrf.mxu0
        %v3506 = vadd.f32 0.0, %v3505
        %v3507 = vpop.f32.mrf.mxu0
        %3508 = vmatprep.mubr.f32.mxu0 %v3079
        %3509 = vmatmul.mubr.f32.gmra.mxu0 %v3078
        %v3510 = vpop.f32.mrf.mxu0
        %v3511 = vadd.f32 0.0, %v3510
        %v3512 = vpop.f32.mrf.mxu0
        %3513 = vmatprep.mubr.f32.mxu0 %v3081
        %3514 = vmatmul.mubr.f32.gmra.mxu0 %v3080
        %v3515 = vpop.f32.mrf.mxu0
        %v3516 = vadd.f32 0.0, %v3515
        %v3517 = vpop.f32.mrf.mxu0
        %3518 = vmatprep.mubr.f32.mxu0 %v3083
        %3519 = vmatmul.mubr.f32.gmra.mxu0 %v3082
        %v3520 = vpop.f32.mrf.mxu0
        %v3521 = vadd.f32 0.0, %v3520
        %v3522 = vpop.f32.mrf.mxu0
        %3523 = vmatprep.mubr.f32.mxu0 %v3085
        %3524 = vmatmul.mubr.f32.gmra.mxu0 %v3084
        %v3525 = vpop.f32.mrf.mxu0
        %v3526 = vadd.f32 0.0, %v3525
        %v3527 = vpop.f32.mrf.mxu0
        %3528 = vmatprep.mubr.f32.mxu0 %v3087
        %3529 = vmatmul.mubr.f32.gmra.mxu0 %v3086
        %v3530 = vpop.f32.mrf.mxu0
        %v3531 = vadd.f32 0.0, %v3530
        %v3532 = vpop.f32.mrf.mxu0
        %3533 = vmatprep.mubr.f32.mxu0 %v3089
        %3534 = vmatmul.mubr.f32.gmra.mxu0 %v3088
        %v3535 = vpop.f32.mrf.mxu0
        %v3536 = vadd.f32 0.0, %v3535
        %v3537 = vpop.f32.mrf.mxu0
        %3538 = vmatprep.mubr.f32.mxu0 %v3091
        %3539 = vmatmul.mubr.f32.gmra.mxu0 %v3090
        %v3540 = vpop.f32.mrf.mxu0
        %v3541 = vadd.f32 0.0, %v3540
        %v3542 = vpop.f32.mrf.mxu0
        %3543 = vmatprep.mubr.f32.mxu0 %v3093
        %3544 = vmatmul.mubr.f32.gmra.mxu0 %v3092
        %v3545 = vpop.f32.mrf.mxu0
        %v3546 = vadd.f32 0.0, %v3545
        %v3547 = vpop.f32.mrf.mxu0
        %3548 = vmatprep.mubr.f32.mxu0 %v3095
        %3549 = vmatmul.mubr.f32.gmra.mxu0 %v3094
        %v3550 = vpop.f32.mrf.mxu0
        %v3551 = vadd.f32 0.0, %v3550
        %v3552 = vpop.f32.mrf.mxu0
        %3553 = vmatprep.mubr.f32.mxu0 %v3097
        %3554 = vmatmul.mubr.f32.gmra.mxu0 %v3096
        %v3555 = vpop.f32.mrf.mxu0
        %v3556 = vadd.f32 0.0, %v3555
        %v3557 = vpop.f32.mrf.mxu0
        %3558 = vmatprep.mubr.f32.mxu0 %v3099
        %3559 = vmatmul.mubr.f32.gmra.mxu0 %v3098
        %v3560 = vpop.f32.mrf.mxu0
        %v3561 = vadd.f32 0.0, %v3560
        %v3562 = vpop.f32.mrf.mxu0
        %3563 = vmatprep.mubr.f32.mxu0 %v3101
        %3564 = vmatmul.mubr.f32.gmra.mxu0 %v3100
        %v3565 = vpop.f32.mrf.mxu0
        %v3566 = vadd.f32 0.0, %v3565
        %v3567 = vpop.f32.mrf.mxu0
        %3568 = vmatprep.mubr.f32.mxu0 %v3103
        %3569 = vmatmul.mubr.f32.gmra.mxu0 %v3102
        %v3570 = vpop.f32.mrf.mxu0
        %v3571 = vadd.f32 0.0, %v3570
        %v3572 = vpop.f32.mrf.mxu0
        %3573 = vmatprep.mubr.f32.mxu0 %v3105
        %3574 = vmatmul.mubr.f32.gmra.mxu0 %v3104
        %v3575 = vpop.f32.mrf.mxu0
        %v3576 = vadd.f32 0.0, %v3575
        %v3577 = vpop.f32.mrf.mxu0
        %3578 = vmatprep.mubr.f32.mxu0 %v3107
        %3579 = vmatmul.mubr.f32.gmra.mxu0 %v3106
        %v3580 = vpop.f32.mrf.mxu0
        %v3581 = vadd.f32 0.0, %v3580
        %v3582 = vpop.f32.mrf.mxu0
        %3583 = vmatprep.mubr.f32.mxu0 %v3109
        %3584 = vmatmul.mubr.f32.gmra.mxu0 %v3108
        %v3585 = vpop.f32.mrf.mxu0
        %v3586 = vadd.f32 0.0, %v3585
        %v3587 = vpop.f32.mrf.mxu0
        %3588 = vmatprep.mubr.f32.mxu0 %v3111
        %3589 = vmatmul.mubr.f32.gmra.mxu0 %v3110
        %v3590 = vpop.f32.mrf.mxu0
        %v3591 = vadd.f32 0.0, %v3590
        %v3592 = vpop.f32.mrf.mxu0
        %3593 = vmatprep.mubr.f32.mxu0 %v3113
        %3594 = vmatmul.mubr.f32.gmra.mxu0 %v3112
        %v3595 = vpop.f32.mrf.mxu0
        %v3596 = vadd.f32 0.0, %v3595
        %v3597 = vpop.f32.mrf.mxu0
        %3598 = vmatprep.mubr.f32.mxu0 %v3115
        %3599 = vmatmul.mubr.f32.gmra.mxu0 %v3114
        %v3600 = vpop.f32.mrf.mxu0
        %v3601 = vadd.f32 0.0, %v3600
        %v3602 = vpop.f32.mrf.mxu0
        %3603 = vmatprep.mubr.f32.mxu0 %v3117
        %3604 = vmatmul.mubr.f32.gmra.mxu0 %v3116
        %v3605 = vpop.f32.mrf.mxu0
        %v3606 = vadd.f32 0.0, %v3605
        %v3607 = vpop.f32.mrf.mxu0
        %3608 = vmatprep.mubr.f32.mxu0 %v3119
        %3609 = vmatmul.mubr.f32.gmra.mxu0 %v3118
        %v3610 = vpop.f32.mrf.mxu0
        %v3611 = vadd.f32 0.0, %v3610
        %v3612 = vpop.f32.mrf.mxu0
        %3613 = vmatprep.mubr.f32.mxu0 %v3121
        %3614 = vmatmul.mubr.f32.gmra.mxu0 %v3120
        %v3615 = vpop.f32.mrf.mxu0
        %v3616 = vadd.f32 0.0, %v3615
        %v3617 = vpop.f32.mrf.mxu0
        %3618 = vmatprep.mubr.f32.mxu0 %v3123
        %3619 = vmatmul.mubr.f32.gmra.mxu0 %v3122
        %v3620 = vpop.f32.mrf.mxu0
        %v3621 = vadd.f32 0.0, %v3620
        %v3622 = vpop.f32.mrf.mxu0
        %3623 = vmatprep.mubr.f32.mxu0 %v3125
        %3624 = vmatmul.mubr.f32.gmra.mxu0 %v3124
        %v3625 = vpop.f32.mrf.mxu0
        %v3626 = vadd.f32 0.0, %v3625
        %v3627 = vpop.f32.mrf.mxu0
        %3628 = vmatprep.mubr.f32.mxu0 %v3127
        %3629 = vmatmul.mubr.f32.gmra.mxu0 %v3126
        %v3630 = vpop.f32.mrf.mxu0
        %v3631 = vadd.f32 0.0, %v3630
        %v3632 = vpop.f32.mrf.mxu0
        %3633 = vmatprep.mubr.f32.mxu0 %v3129
        %3634 = vmatmul.mubr.f32.gmra.mxu0 %v3128
        %v3635 = vpop.f32.mrf.mxu0
        %v3636 = vadd.f32 0.0, %v3635
        %v3637 = vpop.f32.mrf.mxu0
        %3638 = vmatprep.mubr.f32.mxu0 %v3131
        %3639 = vmatmul.mubr.f32.gmra.mxu0 %v3130
        %v3640 = vpop.f32.mrf.mxu0
        %v3641 = vadd.f32 0.0, %v3640
        %v3642 = vpop.f32.mrf.mxu0
        %3643 = vmatprep.mubr.f32.mxu0 %v3133
        %3644 = vmatmul.mubr.f32.gmra.mxu0 %v3132
        %v3645 = vpop.f32.mrf.mxu0
        %v3646 = vadd.f32 0.0, %v3645
        %v3647 = vpop.f32.mrf.mxu0
        %3648 = vmatprep.mubr.f32.mxu0 %v3135
        %3649 = vmatmul.mubr.f32.gmra.mxu0 %v3134
        %v3650 = vpop.f32.mrf.mxu0
        %v3651 = vadd.f32 0.0, %v3650
        %v3652 = vpop.f32.mrf.mxu0
        %3653 = vmatprep.mubr.f32.mxu0 %v3137
        %3654 = vmatmul.mubr.f32.gmra.mxu0 %v3136
        %v3655 = vpop.f32.mrf.mxu0
        %v3656 = vadd.f32 0.0, %v3655
        %v3657 = vpop.f32.mrf.mxu0
        %3658 = vmatprep.mubr.f32.mxu0 %v3139
        %3659 = vmatmul.mubr.f32.gmra.mxu0 %v3138
        %v3660 = vpop.f32.mrf.mxu0
        %v3661 = vadd.f32 0.0, %v3660
        %v3662 = vpop.f32.mrf.mxu0
        %3663 = vmatprep.mubr.f32.mxu0 %v3141
        %3664 = vmatmul.mubr.f32.gmra.mxu0 %v3140
        %v3665 = vpop.f32.mrf.mxu0
        %v3666 = vadd.f32 0.0, %v3665
        %v3667 = vpop.f32.mrf.mxu0
        %3668 = vmatprep.mubr.f32.mxu0 %v3143
        %3669 = vmatmul.mubr.f32.gmra.mxu0 %v3142
        %v3670 = vpop.f32.mrf.mxu0
        %v3671 = vadd.f32 0.0, %v3670
        %v3672 = vpop.f32.mrf.mxu0
        %3673 = vmatprep.mubr.f32.mxu0 %v3145
        %3674 = vmatmul.mubr.f32.gmra.mxu0 %v3144
        %v3675 = vpop.f32.mrf.mxu0
        %v3676 = vadd.f32 0.0, %v3675
        %v3677 = vpop.f32.mrf.mxu0
        %3678 = vmatprep.mubr.f32.mxu0 %v3147
        %3679 = vmatmul.mubr.f32.gmra.mxu0 %v3146
        %v3680 = vpop.f32.mrf.mxu0
        %v3681 = vadd.f32 0.0, %v3680
        %v3682 = vpop.f32.mrf.mxu0
        %3683 = vmatprep.mubr.f32.mxu0 %v3149
        %3684 = vmatmul.mubr.f32.gmra.mxu0 %v3148
        %v3685 = vpop.f32.mrf.mxu0
        %v3686 = vadd.f32 0.0, %v3685
        %v3687 = vpop.f32.mrf.mxu0
        %3688 = vmatprep.mubr.f32.mxu0 %v3151
        %3689 = vmatmul.mubr.f32.gmra.mxu0 %v3150
        %v3690 = vpop.f32.mrf.mxu0
        %v3691 = vadd.f32 0.0, %v3690
        %v3692 = vpop.f32.mrf.mxu0
        %3693 = vmatprep.mubr.f32.mxu0 %v3153
        %3694 = vmatmul.mubr.f32.gmra.mxu0 %v3152
        %v3695 = vpop.f32.mrf.mxu0
        %v3696 = vadd.f32 0.0, %v3695
        %v3697 = vpop.f32.mrf.mxu0
        %3698 = vdwg.mxu0
        %v3699 = vmax.f32 %v3221, %v3341
        %v3700 = vmax.f32 %v3226, %v3346
        %v3701 = vmax.f32 %v3231, %v3351
        %v3702 = vmax.f32 %v3236, %v3356
        %v3703 = vmax.f32 %v3241, %v3361
        %v3704 = vmax.f32 %v3246, %v3366
        %v3705 = vmax.f32 %v3251, %v3371
        %v3706 = vmax.f32 %v3256, %v3376
        %v3707 = vmax.f32 %v3261, %v3381
        %v3708 = vmax.f32 %v3266, %v3386
        %v3709 = vmax.f32 %v3271, %v3391
        %v3710 = vmax.f32 %v3276, %v3396
        %v3711 = vmax.f32 %v3281, %v3401
        %v3712 = vmax.f32 %v3286, %v3406
        %v3713 = vmax.f32 %v3291, %v3411
        %v3714 = vmax.f32 %v3296, %v3416
        %v3715 = vmax.f32 %v3301, %v3421
        %v3716 = vmax.f32 %v3306, %v3426
        %v3717 = vmax.f32 %v3311, %v3431
        %v3718 = vmax.f32 %v3316, %v3436
        %v3719 = vmax.f32 %v3321, %v3441
        %v3720 = vmax.f32 %v3326, %v3446
        %v3721 = vmax.f32 %v3331, %v3451
        %v3722 = vmax.f32 %v3336, %v3456
        %v3723 = vmax.f32 %v3461, %v3581
        %v3724 = vmax.f32 %v3466, %v3586
        %v3725 = vmax.f32 %v3471, %v3591
        %v3726 = vmax.f32 %v3476, %v3596
        %v3727 = vmax.f32 %v3481, %v3601
        %v3728 = vmax.f32 %v3486, %v3606
        %v3729 = vmax.f32 %v3491, %v3611
        %v3730 = vmax.f32 %v3496, %v3616
        %v3731 = vmax.f32 %v3501, %v3621
        %v3732 = vmax.f32 %v3506, %v3626
        %v3733 = vmax.f32 %v3511, %v3631
        %v3734 = vmax.f32 %v3516, %v3636
        %v3735 = vmax.f32 %v3521, %v3641
        %v3736 = vmax.f32 %v3526, %v3646
        %v3737 = vmax.f32 %v3531, %v3651
        %v3738 = vmax.f32 %v3536, %v3656
        %v3739 = vmax.f32 %v3541, %v3661
        %v3740 = vmax.f32 %v3546, %v3666
        %v3741 = vmax.f32 %v3551, %v3671
        %v3742 = vmax.f32 %v3556, %v3676
        %v3743 = vmax.f32 %v3561, %v3681
        %v3744 = vmax.f32 %v3566, %v3686
        %v3745 = vmax.f32 %v3571, %v3691
        %v3746 = vmax.f32 %v3576, %v3696
        %v3747 = vmax.f32 %v3699, %v3723
        %v3748 = vmax.f32 %v3700, %v3724
        %v3749 = vmax.f32 %v3701, %v3725
        %v3750 = vmax.f32 %v3702, %v3726
        %v3751 = vmax.f32 %v3703, %v3727
        %v3752 = vmax.f32 %v3704, %v3728
        %v3753 = vmax.f32 %v3705, %v3729
        %v3754 = vmax.f32 %v3706, %v3730
        %v3755 = vmax.f32 %v3707, %v3731
        %v3756 = vmax.f32 %v3708, %v3732
        %v3757 = vmax.f32 %v3709, %v3733
        %v3758 = vmax.f32 %v3710, %v3734
        %v3759 = vmax.f32 %v3711, %v3735
        %v3760 = vmax.f32 %v3712, %v3736
        %v3761 = vmax.f32 %v3713, %v3737
        %v3762 = vmax.f32 %v3714, %v3738
        %v3763 = vmax.f32 %v3715, %v3739
        %v3764 = vmax.f32 %v3716, %v3740
        %v3765 = vmax.f32 %v3717, %v3741
        %v3766 = vmax.f32 %v3718, %v3742
        %v3767 = vmax.f32 %v3719, %v3743
        %v3768 = vmax.f32 %v3720, %v3744
        %v3769 = vmax.f32 %v3721, %v3745
        %v3770 = vmax.f32 %v3722, %v3746
        %3771 = vst [vmem:[#allocation2] sm:$0xff] %v3747
        %3772 = vst [vmem:[#allocation2 + $0x8] sm:$0xff] %v3748
        %3773 = vst [vmem:[#allocation2 + $0x10] sm:$0xff] %v3749
        %3774 = vst [vmem:[#allocation2 + $0x18] sm:$0xff] %v3750
        %3775 = vst [vmem:[#allocation2 + $0x20] sm:$0xff] %v3751
        %3776 = vst [vmem:[#allocation2 + $0x28] sm:$0xff] %v3752
        %3777 = vst [vmem:[#allocation2 + $0x30] sm:$0xff] %v3753
        %3778 = vst [vmem:[#allocation2 + $0x38] sm:$0xff] %v3754
        %3779 = vst [vmem:[#allocation2 + $0x40] sm:$0xff] %v3755
        %3780 = vst [vmem:[#allocation2 + $0x48] sm:$0xff] %v3756
        %3781 = vst [vmem:[#allocation2 + $0x50] sm:$0xff] %v3757
        %3782 = vst [vmem:[#allocation2 + $0x58] sm:$0xff] %v3758
        %3783 = vst [vmem:[#allocation2 + $0x60] sm:$0xff] %v3759
        %3784 = vst [vmem:[#allocation2 + $0x68] sm:$0xff] %v3760
        %3785 = vst [vmem:[#allocation2 + $0x70] sm:$0xff] %v3761
        %3786 = vst [vmem:[#allocation2 + $0x78] sm:$0xff] %v3762
        %3787 = vst [vmem:[#allocation2 + $0x80] sm:$0xff] %v3763
        %3788 = vst [vmem:[#allocation2 + $0x88] sm:$0xff] %v3764
        %3789 = vst [vmem:[#allocation2 + $0x90] sm:$0xff] %v3765
        %3790 = vst [vmem:[#allocation2 + $0x98] sm:$0xff] %v3766
        %3791 = vst [vmem:[#allocation2 + $0xa0] sm:$0xff] %v3767
        %3792 = vst [vmem:[#allocation2 + $0xa8] sm:$0xff] %v3768
        %3793 = vst [vmem:[#allocation2 + $0xb0] sm:$0xff] %v3769
        %3794 = vst [vmem:[#allocation2 + $0xb8] sm:$0xff] %v3770
        %v3795 = vld [vmem:[#allocation8] sm:$0x1]
        %v3797 = vlaneseq
        %v3798 = vshrl.u32 %v3797, 7
        %v3799 = vsub.s32 0, %v3798
        %v3800 = vrot.slane %v3795, %v3799
        %v3802 = vld [vmem:[#allocation2] sm:$0xff]
        %v3803 = vld [vmem:[#allocation2 + $0x10] sm:$0xff]
        %v3804 = vld [vmem:[#allocation2 + $0x20] sm:$0xff]
        %v3805 = vld [vmem:[#allocation2 + $0x30] sm:$0xff]
        %v3806 = vld [vmem:[#allocation2 + $0x40] sm:$0xff]
        %v3807 = vld [vmem:[#allocation2 + $0x50] sm:$0xff]
        %v3808 = vld [vmem:[#allocation2 + $0x60] sm:$0xff]
        %v3809 = vld [vmem:[#allocation2 + $0x70] sm:$0xff]
        %v3810 = vld [vmem:[#allocation7] sm:$0xff]
        %v3811 = vld [vmem:[#allocation7 + $0x8] sm:$0xff]
        %v3812 = vld [vmem:[#allocation7 + $0x10] sm:$0xff]
        %v3813 = vld [vmem:[#allocation7 + $0x18] sm:$0xff]
        %v3814 = vld [vmem:[#allocation7 + $0x20] sm:$0xff]
        %v3815 = vld [vmem:[#allocation7 + $0x28] sm:$0xff]
        %v3816 = vld [vmem:[#allocation7 + $0x30] sm:$0xff]
        %v3817 = vld [vmem:[#allocation7 + $0x38] sm:$0xff]
        %v3818 = vld [vmem:[#allocation7 + $0x40] sm:$0xff]
        %v3819 = vld [vmem:[#allocation7 + $0x48] sm:$0xff]
        %v3820 = vld [vmem:[#allocation7 + $0x50] sm:$0xff]
        %v3821 = vld [vmem:[#allocation7 + $0x58] sm:$0xff]
        %v3822 = vld [vmem:[#allocation7 + $0x60] sm:$0xff]
        %v3823 = vld [vmem:[#allocation7 + $0x68] sm:$0xff]
        %v3824 = vld [vmem:[#allocation7 + $0x70] sm:$0xff]
        %v3825 = vld [vmem:[#allocation7 + $0x78] sm:$0xff]
        %3826 = vmatprep.subr.mxu0 0.0
        %3827 = vmatpush1.msra.mxu0 %v3825
        %3828 = vmatprep.subr.mxu0 0.0
        %3829 = vmatpush1.msra.mxu0 %v3824
        %3830 = vmatprep.subr.mxu0 0.0
        %3831 = vmatpush1.msra.mxu0 %v3823
        %3832 = vmatprep.subr.mxu0 0.0
        %3833 = vmatpush1.msra.mxu0 %v3822
        %3834 = vmatprep.subr.mxu0 0.0
        %3835 = vmatpush1.msra.mxu0 %v3821
        %3836 = vmatprep.subr.mxu0 0.0
        %3837 = vmatpush1.msra.mxu0 %v3820
        %3838 = vmatprep.subr.mxu0 0.0
        %3839 = vmatpush1.msra.mxu0 %v3819
        %3840 = vmatprep.subr.mxu0 0.0
        %3841 = vmatpush1.msra.mxu0 %v3818
        %3842 = vmatprep.subr.mxu0 0.0
        %3843 = vmatpush1.msra.mxu0 %v3817
        %3844 = vmatprep.subr.mxu0 0.0
        %3845 = vmatpush1.msra.mxu0 %v3816
        %3846 = vmatprep.subr.mxu0 0.0
        %3847 = vmatpush1.msra.mxu0 %v3815
        %3848 = vmatprep.subr.mxu0 0.0
        %3849 = vmatpush1.msra.mxu0 %v3814
        %3850 = vmatprep.subr.mxu0 0.0
        %3851 = vmatpush1.msra.mxu0 %v3813
        %3852 = vmatprep.subr.mxu0 0.0
        %3853 = vmatpush1.msra.mxu0 %v3812
        %3854 = vmatprep.subr.mxu0 0.0
        %3855 = vmatpush1.msra.mxu0 %v3811
        %3856 = vmatprep.subr.mxu0 0.0
        %3857 = vmatpush1.msra.mxu0 %v3810
        %3858 = vmatprep.subr.mxu0 0.0
        %3859 = vmatpush2.msra.mxu0 0.0
        %3860 = vmatprep.subr.mxu0 0.0
        %3861 = vmatpush2.msra.mxu0 0.0
        %3862 = vmatprep.subr.mxu0 0.0
        %3863 = vmatpush2.msra.mxu0 0.0
        %3864 = vmatprep.subr.mxu0 0.0
        %3865 = vmatpush2.msra.mxu0 0.0
        %3866 = vmatprep.subr.mxu0 0.0
        %3867 = vmatpush2.msra.mxu0 0.0
        %3868 = vmatprep.subr.mxu0 0.0
        %3869 = vmatpush2.msra.mxu0 0.0
        %3870 = vmatprep.subr.mxu0 0.0
        %3871 = vmatpush2.msra.mxu0 0.0
        %3872 = vmatprep.subr.mxu0 0.0
        %3873 = vmatpush2.msra.mxu0 0.0
        %3874 = vmatprep.subr.mxu0 0.0
        %3875 = vmatpush2.msra.mxu0 0.0
        %3876 = vmatprep.subr.mxu0 0.0
        %3877 = vmatpush2.msra.mxu0 0.0
        %3878 = vmatprep.subr.mxu0 0.0
        %3879 = vmatpush2.msra.mxu0 0.0
        %3880 = vmatprep.subr.mxu0 0.0
        %3881 = vmatpush2.msra.mxu0 0.0
        %3882 = vmatprep.subr.mxu0 0.0
        %3883 = vmatpush2.msra.mxu0 0.0
        %3884 = vmatprep.subr.mxu0 0.0
        %3885 = vmatpush2.msra.mxu0 0.0
        %3886 = vmatprep.subr.mxu0 0.0
        %3887 = vmatpush2.msra.mxu0 0.0
        %3888 = vmatprep.subr.mxu0 0.0
        %3889 = vmatpush2.msra.mxu0 0.0
        %3890 = vmatprep.mubr.f32.mxu0 0.0
        %3891 = vmatmul.mubr.f32.gmra.mxu0 %v3802
        %v3892 = vpop.f32.mrf.mxu0
        %v3893 = vadd.f32 0.0, %v3892
        %v3894 = vpop.f32.mrf.mxu0
        %3895 = vmatprep.mubr.f32.mxu0 0.0
        %3896 = vmatmul.mubr.f32.gmra.mxu0 %v3803
        %v3897 = vpop.f32.mrf.mxu0
        %v3898 = vadd.f32 0.0, %v3897
        %v3899 = vpop.f32.mrf.mxu0
        %3900 = vmatprep.mubr.f32.mxu0 0.0
        %3901 = vmatmul.mubr.f32.gmra.mxu0 %v3804
        %v3902 = vpop.f32.mrf.mxu0
        %v3903 = vadd.f32 0.0, %v3902
        %v3904 = vpop.f32.mrf.mxu0
        %3905 = vmatprep.mubr.f32.mxu0 0.0
        %3906 = vmatmul.mubr.f32.gmra.mxu0 %v3805
        %v3907 = vpop.f32.mrf.mxu0
        %v3908 = vadd.f32 0.0, %v3907
        %v3909 = vpop.f32.mrf.mxu0
        %3910 = vmatprep.mubr.f32.mxu0 0.0
        %3911 = vmatmul.mubr.f32.gmra.mxu0 %v3806
        %v3912 = vpop.f32.mrf.mxu0
        %v3913 = vadd.f32 0.0, %v3912
        %v3914 = vpop.f32.mrf.mxu0
        %3915 = vmatprep.mubr.f32.mxu0 0.0
        %3916 = vmatmul.mubr.f32.gmra.mxu0 %v3807
        %v3917 = vpop.f32.mrf.mxu0
        %v3918 = vadd.f32 0.0, %v3917
        %v3919 = vpop.f32.mrf.mxu0
        %3920 = vmatprep.mubr.f32.mxu0 0.0
        %3921 = vmatmul.mubr.f32.gmra.mxu0 %v3808
        %v3922 = vpop.f32.mrf.mxu0
        %v3923 = vadd.f32 0.0, %v3922
        %v3924 = vpop.f32.mrf.mxu0
        %3925 = vmatprep.mubr.f32.mxu0 0.0
        %3926 = vmatmul.mubr.f32.gmra.mxu0 %v3809
        %v3927 = vpop.f32.mrf.mxu0
        %v3928 = vadd.f32 0.0, %v3927
        %v3929 = vpop.f32.mrf.mxu0
        %3930 = vdwg.mxu0
        %v3931 = vadd.f32 %v3800, %v3893
        %v3932 = vadd.f32 %v3800, %v3898
        %v3933 = vadd.f32 %v3800, %v3903
        %v3934 = vadd.f32 %v3800, %v3908
        %v3935 = vadd.f32 %v3800, %v3913
        %v3936 = vadd.f32 %v3800, %v3918
        %v3937 = vadd.f32 %v3800, %v3923
        %v3938 = vadd.f32 %v3800, %v3928
        %v3939 = vld [vmem:[#allocation2 + $0x1] sm:$0xff]
        %v3940 = vld [vmem:[#allocation2 + $0x11] sm:$0xff]
        %v3941 = vld [vmem:[#allocation2 + $0x21] sm:$0xff]
        %v3942 = vld [vmem:[#allocation2 + $0x31] sm:$0xff]
        %v3943 = vld [vmem:[#allocation2 + $0x41] sm:$0xff]
        %v3944 = vld [vmem:[#allocation2 + $0x51] sm:$0xff]
        %v3945 = vld [vmem:[#allocation2 + $0x61] sm:$0xff]
        %v3946 = vld [vmem:[#allocation2 + $0x71] sm:$0xff]
        %s3947 = scalar_lea.vmem [#allocation7], 128
        %v3948 = vld [vmem:[%s3947] sm:$0xff]
        %v3949 = vld [vmem:[%s3947 + $0x8] sm:$0xff]
        %v3950 = vld [vmem:[%s3947 + $0x10] sm:$0xff]
        %v3951 = vld [vmem:[%s3947 + $0x18] sm:$0xff]
        %v3952 = vld [vmem:[%s3947 + $0x20] sm:$0xff]
        %v3953 = vld [vmem:[%s3947 + $0x28] sm:$0xff]
        %v3954 = vld [vmem:[%s3947 + $0x30] sm:$0xff]
        %v3955 = vld [vmem:[%s3947 + $0x38] sm:$0xff]
        %v3956 = vld [vmem:[%s3947 + $0x40] sm:$0xff]
        %v3957 = vld [vmem:[%s3947 + $0x48] sm:$0xff]
        %v3958 = vld [vmem:[%s3947 + $0x50] sm:$0xff]
        %v3959 = vld [vmem:[%s3947 + $0x58] sm:$0xff]
        %v3960 = vld [vmem:[%s3947 + $0x60] sm:$0xff]
        %v3961 = vld [vmem:[%s3947 + $0x68] sm:$0xff]
        %v3962 = vld [vmem:[%s3947 + $0x70] sm:$0xff]
        %v3963 = vld [vmem:[%s3947 + $0x78] sm:$0xff]
        %3964 = vmatprep.subr.mxu0 0.0
        %3965 = vmatpush1.msra.mxu0 %v3963
        %3966 = vmatprep.subr.mxu0 0.0
        %3967 = vmatpush1.msra.mxu0 %v3962
        %3968 = vmatprep.subr.mxu0 0.0
        %3969 = vmatpush1.msra.mxu0 %v3961
        %3970 = vmatprep.subr.mxu0 0.0
        %3971 = vmatpush1.msra.mxu0 %v3960
        %3972 = vmatprep.subr.mxu0 0.0
        %3973 = vmatpush1.msra.mxu0 %v3959
        %3974 = vmatprep.subr.mxu0 0.0
        %3975 = vmatpush1.msra.mxu0 %v3958
        %3976 = vmatprep.subr.mxu0 0.0
        %3977 = vmatpush1.msra.mxu0 %v3957
        %3978 = vmatprep.subr.mxu0 0.0
        %3979 = vmatpush1.msra.mxu0 %v3956
        %3980 = vmatprep.subr.mxu0 0.0
        %3981 = vmatpush1.msra.mxu0 %v3955
        %3982 = vmatprep.subr.mxu0 0.0
        %3983 = vmatpush1.msra.mxu0 %v3954
        %3984 = vmatprep.subr.mxu0 0.0
        %3985 = vmatpush1.msra.mxu0 %v3953
        %3986 = vmatprep.subr.mxu0 0.0
        %3987 = vmatpush1.msra.mxu0 %v3952
        %3988 = vmatprep.subr.mxu0 0.0
        %3989 = vmatpush1.msra.mxu0 %v3951
        %3990 = vmatprep.subr.mxu0 0.0
        %3991 = vmatpush1.msra.mxu0 %v3950
        %3992 = vmatprep.subr.mxu0 0.0
        %3993 = vmatpush1.msra.mxu0 %v3949
        %3994 = vmatprep.subr.mxu0 0.0
        %3995 = vmatpush1.msra.mxu0 %v3948
        %3996 = vmatprep.subr.mxu0 0.0
        %3997 = vmatpush2.msra.mxu0 0.0
        %3998 = vmatprep.subr.mxu0 0.0
        %3999 = vmatpush2.msra.mxu0 0.0
        %4000 = vmatprep.subr.mxu0 0.0
        %4001 = vmatpush2.msra.mxu0 0.0
        %4002 = vmatprep.subr.mxu0 0.0
        %4003 = vmatpush2.msra.mxu0 0.0
        %4004 = vmatprep.subr.mxu0 0.0
        %4005 = vmatpush2.msra.mxu0 0.0
        %4006 = vmatprep.subr.mxu0 0.0
        %4007 = vmatpush2.msra.mxu0 0.0
        %4008 = vmatprep.subr.mxu0 0.0
        %4009 = vmatpush2.msra.mxu0 0.0
        %4010 = vmatprep.subr.mxu0 0.0
        %4011 = vmatpush2.msra.mxu0 0.0
        %4012 = vmatprep.subr.mxu0 0.0
        %4013 = vmatpush2.msra.mxu0 0.0
        %4014 = vmatprep.subr.mxu0 0.0
        %4015 = vmatpush2.msra.mxu0 0.0
        %4016 = vmatprep.subr.mxu0 0.0
        %4017 = vmatpush2.msra.mxu0 0.0
        %4018 = vmatprep.subr.mxu0 0.0
        %4019 = vmatpush2.msra.mxu0 0.0
        %4020 = vmatprep.subr.mxu0 0.0
        %4021 = vmatpush2.msra.mxu0 0.0
        %4022 = vmatprep.subr.mxu0 0.0
        %4023 = vmatpush2.msra.mxu0 0.0
        %4024 = vmatprep.subr.mxu0 0.0
        %4025 = vmatpush2.msra.mxu0 0.0
        %4026 = vmatprep.subr.mxu0 0.0
        %4027 = vmatpush2.msra.mxu0 0.0
        %4028 = vmatprep.mubr.f32.mxu0 0.0
        %4029 = vmatmul.mubr.f32.gmra.mxu0 %v3939
        %v4030 = vpop.f32.mrf.mxu0
        %v4031 = vadd.f32 0.0, %v4030
        %v4032 = vpop.f32.mrf.mxu0
        %4033 = vmatprep.mubr.f32.mxu0 0.0
        %4034 = vmatmul.mubr.f32.gmra.mxu0 %v3940
        %v4035 = vpop.f32.mrf.mxu0
        %v4036 = vadd.f32 0.0, %v4035
        %v4037 = vpop.f32.mrf.mxu0
        %4038 = vmatprep.mubr.f32.mxu0 0.0
        %4039 = vmatmul.mubr.f32.gmra.mxu0 %v3941
        %v4040 = vpop.f32.mrf.mxu0
        %v4041 = vadd.f32 0.0, %v4040
        %v4042 = vpop.f32.mrf.mxu0
        %4043 = vmatprep.mubr.f32.mxu0 0.0
        %4044 = vmatmul.mubr.f32.gmra.mxu0 %v3942
        %v4045 = vpop.f32.mrf.mxu0
        %v4046 = vadd.f32 0.0, %v4045
        %v4047 = vpop.f32.mrf.mxu0
        %4048 = vmatprep.mubr.f32.mxu0 0.0
        %4049 = vmatmul.mubr.f32.gmra.mxu0 %v3943
        %v4050 = vpop.f32.mrf.mxu0
        %v4051 = vadd.f32 0.0, %v4050
        %v4052 = vpop.f32.mrf.mxu0
        %4053 = vmatprep.mubr.f32.mxu0 0.0
        %4054 = vmatmul.mubr.f32.gmra.mxu0 %v3944
        %v4055 = vpop.f32.mrf.mxu0
        %v4056 = vadd.f32 0.0, %v4055
        %v4057 = vpop.f32.mrf.mxu0
        %4058 = vmatprep.mubr.f32.mxu0 0.0
        %4059 = vmatmul.mubr.f32.gmra.mxu0 %v3945
        %v4060 = vpop.f32.mrf.mxu0
        %v4061 = vadd.f32 0.0, %v4060
        %v4062 = vpop.f32.mrf.mxu0
        %4063 = vmatprep.mubr.f32.mxu0 0.0
        %4064 = vmatmul.mubr.f32.gmra.mxu0 %v3946
        %v4065 = vpop.f32.mrf.mxu0
        %v4066 = vadd.f32 0.0, %v4065
        %v4067 = vpop.f32.mrf.mxu0
        %4068 = vdwg.mxu0
        %v4069 = vadd.f32 %v3931, %v4031
        %v4070 = vadd.f32 %v3932, %v4036
        %v4071 = vadd.f32 %v3933, %v4041
        %v4072 = vadd.f32 %v3934, %v4046
        %v4073 = vadd.f32 %v3935, %v4051
        %v4074 = vadd.f32 %v3936, %v4056
        %v4075 = vadd.f32 %v3937, %v4061
        %v4076 = vadd.f32 %v3938, %v4066
        %v4077 = vld [vmem:[#allocation2 + $0x2] sm:$0xff]
        %v4078 = vld [vmem:[#allocation2 + $0x12] sm:$0xff]
        %v4079 = vld [vmem:[#allocation2 + $0x22] sm:$0xff]
        %v4080 = vld [vmem:[#allocation2 + $0x32] sm:$0xff]
        %v4081 = vld [vmem:[#allocation2 + $0x42] sm:$0xff]
        %v4082 = vld [vmem:[#allocation2 + $0x52] sm:$0xff]
        %v4083 = vld [vmem:[#allocation2 + $0x62] sm:$0xff]
        %v4084 = vld [vmem:[#allocation2 + $0x72] sm:$0xff]
        %s4085 = scalar_lea.vmem [#allocation7], 256
        %v4086 = vld [vmem:[%s4085] sm:$0xff]
        %v4087 = vld [vmem:[%s4085 + $0x8] sm:$0xff]
        %v4088 = vld [vmem:[%s4085 + $0x10] sm:$0xff]
        %v4089 = vld [vmem:[%s4085 + $0x18] sm:$0xff]
        %v4090 = vld [vmem:[%s4085 + $0x20] sm:$0xff]
        %v4091 = vld [vmem:[%s4085 + $0x28] sm:$0xff]
        %v4092 = vld [vmem:[%s4085 + $0x30] sm:$0xff]
        %v4093 = vld [vmem:[%s4085 + $0x38] sm:$0xff]
        %v4094 = vld [vmem:[%s4085 + $0x40] sm:$0xff]
        %v4095 = vld [vmem:[%s4085 + $0x48] sm:$0xff]
        %v4096 = vld [vmem:[%s4085 + $0x50] sm:$0xff]
        %v4097 = vld [vmem:[%s4085 + $0x58] sm:$0xff]
        %v4098 = vld [vmem:[%s4085 + $0x60] sm:$0xff]
        %v4099 = vld [vmem:[%s4085 + $0x68] sm:$0xff]
        %v4100 = vld [vmem:[%s4085 + $0x70] sm:$0xff]
        %v4101 = vld [vmem:[%s4085 + $0x78] sm:$0xff]
        %4102 = vmatprep.subr.mxu0 0.0
        %4103 = vmatpush1.msra.mxu0 %v4101
        %4104 = vmatprep.subr.mxu0 0.0
        %4105 = vmatpush1.msra.mxu0 %v4100
        %4106 = vmatprep.subr.mxu0 0.0
        %4107 = vmatpush1.msra.mxu0 %v4099
        %4108 = vmatprep.subr.mxu0 0.0
        %4109 = vmatpush1.msra.mxu0 %v4098
        %4110 = vmatprep.subr.mxu0 0.0
        %4111 = vmatpush1.msra.mxu0 %v4097
        %4112 = vmatprep.subr.mxu0 0.0
        %4113 = vmatpush1.msra.mxu0 %v4096
        %4114 = vmatprep.subr.mxu0 0.0
        %4115 = vmatpush1.msra.mxu0 %v4095
        %4116 = vmatprep.subr.mxu0 0.0
        %4117 = vmatpush1.msra.mxu0 %v4094
        %4118 = vmatprep.subr.mxu0 0.0
        %4119 = vmatpush1.msra.mxu0 %v4093
        %4120 = vmatprep.subr.mxu0 0.0
        %4121 = vmatpush1.msra.mxu0 %v4092
        %4122 = vmatprep.subr.mxu0 0.0
        %4123 = vmatpush1.msra.mxu0 %v4091
        %4124 = vmatprep.subr.mxu0 0.0
        %4125 = vmatpush1.msra.mxu0 %v4090
        %4126 = vmatprep.subr.mxu0 0.0
        %4127 = vmatpush1.msra.mxu0 %v4089
        %4128 = vmatprep.subr.mxu0 0.0
        %4129 = vmatpush1.msra.mxu0 %v4088
        %4130 = vmatprep.subr.mxu0 0.0
        %4131 = vmatpush1.msra.mxu0 %v4087
        %4132 = vmatprep.subr.mxu0 0.0
        %4133 = vmatpush1.msra.mxu0 %v4086
        %4134 = vmatprep.subr.mxu0 0.0
        %4135 = vmatpush2.msra.mxu0 0.0
        %4136 = vmatprep.subr.mxu0 0.0
        %4137 = vmatpush2.msra.mxu0 0.0
        %4138 = vmatprep.subr.mxu0 0.0
        %4139 = vmatpush2.msra.mxu0 0.0
        %4140 = vmatprep.subr.mxu0 0.0
        %4141 = vmatpush2.msra.mxu0 0.0
        %4142 = vmatprep.subr.mxu0 0.0
        %4143 = vmatpush2.msra.mxu0 0.0
        %4144 = vmatprep.subr.mxu0 0.0
        %4145 = vmatpush2.msra.mxu0 0.0
        %4146 = vmatprep.subr.mxu0 0.0
        %4147 = vmatpush2.msra.mxu0 0.0
        %4148 = vmatprep.subr.mxu0 0.0
        %4149 = vmatpush2.msra.mxu0 0.0
        %4150 = vmatprep.subr.mxu0 0.0
        %4151 = vmatpush2.msra.mxu0 0.0
        %4152 = vmatprep.subr.mxu0 0.0
        %4153 = vmatpush2.msra.mxu0 0.0
        %4154 = vmatprep.subr.mxu0 0.0
        %4155 = vmatpush2.msra.mxu0 0.0
        %4156 = vmatprep.subr.mxu0 0.0
        %4157 = vmatpush2.msra.mxu0 0.0
        %4158 = vmatprep.subr.mxu0 0.0
        %4159 = vmatpush2.msra.mxu0 0.0
        %4160 = vmatprep.subr.mxu0 0.0
        %4161 = vmatpush2.msra.mxu0 0.0
        %4162 = vmatprep.subr.mxu0 0.0
        %4163 = vmatpush2.msra.mxu0 0.0
        %4164 = vmatprep.subr.mxu0 0.0
        %4165 = vmatpush2.msra.mxu0 0.0
        %4166 = vmatprep.mubr.f32.mxu0 0.0
        %4167 = vmatmul.mubr.f32.gmra.mxu0 %v4077
        %v4168 = vpop.f32.mrf.mxu0
        %v4169 = vadd.f32 0.0, %v4168
        %v4170 = vpop.f32.mrf.mxu0
        %4171 = vmatprep.mubr.f32.mxu0 0.0
        %4172 = vmatmul.mubr.f32.gmra.mxu0 %v4078
        %v4173 = vpop.f32.mrf.mxu0
        %v4174 = vadd.f32 0.0, %v4173
        %v4175 = vpop.f32.mrf.mxu0
        %4176 = vmatprep.mubr.f32.mxu0 0.0
        %4177 = vmatmul.mubr.f32.gmra.mxu0 %v4079
        %v4178 = vpop.f32.mrf.mxu0
        %v4179 = vadd.f32 0.0, %v4178
        %v4180 = vpop.f32.mrf.mxu0
        %4181 = vmatprep.mubr.f32.mxu0 0.0
        %4182 = vmatmul.mubr.f32.gmra.mxu0 %v4080
        %v4183 = vpop.f32.mrf.mxu0
        %v4184 = vadd.f32 0.0, %v4183
        %v4185 = vpop.f32.mrf.mxu0
        %4186 = vmatprep.mubr.f32.mxu0 0.0
        %4187 = vmatmul.mubr.f32.gmra.mxu0 %v4081
        %v4188 = vpop.f32.mrf.mxu0
        %v4189 = vadd.f32 0.0, %v4188
        %v4190 = vpop.f32.mrf.mxu0
        %4191 = vmatprep.mubr.f32.mxu0 0.0
        %4192 = vmatmul.mubr.f32.gmra.mxu0 %v4082
        %v4193 = vpop.f32.mrf.mxu0
        %v4194 = vadd.f32 0.0, %v4193
        %v4195 = vpop.f32.mrf.mxu0
        %4196 = vmatprep.mubr.f32.mxu0 0.0
        %4197 = vmatmul.mubr.f32.gmra.mxu0 %v4083
        %v4198 = vpop.f32.mrf.mxu0
        %v4199 = vadd.f32 0.0, %v4198
        %v4200 = vpop.f32.mrf.mxu0
        %4201 = vmatprep.mubr.f32.mxu0 0.0
        %4202 = vmatmul.mubr.f32.gmra.mxu0 %v4084
        %v4203 = vpop.f32.mrf.mxu0
        %v4204 = vadd.f32 0.0, %v4203
        %v4205 = vpop.f32.mrf.mxu0
        %4206 = vdwg.mxu0
        %v4207 = vadd.f32 %v4069, %v4169
        %v4208 = vadd.f32 %v4070, %v4174
        %v4209 = vadd.f32 %v4071, %v4179
        %v4210 = vadd.f32 %v4072, %v4184
        %v4211 = vadd.f32 %v4073, %v4189
        %v4212 = vadd.f32 %v4074, %v4194
        %v4213 = vadd.f32 %v4075, %v4199
        %v4214 = vadd.f32 %v4076, %v4204
        %v4215 = vld [vmem:[#allocation2 + $0x3] sm:$0xff]
        %v4216 = vld [vmem:[#allocation2 + $0x13] sm:$0xff]
        %v4217 = vld [vmem:[#allocation2 + $0x23] sm:$0xff]
        %v4218 = vld [vmem:[#allocation2 + $0x33] sm:$0xff]
        %v4219 = vld [vmem:[#allocation2 + $0x43] sm:$0xff]
        %v4220 = vld [vmem:[#allocation2 + $0x53] sm:$0xff]
        %v4221 = vld [vmem:[#allocation2 + $0x63] sm:$0xff]
        %v4222 = vld [vmem:[#allocation2 + $0x73] sm:$0xff]
        %s4223 = scalar_lea.vmem [#allocation7], 384
        %v4224 = vld [vmem:[%s4223] sm:$0xff]
        %v4225 = vld [vmem:[%s4223 + $0x8] sm:$0xff]
        %v4226 = vld [vmem:[%s4223 + $0x10] sm:$0xff]
        %v4227 = vld [vmem:[%s4223 + $0x18] sm:$0xff]
        %v4228 = vld [vmem:[%s4223 + $0x20] sm:$0xff]
        %v4229 = vld [vmem:[%s4223 + $0x28] sm:$0xff]
        %v4230 = vld [vmem:[%s4223 + $0x30] sm:$0xff]
        %v4231 = vld [vmem:[%s4223 + $0x38] sm:$0xff]
        %v4232 = vld [vmem:[%s4223 + $0x40] sm:$0xff]
        %v4233 = vld [vmem:[%s4223 + $0x48] sm:$0xff]
        %v4234 = vld [vmem:[%s4223 + $0x50] sm:$0xff]
        %v4235 = vld [vmem:[%s4223 + $0x58] sm:$0xff]
        %v4236 = vld [vmem:[%s4223 + $0x60] sm:$0xff]
        %v4237 = vld [vmem:[%s4223 + $0x68] sm:$0xff]
        %v4238 = vld [vmem:[%s4223 + $0x70] sm:$0xff]
        %v4239 = vld [vmem:[%s4223 + $0x78] sm:$0xff]
        %4240 = vmatprep.subr.mxu0 0.0
        %4241 = vmatpush1.msra.mxu0 %v4239
        %4242 = vmatprep.subr.mxu0 0.0
        %4243 = vmatpush1.msra.mxu0 %v4238
        %4244 = vmatprep.subr.mxu0 0.0
        %4245 = vmatpush1.msra.mxu0 %v4237
        %4246 = vmatprep.subr.mxu0 0.0
        %4247 = vmatpush1.msra.mxu0 %v4236
        %4248 = vmatprep.subr.mxu0 0.0
        %4249 = vmatpush1.msra.mxu0 %v4235
        %4250 = vmatprep.subr.mxu0 0.0
        %4251 = vmatpush1.msra.mxu0 %v4234
        %4252 = vmatprep.subr.mxu0 0.0
        %4253 = vmatpush1.msra.mxu0 %v4233
        %4254 = vmatprep.subr.mxu0 0.0
        %4255 = vmatpush1.msra.mxu0 %v4232
        %4256 = vmatprep.subr.mxu0 0.0
        %4257 = vmatpush1.msra.mxu0 %v4231
        %4258 = vmatprep.subr.mxu0 0.0
        %4259 = vmatpush1.msra.mxu0 %v4230
        %4260 = vmatprep.subr.mxu0 0.0
        %4261 = vmatpush1.msra.mxu0 %v4229
        %4262 = vmatprep.subr.mxu0 0.0
        %4263 = vmatpush1.msra.mxu0 %v4228
        %4264 = vmatprep.subr.mxu0 0.0
        %4265 = vmatpush1.msra.mxu0 %v4227
        %4266 = vmatprep.subr.mxu0 0.0
        %4267 = vmatpush1.msra.mxu0 %v4226
        %4268 = vmatprep.subr.mxu0 0.0
        %4269 = vmatpush1.msra.mxu0 %v4225
        %4270 = vmatprep.subr.mxu0 0.0
        %4271 = vmatpush1.msra.mxu0 %v4224
        %4272 = vmatprep.subr.mxu0 0.0
        %4273 = vmatpush2.msra.mxu0 0.0
        %4274 = vmatprep.subr.mxu0 0.0
        %4275 = vmatpush2.msra.mxu0 0.0
        %4276 = vmatprep.subr.mxu0 0.0
        %4277 = vmatpush2.msra.mxu0 0.0
        %4278 = vmatprep.subr.mxu0 0.0
        %4279 = vmatpush2.msra.mxu0 0.0
        %4280 = vmatprep.subr.mxu0 0.0
        %4281 = vmatpush2.msra.mxu0 0.0
        %4282 = vmatprep.subr.mxu0 0.0
        %4283 = vmatpush2.msra.mxu0 0.0
        %4284 = vmatprep.subr.mxu0 0.0
        %4285 = vmatpush2.msra.mxu0 0.0
        %4286 = vmatprep.subr.mxu0 0.0
        %4287 = vmatpush2.msra.mxu0 0.0
        %4288 = vmatprep.subr.mxu0 0.0
        %4289 = vmatpush2.msra.mxu0 0.0
        %4290 = vmatprep.subr.mxu0 0.0
        %4291 = vmatpush2.msra.mxu0 0.0
        %4292 = vmatprep.subr.mxu0 0.0
        %4293 = vmatpush2.msra.mxu0 0.0
        %4294 = vmatprep.subr.mxu0 0.0
        %4295 = vmatpush2.msra.mxu0 0.0
        %4296 = vmatprep.subr.mxu0 0.0
        %4297 = vmatpush2.msra.mxu0 0.0
        %4298 = vmatprep.subr.mxu0 0.0
        %4299 = vmatpush2.msra.mxu0 0.0
        %4300 = vmatprep.subr.mxu0 0.0
        %4301 = vmatpush2.msra.mxu0 0.0
        %4302 = vmatprep.subr.mxu0 0.0
        %4303 = vmatpush2.msra.mxu0 0.0
        %4304 = vmatprep.mubr.f32.mxu0 0.0
        %4305 = vmatmul.mubr.f32.gmra.mxu0 %v4215
        %v4306 = vpop.f32.mrf.mxu0
        %v4307 = vadd.f32 0.0, %v4306
        %v4308 = vpop.f32.mrf.mxu0
        %4309 = vmatprep.mubr.f32.mxu0 0.0
        %4310 = vmatmul.mubr.f32.gmra.mxu0 %v4216
        %v4311 = vpop.f32.mrf.mxu0
        %v4312 = vadd.f32 0.0, %v4311
        %v4313 = vpop.f32.mrf.mxu0
        %4314 = vmatprep.mubr.f32.mxu0 0.0
        %4315 = vmatmul.mubr.f32.gmra.mxu0 %v4217
        %v4316 = vpop.f32.mrf.mxu0
        %v4317 = vadd.f32 0.0, %v4316
        %v4318 = vpop.f32.mrf.mxu0
        %4319 = vmatprep.mubr.f32.mxu0 0.0
        %4320 = vmatmul.mubr.f32.gmra.mxu0 %v4218
        %v4321 = vpop.f32.mrf.mxu0
        %v4322 = vadd.f32 0.0, %v4321
        %v4323 = vpop.f32.mrf.mxu0
        %4324 = vmatprep.mubr.f32.mxu0 0.0
        %4325 = vmatmul.mubr.f32.gmra.mxu0 %v4219
        %v4326 = vpop.f32.mrf.mxu0
        %v4327 = vadd.f32 0.0, %v4326
        %v4328 = vpop.f32.mrf.mxu0
        %4329 = vmatprep.mubr.f32.mxu0 0.0
        %4330 = vmatmul.mubr.f32.gmra.mxu0 %v4220
        %v4331 = vpop.f32.mrf.mxu0
        %v4332 = vadd.f32 0.0, %v4331
        %v4333 = vpop.f32.mrf.mxu0
        %4334 = vmatprep.mubr.f32.mxu0 0.0
        %4335 = vmatmul.mubr.f32.gmra.mxu0 %v4221
        %v4336 = vpop.f32.mrf.mxu0
        %v4337 = vadd.f32 0.0, %v4336
        %v4338 = vpop.f32.mrf.mxu0
        %4339 = vmatprep.mubr.f32.mxu0 0.0
        %4340 = vmatmul.mubr.f32.gmra.mxu0 %v4222
        %v4341 = vpop.f32.mrf.mxu0
        %v4342 = vadd.f32 0.0, %v4341
        %v4343 = vpop.f32.mrf.mxu0
        %4344 = vdwg.mxu0
        %v4345 = vadd.f32 %v4207, %v4307
        %v4346 = vadd.f32 %v4208, %v4312
        %v4347 = vadd.f32 %v4209, %v4317
        %v4348 = vadd.f32 %v4210, %v4322
        %v4349 = vadd.f32 %v4211, %v4327
        %v4350 = vadd.f32 %v4212, %v4332
        %v4351 = vadd.f32 %v4213, %v4337
        %v4352 = vadd.f32 %v4214, %v4342
        %v4353 = vld [vmem:[#allocation2 + $0x4] sm:$0xff]
        %v4354 = vld [vmem:[#allocation2 + $0x14] sm:$0xff]
        %v4355 = vld [vmem:[#allocation2 + $0x24] sm:$0xff]
        %v4356 = vld [vmem:[#allocation2 + $0x34] sm:$0xff]
        %v4357 = vld [vmem:[#allocation2 + $0x44] sm:$0xff]
        %v4358 = vld [vmem:[#allocation2 + $0x54] sm:$0xff]
        %v4359 = vld [vmem:[#allocation2 + $0x64] sm:$0xff]
        %v4360 = vld [vmem:[#allocation2 + $0x74] sm:$0xff]
        %s4361 = scalar_lea.vmem [#allocation7], 512
        %v4362 = vld [vmem:[%s4361] sm:$0xff]
        %v4363 = vld [vmem:[%s4361 + $0x8] sm:$0xff]
        %v4364 = vld [vmem:[%s4361 + $0x10] sm:$0xff]
        %v4365 = vld [vmem:[%s4361 + $0x18] sm:$0xff]
        %v4366 = vld [vmem:[%s4361 + $0x20] sm:$0xff]
        %v4367 = vld [vmem:[%s4361 + $0x28] sm:$0xff]
        %v4368 = vld [vmem:[%s4361 + $0x30] sm:$0xff]
        %v4369 = vld [vmem:[%s4361 + $0x38] sm:$0xff]
        %v4370 = vld [vmem:[%s4361 + $0x40] sm:$0xff]
        %v4371 = vld [vmem:[%s4361 + $0x48] sm:$0xff]
        %v4372 = vld [vmem:[%s4361 + $0x50] sm:$0xff]
        %v4373 = vld [vmem:[%s4361 + $0x58] sm:$0xff]
        %v4374 = vld [vmem:[%s4361 + $0x60] sm:$0xff]
        %v4375 = vld [vmem:[%s4361 + $0x68] sm:$0xff]
        %v4376 = vld [vmem:[%s4361 + $0x70] sm:$0xff]
        %v4377 = vld [vmem:[%s4361 + $0x78] sm:$0xff]
        %4378 = vmatprep.subr.mxu0 0.0
        %4379 = vmatpush1.msra.mxu0 %v4377
        %4380 = vmatprep.subr.mxu0 0.0
        %4381 = vmatpush1.msra.mxu0 %v4376
        %4382 = vmatprep.subr.mxu0 0.0
        %4383 = vmatpush1.msra.mxu0 %v4375
        %4384 = vmatprep.subr.mxu0 0.0
        %4385 = vmatpush1.msra.mxu0 %v4374
        %4386 = vmatprep.subr.mxu0 0.0
        %4387 = vmatpush1.msra.mxu0 %v4373
        %4388 = vmatprep.subr.mxu0 0.0
        %4389 = vmatpush1.msra.mxu0 %v4372
        %4390 = vmatprep.subr.mxu0 0.0
        %4391 = vmatpush1.msra.mxu0 %v4371
        %4392 = vmatprep.subr.mxu0 0.0
        %4393 = vmatpush1.msra.mxu0 %v4370
        %4394 = vmatprep.subr.mxu0 0.0
        %4395 = vmatpush1.msra.mxu0 %v4369
        %4396 = vmatprep.subr.mxu0 0.0
        %4397 = vmatpush1.msra.mxu0 %v4368
        %4398 = vmatprep.subr.mxu0 0.0
        %4399 = vmatpush1.msra.mxu0 %v4367
        %4400 = vmatprep.subr.mxu0 0.0
        %4401 = vmatpush1.msra.mxu0 %v4366
        %4402 = vmatprep.subr.mxu0 0.0
        %4403 = vmatpush1.msra.mxu0 %v4365
        %4404 = vmatprep.subr.mxu0 0.0
        %4405 = vmatpush1.msra.mxu0 %v4364
        %4406 = vmatprep.subr.mxu0 0.0
        %4407 = vmatpush1.msra.mxu0 %v4363
        %4408 = vmatprep.subr.mxu0 0.0
        %4409 = vmatpush1.msra.mxu0 %v4362
        %4410 = vmatprep.subr.mxu0 0.0
        %4411 = vmatpush2.msra.mxu0 0.0
        %4412 = vmatprep.subr.mxu0 0.0
        %4413 = vmatpush2.msra.mxu0 0.0
        %4414 = vmatprep.subr.mxu0 0.0
        %4415 = vmatpush2.msra.mxu0 0.0
        %4416 = vmatprep.subr.mxu0 0.0
        %4417 = vmatpush2.msra.mxu0 0.0
        %4418 = vmatprep.subr.mxu0 0.0
        %4419 = vmatpush2.msra.mxu0 0.0
        %4420 = vmatprep.subr.mxu0 0.0
        %4421 = vmatpush2.msra.mxu0 0.0
        %4422 = vmatprep.subr.mxu0 0.0
        %4423 = vmatpush2.msra.mxu0 0.0
        %4424 = vmatprep.subr.mxu0 0.0
        %4425 = vmatpush2.msra.mxu0 0.0
        %4426 = vmatprep.subr.mxu0 0.0
        %4427 = vmatpush2.msra.mxu0 0.0
        %4428 = vmatprep.subr.mxu0 0.0
        %4429 = vmatpush2.msra.mxu0 0.0
        %4430 = vmatprep.subr.mxu0 0.0
        %4431 = vmatpush2.msra.mxu0 0.0
        %4432 = vmatprep.subr.mxu0 0.0
        %4433 = vmatpush2.msra.mxu0 0.0
        %4434 = vmatprep.subr.mxu0 0.0
        %4435 = vmatpush2.msra.mxu0 0.0
        %4436 = vmatprep.subr.mxu0 0.0
        %4437 = vmatpush2.msra.mxu0 0.0
        %4438 = vmatprep.subr.mxu0 0.0
        %4439 = vmatpush2.msra.mxu0 0.0
        %4440 = vmatprep.subr.mxu0 0.0
        %4441 = vmatpush2.msra.mxu0 0.0
        %4442 = vmatprep.mubr.f32.mxu0 0.0
        %4443 = vmatmul.mubr.f32.gmra.mxu0 %v4353
        %v4444 = vpop.f32.mrf.mxu0
        %v4445 = vadd.f32 0.0, %v4444
        %v4446 = vpop.f32.mrf.mxu0
        %4447 = vmatprep.mubr.f32.mxu0 0.0
        %4448 = vmatmul.mubr.f32.gmra.mxu0 %v4354
        %v4449 = vpop.f32.mrf.mxu0
        %v4450 = vadd.f32 0.0, %v4449
        %v4451 = vpop.f32.mrf.mxu0
        %4452 = vmatprep.mubr.f32.mxu0 0.0
        %4453 = vmatmul.mubr.f32.gmra.mxu0 %v4355
        %v4454 = vpop.f32.mrf.mxu0
        %v4455 = vadd.f32 0.0, %v4454
        %v4456 = vpop.f32.mrf.mxu0
        %4457 = vmatprep.mubr.f32.mxu0 0.0
        %4458 = vmatmul.mubr.f32.gmra.mxu0 %v4356
        %v4459 = vpop.f32.mrf.mxu0
        %v4460 = vadd.f32 0.0, %v4459
        %v4461 = vpop.f32.mrf.mxu0
        %4462 = vmatprep.mubr.f32.mxu0 0.0
        %4463 = vmatmul.mubr.f32.gmra.mxu0 %v4357
        %v4464 = vpop.f32.mrf.mxu0
        %v4465 = vadd.f32 0.0, %v4464
        %v4466 = vpop.f32.mrf.mxu0
        %4467 = vmatprep.mubr.f32.mxu0 0.0
        %4468 = vmatmul.mubr.f32.gmra.mxu0 %v4358
        %v4469 = vpop.f32.mrf.mxu0
        %v4470 = vadd.f32 0.0, %v4469
        %v4471 = vpop.f32.mrf.mxu0
        %4472 = vmatprep.mubr.f32.mxu0 0.0
        %4473 = vmatmul.mubr.f32.gmra.mxu0 %v4359
        %v4474 = vpop.f32.mrf.mxu0
        %v4475 = vadd.f32 0.0, %v4474
        %v4476 = vpop.f32.mrf.mxu0
        %4477 = vmatprep.mubr.f32.mxu0 0.0
        %4478 = vmatmul.mubr.f32.gmra.mxu0 %v4360
        %v4479 = vpop.f32.mrf.mxu0
        %v4480 = vadd.f32 0.0, %v4479
        %v4481 = vpop.f32.mrf.mxu0
        %4482 = vdwg.mxu0
        %v4483 = vadd.f32 %v4345, %v4445
        %v4484 = vadd.f32 %v4346, %v4450
        %v4485 = vadd.f32 %v4347, %v4455
        %v4486 = vadd.f32 %v4348, %v4460
        %v4487 = vadd.f32 %v4349, %v4465
        %v4488 = vadd.f32 %v4350, %v4470
        %v4489 = vadd.f32 %v4351, %v4475
        %v4490 = vadd.f32 %v4352, %v4480
        %s4491 = scalar_lea.vmem [#allocation2], 16
        %v4492 = vld [vmem:[%s4491] sm:$0xff]
        %v4493 = vld [vmem:[%s4491 + $0x10] sm:$0xff]
        %v4494 = vld [vmem:[%s4491 + $0x20] sm:$0xff]
        %v4495 = vld [vmem:[%s4491 + $0x30] sm:$0xff]
        %v4496 = vld [vmem:[%s4491 + $0x40] sm:$0xff]
        %v4497 = vld [vmem:[%s4491 + $0x50] sm:$0xff]
        %v4498 = vld [vmem:[%s4491 + $0x60] sm:$0xff]
        %v4499 = vld [vmem:[%s4491 + $0x70] sm:$0xff]
        %s4500 = scalar_lea.vmem [#allocation7], 640
        %v4501 = vld [vmem:[%s4500] sm:$0xff]
        %v4502 = vld [vmem:[%s4500 + $0x8] sm:$0xff]
        %v4503 = vld [vmem:[%s4500 + $0x10] sm:$0xff]
        %v4504 = vld [vmem:[%s4500 + $0x18] sm:$0xff]
        %v4505 = vld [vmem:[%s4500 + $0x20] sm:$0xff]
        %v4506 = vld [vmem:[%s4500 + $0x28] sm:$0xff]
        %v4507 = vld [vmem:[%s4500 + $0x30] sm:$0xff]
        %v4508 = vld [vmem:[%s4500 + $0x38] sm:$0xff]
        %v4509 = vld [vmem:[%s4500 + $0x40] sm:$0xff]
        %v4510 = vld [vmem:[%s4500 + $0x48] sm:$0xff]
        %v4511 = vld [vmem:[%s4500 + $0x50] sm:$0xff]
        %v4512 = vld [vmem:[%s4500 + $0x58] sm:$0xff]
        %v4513 = vld [vmem:[%s4500 + $0x60] sm:$0xff]
        %v4514 = vld [vmem:[%s4500 + $0x68] sm:$0xff]
        %v4515 = vld [vmem:[%s4500 + $0x70] sm:$0xff]
        %v4516 = vld [vmem:[%s4500 + $0x78] sm:$0xff]
        %4517 = vmatprep.subr.mxu0 0.0
        %4518 = vmatpush1.msra.mxu0 %v4516
        %4519 = vmatprep.subr.mxu0 0.0
        %4520 = vmatpush1.msra.mxu0 %v4515
        %4521 = vmatprep.subr.mxu0 0.0
        %4522 = vmatpush1.msra.mxu0 %v4514
        %4523 = vmatprep.subr.mxu0 0.0
        %4524 = vmatpush1.msra.mxu0 %v4513
        %4525 = vmatprep.subr.mxu0 0.0
        %4526 = vmatpush1.msra.mxu0 %v4512
        %4527 = vmatprep.subr.mxu0 0.0
        %4528 = vmatpush1.msra.mxu0 %v4511
        %4529 = vmatprep.subr.mxu0 0.0
        %4530 = vmatpush1.msra.mxu0 %v4510
        %4531 = vmatprep.subr.mxu0 0.0
        %4532 = vmatpush1.msra.mxu0 %v4509
        %4533 = vmatprep.subr.mxu0 0.0
        %4534 = vmatpush1.msra.mxu0 %v4508
        %4535 = vmatprep.subr.mxu0 0.0
        %4536 = vmatpush1.msra.mxu0 %v4507
        %4537 = vmatprep.subr.mxu0 0.0
        %4538 = vmatpush1.msra.mxu0 %v4506
        %4539 = vmatprep.subr.mxu0 0.0
        %4540 = vmatpush1.msra.mxu0 %v4505
        %4541 = vmatprep.subr.mxu0 0.0
        %4542 = vmatpush1.msra.mxu0 %v4504
        %4543 = vmatprep.subr.mxu0 0.0
        %4544 = vmatpush1.msra.mxu0 %v4503
        %4545 = vmatprep.subr.mxu0 0.0
        %4546 = vmatpush1.msra.mxu0 %v4502
        %4547 = vmatprep.subr.mxu0 0.0
        %4548 = vmatpush1.msra.mxu0 %v4501
        %4549 = vmatprep.subr.mxu0 0.0
        %4550 = vmatpush2.msra.mxu0 0.0
        %4551 = vmatprep.subr.mxu0 0.0
        %4552 = vmatpush2.msra.mxu0 0.0
        %4553 = vmatprep.subr.mxu0 0.0
        %4554 = vmatpush2.msra.mxu0 0.0
        %4555 = vmatprep.subr.mxu0 0.0
        %4556 = vmatpush2.msra.mxu0 0.0
        %4557 = vmatprep.subr.mxu0 0.0
        %4558 = vmatpush2.msra.mxu0 0.0
        %4559 = vmatprep.subr.mxu0 0.0
        %4560 = vmatpush2.msra.mxu0 0.0
        %4561 = vmatprep.subr.mxu0 0.0
        %4562 = vmatpush2.msra.mxu0 0.0
        %4563 = vmatprep.subr.mxu0 0.0
        %4564 = vmatpush2.msra.mxu0 0.0
        %4565 = vmatprep.subr.mxu0 0.0
        %4566 = vmatpush2.msra.mxu0 0.0
        %4567 = vmatprep.subr.mxu0 0.0
        %4568 = vmatpush2.msra.mxu0 0.0
        %4569 = vmatprep.subr.mxu0 0.0
        %4570 = vmatpush2.msra.mxu0 0.0
        %4571 = vmatprep.subr.mxu0 0.0
        %4572 = vmatpush2.msra.mxu0 0.0
        %4573 = vmatprep.subr.mxu0 0.0
        %4574 = vmatpush2.msra.mxu0 0.0
        %4575 = vmatprep.subr.mxu0 0.0
        %4576 = vmatpush2.msra.mxu0 0.0
        %4577 = vmatprep.subr.mxu0 0.0
        %4578 = vmatpush2.msra.mxu0 0.0
        %4579 = vmatprep.subr.mxu0 0.0
        %4580 = vmatpush2.msra.mxu0 0.0
        %4581 = vmatprep.mubr.f32.mxu0 0.0
        %4582 = vmatmul.mubr.f32.gmra.mxu0 %v4492
        %v4583 = vpop.f32.mrf.mxu0
        %v4584 = vadd.f32 0.0, %v4583
        %v4585 = vpop.f32.mrf.mxu0
        %4586 = vmatprep.mubr.f32.mxu0 0.0
        %4587 = vmatmul.mubr.f32.gmra.mxu0 %v4493
        %v4588 = vpop.f32.mrf.mxu0
        %v4589 = vadd.f32 0.0, %v4588
        %v4590 = vpop.f32.mrf.mxu0
        %4591 = vmatprep.mubr.f32.mxu0 0.0
        %4592 = vmatmul.mubr.f32.gmra.mxu0 %v4494
        %v4593 = vpop.f32.mrf.mxu0
        %v4594 = vadd.f32 0.0, %v4593
        %v4595 = vpop.f32.mrf.mxu0
        %4596 = vmatprep.mubr.f32.mxu0 0.0
        %4597 = vmatmul.mubr.f32.gmra.mxu0 %v4495
        %v4598 = vpop.f32.mrf.mxu0
        %v4599 = vadd.f32 0.0, %v4598
        %v4600 = vpop.f32.mrf.mxu0
        %4601 = vmatprep.mubr.f32.mxu0 0.0
        %4602 = vmatmul.mubr.f32.gmra.mxu0 %v4496
        %v4603 = vpop.f32.mrf.mxu0
        %v4604 = vadd.f32 0.0, %v4603
        %v4605 = vpop.f32.mrf.mxu0
        %4606 = vmatprep.mubr.f32.mxu0 0.0
        %4607 = vmatmul.mubr.f32.gmra.mxu0 %v4497
        %v4608 = vpop.f32.mrf.mxu0
        %v4609 = vadd.f32 0.0, %v4608
        %v4610 = vpop.f32.mrf.mxu0
        %4611 = vmatprep.mubr.f32.mxu0 0.0
        %4612 = vmatmul.mubr.f32.gmra.mxu0 %v4498
        %v4613 = vpop.f32.mrf.mxu0
        %v4614 = vadd.f32 0.0, %v4613
        %v4615 = vpop.f32.mrf.mxu0
        %4616 = vmatprep.mubr.f32.mxu0 0.0
        %4617 = vmatmul.mubr.f32.gmra.mxu0 %v4499
        %v4618 = vpop.f32.mrf.mxu0
        %v4619 = vadd.f32 0.0, %v4618
        %v4620 = vpop.f32.mrf.mxu0
        %4621 = vdwg.mxu0
        %v4622 = vadd.f32 %v4483, %v4584
        %v4623 = vadd.f32 %v4484, %v4589
        %v4624 = vadd.f32 %v4485, %v4594
        %v4625 = vadd.f32 %v4486, %v4599
        %v4626 = vadd.f32 %v4487, %v4604
        %v4627 = vadd.f32 %v4488, %v4609
        %v4628 = vadd.f32 %v4489, %v4614
        %v4629 = vadd.f32 %v4490, %v4619
        %v4630 = vld [vmem:[%s4491 + $0x1] sm:$0xff]
        %v4631 = vld [vmem:[%s4491 + $0x11] sm:$0xff]
        %v4632 = vld [vmem:[%s4491 + $0x21] sm:$0xff]
        %v4633 = vld [vmem:[%s4491 + $0x31] sm:$0xff]
        %v4634 = vld [vmem:[%s4491 + $0x41] sm:$0xff]
        %v4635 = vld [vmem:[%s4491 + $0x51] sm:$0xff]
        %v4636 = vld [vmem:[%s4491 + $0x61] sm:$0xff]
        %v4637 = vld [vmem:[%s4491 + $0x71] sm:$0xff]
        %s4638 = scalar_lea.vmem [#allocation7], 768
        %v4639 = vld [vmem:[%s4638] sm:$0xff]
        %v4640 = vld [vmem:[%s4638 + $0x8] sm:$0xff]
        %v4641 = vld [vmem:[%s4638 + $0x10] sm:$0xff]
        %v4642 = vld [vmem:[%s4638 + $0x18] sm:$0xff]
        %v4643 = vld [vmem:[%s4638 + $0x20] sm:$0xff]
        %v4644 = vld [vmem:[%s4638 + $0x28] sm:$0xff]
        %v4645 = vld [vmem:[%s4638 + $0x30] sm:$0xff]
        %v4646 = vld [vmem:[%s4638 + $0x38] sm:$0xff]
        %v4647 = vld [vmem:[%s4638 + $0x40] sm:$0xff]
        %v4648 = vld [vmem:[%s4638 + $0x48] sm:$0xff]
        %v4649 = vld [vmem:[%s4638 + $0x50] sm:$0xff]
        %v4650 = vld [vmem:[%s4638 + $0x58] sm:$0xff]
        %v4651 = vld [vmem:[%s4638 + $0x60] sm:$0xff]
        %v4652 = vld [vmem:[%s4638 + $0x68] sm:$0xff]
        %v4653 = vld [vmem:[%s4638 + $0x70] sm:$0xff]
        %v4654 = vld [vmem:[%s4638 + $0x78] sm:$0xff]
        %4655 = vmatprep.subr.mxu0 0.0
        %4656 = vmatpush1.msra.mxu0 %v4654
        %4657 = vmatprep.subr.mxu0 0.0
        %4658 = vmatpush1.msra.mxu0 %v4653
        %4659 = vmatprep.subr.mxu0 0.0
        %4660 = vmatpush1.msra.mxu0 %v4652
        %4661 = vmatprep.subr.mxu0 0.0
        %4662 = vmatpush1.msra.mxu0 %v4651
        %4663 = vmatprep.subr.mxu0 0.0
        %4664 = vmatpush1.msra.mxu0 %v4650
        %4665 = vmatprep.subr.mxu0 0.0
        %4666 = vmatpush1.msra.mxu0 %v4649
        %4667 = vmatprep.subr.mxu0 0.0
        %4668 = vmatpush1.msra.mxu0 %v4648
        %4669 = vmatprep.subr.mxu0 0.0
        %4670 = vmatpush1.msra.mxu0 %v4647
        %4671 = vmatprep.subr.mxu0 0.0
        %4672 = vmatpush1.msra.mxu0 %v4646
        %4673 = vmatprep.subr.mxu0 0.0
        %4674 = vmatpush1.msra.mxu0 %v4645
        %4675 = vmatprep.subr.mxu0 0.0
        %4676 = vmatpush1.msra.mxu0 %v4644
        %4677 = vmatprep.subr.mxu0 0.0
        %4678 = vmatpush1.msra.mxu0 %v4643
        %4679 = vmatprep.subr.mxu0 0.0
        %4680 = vmatpush1.msra.mxu0 %v4642
        %4681 = vmatprep.subr.mxu0 0.0
        %4682 = vmatpush1.msra.mxu0 %v4641
        %4683 = vmatprep.subr.mxu0 0.0
        %4684 = vmatpush1.msra.mxu0 %v4640
        %4685 = vmatprep.subr.mxu0 0.0
        %4686 = vmatpush1.msra.mxu0 %v4639
        %4687 = vmatprep.subr.mxu0 0.0
        %4688 = vmatpush2.msra.mxu0 0.0
        %4689 = vmatprep.subr.mxu0 0.0
        %4690 = vmatpush2.msra.mxu0 0.0
        %4691 = vmatprep.subr.mxu0 0.0
        %4692 = vmatpush2.msra.mxu0 0.0
        %4693 = vmatprep.subr.mxu0 0.0
        %4694 = vmatpush2.msra.mxu0 0.0
        %4695 = vmatprep.subr.mxu0 0.0
        %4696 = vmatpush2.msra.mxu0 0.0
        %4697 = vmatprep.subr.mxu0 0.0
        %4698 = vmatpush2.msra.mxu0 0.0
        %4699 = vmatprep.subr.mxu0 0.0
        %4700 = vmatpush2.msra.mxu0 0.0
        %4701 = vmatprep.subr.mxu0 0.0
        %4702 = vmatpush2.msra.mxu0 0.0
        %4703 = vmatprep.subr.mxu0 0.0
        %4704 = vmatpush2.msra.mxu0 0.0
        %4705 = vmatprep.subr.mxu0 0.0
        %4706 = vmatpush2.msra.mxu0 0.0
        %4707 = vmatprep.subr.mxu0 0.0
        %4708 = vmatpush2.msra.mxu0 0.0
        %4709 = vmatprep.subr.mxu0 0.0
        %4710 = vmatpush2.msra.mxu0 0.0
        %4711 = vmatprep.subr.mxu0 0.0
        %4712 = vmatpush2.msra.mxu0 0.0
        %4713 = vmatprep.subr.mxu0 0.0
        %4714 = vmatpush2.msra.mxu0 0.0
        %4715 = vmatprep.subr.mxu0 0.0
        %4716 = vmatpush2.msra.mxu0 0.0
        %4717 = vmatprep.subr.mxu0 0.0
        %4718 = vmatpush2.msra.mxu0 0.0
        %4719 = vmatprep.mubr.f32.mxu0 0.0
        %4720 = vmatmul.mubr.f32.gmra.mxu0 %v4630
        %v4721 = vpop.f32.mrf.mxu0
        %v4722 = vadd.f32 0.0, %v4721
        %v4723 = vpop.f32.mrf.mxu0
        %4724 = vmatprep.mubr.f32.mxu0 0.0
        %4725 = vmatmul.mubr.f32.gmra.mxu0 %v4631
        %v4726 = vpop.f32.mrf.mxu0
        %v4727 = vadd.f32 0.0, %v4726
        %v4728 = vpop.f32.mrf.mxu0
        %4729 = vmatprep.mubr.f32.mxu0 0.0
        %4730 = vmatmul.mubr.f32.gmra.mxu0 %v4632
        %v4731 = vpop.f32.mrf.mxu0
        %v4732 = vadd.f32 0.0, %v4731
        %v4733 = vpop.f32.mrf.mxu0
        %4734 = vmatprep.mubr.f32.mxu0 0.0
        %4735 = vmatmul.mubr.f32.gmra.mxu0 %v4633
        %v4736 = vpop.f32.mrf.mxu0
        %v4737 = vadd.f32 0.0, %v4736
        %v4738 = vpop.f32.mrf.mxu0
        %4739 = vmatprep.mubr.f32.mxu0 0.0
        %4740 = vmatmul.mubr.f32.gmra.mxu0 %v4634
        %v4741 = vpop.f32.mrf.mxu0
        %v4742 = vadd.f32 0.0, %v4741
        %v4743 = vpop.f32.mrf.mxu0
        %4744 = vmatprep.mubr.f32.mxu0 0.0
        %4745 = vmatmul.mubr.f32.gmra.mxu0 %v4635
        %v4746 = vpop.f32.mrf.mxu0
        %v4747 = vadd.f32 0.0, %v4746
        %v4748 = vpop.f32.mrf.mxu0
        %4749 = vmatprep.mubr.f32.mxu0 0.0
        %4750 = vmatmul.mubr.f32.gmra.mxu0 %v4636
        %v4751 = vpop.f32.mrf.mxu0
        %v4752 = vadd.f32 0.0, %v4751
        %v4753 = vpop.f32.mrf.mxu0
        %4754 = vmatprep.mubr.f32.mxu0 0.0
        %4755 = vmatmul.mubr.f32.gmra.mxu0 %v4637
        %v4756 = vpop.f32.mrf.mxu0
        %v4757 = vadd.f32 0.0, %v4756
        %v4758 = vpop.f32.mrf.mxu0
        %4759 = vdwg.mxu0
        %v4760 = vadd.f32 %v4622, %v4722
        %v4761 = vadd.f32 %v4623, %v4727
        %v4762 = vadd.f32 %v4624, %v4732
        %v4763 = vadd.f32 %v4625, %v4737
        %v4764 = vadd.f32 %v4626, %v4742
        %v4765 = vadd.f32 %v4627, %v4747
        %v4766 = vadd.f32 %v4628, %v4752
        %v4767 = vadd.f32 %v4629, %v4757
        %v4768 = vld [vmem:[%s4491 + $0x2] sm:$0xff]
        %v4769 = vld [vmem:[%s4491 + $0x12] sm:$0xff]
        %v4770 = vld [vmem:[%s4491 + $0x22] sm:$0xff]
        %v4771 = vld [vmem:[%s4491 + $0x32] sm:$0xff]
        %v4772 = vld [vmem:[%s4491 + $0x42] sm:$0xff]
        %v4773 = vld [vmem:[%s4491 + $0x52] sm:$0xff]
        %v4774 = vld [vmem:[%s4491 + $0x62] sm:$0xff]
        %v4775 = vld [vmem:[%s4491 + $0x72] sm:$0xff]
        %s4776 = scalar_lea.vmem [#allocation7], 896
        %v4777 = vld [vmem:[%s4776] sm:$0xff]
        %v4778 = vld [vmem:[%s4776 + $0x8] sm:$0xff]
        %v4779 = vld [vmem:[%s4776 + $0x10] sm:$0xff]
        %v4780 = vld [vmem:[%s4776 + $0x18] sm:$0xff]
        %v4781 = vld [vmem:[%s4776 + $0x20] sm:$0xff]
        %v4782 = vld [vmem:[%s4776 + $0x28] sm:$0xff]
        %v4783 = vld [vmem:[%s4776 + $0x30] sm:$0xff]
        %v4784 = vld [vmem:[%s4776 + $0x38] sm:$0xff]
        %v4785 = vld [vmem:[%s4776 + $0x40] sm:$0xff]
        %v4786 = vld [vmem:[%s4776 + $0x48] sm:$0xff]
        %v4787 = vld [vmem:[%s4776 + $0x50] sm:$0xff]
        %v4788 = vld [vmem:[%s4776 + $0x58] sm:$0xff]
        %v4789 = vld [vmem:[%s4776 + $0x60] sm:$0xff]
        %v4790 = vld [vmem:[%s4776 + $0x68] sm:$0xff]
        %v4791 = vld [vmem:[%s4776 + $0x70] sm:$0xff]
        %v4792 = vld [vmem:[%s4776 + $0x78] sm:$0xff]
        %4793 = vmatprep.subr.mxu0 0.0
        %4794 = vmatpush1.msra.mxu0 %v4792
        %4795 = vmatprep.subr.mxu0 0.0
        %4796 = vmatpush1.msra.mxu0 %v4791
        %4797 = vmatprep.subr.mxu0 0.0
        %4798 = vmatpush1.msra.mxu0 %v4790
        %4799 = vmatprep.subr.mxu0 0.0
        %4800 = vmatpush1.msra.mxu0 %v4789
        %4801 = vmatprep.subr.mxu0 0.0
        %4802 = vmatpush1.msra.mxu0 %v4788
        %4803 = vmatprep.subr.mxu0 0.0
        %4804 = vmatpush1.msra.mxu0 %v4787
        %4805 = vmatprep.subr.mxu0 0.0
        %4806 = vmatpush1.msra.mxu0 %v4786
        %4807 = vmatprep.subr.mxu0 0.0
        %4808 = vmatpush1.msra.mxu0 %v4785
        %4809 = vmatprep.subr.mxu0 0.0
        %4810 = vmatpush1.msra.mxu0 %v4784
        %4811 = vmatprep.subr.mxu0 0.0
        %4812 = vmatpush1.msra.mxu0 %v4783
        %4813 = vmatprep.subr.mxu0 0.0
        %4814 = vmatpush1.msra.mxu0 %v4782
        %4815 = vmatprep.subr.mxu0 0.0
        %4816 = vmatpush1.msra.mxu0 %v4781
        %4817 = vmatprep.subr.mxu0 0.0
        %4818 = vmatpush1.msra.mxu0 %v4780
        %4819 = vmatprep.subr.mxu0 0.0
        %4820 = vmatpush1.msra.mxu0 %v4779
        %4821 = vmatprep.subr.mxu0 0.0
        %4822 = vmatpush1.msra.mxu0 %v4778
        %4823 = vmatprep.subr.mxu0 0.0
        %4824 = vmatpush1.msra.mxu0 %v4777
        %4825 = vmatprep.subr.mxu0 0.0
        %4826 = vmatpush2.msra.mxu0 0.0
        %4827 = vmatprep.subr.mxu0 0.0
        %4828 = vmatpush2.msra.mxu0 0.0
        %4829 = vmatprep.subr.mxu0 0.0
        %4830 = vmatpush2.msra.mxu0 0.0
        %4831 = vmatprep.subr.mxu0 0.0
        %4832 = vmatpush2.msra.mxu0 0.0
        %4833 = vmatprep.subr.mxu0 0.0
        %4834 = vmatpush2.msra.mxu0 0.0
        %4835 = vmatprep.subr.mxu0 0.0
        %4836 = vmatpush2.msra.mxu0 0.0
        %4837 = vmatprep.subr.mxu0 0.0
        %4838 = vmatpush2.msra.mxu0 0.0
        %4839 = vmatprep.subr.mxu0 0.0
        %4840 = vmatpush2.msra.mxu0 0.0
        %4841 = vmatprep.subr.mxu0 0.0
        %4842 = vmatpush2.msra.mxu0 0.0
        %4843 = vmatprep.subr.mxu0 0.0
        %4844 = vmatpush2.msra.mxu0 0.0
        %4845 = vmatprep.subr.mxu0 0.0
        %4846 = vmatpush2.msra.mxu0 0.0
        %4847 = vmatprep.subr.mxu0 0.0
        %4848 = vmatpush2.msra.mxu0 0.0
        %4849 = vmatprep.subr.mxu0 0.0
        %4850 = vmatpush2.msra.mxu0 0.0
        %4851 = vmatprep.subr.mxu0 0.0
        %4852 = vmatpush2.msra.mxu0 0.0
        %4853 = vmatprep.subr.mxu0 0.0
        %4854 = vmatpush2.msra.mxu0 0.0
        %4855 = vmatprep.subr.mxu0 0.0
        %4856 = vmatpush2.msra.mxu0 0.0
        %4857 = vmatprep.mubr.f32.mxu0 0.0
        %4858 = vmatmul.mubr.f32.gmra.mxu0 %v4768
        %v4859 = vpop.f32.mrf.mxu0
        %v4860 = vadd.f32 0.0, %v4859
        %v4861 = vpop.f32.mrf.mxu0
        %4862 = vmatprep.mubr.f32.mxu0 0.0
        %4863 = vmatmul.mubr.f32.gmra.mxu0 %v4769
        %v4864 = vpop.f32.mrf.mxu0
        %v4865 = vadd.f32 0.0, %v4864
        %v4866 = vpop.f32.mrf.mxu0
        %4867 = vmatprep.mubr.f32.mxu0 0.0
        %4868 = vmatmul.mubr.f32.gmra.mxu0 %v4770
        %v4869 = vpop.f32.mrf.mxu0
        %v4870 = vadd.f32 0.0, %v4869
        %v4871 = vpop.f32.mrf.mxu0
        %4872 = vmatprep.mubr.f32.mxu0 0.0
        %4873 = vmatmul.mubr.f32.gmra.mxu0 %v4771
        %v4874 = vpop.f32.mrf.mxu0
        %v4875 = vadd.f32 0.0, %v4874
        %v4876 = vpop.f32.mrf.mxu0
        %4877 = vmatprep.mubr.f32.mxu0 0.0
        %4878 = vmatmul.mubr.f32.gmra.mxu0 %v4772
        %v4879 = vpop.f32.mrf.mxu0
        %v4880 = vadd.f32 0.0, %v4879
        %v4881 = vpop.f32.mrf.mxu0
        %4882 = vmatprep.mubr.f32.mxu0 0.0
        %4883 = vmatmul.mubr.f32.gmra.mxu0 %v4773
        %v4884 = vpop.f32.mrf.mxu0
        %v4885 = vadd.f32 0.0, %v4884
        %v4886 = vpop.f32.mrf.mxu0
        %4887 = vmatprep.mubr.f32.mxu0 0.0
        %4888 = vmatmul.mubr.f32.gmra.mxu0 %v4774
        %v4889 = vpop.f32.mrf.mxu0
        %v4890 = vadd.f32 0.0, %v4889
        %v4891 = vpop.f32.mrf.mxu0
        %4892 = vmatprep.mubr.f32.mxu0 0.0
        %4893 = vmatmul.mubr.f32.gmra.mxu0 %v4775
        %v4894 = vpop.f32.mrf.mxu0
        %v4895 = vadd.f32 0.0, %v4894
        %v4896 = vpop.f32.mrf.mxu0
        %4897 = vdwg.mxu0
        %v4898 = vadd.f32 %v4760, %v4860
        %v4899 = vadd.f32 %v4761, %v4865
        %v4900 = vadd.f32 %v4762, %v4870
        %v4901 = vadd.f32 %v4763, %v4875
        %v4902 = vadd.f32 %v4764, %v4880
        %v4903 = vadd.f32 %v4765, %v4885
        %v4904 = vadd.f32 %v4766, %v4890
        %v4905 = vadd.f32 %v4767, %v4895
        %v4906 = vld [vmem:[%s4491 + $0x3] sm:$0xff]
        %v4907 = vld [vmem:[%s4491 + $0x13] sm:$0xff]
        %v4908 = vld [vmem:[%s4491 + $0x23] sm:$0xff]
        %v4909 = vld [vmem:[%s4491 + $0x33] sm:$0xff]
        %v4910 = vld [vmem:[%s4491 + $0x43] sm:$0xff]
        %v4911 = vld [vmem:[%s4491 + $0x53] sm:$0xff]
        %v4912 = vld [vmem:[%s4491 + $0x63] sm:$0xff]
        %v4913 = vld [vmem:[%s4491 + $0x73] sm:$0xff]
        %s4914 = scalar_lea.vmem [#allocation7], 1024
        %v4915 = vld [vmem:[%s4914] sm:$0xff]
        %v4916 = vld [vmem:[%s4914 + $0x8] sm:$0xff]
        %v4917 = vld [vmem:[%s4914 + $0x10] sm:$0xff]
        %v4918 = vld [vmem:[%s4914 + $0x18] sm:$0xff]
        %v4919 = vld [vmem:[%s4914 + $0x20] sm:$0xff]
        %v4920 = vld [vmem:[%s4914 + $0x28] sm:$0xff]
        %v4921 = vld [vmem:[%s4914 + $0x30] sm:$0xff]
        %v4922 = vld [vmem:[%s4914 + $0x38] sm:$0xff]
        %v4923 = vld [vmem:[%s4914 + $0x40] sm:$0xff]
        %v4924 = vld [vmem:[%s4914 + $0x48] sm:$0xff]
        %v4925 = vld [vmem:[%s4914 + $0x50] sm:$0xff]
        %v4926 = vld [vmem:[%s4914 + $0x58] sm:$0xff]
        %v4927 = vld [vmem:[%s4914 + $0x60] sm:$0xff]
        %v4928 = vld [vmem:[%s4914 + $0x68] sm:$0xff]
        %v4929 = vld [vmem:[%s4914 + $0x70] sm:$0xff]
        %v4930 = vld [vmem:[%s4914 + $0x78] sm:$0xff]
        %4931 = vmatprep.subr.mxu0 0.0
        %4932 = vmatpush1.msra.mxu0 %v4930
        %4933 = vmatprep.subr.mxu0 0.0
        %4934 = vmatpush1.msra.mxu0 %v4929
        %4935 = vmatprep.subr.mxu0 0.0
        %4936 = vmatpush1.msra.mxu0 %v4928
        %4937 = vmatprep.subr.mxu0 0.0
        %4938 = vmatpush1.msra.mxu0 %v4927
        %4939 = vmatprep.subr.mxu0 0.0
        %4940 = vmatpush1.msra.mxu0 %v4926
        %4941 = vmatprep.subr.mxu0 0.0
        %4942 = vmatpush1.msra.mxu0 %v4925
        %4943 = vmatprep.subr.mxu0 0.0
        %4944 = vmatpush1.msra.mxu0 %v4924
        %4945 = vmatprep.subr.mxu0 0.0
        %4946 = vmatpush1.msra.mxu0 %v4923
        %4947 = vmatprep.subr.mxu0 0.0
        %4948 = vmatpush1.msra.mxu0 %v4922
        %4949 = vmatprep.subr.mxu0 0.0
        %4950 = vmatpush1.msra.mxu0 %v4921
        %4951 = vmatprep.subr.mxu0 0.0
        %4952 = vmatpush1.msra.mxu0 %v4920
        %4953 = vmatprep.subr.mxu0 0.0
        %4954 = vmatpush1.msra.mxu0 %v4919
        %4955 = vmatprep.subr.mxu0 0.0
        %4956 = vmatpush1.msra.mxu0 %v4918
        %4957 = vmatprep.subr.mxu0 0.0
        %4958 = vmatpush1.msra.mxu0 %v4917
        %4959 = vmatprep.subr.mxu0 0.0
        %4960 = vmatpush1.msra.mxu0 %v4916
        %4961 = vmatprep.subr.mxu0 0.0
        %4962 = vmatpush1.msra.mxu0 %v4915
        %4963 = vmatprep.subr.mxu0 0.0
        %4964 = vmatpush2.msra.mxu0 0.0
        %4965 = vmatprep.subr.mxu0 0.0
        %4966 = vmatpush2.msra.mxu0 0.0
        %4967 = vmatprep.subr.mxu0 0.0
        %4968 = vmatpush2.msra.mxu0 0.0
        %4969 = vmatprep.subr.mxu0 0.0
        %4970 = vmatpush2.msra.mxu0 0.0
        %4971 = vmatprep.subr.mxu0 0.0
        %4972 = vmatpush2.msra.mxu0 0.0
        %4973 = vmatprep.subr.mxu0 0.0
        %4974 = vmatpush2.msra.mxu0 0.0
        %4975 = vmatprep.subr.mxu0 0.0
        %4976 = vmatpush2.msra.mxu0 0.0
        %4977 = vmatprep.subr.mxu0 0.0
        %4978 = vmatpush2.msra.mxu0 0.0
        %4979 = vmatprep.subr.mxu0 0.0
        %4980 = vmatpush2.msra.mxu0 0.0
        %4981 = vmatprep.subr.mxu0 0.0
        %4982 = vmatpush2.msra.mxu0 0.0
        %4983 = vmatprep.subr.mxu0 0.0
        %4984 = vmatpush2.msra.mxu0 0.0
        %4985 = vmatprep.subr.mxu0 0.0
        %4986 = vmatpush2.msra.mxu0 0.0
        %4987 = vmatprep.subr.mxu0 0.0
        %4988 = vmatpush2.msra.mxu0 0.0
        %4989 = vmatprep.subr.mxu0 0.0
        %4990 = vmatpush2.msra.mxu0 0.0
        %4991 = vmatprep.subr.mxu0 0.0
        %4992 = vmatpush2.msra.mxu0 0.0
        %4993 = vmatprep.subr.mxu0 0.0
        %4994 = vmatpush2.msra.mxu0 0.0
        %4995 = vmatprep.mubr.f32.mxu0 0.0
        %4996 = vmatmul.mubr.f32.gmra.mxu0 %v4906
        %v4997 = vpop.f32.mrf.mxu0
        %v4998 = vadd.f32 0.0, %v4997
        %v4999 = vpop.f32.mrf.mxu0
        %5000 = vmatprep.mubr.f32.mxu0 0.0
        %5001 = vmatmul.mubr.f32.gmra.mxu0 %v4907
        %v5002 = vpop.f32.mrf.mxu0
        %v5003 = vadd.f32 0.0, %v5002
        %v5004 = vpop.f32.mrf.mxu0
        %5005 = vmatprep.mubr.f32.mxu0 0.0
        %5006 = vmatmul.mubr.f32.gmra.mxu0 %v4908
        %v5007 = vpop.f32.mrf.mxu0
        %v5008 = vadd.f32 0.0, %v5007
        %v5009 = vpop.f32.mrf.mxu0
        %5010 = vmatprep.mubr.f32.mxu0 0.0
        %5011 = vmatmul.mubr.f32.gmra.mxu0 %v4909
        %v5012 = vpop.f32.mrf.mxu0
        %v5013 = vadd.f32 0.0, %v5012
        %v5014 = vpop.f32.mrf.mxu0
        %5015 = vmatprep.mubr.f32.mxu0 0.0
        %5016 = vmatmul.mubr.f32.gmra.mxu0 %v4910
        %v5017 = vpop.f32.mrf.mxu0
        %v5018 = vadd.f32 0.0, %v5017
        %v5019 = vpop.f32.mrf.mxu0
        %5020 = vmatprep.mubr.f32.mxu0 0.0
        %5021 = vmatmul.mubr.f32.gmra.mxu0 %v4911
        %v5022 = vpop.f32.mrf.mxu0
        %v5023 = vadd.f32 0.0, %v5022
        %v5024 = vpop.f32.mrf.mxu0
        %5025 = vmatprep.mubr.f32.mxu0 0.0
        %5026 = vmatmul.mubr.f32.gmra.mxu0 %v4912
        %v5027 = vpop.f32.mrf.mxu0
        %v5028 = vadd.f32 0.0, %v5027
        %v5029 = vpop.f32.mrf.mxu0
        %5030 = vmatprep.mubr.f32.mxu0 0.0
        %5031 = vmatmul.mubr.f32.gmra.mxu0 %v4913
        %v5032 = vpop.f32.mrf.mxu0
        %v5033 = vadd.f32 0.0, %v5032
        %v5034 = vpop.f32.mrf.mxu0
        %5035 = vdwg.mxu0
        %v5036 = vadd.f32 %v4898, %v4998
        %v5037 = vadd.f32 %v4899, %v5003
        %v5038 = vadd.f32 %v4900, %v5008
        %v5039 = vadd.f32 %v4901, %v5013
        %v5040 = vadd.f32 %v4902, %v5018
        %v5041 = vadd.f32 %v4903, %v5023
        %v5042 = vadd.f32 %v4904, %v5028
        %v5043 = vadd.f32 %v4905, %v5033
        %v5044 = vld [vmem:[%s4491 + $0x4] sm:$0xff]
        %v5045 = vld [vmem:[%s4491 + $0x14] sm:$0xff]
        %v5046 = vld [vmem:[%s4491 + $0x24] sm:$0xff]
        %v5047 = vld [vmem:[%s4491 + $0x34] sm:$0xff]
        %v5048 = vld [vmem:[%s4491 + $0x44] sm:$0xff]
        %v5049 = vld [vmem:[%s4491 + $0x54] sm:$0xff]
        %v5050 = vld [vmem:[%s4491 + $0x64] sm:$0xff]
        %v5051 = vld [vmem:[%s4491 + $0x74] sm:$0xff]
        %s5052 = scalar_lea.vmem [#allocation7], 1152
        %v5053 = vld [vmem:[%s5052] sm:$0xff]
        %v5054 = vld [vmem:[%s5052 + $0x8] sm:$0xff]
        %v5055 = vld [vmem:[%s5052 + $0x10] sm:$0xff]
        %v5056 = vld [vmem:[%s5052 + $0x18] sm:$0xff]
        %v5057 = vld [vmem:[%s5052 + $0x20] sm:$0xff]
        %v5058 = vld [vmem:[%s5052 + $0x28] sm:$0xff]
        %v5059 = vld [vmem:[%s5052 + $0x30] sm:$0xff]
        %v5060 = vld [vmem:[%s5052 + $0x38] sm:$0xff]
        %v5061 = vld [vmem:[%s5052 + $0x40] sm:$0xff]
        %v5062 = vld [vmem:[%s5052 + $0x48] sm:$0xff]
        %v5063 = vld [vmem:[%s5052 + $0x50] sm:$0xff]
        %v5064 = vld [vmem:[%s5052 + $0x58] sm:$0xff]
        %v5065 = vld [vmem:[%s5052 + $0x60] sm:$0xff]
        %v5066 = vld [vmem:[%s5052 + $0x68] sm:$0xff]
        %v5067 = vld [vmem:[%s5052 + $0x70] sm:$0xff]
        %v5068 = vld [vmem:[%s5052 + $0x78] sm:$0xff]
        %5069 = vmatprep.subr.mxu0 0.0
        %5070 = vmatpush1.msra.mxu0 %v5068
        %5071 = vmatprep.subr.mxu0 0.0
        %5072 = vmatpush1.msra.mxu0 %v5067
        %5073 = vmatprep.subr.mxu0 0.0
        %5074 = vmatpush1.msra.mxu0 %v5066
        %5075 = vmatprep.subr.mxu0 0.0
        %5076 = vmatpush1.msra.mxu0 %v5065
        %5077 = vmatprep.subr.mxu0 0.0
        %5078 = vmatpush1.msra.mxu0 %v5064
        %5079 = vmatprep.subr.mxu0 0.0
        %5080 = vmatpush1.msra.mxu0 %v5063
        %5081 = vmatprep.subr.mxu0 0.0
        %5082 = vmatpush1.msra.mxu0 %v5062
        %5083 = vmatprep.subr.mxu0 0.0
        %5084 = vmatpush1.msra.mxu0 %v5061
        %5085 = vmatprep.subr.mxu0 0.0
        %5086 = vmatpush1.msra.mxu0 %v5060
        %5087 = vmatprep.subr.mxu0 0.0
        %5088 = vmatpush1.msra.mxu0 %v5059
        %5089 = vmatprep.subr.mxu0 0.0
        %5090 = vmatpush1.msra.mxu0 %v5058
        %5091 = vmatprep.subr.mxu0 0.0
        %5092 = vmatpush1.msra.mxu0 %v5057
        %5093 = vmatprep.subr.mxu0 0.0
        %5094 = vmatpush1.msra.mxu0 %v5056
        %5095 = vmatprep.subr.mxu0 0.0
        %5096 = vmatpush1.msra.mxu0 %v5055
        %5097 = vmatprep.subr.mxu0 0.0
        %5098 = vmatpush1.msra.mxu0 %v5054
        %5099 = vmatprep.subr.mxu0 0.0
        %5100 = vmatpush1.msra.mxu0 %v5053
        %5101 = vmatprep.subr.mxu0 0.0
        %5102 = vmatpush2.msra.mxu0 0.0
        %5103 = vmatprep.subr.mxu0 0.0
        %5104 = vmatpush2.msra.mxu0 0.0
        %5105 = vmatprep.subr.mxu0 0.0
        %5106 = vmatpush2.msra.mxu0 0.0
        %5107 = vmatprep.subr.mxu0 0.0
        %5108 = vmatpush2.msra.mxu0 0.0
        %5109 = vmatprep.subr.mxu0 0.0
        %5110 = vmatpush2.msra.mxu0 0.0
        %5111 = vmatprep.subr.mxu0 0.0
        %5112 = vmatpush2.msra.mxu0 0.0
        %5113 = vmatprep.subr.mxu0 0.0
        %5114 = vmatpush2.msra.mxu0 0.0
        %5115 = vmatprep.subr.mxu0 0.0
        %5116 = vmatpush2.msra.mxu0 0.0
        %5117 = vmatprep.subr.mxu0 0.0
        %5118 = vmatpush2.msra.mxu0 0.0
        %5119 = vmatprep.subr.mxu0 0.0
        %5120 = vmatpush2.msra.mxu0 0.0
        %5121 = vmatprep.subr.mxu0 0.0
        %5122 = vmatpush2.msra.mxu0 0.0
        %5123 = vmatprep.subr.mxu0 0.0
        %5124 = vmatpush2.msra.mxu0 0.0
        %5125 = vmatprep.subr.mxu0 0.0
        %5126 = vmatpush2.msra.mxu0 0.0
        %5127 = vmatprep.subr.mxu0 0.0
        %5128 = vmatpush2.msra.mxu0 0.0
        %5129 = vmatprep.subr.mxu0 0.0
        %5130 = vmatpush2.msra.mxu0 0.0
        %5131 = vmatprep.subr.mxu0 0.0
        %5132 = vmatpush2.msra.mxu0 0.0
        %5133 = vmatprep.mubr.f32.mxu0 0.0
        %5134 = vmatmul.mubr.f32.gmra.mxu0 %v5044
        %v5135 = vpop.f32.mrf.mxu0
        %v5136 = vadd.f32 0.0, %v5135
        %v5137 = vpop.f32.mrf.mxu0
        %5138 = vmatprep.mubr.f32.mxu0 0.0
        %5139 = vmatmul.mubr.f32.gmra.mxu0 %v5045
        %v5140 = vpop.f32.mrf.mxu0
        %v5141 = vadd.f32 0.0, %v5140
        %v5142 = vpop.f32.mrf.mxu0
        %5143 = vmatprep.mubr.f32.mxu0 0.0
        %5144 = vmatmul.mubr.f32.gmra.mxu0 %v5046
        %v5145 = vpop.f32.mrf.mxu0
        %v5146 = vadd.f32 0.0, %v5145
        %v5147 = vpop.f32.mrf.mxu0
        %5148 = vmatprep.mubr.f32.mxu0 0.0
        %5149 = vmatmul.mubr.f32.gmra.mxu0 %v5047
        %v5150 = vpop.f32.mrf.mxu0
        %v5151 = vadd.f32 0.0, %v5150
        %v5152 = vpop.f32.mrf.mxu0
        %5153 = vmatprep.mubr.f32.mxu0 0.0
        %5154 = vmatmul.mubr.f32.gmra.mxu0 %v5048
        %v5155 = vpop.f32.mrf.mxu0
        %v5156 = vadd.f32 0.0, %v5155
        %v5157 = vpop.f32.mrf.mxu0
        %5158 = vmatprep.mubr.f32.mxu0 0.0
        %5159 = vmatmul.mubr.f32.gmra.mxu0 %v5049
        %v5160 = vpop.f32.mrf.mxu0
        %v5161 = vadd.f32 0.0, %v5160
        %v5162 = vpop.f32.mrf.mxu0
        %5163 = vmatprep.mubr.f32.mxu0 0.0
        %5164 = vmatmul.mubr.f32.gmra.mxu0 %v5050
        %v5165 = vpop.f32.mrf.mxu0
        %v5166 = vadd.f32 0.0, %v5165
        %v5167 = vpop.f32.mrf.mxu0
        %5168 = vmatprep.mubr.f32.mxu0 0.0
        %5169 = vmatmul.mubr.f32.gmra.mxu0 %v5051
        %v5170 = vpop.f32.mrf.mxu0
        %v5171 = vadd.f32 0.0, %v5170
        %v5172 = vpop.f32.mrf.mxu0
        %5173 = vdwg.mxu0
        %v5174 = vadd.f32 %v5036, %v5136
        %v5175 = vadd.f32 %v5037, %v5141
        %v5176 = vadd.f32 %v5038, %v5146
        %v5177 = vadd.f32 %v5039, %v5151
        %v5178 = vadd.f32 %v5040, %v5156
        %v5179 = vadd.f32 %v5041, %v5161
        %v5180 = vadd.f32 %v5042, %v5166
        %v5181 = vadd.f32 %v5043, %v5171
        %s5182 = scalar_lea.vmem [#allocation2], 32
        %v5183 = vld [vmem:[%s5182] sm:$0xff]
        %v5184 = vld [vmem:[%s5182 + $0x10] sm:$0xff]
        %v5185 = vld [vmem:[%s5182 + $0x20] sm:$0xff]
        %v5186 = vld [vmem:[%s5182 + $0x30] sm:$0xff]
        %v5187 = vld [vmem:[%s5182 + $0x40] sm:$0xff]
        %v5188 = vld [vmem:[%s5182 + $0x50] sm:$0xff]
        %v5189 = vld [vmem:[%s5182 + $0x60] sm:$0xff]
        %v5190 = vld [vmem:[%s5182 + $0x70] sm:$0xff]
        %s5191 = scalar_lea.vmem [#allocation7], 1280
        %v5192 = vld [vmem:[%s5191] sm:$0xff]
        %v5193 = vld [vmem:[%s5191 + $0x8] sm:$0xff]
        %v5194 = vld [vmem:[%s5191 + $0x10] sm:$0xff]
        %v5195 = vld [vmem:[%s5191 + $0x18] sm:$0xff]
        %v5196 = vld [vmem:[%s5191 + $0x20] sm:$0xff]
        %v5197 = vld [vmem:[%s5191 + $0x28] sm:$0xff]
        %v5198 = vld [vmem:[%s5191 + $0x30] sm:$0xff]
        %v5199 = vld [vmem:[%s5191 + $0x38] sm:$0xff]
        %v5200 = vld [vmem:[%s5191 + $0x40] sm:$0xff]
        %v5201 = vld [vmem:[%s5191 + $0x48] sm:$0xff]
        %v5202 = vld [vmem:[%s5191 + $0x50] sm:$0xff]
        %v5203 = vld [vmem:[%s5191 + $0x58] sm:$0xff]
        %v5204 = vld [vmem:[%s5191 + $0x60] sm:$0xff]
        %v5205 = vld [vmem:[%s5191 + $0x68] sm:$0xff]
        %v5206 = vld [vmem:[%s5191 + $0x70] sm:$0xff]
        %v5207 = vld [vmem:[%s5191 + $0x78] sm:$0xff]
        %5208 = vmatprep.subr.mxu0 0.0
        %5209 = vmatpush1.msra.mxu0 %v5207
        %5210 = vmatprep.subr.mxu0 0.0
        %5211 = vmatpush1.msra.mxu0 %v5206
        %5212 = vmatprep.subr.mxu0 0.0
        %5213 = vmatpush1.msra.mxu0 %v5205
        %5214 = vmatprep.subr.mxu0 0.0
        %5215 = vmatpush1.msra.mxu0 %v5204
        %5216 = vmatprep.subr.mxu0 0.0
        %5217 = vmatpush1.msra.mxu0 %v5203
        %5218 = vmatprep.subr.mxu0 0.0
        %5219 = vmatpush1.msra.mxu0 %v5202
        %5220 = vmatprep.subr.mxu0 0.0
        %5221 = vmatpush1.msra.mxu0 %v5201
        %5222 = vmatprep.subr.mxu0 0.0
        %5223 = vmatpush1.msra.mxu0 %v5200
        %5224 = vmatprep.subr.mxu0 0.0
        %5225 = vmatpush1.msra.mxu0 %v5199
        %5226 = vmatprep.subr.mxu0 0.0
        %5227 = vmatpush1.msra.mxu0 %v5198
        %5228 = vmatprep.subr.mxu0 0.0
        %5229 = vmatpush1.msra.mxu0 %v5197
        %5230 = vmatprep.subr.mxu0 0.0
        %5231 = vmatpush1.msra.mxu0 %v5196
        %5232 = vmatprep.subr.mxu0 0.0
        %5233 = vmatpush1.msra.mxu0 %v5195
        %5234 = vmatprep.subr.mxu0 0.0
        %5235 = vmatpush1.msra.mxu0 %v5194
        %5236 = vmatprep.subr.mxu0 0.0
        %5237 = vmatpush1.msra.mxu0 %v5193
        %5238 = vmatprep.subr.mxu0 0.0
        %5239 = vmatpush1.msra.mxu0 %v5192
        %5240 = vmatprep.subr.mxu0 0.0
        %5241 = vmatpush2.msra.mxu0 0.0
        %5242 = vmatprep.subr.mxu0 0.0
        %5243 = vmatpush2.msra.mxu0 0.0
        %5244 = vmatprep.subr.mxu0 0.0
        %5245 = vmatpush2.msra.mxu0 0.0
        %5246 = vmatprep.subr.mxu0 0.0
        %5247 = vmatpush2.msra.mxu0 0.0
        %5248 = vmatprep.subr.mxu0 0.0
        %5249 = vmatpush2.msra.mxu0 0.0
        %5250 = vmatprep.subr.mxu0 0.0
        %5251 = vmatpush2.msra.mxu0 0.0
        %5252 = vmatprep.subr.mxu0 0.0
        %5253 = vmatpush2.msra.mxu0 0.0
        %5254 = vmatprep.subr.mxu0 0.0
        %5255 = vmatpush2.msra.mxu0 0.0
        %5256 = vmatprep.subr.mxu0 0.0
        %5257 = vmatpush2.msra.mxu0 0.0
        %5258 = vmatprep.subr.mxu0 0.0
        %5259 = vmatpush2.msra.mxu0 0.0
        %5260 = vmatprep.subr.mxu0 0.0
        %5261 = vmatpush2.msra.mxu0 0.0
        %5262 = vmatprep.subr.mxu0 0.0
        %5263 = vmatpush2.msra.mxu0 0.0
        %5264 = vmatprep.subr.mxu0 0.0
        %5265 = vmatpush2.msra.mxu0 0.0
        %5266 = vmatprep.subr.mxu0 0.0
        %5267 = vmatpush2.msra.mxu0 0.0
        %5268 = vmatprep.subr.mxu0 0.0
        %5269 = vmatpush2.msra.mxu0 0.0
        %5270 = vmatprep.subr.mxu0 0.0
        %5271 = vmatpush2.msra.mxu0 0.0
        %5272 = vmatprep.mubr.f32.mxu0 0.0
        %5273 = vmatmul.mubr.f32.gmra.mxu0 %v5183
        %v5274 = vpop.f32.mrf.mxu0
        %v5275 = vadd.f32 0.0, %v5274
        %v5276 = vpop.f32.mrf.mxu0
        %5277 = vmatprep.mubr.f32.mxu0 0.0
        %5278 = vmatmul.mubr.f32.gmra.mxu0 %v5184
        %v5279 = vpop.f32.mrf.mxu0
        %v5280 = vadd.f32 0.0, %v5279
        %v5281 = vpop.f32.mrf.mxu0
        %5282 = vmatprep.mubr.f32.mxu0 0.0
        %5283 = vmatmul.mubr.f32.gmra.mxu0 %v5185
        %v5284 = vpop.f32.mrf.mxu0
        %v5285 = vadd.f32 0.0, %v5284
        %v5286 = vpop.f32.mrf.mxu0
        %5287 = vmatprep.mubr.f32.mxu0 0.0
        %5288 = vmatmul.mubr.f32.gmra.mxu0 %v5186
        %v5289 = vpop.f32.mrf.mxu0
        %v5290 = vadd.f32 0.0, %v5289
        %v5291 = vpop.f32.mrf.mxu0
        %5292 = vmatprep.mubr.f32.mxu0 0.0
        %5293 = vmatmul.mubr.f32.gmra.mxu0 %v5187
        %v5294 = vpop.f32.mrf.mxu0
        %v5295 = vadd.f32 0.0, %v5294
        %v5296 = vpop.f32.mrf.mxu0
        %5297 = vmatprep.mubr.f32.mxu0 0.0
        %5298 = vmatmul.mubr.f32.gmra.mxu0 %v5188
        %v5299 = vpop.f32.mrf.mxu0
        %v5300 = vadd.f32 0.0, %v5299
        %v5301 = vpop.f32.mrf.mxu0
        %5302 = vmatprep.mubr.f32.mxu0 0.0
        %5303 = vmatmul.mubr.f32.gmra.mxu0 %v5189
        %v5304 = vpop.f32.mrf.mxu0
        %v5305 = vadd.f32 0.0, %v5304
        %v5306 = vpop.f32.mrf.mxu0
        %5307 = vmatprep.mubr.f32.mxu0 0.0
        %5308 = vmatmul.mubr.f32.gmra.mxu0 %v5190
        %v5309 = vpop.f32.mrf.mxu0
        %v5310 = vadd.f32 0.0, %v5309
        %v5311 = vpop.f32.mrf.mxu0
        %5312 = vdwg.mxu0
        %v5313 = vadd.f32 %v5174, %v5275
        %v5314 = vadd.f32 %v5175, %v5280
        %v5315 = vadd.f32 %v5176, %v5285
        %v5316 = vadd.f32 %v5177, %v5290
        %v5317 = vadd.f32 %v5178, %v5295
        %v5318 = vadd.f32 %v5179, %v5300
        %v5319 = vadd.f32 %v5180, %v5305
        %v5320 = vadd.f32 %v5181, %v5310
        %v5321 = vld [vmem:[%s5182 + $0x1] sm:$0xff]
        %v5322 = vld [vmem:[%s5182 + $0x11] sm:$0xff]
        %v5323 = vld [vmem:[%s5182 + $0x21] sm:$0xff]
        %v5324 = vld [vmem:[%s5182 + $0x31] sm:$0xff]
        %v5325 = vld [vmem:[%s5182 + $0x41] sm:$0xff]
        %v5326 = vld [vmem:[%s5182 + $0x51] sm:$0xff]
        %v5327 = vld [vmem:[%s5182 + $0x61] sm:$0xff]
        %v5328 = vld [vmem:[%s5182 + $0x71] sm:$0xff]
        %s5329 = scalar_lea.vmem [#allocation7], 1408
        %v5330 = vld [vmem:[%s5329] sm:$0xff]
        %v5331 = vld [vmem:[%s5329 + $0x8] sm:$0xff]
        %v5332 = vld [vmem:[%s5329 + $0x10] sm:$0xff]
        %v5333 = vld [vmem:[%s5329 + $0x18] sm:$0xff]
        %v5334 = vld [vmem:[%s5329 + $0x20] sm:$0xff]
        %v5335 = vld [vmem:[%s5329 + $0x28] sm:$0xff]
        %v5336 = vld [vmem:[%s5329 + $0x30] sm:$0xff]
        %v5337 = vld [vmem:[%s5329 + $0x38] sm:$0xff]
        %v5338 = vld [vmem:[%s5329 + $0x40] sm:$0xff]
        %v5339 = vld [vmem:[%s5329 + $0x48] sm:$0xff]
        %v5340 = vld [vmem:[%s5329 + $0x50] sm:$0xff]
        %v5341 = vld [vmem:[%s5329 + $0x58] sm:$0xff]
        %v5342 = vld [vmem:[%s5329 + $0x60] sm:$0xff]
        %v5343 = vld [vmem:[%s5329 + $0x68] sm:$0xff]
        %v5344 = vld [vmem:[%s5329 + $0x70] sm:$0xff]
        %v5345 = vld [vmem:[%s5329 + $0x78] sm:$0xff]
        %5346 = vmatprep.subr.mxu0 0.0
        %5347 = vmatpush1.msra.mxu0 %v5345
        %5348 = vmatprep.subr.mxu0 0.0
        %5349 = vmatpush1.msra.mxu0 %v5344
        %5350 = vmatprep.subr.mxu0 0.0
        %5351 = vmatpush1.msra.mxu0 %v5343
        %5352 = vmatprep.subr.mxu0 0.0
        %5353 = vmatpush1.msra.mxu0 %v5342
        %5354 = vmatprep.subr.mxu0 0.0
        %5355 = vmatpush1.msra.mxu0 %v5341
        %5356 = vmatprep.subr.mxu0 0.0
        %5357 = vmatpush1.msra.mxu0 %v5340
        %5358 = vmatprep.subr.mxu0 0.0
        %5359 = vmatpush1.msra.mxu0 %v5339
        %5360 = vmatprep.subr.mxu0 0.0
        %5361 = vmatpush1.msra.mxu0 %v5338
        %5362 = vmatprep.subr.mxu0 0.0
        %5363 = vmatpush1.msra.mxu0 %v5337
        %5364 = vmatprep.subr.mxu0 0.0
        %5365 = vmatpush1.msra.mxu0 %v5336
        %5366 = vmatprep.subr.mxu0 0.0
        %5367 = vmatpush1.msra.mxu0 %v5335
        %5368 = vmatprep.subr.mxu0 0.0
        %5369 = vmatpush1.msra.mxu0 %v5334
        %5370 = vmatprep.subr.mxu0 0.0
        %5371 = vmatpush1.msra.mxu0 %v5333
        %5372 = vmatprep.subr.mxu0 0.0
        %5373 = vmatpush1.msra.mxu0 %v5332
        %5374 = vmatprep.subr.mxu0 0.0
        %5375 = vmatpush1.msra.mxu0 %v5331
        %5376 = vmatprep.subr.mxu0 0.0
        %5377 = vmatpush1.msra.mxu0 %v5330
        %5378 = vmatprep.subr.mxu0 0.0
        %5379 = vmatpush2.msra.mxu0 0.0
        %5380 = vmatprep.subr.mxu0 0.0
        %5381 = vmatpush2.msra.mxu0 0.0
        %5382 = vmatprep.subr.mxu0 0.0
        %5383 = vmatpush2.msra.mxu0 0.0
        %5384 = vmatprep.subr.mxu0 0.0
        %5385 = vmatpush2.msra.mxu0 0.0
        %5386 = vmatprep.subr.mxu0 0.0
        %5387 = vmatpush2.msra.mxu0 0.0
        %5388 = vmatprep.subr.mxu0 0.0
        %5389 = vmatpush2.msra.mxu0 0.0
        %5390 = vmatprep.subr.mxu0 0.0
        %5391 = vmatpush2.msra.mxu0 0.0
        %5392 = vmatprep.subr.mxu0 0.0
        %5393 = vmatpush2.msra.mxu0 0.0
        %5394 = vmatprep.subr.mxu0 0.0
        %5395 = vmatpush2.msra.mxu0 0.0
        %5396 = vmatprep.subr.mxu0 0.0
        %5397 = vmatpush2.msra.mxu0 0.0
        %5398 = vmatprep.subr.mxu0 0.0
        %5399 = vmatpush2.msra.mxu0 0.0
        %5400 = vmatprep.subr.mxu0 0.0
        %5401 = vmatpush2.msra.mxu0 0.0
        %5402 = vmatprep.subr.mxu0 0.0
        %5403 = vmatpush2.msra.mxu0 0.0
        %5404 = vmatprep.subr.mxu0 0.0
        %5405 = vmatpush2.msra.mxu0 0.0
        %5406 = vmatprep.subr.mxu0 0.0
        %5407 = vmatpush2.msra.mxu0 0.0
        %5408 = vmatprep.subr.mxu0 0.0
        %5409 = vmatpush2.msra.mxu0 0.0
        %5410 = vmatprep.mubr.f32.mxu0 0.0
        %5411 = vmatmul.mubr.f32.gmra.mxu0 %v5321
        %v5412 = vpop.f32.mrf.mxu0
        %v5413 = vadd.f32 0.0, %v5412
        %v5414 = vpop.f32.mrf.mxu0
        %5415 = vmatprep.mubr.f32.mxu0 0.0
        %5416 = vmatmul.mubr.f32.gmra.mxu0 %v5322
        %v5417 = vpop.f32.mrf.mxu0
        %v5418 = vadd.f32 0.0, %v5417
        %v5419 = vpop.f32.mrf.mxu0
        %5420 = vmatprep.mubr.f32.mxu0 0.0
        %5421 = vmatmul.mubr.f32.gmra.mxu0 %v5323
        %v5422 = vpop.f32.mrf.mxu0
        %v5423 = vadd.f32 0.0, %v5422
        %v5424 = vpop.f32.mrf.mxu0
        %5425 = vmatprep.mubr.f32.mxu0 0.0
        %5426 = vmatmul.mubr.f32.gmra.mxu0 %v5324
        %v5427 = vpop.f32.mrf.mxu0
        %v5428 = vadd.f32 0.0, %v5427
        %v5429 = vpop.f32.mrf.mxu0
        %5430 = vmatprep.mubr.f32.mxu0 0.0
        %5431 = vmatmul.mubr.f32.gmra.mxu0 %v5325
        %v5432 = vpop.f32.mrf.mxu0
        %v5433 = vadd.f32 0.0, %v5432
        %v5434 = vpop.f32.mrf.mxu0
        %5435 = vmatprep.mubr.f32.mxu0 0.0
        %5436 = vmatmul.mubr.f32.gmra.mxu0 %v5326
        %v5437 = vpop.f32.mrf.mxu0
        %v5438 = vadd.f32 0.0, %v5437
        %v5439 = vpop.f32.mrf.mxu0
        %5440 = vmatprep.mubr.f32.mxu0 0.0
        %5441 = vmatmul.mubr.f32.gmra.mxu0 %v5327
        %v5442 = vpop.f32.mrf.mxu0
        %v5443 = vadd.f32 0.0, %v5442
        %v5444 = vpop.f32.mrf.mxu0
        %5445 = vmatprep.mubr.f32.mxu0 0.0
        %5446 = vmatmul.mubr.f32.gmra.mxu0 %v5328
        %v5447 = vpop.f32.mrf.mxu0
        %v5448 = vadd.f32 0.0, %v5447
        %v5449 = vpop.f32.mrf.mxu0
        %5450 = vdwg.mxu0
        %v5451 = vadd.f32 %v5313, %v5413
        %v5452 = vadd.f32 %v5314, %v5418
        %v5453 = vadd.f32 %v5315, %v5423
        %v5454 = vadd.f32 %v5316, %v5428
        %v5455 = vadd.f32 %v5317, %v5433
        %v5456 = vadd.f32 %v5318, %v5438
        %v5457 = vadd.f32 %v5319, %v5443
        %v5458 = vadd.f32 %v5320, %v5448
        %v5459 = vld [vmem:[%s5182 + $0x2] sm:$0xff]
        %v5460 = vld [vmem:[%s5182 + $0x12] sm:$0xff]
        %v5461 = vld [vmem:[%s5182 + $0x22] sm:$0xff]
        %v5462 = vld [vmem:[%s5182 + $0x32] sm:$0xff]
        %v5463 = vld [vmem:[%s5182 + $0x42] sm:$0xff]
        %v5464 = vld [vmem:[%s5182 + $0x52] sm:$0xff]
        %v5465 = vld [vmem:[%s5182 + $0x62] sm:$0xff]
        %v5466 = vld [vmem:[%s5182 + $0x72] sm:$0xff]
        %s5467 = scalar_lea.vmem [#allocation7], 1536
        %v5468 = vld [vmem:[%s5467] sm:$0xff]
        %v5469 = vld [vmem:[%s5467 + $0x8] sm:$0xff]
        %v5470 = vld [vmem:[%s5467 + $0x10] sm:$0xff]
        %v5471 = vld [vmem:[%s5467 + $0x18] sm:$0xff]
        %v5472 = vld [vmem:[%s5467 + $0x20] sm:$0xff]
        %v5473 = vld [vmem:[%s5467 + $0x28] sm:$0xff]
        %v5474 = vld [vmem:[%s5467 + $0x30] sm:$0xff]
        %v5475 = vld [vmem:[%s5467 + $0x38] sm:$0xff]
        %v5476 = vld [vmem:[%s5467 + $0x40] sm:$0xff]
        %v5477 = vld [vmem:[%s5467 + $0x48] sm:$0xff]
        %v5478 = vld [vmem:[%s5467 + $0x50] sm:$0xff]
        %v5479 = vld [vmem:[%s5467 + $0x58] sm:$0xff]
        %v5480 = vld [vmem:[%s5467 + $0x60] sm:$0xff]
        %v5481 = vld [vmem:[%s5467 + $0x68] sm:$0xff]
        %v5482 = vld [vmem:[%s5467 + $0x70] sm:$0xff]
        %v5483 = vld [vmem:[%s5467 + $0x78] sm:$0xff]
        %5484 = vmatprep.subr.mxu0 0.0
        %5485 = vmatpush1.msra.mxu0 %v5483
        %5486 = vmatprep.subr.mxu0 0.0
        %5487 = vmatpush1.msra.mxu0 %v5482
        %5488 = vmatprep.subr.mxu0 0.0
        %5489 = vmatpush1.msra.mxu0 %v5481
        %5490 = vmatprep.subr.mxu0 0.0
        %5491 = vmatpush1.msra.mxu0 %v5480
        %5492 = vmatprep.subr.mxu0 0.0
        %5493 = vmatpush1.msra.mxu0 %v5479
        %5494 = vmatprep.subr.mxu0 0.0
        %5495 = vmatpush1.msra.mxu0 %v5478
        %5496 = vmatprep.subr.mxu0 0.0
        %5497 = vmatpush1.msra.mxu0 %v5477
        %5498 = vmatprep.subr.mxu0 0.0
        %5499 = vmatpush1.msra.mxu0 %v5476
        %5500 = vmatprep.subr.mxu0 0.0
        %5501 = vmatpush1.msra.mxu0 %v5475
        %5502 = vmatprep.subr.mxu0 0.0
        %5503 = vmatpush1.msra.mxu0 %v5474
        %5504 = vmatprep.subr.mxu0 0.0
        %5505 = vmatpush1.msra.mxu0 %v5473
        %5506 = vmatprep.subr.mxu0 0.0
        %5507 = vmatpush1.msra.mxu0 %v5472
        %5508 = vmatprep.subr.mxu0 0.0
        %5509 = vmatpush1.msra.mxu0 %v5471
        %5510 = vmatprep.subr.mxu0 0.0
        %5511 = vmatpush1.msra.mxu0 %v5470
        %5512 = vmatprep.subr.mxu0 0.0
        %5513 = vmatpush1.msra.mxu0 %v5469
        %5514 = vmatprep.subr.mxu0 0.0
        %5515 = vmatpush1.msra.mxu0 %v5468
        %5516 = vmatprep.subr.mxu0 0.0
        %5517 = vmatpush2.msra.mxu0 0.0
        %5518 = vmatprep.subr.mxu0 0.0
        %5519 = vmatpush2.msra.mxu0 0.0
        %5520 = vmatprep.subr.mxu0 0.0
        %5521 = vmatpush2.msra.mxu0 0.0
        %5522 = vmatprep.subr.mxu0 0.0
        %5523 = vmatpush2.msra.mxu0 0.0
        %5524 = vmatprep.subr.mxu0 0.0
        %5525 = vmatpush2.msra.mxu0 0.0
        %5526 = vmatprep.subr.mxu0 0.0
        %5527 = vmatpush2.msra.mxu0 0.0
        %5528 = vmatprep.subr.mxu0 0.0
        %5529 = vmatpush2.msra.mxu0 0.0
        %5530 = vmatprep.subr.mxu0 0.0
        %5531 = vmatpush2.msra.mxu0 0.0
        %5532 = vmatprep.subr.mxu0 0.0
        %5533 = vmatpush2.msra.mxu0 0.0
        %5534 = vmatprep.subr.mxu0 0.0
        %5535 = vmatpush2.msra.mxu0 0.0
        %5536 = vmatprep.subr.mxu0 0.0
        %5537 = vmatpush2.msra.mxu0 0.0
        %5538 = vmatprep.subr.mxu0 0.0
        %5539 = vmatpush2.msra.mxu0 0.0
        %5540 = vmatprep.subr.mxu0 0.0
        %5541 = vmatpush2.msra.mxu0 0.0
        %5542 = vmatprep.subr.mxu0 0.0
        %5543 = vmatpush2.msra.mxu0 0.0
        %5544 = vmatprep.subr.mxu0 0.0
        %5545 = vmatpush2.msra.mxu0 0.0
        %5546 = vmatprep.subr.mxu0 0.0
        %5547 = vmatpush2.msra.mxu0 0.0
        %5548 = vmatprep.mubr.f32.mxu0 0.0
        %5549 = vmatmul.mubr.f32.gmra.mxu0 %v5459
        %v5550 = vpop.f32.mrf.mxu0
        %v5551 = vadd.f32 0.0, %v5550
        %v5552 = vpop.f32.mrf.mxu0
        %5553 = vmatprep.mubr.f32.mxu0 0.0
        %5554 = vmatmul.mubr.f32.gmra.mxu0 %v5460
        %v5555 = vpop.f32.mrf.mxu0
        %v5556 = vadd.f32 0.0, %v5555
        %v5557 = vpop.f32.mrf.mxu0
        %5558 = vmatprep.mubr.f32.mxu0 0.0
        %5559 = vmatmul.mubr.f32.gmra.mxu0 %v5461
        %v5560 = vpop.f32.mrf.mxu0
        %v5561 = vadd.f32 0.0, %v5560
        %v5562 = vpop.f32.mrf.mxu0
        %5563 = vmatprep.mubr.f32.mxu0 0.0
        %5564 = vmatmul.mubr.f32.gmra.mxu0 %v5462
        %v5565 = vpop.f32.mrf.mxu0
        %v5566 = vadd.f32 0.0, %v5565
        %v5567 = vpop.f32.mrf.mxu0
        %5568 = vmatprep.mubr.f32.mxu0 0.0
        %5569 = vmatmul.mubr.f32.gmra.mxu0 %v5463
        %v5570 = vpop.f32.mrf.mxu0
        %v5571 = vadd.f32 0.0, %v5570
        %v5572 = vpop.f32.mrf.mxu0
        %5573 = vmatprep.mubr.f32.mxu0 0.0
        %5574 = vmatmul.mubr.f32.gmra.mxu0 %v5464
        %v5575 = vpop.f32.mrf.mxu0
        %v5576 = vadd.f32 0.0, %v5575
        %v5577 = vpop.f32.mrf.mxu0
        %5578 = vmatprep.mubr.f32.mxu0 0.0
        %5579 = vmatmul.mubr.f32.gmra.mxu0 %v5465
        %v5580 = vpop.f32.mrf.mxu0
        %v5581 = vadd.f32 0.0, %v5580
        %v5582 = vpop.f32.mrf.mxu0
        %5583 = vmatprep.mubr.f32.mxu0 0.0
        %5584 = vmatmul.mubr.f32.gmra.mxu0 %v5466
        %v5585 = vpop.f32.mrf.mxu0
        %v5586 = vadd.f32 0.0, %v5585
        %v5587 = vpop.f32.mrf.mxu0
        %5588 = vdwg.mxu0
        %v5589 = vadd.f32 %v5451, %v5551
        %v5590 = vadd.f32 %v5452, %v5556
        %v5591 = vadd.f32 %v5453, %v5561
        %v5592 = vadd.f32 %v5454, %v5566
        %v5593 = vadd.f32 %v5455, %v5571
        %v5594 = vadd.f32 %v5456, %v5576
        %v5595 = vadd.f32 %v5457, %v5581
        %v5596 = vadd.f32 %v5458, %v5586
        %v5597 = vld [vmem:[%s5182 + $0x3] sm:$0xff]
        %v5598 = vld [vmem:[%s5182 + $0x13] sm:$0xff]
        %v5599 = vld [vmem:[%s5182 + $0x23] sm:$0xff]
        %v5600 = vld [vmem:[%s5182 + $0x33] sm:$0xff]
        %v5601 = vld [vmem:[%s5182 + $0x43] sm:$0xff]
        %v5602 = vld [vmem:[%s5182 + $0x53] sm:$0xff]
        %v5603 = vld [vmem:[%s5182 + $0x63] sm:$0xff]
        %v5604 = vld [vmem:[%s5182 + $0x73] sm:$0xff]
        %s5605 = scalar_lea.vmem [#allocation7], 1664
        %v5606 = vld [vmem:[%s5605] sm:$0xff]
        %v5607 = vld [vmem:[%s5605 + $0x8] sm:$0xff]
        %v5608 = vld [vmem:[%s5605 + $0x10] sm:$0xff]
        %v5609 = vld [vmem:[%s5605 + $0x18] sm:$0xff]
        %v5610 = vld [vmem:[%s5605 + $0x20] sm:$0xff]
        %v5611 = vld [vmem:[%s5605 + $0x28] sm:$0xff]
        %v5612 = vld [vmem:[%s5605 + $0x30] sm:$0xff]
        %v5613 = vld [vmem:[%s5605 + $0x38] sm:$0xff]
        %v5614 = vld [vmem:[%s5605 + $0x40] sm:$0xff]
        %v5615 = vld [vmem:[%s5605 + $0x48] sm:$0xff]
        %v5616 = vld [vmem:[%s5605 + $0x50] sm:$0xff]
        %v5617 = vld [vmem:[%s5605 + $0x58] sm:$0xff]
        %v5618 = vld [vmem:[%s5605 + $0x60] sm:$0xff]
        %v5619 = vld [vmem:[%s5605 + $0x68] sm:$0xff]
        %v5620 = vld [vmem:[%s5605 + $0x70] sm:$0xff]
        %v5621 = vld [vmem:[%s5605 + $0x78] sm:$0xff]
        %5622 = vmatprep.subr.mxu0 0.0
        %5623 = vmatpush1.msra.mxu0 %v5621
        %5624 = vmatprep.subr.mxu0 0.0
        %5625 = vmatpush1.msra.mxu0 %v5620
        %5626 = vmatprep.subr.mxu0 0.0
        %5627 = vmatpush1.msra.mxu0 %v5619
        %5628 = vmatprep.subr.mxu0 0.0
        %5629 = vmatpush1.msra.mxu0 %v5618
        %5630 = vmatprep.subr.mxu0 0.0
        %5631 = vmatpush1.msra.mxu0 %v5617
        %5632 = vmatprep.subr.mxu0 0.0
        %5633 = vmatpush1.msra.mxu0 %v5616
        %5634 = vmatprep.subr.mxu0 0.0
        %5635 = vmatpush1.msra.mxu0 %v5615
        %5636 = vmatprep.subr.mxu0 0.0
        %5637 = vmatpush1.msra.mxu0 %v5614
        %5638 = vmatprep.subr.mxu0 0.0
        %5639 = vmatpush1.msra.mxu0 %v5613
        %5640 = vmatprep.subr.mxu0 0.0
        %5641 = vmatpush1.msra.mxu0 %v5612
        %5642 = vmatprep.subr.mxu0 0.0
        %5643 = vmatpush1.msra.mxu0 %v5611
        %5644 = vmatprep.subr.mxu0 0.0
        %5645 = vmatpush1.msra.mxu0 %v5610
        %5646 = vmatprep.subr.mxu0 0.0
        %5647 = vmatpush1.msra.mxu0 %v5609
        %5648 = vmatprep.subr.mxu0 0.0
        %5649 = vmatpush1.msra.mxu0 %v5608
        %5650 = vmatprep.subr.mxu0 0.0
        %5651 = vmatpush1.msra.mxu0 %v5607
        %5652 = vmatprep.subr.mxu0 0.0
        %5653 = vmatpush1.msra.mxu0 %v5606
        %5654 = vmatprep.subr.mxu0 0.0
        %5655 = vmatpush2.msra.mxu0 0.0
        %5656 = vmatprep.subr.mxu0 0.0
        %5657 = vmatpush2.msra.mxu0 0.0
        %5658 = vmatprep.subr.mxu0 0.0
        %5659 = vmatpush2.msra.mxu0 0.0
        %5660 = vmatprep.subr.mxu0 0.0
        %5661 = vmatpush2.msra.mxu0 0.0
        %5662 = vmatprep.subr.mxu0 0.0
        %5663 = vmatpush2.msra.mxu0 0.0
        %5664 = vmatprep.subr.mxu0 0.0
        %5665 = vmatpush2.msra.mxu0 0.0
        %5666 = vmatprep.subr.mxu0 0.0
        %5667 = vmatpush2.msra.mxu0 0.0
        %5668 = vmatprep.subr.mxu0 0.0
        %5669 = vmatpush2.msra.mxu0 0.0
        %5670 = vmatprep.subr.mxu0 0.0
        %5671 = vmatpush2.msra.mxu0 0.0
        %5672 = vmatprep.subr.mxu0 0.0
        %5673 = vmatpush2.msra.mxu0 0.0
        %5674 = vmatprep.subr.mxu0 0.0
        %5675 = vmatpush2.msra.mxu0 0.0
        %5676 = vmatprep.subr.mxu0 0.0
        %5677 = vmatpush2.msra.mxu0 0.0
        %5678 = vmatprep.subr.mxu0 0.0
        %5679 = vmatpush2.msra.mxu0 0.0
        %5680 = vmatprep.subr.mxu0 0.0
        %5681 = vmatpush2.msra.mxu0 0.0
        %5682 = vmatprep.subr.mxu0 0.0
        %5683 = vmatpush2.msra.mxu0 0.0
        %5684 = vmatprep.subr.mxu0 0.0
        %5685 = vmatpush2.msra.mxu0 0.0
        %5686 = vmatprep.mubr.f32.mxu0 0.0
        %5687 = vmatmul.mubr.f32.gmra.mxu0 %v5597
        %v5688 = vpop.f32.mrf.mxu0
        %v5689 = vadd.f32 0.0, %v5688
        %v5690 = vpop.f32.mrf.mxu0
        %5691 = vmatprep.mubr.f32.mxu0 0.0
        %5692 = vmatmul.mubr.f32.gmra.mxu0 %v5598
        %v5693 = vpop.f32.mrf.mxu0
        %v5694 = vadd.f32 0.0, %v5693
        %v5695 = vpop.f32.mrf.mxu0
        %5696 = vmatprep.mubr.f32.mxu0 0.0
        %5697 = vmatmul.mubr.f32.gmra.mxu0 %v5599
        %v5698 = vpop.f32.mrf.mxu0
        %v5699 = vadd.f32 0.0, %v5698
        %v5700 = vpop.f32.mrf.mxu0
        %5701 = vmatprep.mubr.f32.mxu0 0.0
        %5702 = vmatmul.mubr.f32.gmra.mxu0 %v5600
        %v5703 = vpop.f32.mrf.mxu0
        %v5704 = vadd.f32 0.0, %v5703
        %v5705 = vpop.f32.mrf.mxu0
        %5706 = vmatprep.mubr.f32.mxu0 0.0
        %5707 = vmatmul.mubr.f32.gmra.mxu0 %v5601
        %v5708 = vpop.f32.mrf.mxu0
        %v5709 = vadd.f32 0.0, %v5708
        %v5710 = vpop.f32.mrf.mxu0
        %5711 = vmatprep.mubr.f32.mxu0 0.0
        %5712 = vmatmul.mubr.f32.gmra.mxu0 %v5602
        %v5713 = vpop.f32.mrf.mxu0
        %v5714 = vadd.f32 0.0, %v5713
        %v5715 = vpop.f32.mrf.mxu0
        %5716 = vmatprep.mubr.f32.mxu0 0.0
        %5717 = vmatmul.mubr.f32.gmra.mxu0 %v5603
        %v5718 = vpop.f32.mrf.mxu0
        %v5719 = vadd.f32 0.0, %v5718
        %v5720 = vpop.f32.mrf.mxu0
        %5721 = vmatprep.mubr.f32.mxu0 0.0
        %5722 = vmatmul.mubr.f32.gmra.mxu0 %v5604
        %v5723 = vpop.f32.mrf.mxu0
        %v5724 = vadd.f32 0.0, %v5723
        %v5725 = vpop.f32.mrf.mxu0
        %5726 = vdwg.mxu0
        %v5727 = vadd.f32 %v5589, %v5689
        %v5728 = vadd.f32 %v5590, %v5694
        %v5729 = vadd.f32 %v5591, %v5699
        %v5730 = vadd.f32 %v5592, %v5704
        %v5731 = vadd.f32 %v5593, %v5709
        %v5732 = vadd.f32 %v5594, %v5714
        %v5733 = vadd.f32 %v5595, %v5719
        %v5734 = vadd.f32 %v5596, %v5724
        %v5735 = vld [vmem:[%s5182 + $0x4] sm:$0xff]
        %v5736 = vld [vmem:[%s5182 + $0x14] sm:$0xff]
        %v5737 = vld [vmem:[%s5182 + $0x24] sm:$0xff]
        %v5738 = vld [vmem:[%s5182 + $0x34] sm:$0xff]
        %v5739 = vld [vmem:[%s5182 + $0x44] sm:$0xff]
        %v5740 = vld [vmem:[%s5182 + $0x54] sm:$0xff]
        %v5741 = vld [vmem:[%s5182 + $0x64] sm:$0xff]
        %v5742 = vld [vmem:[%s5182 + $0x74] sm:$0xff]
        %s5743 = scalar_lea.vmem [#allocation7], 1792
        %v5744 = vld [vmem:[%s5743] sm:$0xff]
        %v5745 = vld [vmem:[%s5743 + $0x8] sm:$0xff]
        %v5746 = vld [vmem:[%s5743 + $0x10] sm:$0xff]
        %v5747 = vld [vmem:[%s5743 + $0x18] sm:$0xff]
        %v5748 = vld [vmem:[%s5743 + $0x20] sm:$0xff]
        %v5749 = vld [vmem:[%s5743 + $0x28] sm:$0xff]
        %v5750 = vld [vmem:[%s5743 + $0x30] sm:$0xff]
        %v5751 = vld [vmem:[%s5743 + $0x38] sm:$0xff]
        %v5752 = vld [vmem:[%s5743 + $0x40] sm:$0xff]
        %v5753 = vld [vmem:[%s5743 + $0x48] sm:$0xff]
        %v5754 = vld [vmem:[%s5743 + $0x50] sm:$0xff]
        %v5755 = vld [vmem:[%s5743 + $0x58] sm:$0xff]
        %v5756 = vld [vmem:[%s5743 + $0x60] sm:$0xff]
        %v5757 = vld [vmem:[%s5743 + $0x68] sm:$0xff]
        %v5758 = vld [vmem:[%s5743 + $0x70] sm:$0xff]
        %v5759 = vld [vmem:[%s5743 + $0x78] sm:$0xff]
        %5760 = vmatprep.subr.mxu0 0.0
        %5761 = vmatpush1.msra.mxu0 %v5759
        %5762 = vmatprep.subr.mxu0 0.0
        %5763 = vmatpush1.msra.mxu0 %v5758
        %5764 = vmatprep.subr.mxu0 0.0
        %5765 = vmatpush1.msra.mxu0 %v5757
        %5766 = vmatprep.subr.mxu0 0.0
        %5767 = vmatpush1.msra.mxu0 %v5756
        %5768 = vmatprep.subr.mxu0 0.0
        %5769 = vmatpush1.msra.mxu0 %v5755
        %5770 = vmatprep.subr.mxu0 0.0
        %5771 = vmatpush1.msra.mxu0 %v5754
        %5772 = vmatprep.subr.mxu0 0.0
        %5773 = vmatpush1.msra.mxu0 %v5753
        %5774 = vmatprep.subr.mxu0 0.0
        %5775 = vmatpush1.msra.mxu0 %v5752
        %5776 = vmatprep.subr.mxu0 0.0
        %5777 = vmatpush1.msra.mxu0 %v5751
        %5778 = vmatprep.subr.mxu0 0.0
        %5779 = vmatpush1.msra.mxu0 %v5750
        %5780 = vmatprep.subr.mxu0 0.0
        %5781 = vmatpush1.msra.mxu0 %v5749
        %5782 = vmatprep.subr.mxu0 0.0
        %5783 = vmatpush1.msra.mxu0 %v5748
        %5784 = vmatprep.subr.mxu0 0.0
        %5785 = vmatpush1.msra.mxu0 %v5747
        %5786 = vmatprep.subr.mxu0 0.0
        %5787 = vmatpush1.msra.mxu0 %v5746
        %5788 = vmatprep.subr.mxu0 0.0
        %5789 = vmatpush1.msra.mxu0 %v5745
        %5790 = vmatprep.subr.mxu0 0.0
        %5791 = vmatpush1.msra.mxu0 %v5744
        %5792 = vmatprep.subr.mxu0 0.0
        %5793 = vmatpush2.msra.mxu0 0.0
        %5794 = vmatprep.subr.mxu0 0.0
        %5795 = vmatpush2.msra.mxu0 0.0
        %5796 = vmatprep.subr.mxu0 0.0
        %5797 = vmatpush2.msra.mxu0 0.0
        %5798 = vmatprep.subr.mxu0 0.0
        %5799 = vmatpush2.msra.mxu0 0.0
        %5800 = vmatprep.subr.mxu0 0.0
        %5801 = vmatpush2.msra.mxu0 0.0
        %5802 = vmatprep.subr.mxu0 0.0
        %5803 = vmatpush2.msra.mxu0 0.0
        %5804 = vmatprep.subr.mxu0 0.0
        %5805 = vmatpush2.msra.mxu0 0.0
        %5806 = vmatprep.subr.mxu0 0.0
        %5807 = vmatpush2.msra.mxu0 0.0
        %5808 = vmatprep.subr.mxu0 0.0
        %5809 = vmatpush2.msra.mxu0 0.0
        %5810 = vmatprep.subr.mxu0 0.0
        %5811 = vmatpush2.msra.mxu0 0.0
        %5812 = vmatprep.subr.mxu0 0.0
        %5813 = vmatpush2.msra.mxu0 0.0
        %5814 = vmatprep.subr.mxu0 0.0
        %5815 = vmatpush2.msra.mxu0 0.0
        %5816 = vmatprep.subr.mxu0 0.0
        %5817 = vmatpush2.msra.mxu0 0.0
        %5818 = vmatprep.subr.mxu0 0.0
        %5819 = vmatpush2.msra.mxu0 0.0
        %5820 = vmatprep.subr.mxu0 0.0
        %5821 = vmatpush2.msra.mxu0 0.0
        %5822 = vmatprep.subr.mxu0 0.0
        %5823 = vmatpush2.msra.mxu0 0.0
        %5824 = vmatprep.mubr.f32.mxu0 0.0
        %5825 = vmatmul.mubr.f32.gmra.mxu0 %v5735
        %v5826 = vpop.f32.mrf.mxu0
        %v5827 = vadd.f32 0.0, %v5826
        %v5828 = vpop.f32.mrf.mxu0
        %5829 = vmatprep.mubr.f32.mxu0 0.0
        %5830 = vmatmul.mubr.f32.gmra.mxu0 %v5736
        %v5831 = vpop.f32.mrf.mxu0
        %v5832 = vadd.f32 0.0, %v5831
        %v5833 = vpop.f32.mrf.mxu0
        %5834 = vmatprep.mubr.f32.mxu0 0.0
        %5835 = vmatmul.mubr.f32.gmra.mxu0 %v5737
        %v5836 = vpop.f32.mrf.mxu0
        %v5837 = vadd.f32 0.0, %v5836
        %v5838 = vpop.f32.mrf.mxu0
        %5839 = vmatprep.mubr.f32.mxu0 0.0
        %5840 = vmatmul.mubr.f32.gmra.mxu0 %v5738
        %v5841 = vpop.f32.mrf.mxu0
        %v5842 = vadd.f32 0.0, %v5841
        %v5843 = vpop.f32.mrf.mxu0
        %5844 = vmatprep.mubr.f32.mxu0 0.0
        %5845 = vmatmul.mubr.f32.gmra.mxu0 %v5739
        %v5846 = vpop.f32.mrf.mxu0
        %v5847 = vadd.f32 0.0, %v5846
        %v5848 = vpop.f32.mrf.mxu0
        %5849 = vmatprep.mubr.f32.mxu0 0.0
        %5850 = vmatmul.mubr.f32.gmra.mxu0 %v5740
        %v5851 = vpop.f32.mrf.mxu0
        %v5852 = vadd.f32 0.0, %v5851
        %v5853 = vpop.f32.mrf.mxu0
        %5854 = vmatprep.mubr.f32.mxu0 0.0
        %5855 = vmatmul.mubr.f32.gmra.mxu0 %v5741
        %v5856 = vpop.f32.mrf.mxu0
        %v5857 = vadd.f32 0.0, %v5856
        %v5858 = vpop.f32.mrf.mxu0
        %5859 = vmatprep.mubr.f32.mxu0 0.0
        %5860 = vmatmul.mubr.f32.gmra.mxu0 %v5742
        %v5861 = vpop.f32.mrf.mxu0
        %v5862 = vadd.f32 0.0, %v5861
        %v5863 = vpop.f32.mrf.mxu0
        %5864 = vdwg.mxu0
        %v5865 = vadd.f32 %v5727, %v5827
        %v5866 = vadd.f32 %v5728, %v5832
        %v5867 = vadd.f32 %v5729, %v5837
        %v5868 = vadd.f32 %v5730, %v5842
        %v5869 = vadd.f32 %v5731, %v5847
        %v5870 = vadd.f32 %v5732, %v5852
        %v5871 = vadd.f32 %v5733, %v5857
        %v5872 = vadd.f32 %v5734, %v5862
        %s5873 = scalar_lea.vmem [#allocation2], 48
        %v5874 = vld [vmem:[%s5873] sm:$0xff]
        %v5875 = vld [vmem:[%s5873 + $0x10] sm:$0xff]
        %v5876 = vld [vmem:[%s5873 + $0x20] sm:$0xff]
        %v5877 = vld [vmem:[%s5873 + $0x30] sm:$0xff]
        %v5878 = vld [vmem:[%s5873 + $0x40] sm:$0xff]
        %v5879 = vld [vmem:[%s5873 + $0x50] sm:$0xff]
        %v5880 = vld [vmem:[%s5873 + $0x60] sm:$0xff]
        %v5881 = vld [vmem:[%s5873 + $0x70] sm:$0xff]
        %s5882 = scalar_lea.vmem [#allocation7], 1920
        %v5883 = vld [vmem:[%s5882] sm:$0xff]
        %v5884 = vld [vmem:[%s5882 + $0x8] sm:$0xff]
        %v5885 = vld [vmem:[%s5882 + $0x10] sm:$0xff]
        %v5886 = vld [vmem:[%s5882 + $0x18] sm:$0xff]
        %v5887 = vld [vmem:[%s5882 + $0x20] sm:$0xff]
        %v5888 = vld [vmem:[%s5882 + $0x28] sm:$0xff]
        %v5889 = vld [vmem:[%s5882 + $0x30] sm:$0xff]
        %v5890 = vld [vmem:[%s5882 + $0x38] sm:$0xff]
        %v5891 = vld [vmem:[%s5882 + $0x40] sm:$0xff]
        %v5892 = vld [vmem:[%s5882 + $0x48] sm:$0xff]
        %v5893 = vld [vmem:[%s5882 + $0x50] sm:$0xff]
        %v5894 = vld [vmem:[%s5882 + $0x58] sm:$0xff]
        %v5895 = vld [vmem:[%s5882 + $0x60] sm:$0xff]
        %v5896 = vld [vmem:[%s5882 + $0x68] sm:$0xff]
        %v5897 = vld [vmem:[%s5882 + $0x70] sm:$0xff]
        %v5898 = vld [vmem:[%s5882 + $0x78] sm:$0xff]
        %5899 = vmatprep.subr.mxu0 0.0
        %5900 = vmatpush1.msra.mxu0 %v5898
        %5901 = vmatprep.subr.mxu0 0.0
        %5902 = vmatpush1.msra.mxu0 %v5897
        %5903 = vmatprep.subr.mxu0 0.0
        %5904 = vmatpush1.msra.mxu0 %v5896
        %5905 = vmatprep.subr.mxu0 0.0
        %5906 = vmatpush1.msra.mxu0 %v5895
        %5907 = vmatprep.subr.mxu0 0.0
        %5908 = vmatpush1.msra.mxu0 %v5894
        %5909 = vmatprep.subr.mxu0 0.0
        %5910 = vmatpush1.msra.mxu0 %v5893
        %5911 = vmatprep.subr.mxu0 0.0
        %5912 = vmatpush1.msra.mxu0 %v5892
        %5913 = vmatprep.subr.mxu0 0.0
        %5914 = vmatpush1.msra.mxu0 %v5891
        %5915 = vmatprep.subr.mxu0 0.0
        %5916 = vmatpush1.msra.mxu0 %v5890
        %5917 = vmatprep.subr.mxu0 0.0
        %5918 = vmatpush1.msra.mxu0 %v5889
        %5919 = vmatprep.subr.mxu0 0.0
        %5920 = vmatpush1.msra.mxu0 %v5888
        %5921 = vmatprep.subr.mxu0 0.0
        %5922 = vmatpush1.msra.mxu0 %v5887
        %5923 = vmatprep.subr.mxu0 0.0
        %5924 = vmatpush1.msra.mxu0 %v5886
        %5925 = vmatprep.subr.mxu0 0.0
        %5926 = vmatpush1.msra.mxu0 %v5885
        %5927 = vmatprep.subr.mxu0 0.0
        %5928 = vmatpush1.msra.mxu0 %v5884
        %5929 = vmatprep.subr.mxu0 0.0
        %5930 = vmatpush1.msra.mxu0 %v5883
        %5931 = vmatprep.subr.mxu0 0.0
        %5932 = vmatpush2.msra.mxu0 0.0
        %5933 = vmatprep.subr.mxu0 0.0
        %5934 = vmatpush2.msra.mxu0 0.0
        %5935 = vmatprep.subr.mxu0 0.0
        %5936 = vmatpush2.msra.mxu0 0.0
        %5937 = vmatprep.subr.mxu0 0.0
        %5938 = vmatpush2.msra.mxu0 0.0
        %5939 = vmatprep.subr.mxu0 0.0
        %5940 = vmatpush2.msra.mxu0 0.0
        %5941 = vmatprep.subr.mxu0 0.0
        %5942 = vmatpush2.msra.mxu0 0.0
        %5943 = vmatprep.subr.mxu0 0.0
        %5944 = vmatpush2.msra.mxu0 0.0
        %5945 = vmatprep.subr.mxu0 0.0
        %5946 = vmatpush2.msra.mxu0 0.0
        %5947 = vmatprep.subr.mxu0 0.0
        %5948 = vmatpush2.msra.mxu0 0.0
        %5949 = vmatprep.subr.mxu0 0.0
        %5950 = vmatpush2.msra.mxu0 0.0
        %5951 = vmatprep.subr.mxu0 0.0
        %5952 = vmatpush2.msra.mxu0 0.0
        %5953 = vmatprep.subr.mxu0 0.0
        %5954 = vmatpush2.msra.mxu0 0.0
        %5955 = vmatprep.subr.mxu0 0.0
        %5956 = vmatpush2.msra.mxu0 0.0
        %5957 = vmatprep.subr.mxu0 0.0
        %5958 = vmatpush2.msra.mxu0 0.0
        %5959 = vmatprep.subr.mxu0 0.0
        %5960 = vmatpush2.msra.mxu0 0.0
        %5961 = vmatprep.subr.mxu0 0.0
        %5962 = vmatpush2.msra.mxu0 0.0
        %5963 = vmatprep.mubr.f32.mxu0 0.0
        %5964 = vmatmul.mubr.f32.gmra.mxu0 %v5874
        %v5965 = vpop.f32.mrf.mxu0
        %v5966 = vadd.f32 0.0, %v5965
        %v5967 = vpop.f32.mrf.mxu0
        %5968 = vmatprep.mubr.f32.mxu0 0.0
        %5969 = vmatmul.mubr.f32.gmra.mxu0 %v5875
        %v5970 = vpop.f32.mrf.mxu0
        %v5971 = vadd.f32 0.0, %v5970
        %v5972 = vpop.f32.mrf.mxu0
        %5973 = vmatprep.mubr.f32.mxu0 0.0
        %5974 = vmatmul.mubr.f32.gmra.mxu0 %v5876
        %v5975 = vpop.f32.mrf.mxu0
        %v5976 = vadd.f32 0.0, %v5975
        %v5977 = vpop.f32.mrf.mxu0
        %5978 = vmatprep.mubr.f32.mxu0 0.0
        %5979 = vmatmul.mubr.f32.gmra.mxu0 %v5877
        %v5980 = vpop.f32.mrf.mxu0
        %v5981 = vadd.f32 0.0, %v5980
        %v5982 = vpop.f32.mrf.mxu0
        %5983 = vmatprep.mubr.f32.mxu0 0.0
        %5984 = vmatmul.mubr.f32.gmra.mxu0 %v5878
        %v5985 = vpop.f32.mrf.mxu0
        %v5986 = vadd.f32 0.0, %v5985
        %v5987 = vpop.f32.mrf.mxu0
        %5988 = vmatprep.mubr.f32.mxu0 0.0
        %5989 = vmatmul.mubr.f32.gmra.mxu0 %v5879
        %v5990 = vpop.f32.mrf.mxu0
        %v5991 = vadd.f32 0.0, %v5990
        %v5992 = vpop.f32.mrf.mxu0
        %5993 = vmatprep.mubr.f32.mxu0 0.0
        %5994 = vmatmul.mubr.f32.gmra.mxu0 %v5880
        %v5995 = vpop.f32.mrf.mxu0
        %v5996 = vadd.f32 0.0, %v5995
        %v5997 = vpop.f32.mrf.mxu0
        %5998 = vmatprep.mubr.f32.mxu0 0.0
        %5999 = vmatmul.mubr.f32.gmra.mxu0 %v5881
        %v6000 = vpop.f32.mrf.mxu0
        %v6001 = vadd.f32 0.0, %v6000
        %v6002 = vpop.f32.mrf.mxu0
        %6003 = vdwg.mxu0
        %v6004 = vadd.f32 %v5865, %v5966
        %v6005 = vadd.f32 %v5866, %v5971
        %v6006 = vadd.f32 %v5867, %v5976
        %v6007 = vadd.f32 %v5868, %v5981
        %v6008 = vadd.f32 %v5869, %v5986
        %v6009 = vadd.f32 %v5870, %v5991
        %v6010 = vadd.f32 %v5871, %v5996
        %v6011 = vadd.f32 %v5872, %v6001
        %v6012 = vld [vmem:[%s5873 + $0x1] sm:$0xff]
        %v6013 = vld [vmem:[%s5873 + $0x11] sm:$0xff]
        %v6014 = vld [vmem:[%s5873 + $0x21] sm:$0xff]
        %v6015 = vld [vmem:[%s5873 + $0x31] sm:$0xff]
        %v6016 = vld [vmem:[%s5873 + $0x41] sm:$0xff]
        %v6017 = vld [vmem:[%s5873 + $0x51] sm:$0xff]
        %v6018 = vld [vmem:[%s5873 + $0x61] sm:$0xff]
        %v6019 = vld [vmem:[%s5873 + $0x71] sm:$0xff]
        %s6020 = scalar_lea.vmem [#allocation7], 2048
        %v6021 = vld [vmem:[%s6020] sm:$0xff]
        %v6022 = vld [vmem:[%s6020 + $0x8] sm:$0xff]
        %v6023 = vld [vmem:[%s6020 + $0x10] sm:$0xff]
        %v6024 = vld [vmem:[%s6020 + $0x18] sm:$0xff]
        %v6025 = vld [vmem:[%s6020 + $0x20] sm:$0xff]
        %v6026 = vld [vmem:[%s6020 + $0x28] sm:$0xff]
        %v6027 = vld [vmem:[%s6020 + $0x30] sm:$0xff]
        %v6028 = vld [vmem:[%s6020 + $0x38] sm:$0xff]
        %v6029 = vld [vmem:[%s6020 + $0x40] sm:$0xff]
        %v6030 = vld [vmem:[%s6020 + $0x48] sm:$0xff]
        %v6031 = vld [vmem:[%s6020 + $0x50] sm:$0xff]
        %v6032 = vld [vmem:[%s6020 + $0x58] sm:$0xff]
        %v6033 = vld [vmem:[%s6020 + $0x60] sm:$0xff]
        %v6034 = vld [vmem:[%s6020 + $0x68] sm:$0xff]
        %v6035 = vld [vmem:[%s6020 + $0x70] sm:$0xff]
        %v6036 = vld [vmem:[%s6020 + $0x78] sm:$0xff]
        %6037 = vmatprep.subr.mxu0 0.0
        %6038 = vmatpush1.msra.mxu0 %v6036
        %6039 = vmatprep.subr.mxu0 0.0
        %6040 = vmatpush1.msra.mxu0 %v6035
        %6041 = vmatprep.subr.mxu0 0.0
        %6042 = vmatpush1.msra.mxu0 %v6034
        %6043 = vmatprep.subr.mxu0 0.0
        %6044 = vmatpush1.msra.mxu0 %v6033
        %6045 = vmatprep.subr.mxu0 0.0
        %6046 = vmatpush1.msra.mxu0 %v6032
        %6047 = vmatprep.subr.mxu0 0.0
        %6048 = vmatpush1.msra.mxu0 %v6031
        %6049 = vmatprep.subr.mxu0 0.0
        %6050 = vmatpush1.msra.mxu0 %v6030
        %6051 = vmatprep.subr.mxu0 0.0
        %6052 = vmatpush1.msra.mxu0 %v6029
        %6053 = vmatprep.subr.mxu0 0.0
        %6054 = vmatpush1.msra.mxu0 %v6028
        %6055 = vmatprep.subr.mxu0 0.0
        %6056 = vmatpush1.msra.mxu0 %v6027
        %6057 = vmatprep.subr.mxu0 0.0
        %6058 = vmatpush1.msra.mxu0 %v6026
        %6059 = vmatprep.subr.mxu0 0.0
        %6060 = vmatpush1.msra.mxu0 %v6025
        %6061 = vmatprep.subr.mxu0 0.0
        %6062 = vmatpush1.msra.mxu0 %v6024
        %6063 = vmatprep.subr.mxu0 0.0
        %6064 = vmatpush1.msra.mxu0 %v6023
        %6065 = vmatprep.subr.mxu0 0.0
        %6066 = vmatpush1.msra.mxu0 %v6022
        %6067 = vmatprep.subr.mxu0 0.0
        %6068 = vmatpush1.msra.mxu0 %v6021
        %6069 = vmatprep.subr.mxu0 0.0
        %6070 = vmatpush2.msra.mxu0 0.0
        %6071 = vmatprep.subr.mxu0 0.0
        %6072 = vmatpush2.msra.mxu0 0.0
        %6073 = vmatprep.subr.mxu0 0.0
        %6074 = vmatpush2.msra.mxu0 0.0
        %6075 = vmatprep.subr.mxu0 0.0
        %6076 = vmatpush2.msra.mxu0 0.0
        %6077 = vmatprep.subr.mxu0 0.0
        %6078 = vmatpush2.msra.mxu0 0.0
        %6079 = vmatprep.subr.mxu0 0.0
        %6080 = vmatpush2.msra.mxu0 0.0
        %6081 = vmatprep.subr.mxu0 0.0
        %6082 = vmatpush2.msra.mxu0 0.0
        %6083 = vmatprep.subr.mxu0 0.0
        %6084 = vmatpush2.msra.mxu0 0.0
        %6085 = vmatprep.subr.mxu0 0.0
        %6086 = vmatpush2.msra.mxu0 0.0
        %6087 = vmatprep.subr.mxu0 0.0
        %6088 = vmatpush2.msra.mxu0 0.0
        %6089 = vmatprep.subr.mxu0 0.0
        %6090 = vmatpush2.msra.mxu0 0.0
        %6091 = vmatprep.subr.mxu0 0.0
        %6092 = vmatpush2.msra.mxu0 0.0
        %6093 = vmatprep.subr.mxu0 0.0
        %6094 = vmatpush2.msra.mxu0 0.0
        %6095 = vmatprep.subr.mxu0 0.0
        %6096 = vmatpush2.msra.mxu0 0.0
        %6097 = vmatprep.subr.mxu0 0.0
        %6098 = vmatpush2.msra.mxu0 0.0
        %6099 = vmatprep.subr.mxu0 0.0
        %6100 = vmatpush2.msra.mxu0 0.0
        %6101 = vmatprep.mubr.f32.mxu0 0.0
        %6102 = vmatmul.mubr.f32.gmra.mxu0 %v6012
        %v6103 = vpop.f32.mrf.mxu0
        %v6104 = vadd.f32 0.0, %v6103
        %v6105 = vpop.f32.mrf.mxu0
        %6106 = vmatprep.mubr.f32.mxu0 0.0
        %6107 = vmatmul.mubr.f32.gmra.mxu0 %v6013
        %v6108 = vpop.f32.mrf.mxu0
        %v6109 = vadd.f32 0.0, %v6108
        %v6110 = vpop.f32.mrf.mxu0
        %6111 = vmatprep.mubr.f32.mxu0 0.0
        %6112 = vmatmul.mubr.f32.gmra.mxu0 %v6014
        %v6113 = vpop.f32.mrf.mxu0
        %v6114 = vadd.f32 0.0, %v6113
        %v6115 = vpop.f32.mrf.mxu0
        %6116 = vmatprep.mubr.f32.mxu0 0.0
        %6117 = vmatmul.mubr.f32.gmra.mxu0 %v6015
        %v6118 = vpop.f32.mrf.mxu0
        %v6119 = vadd.f32 0.0, %v6118
        %v6120 = vpop.f32.mrf.mxu0
        %6121 = vmatprep.mubr.f32.mxu0 0.0
        %6122 = vmatmul.mubr.f32.gmra.mxu0 %v6016
        %v6123 = vpop.f32.mrf.mxu0
        %v6124 = vadd.f32 0.0, %v6123
        %v6125 = vpop.f32.mrf.mxu0
        %6126 = vmatprep.mubr.f32.mxu0 0.0
        %6127 = vmatmul.mubr.f32.gmra.mxu0 %v6017
        %v6128 = vpop.f32.mrf.mxu0
        %v6129 = vadd.f32 0.0, %v6128
        %v6130 = vpop.f32.mrf.mxu0
        %6131 = vmatprep.mubr.f32.mxu0 0.0
        %6132 = vmatmul.mubr.f32.gmra.mxu0 %v6018
        %v6133 = vpop.f32.mrf.mxu0
        %v6134 = vadd.f32 0.0, %v6133
        %v6135 = vpop.f32.mrf.mxu0
        %6136 = vmatprep.mubr.f32.mxu0 0.0
        %6137 = vmatmul.mubr.f32.gmra.mxu0 %v6019
        %v6138 = vpop.f32.mrf.mxu0
        %v6139 = vadd.f32 0.0, %v6138
        %v6140 = vpop.f32.mrf.mxu0
        %6141 = vdwg.mxu0
        %v6142 = vadd.f32 %v6004, %v6104
        %v6143 = vadd.f32 %v6005, %v6109
        %v6144 = vadd.f32 %v6006, %v6114
        %v6145 = vadd.f32 %v6007, %v6119
        %v6146 = vadd.f32 %v6008, %v6124
        %v6147 = vadd.f32 %v6009, %v6129
        %v6148 = vadd.f32 %v6010, %v6134
        %v6149 = vadd.f32 %v6011, %v6139
        %v6150 = vld [vmem:[%s5873 + $0x2] sm:$0xff]
        %v6151 = vld [vmem:[%s5873 + $0x12] sm:$0xff]
        %v6152 = vld [vmem:[%s5873 + $0x22] sm:$0xff]
        %v6153 = vld [vmem:[%s5873 + $0x32] sm:$0xff]
        %v6154 = vld [vmem:[%s5873 + $0x42] sm:$0xff]
        %v6155 = vld [vmem:[%s5873 + $0x52] sm:$0xff]
        %v6156 = vld [vmem:[%s5873 + $0x62] sm:$0xff]
        %v6157 = vld [vmem:[%s5873 + $0x72] sm:$0xff]
        %s6158 = scalar_lea.vmem [#allocation7], 2176
        %v6159 = vld [vmem:[%s6158] sm:$0xff]
        %v6160 = vld [vmem:[%s6158 + $0x8] sm:$0xff]
        %v6161 = vld [vmem:[%s6158 + $0x10] sm:$0xff]
        %v6162 = vld [vmem:[%s6158 + $0x18] sm:$0xff]
        %v6163 = vld [vmem:[%s6158 + $0x20] sm:$0xff]
        %v6164 = vld [vmem:[%s6158 + $0x28] sm:$0xff]
        %v6165 = vld [vmem:[%s6158 + $0x30] sm:$0xff]
        %v6166 = vld [vmem:[%s6158 + $0x38] sm:$0xff]
        %v6167 = vld [vmem:[%s6158 + $0x40] sm:$0xff]
        %v6168 = vld [vmem:[%s6158 + $0x48] sm:$0xff]
        %v6169 = vld [vmem:[%s6158 + $0x50] sm:$0xff]
        %v6170 = vld [vmem:[%s6158 + $0x58] sm:$0xff]
        %v6171 = vld [vmem:[%s6158 + $0x60] sm:$0xff]
        %v6172 = vld [vmem:[%s6158 + $0x68] sm:$0xff]
        %v6173 = vld [vmem:[%s6158 + $0x70] sm:$0xff]
        %v6174 = vld [vmem:[%s6158 + $0x78] sm:$0xff]
        %6175 = vmatprep.subr.mxu0 0.0
        %6176 = vmatpush1.msra.mxu0 %v6174
        %6177 = vmatprep.subr.mxu0 0.0
        %6178 = vmatpush1.msra.mxu0 %v6173
        %6179 = vmatprep.subr.mxu0 0.0
        %6180 = vmatpush1.msra.mxu0 %v6172
        %6181 = vmatprep.subr.mxu0 0.0
        %6182 = vmatpush1.msra.mxu0 %v6171
        %6183 = vmatprep.subr.mxu0 0.0
        %6184 = vmatpush1.msra.mxu0 %v6170
        %6185 = vmatprep.subr.mxu0 0.0
        %6186 = vmatpush1.msra.mxu0 %v6169
        %6187 = vmatprep.subr.mxu0 0.0
        %6188 = vmatpush1.msra.mxu0 %v6168
        %6189 = vmatprep.subr.mxu0 0.0
        %6190 = vmatpush1.msra.mxu0 %v6167
        %6191 = vmatprep.subr.mxu0 0.0
        %6192 = vmatpush1.msra.mxu0 %v6166
        %6193 = vmatprep.subr.mxu0 0.0
        %6194 = vmatpush1.msra.mxu0 %v6165
        %6195 = vmatprep.subr.mxu0 0.0
        %6196 = vmatpush1.msra.mxu0 %v6164
        %6197 = vmatprep.subr.mxu0 0.0
        %6198 = vmatpush1.msra.mxu0 %v6163
        %6199 = vmatprep.subr.mxu0 0.0
        %6200 = vmatpush1.msra.mxu0 %v6162
        %6201 = vmatprep.subr.mxu0 0.0
        %6202 = vmatpush1.msra.mxu0 %v6161
        %6203 = vmatprep.subr.mxu0 0.0
        %6204 = vmatpush1.msra.mxu0 %v6160
        %6205 = vmatprep.subr.mxu0 0.0
        %6206 = vmatpush1.msra.mxu0 %v6159
        %6207 = vmatprep.subr.mxu0 0.0
        %6208 = vmatpush2.msra.mxu0 0.0
        %6209 = vmatprep.subr.mxu0 0.0
        %6210 = vmatpush2.msra.mxu0 0.0
        %6211 = vmatprep.subr.mxu0 0.0
        %6212 = vmatpush2.msra.mxu0 0.0
        %6213 = vmatprep.subr.mxu0 0.0
        %6214 = vmatpush2.msra.mxu0 0.0
        %6215 = vmatprep.subr.mxu0 0.0
        %6216 = vmatpush2.msra.mxu0 0.0
        %6217 = vmatprep.subr.mxu0 0.0
        %6218 = vmatpush2.msra.mxu0 0.0
        %6219 = vmatprep.subr.mxu0 0.0
        %6220 = vmatpush2.msra.mxu0 0.0
        %6221 = vmatprep.subr.mxu0 0.0
        %6222 = vmatpush2.msra.mxu0 0.0
        %6223 = vmatprep.subr.mxu0 0.0
        %6224 = vmatpush2.msra.mxu0 0.0
        %6225 = vmatprep.subr.mxu0 0.0
        %6226 = vmatpush2.msra.mxu0 0.0
        %6227 = vmatprep.subr.mxu0 0.0
        %6228 = vmatpush2.msra.mxu0 0.0
        %6229 = vmatprep.subr.mxu0 0.0
        %6230 = vmatpush2.msra.mxu0 0.0
        %6231 = vmatprep.subr.mxu0 0.0
        %6232 = vmatpush2.msra.mxu0 0.0
        %6233 = vmatprep.subr.mxu0 0.0
        %6234 = vmatpush2.msra.mxu0 0.0
        %6235 = vmatprep.subr.mxu0 0.0
        %6236 = vmatpush2.msra.mxu0 0.0
        %6237 = vmatprep.subr.mxu0 0.0
        %6238 = vmatpush2.msra.mxu0 0.0
        %6239 = vmatprep.mubr.f32.mxu0 0.0
        %6240 = vmatmul.mubr.f32.gmra.mxu0 %v6150
        %v6241 = vpop.f32.mrf.mxu0
        %v6242 = vadd.f32 0.0, %v6241
        %v6243 = vpop.f32.mrf.mxu0
        %6244 = vmatprep.mubr.f32.mxu0 0.0
        %6245 = vmatmul.mubr.f32.gmra.mxu0 %v6151
        %v6246 = vpop.f32.mrf.mxu0
        %v6247 = vadd.f32 0.0, %v6246
        %v6248 = vpop.f32.mrf.mxu0
        %6249 = vmatprep.mubr.f32.mxu0 0.0
        %6250 = vmatmul.mubr.f32.gmra.mxu0 %v6152
        %v6251 = vpop.f32.mrf.mxu0
        %v6252 = vadd.f32 0.0, %v6251
        %v6253 = vpop.f32.mrf.mxu0
        %6254 = vmatprep.mubr.f32.mxu0 0.0
        %6255 = vmatmul.mubr.f32.gmra.mxu0 %v6153
        %v6256 = vpop.f32.mrf.mxu0
        %v6257 = vadd.f32 0.0, %v6256
        %v6258 = vpop.f32.mrf.mxu0
        %6259 = vmatprep.mubr.f32.mxu0 0.0
        %6260 = vmatmul.mubr.f32.gmra.mxu0 %v6154
        %v6261 = vpop.f32.mrf.mxu0
        %v6262 = vadd.f32 0.0, %v6261
        %v6263 = vpop.f32.mrf.mxu0
        %6264 = vmatprep.mubr.f32.mxu0 0.0
        %6265 = vmatmul.mubr.f32.gmra.mxu0 %v6155
        %v6266 = vpop.f32.mrf.mxu0
        %v6267 = vadd.f32 0.0, %v6266
        %v6268 = vpop.f32.mrf.mxu0
        %6269 = vmatprep.mubr.f32.mxu0 0.0
        %6270 = vmatmul.mubr.f32.gmra.mxu0 %v6156
        %v6271 = vpop.f32.mrf.mxu0
        %v6272 = vadd.f32 0.0, %v6271
        %v6273 = vpop.f32.mrf.mxu0
        %6274 = vmatprep.mubr.f32.mxu0 0.0
        %6275 = vmatmul.mubr.f32.gmra.mxu0 %v6157
        %v6276 = vpop.f32.mrf.mxu0
        %v6277 = vadd.f32 0.0, %v6276
        %v6278 = vpop.f32.mrf.mxu0
        %6279 = vdwg.mxu0
        %v6280 = vadd.f32 %v6142, %v6242
        %v6281 = vadd.f32 %v6143, %v6247
        %v6282 = vadd.f32 %v6144, %v6252
        %v6283 = vadd.f32 %v6145, %v6257
        %v6284 = vadd.f32 %v6146, %v6262
        %v6285 = vadd.f32 %v6147, %v6267
        %v6286 = vadd.f32 %v6148, %v6272
        %v6287 = vadd.f32 %v6149, %v6277
        %v6288 = vld [vmem:[%s5873 + $0x3] sm:$0xff]
        %v6289 = vld [vmem:[%s5873 + $0x13] sm:$0xff]
        %v6290 = vld [vmem:[%s5873 + $0x23] sm:$0xff]
        %v6291 = vld [vmem:[%s5873 + $0x33] sm:$0xff]
        %v6292 = vld [vmem:[%s5873 + $0x43] sm:$0xff]
        %v6293 = vld [vmem:[%s5873 + $0x53] sm:$0xff]
        %v6294 = vld [vmem:[%s5873 + $0x63] sm:$0xff]
        %v6295 = vld [vmem:[%s5873 + $0x73] sm:$0xff]
        %s6296 = scalar_lea.vmem [#allocation7], 2304
        %v6297 = vld [vmem:[%s6296] sm:$0xff]
        %v6298 = vld [vmem:[%s6296 + $0x8] sm:$0xff]
        %v6299 = vld [vmem:[%s6296 + $0x10] sm:$0xff]
        %v6300 = vld [vmem:[%s6296 + $0x18] sm:$0xff]
        %v6301 = vld [vmem:[%s6296 + $0x20] sm:$0xff]
        %v6302 = vld [vmem:[%s6296 + $0x28] sm:$0xff]
        %v6303 = vld [vmem:[%s6296 + $0x30] sm:$0xff]
        %v6304 = vld [vmem:[%s6296 + $0x38] sm:$0xff]
        %v6305 = vld [vmem:[%s6296 + $0x40] sm:$0xff]
        %v6306 = vld [vmem:[%s6296 + $0x48] sm:$0xff]
        %v6307 = vld [vmem:[%s6296 + $0x50] sm:$0xff]
        %v6308 = vld [vmem:[%s6296 + $0x58] sm:$0xff]
        %v6309 = vld [vmem:[%s6296 + $0x60] sm:$0xff]
        %v6310 = vld [vmem:[%s6296 + $0x68] sm:$0xff]
        %v6311 = vld [vmem:[%s6296 + $0x70] sm:$0xff]
        %v6312 = vld [vmem:[%s6296 + $0x78] sm:$0xff]
        %6313 = vmatprep.subr.mxu0 0.0
        %6314 = vmatpush1.msra.mxu0 %v6312
        %6315 = vmatprep.subr.mxu0 0.0
        %6316 = vmatpush1.msra.mxu0 %v6311
        %6317 = vmatprep.subr.mxu0 0.0
        %6318 = vmatpush1.msra.mxu0 %v6310
        %6319 = vmatprep.subr.mxu0 0.0
        %6320 = vmatpush1.msra.mxu0 %v6309
        %6321 = vmatprep.subr.mxu0 0.0
        %6322 = vmatpush1.msra.mxu0 %v6308
        %6323 = vmatprep.subr.mxu0 0.0
        %6324 = vmatpush1.msra.mxu0 %v6307
        %6325 = vmatprep.subr.mxu0 0.0
        %6326 = vmatpush1.msra.mxu0 %v6306
        %6327 = vmatprep.subr.mxu0 0.0
        %6328 = vmatpush1.msra.mxu0 %v6305
        %6329 = vmatprep.subr.mxu0 0.0
        %6330 = vmatpush1.msra.mxu0 %v6304
        %6331 = vmatprep.subr.mxu0 0.0
        %6332 = vmatpush1.msra.mxu0 %v6303
        %6333 = vmatprep.subr.mxu0 0.0
        %6334 = vmatpush1.msra.mxu0 %v6302
        %6335 = vmatprep.subr.mxu0 0.0
        %6336 = vmatpush1.msra.mxu0 %v6301
        %6337 = vmatprep.subr.mxu0 0.0
        %6338 = vmatpush1.msra.mxu0 %v6300
        %6339 = vmatprep.subr.mxu0 0.0
        %6340 = vmatpush1.msra.mxu0 %v6299
        %6341 = vmatprep.subr.mxu0 0.0
        %6342 = vmatpush1.msra.mxu0 %v6298
        %6343 = vmatprep.subr.mxu0 0.0
        %6344 = vmatpush1.msra.mxu0 %v6297
        %6345 = vmatprep.subr.mxu0 0.0
        %6346 = vmatpush2.msra.mxu0 0.0
        %6347 = vmatprep.subr.mxu0 0.0
        %6348 = vmatpush2.msra.mxu0 0.0
        %6349 = vmatprep.subr.mxu0 0.0
        %6350 = vmatpush2.msra.mxu0 0.0
        %6351 = vmatprep.subr.mxu0 0.0
        %6352 = vmatpush2.msra.mxu0 0.0
        %6353 = vmatprep.subr.mxu0 0.0
        %6354 = vmatpush2.msra.mxu0 0.0
        %6355 = vmatprep.subr.mxu0 0.0
        %6356 = vmatpush2.msra.mxu0 0.0
        %6357 = vmatprep.subr.mxu0 0.0
        %6358 = vmatpush2.msra.mxu0 0.0
        %6359 = vmatprep.subr.mxu0 0.0
        %6360 = vmatpush2.msra.mxu0 0.0
        %6361 = vmatprep.subr.mxu0 0.0
        %6362 = vmatpush2.msra.mxu0 0.0
        %6363 = vmatprep.subr.mxu0 0.0
        %6364 = vmatpush2.msra.mxu0 0.0
        %6365 = vmatprep.subr.mxu0 0.0
        %6366 = vmatpush2.msra.mxu0 0.0
        %6367 = vmatprep.subr.mxu0 0.0
        %6368 = vmatpush2.msra.mxu0 0.0
        %6369 = vmatprep.subr.mxu0 0.0
        %6370 = vmatpush2.msra.mxu0 0.0
        %6371 = vmatprep.subr.mxu0 0.0
        %6372 = vmatpush2.msra.mxu0 0.0
        %6373 = vmatprep.subr.mxu0 0.0
        %6374 = vmatpush2.msra.mxu0 0.0
        %6375 = vmatprep.subr.mxu0 0.0
        %6376 = vmatpush2.msra.mxu0 0.0
        %6377 = vmatprep.mubr.f32.mxu0 0.0
        %6378 = vmatmul.mubr.f32.gmra.mxu0 %v6288
        %v6379 = vpop.f32.mrf.mxu0
        %v6380 = vadd.f32 0.0, %v6379
        %v6381 = vpop.f32.mrf.mxu0
        %6382 = vmatprep.mubr.f32.mxu0 0.0
        %6383 = vmatmul.mubr.f32.gmra.mxu0 %v6289
        %v6384 = vpop.f32.mrf.mxu0
        %v6385 = vadd.f32 0.0, %v6384
        %v6386 = vpop.f32.mrf.mxu0
        %6387 = vmatprep.mubr.f32.mxu0 0.0
        %6388 = vmatmul.mubr.f32.gmra.mxu0 %v6290
        %v6389 = vpop.f32.mrf.mxu0
        %v6390 = vadd.f32 0.0, %v6389
        %v6391 = vpop.f32.mrf.mxu0
        %6392 = vmatprep.mubr.f32.mxu0 0.0
        %6393 = vmatmul.mubr.f32.gmra.mxu0 %v6291
        %v6394 = vpop.f32.mrf.mxu0
        %v6395 = vadd.f32 0.0, %v6394
        %v6396 = vpop.f32.mrf.mxu0
        %6397 = vmatprep.mubr.f32.mxu0 0.0
        %6398 = vmatmul.mubr.f32.gmra.mxu0 %v6292
        %v6399 = vpop.f32.mrf.mxu0
        %v6400 = vadd.f32 0.0, %v6399
        %v6401 = vpop.f32.mrf.mxu0
        %6402 = vmatprep.mubr.f32.mxu0 0.0
        %6403 = vmatmul.mubr.f32.gmra.mxu0 %v6293
        %v6404 = vpop.f32.mrf.mxu0
        %v6405 = vadd.f32 0.0, %v6404
        %v6406 = vpop.f32.mrf.mxu0
        %6407 = vmatprep.mubr.f32.mxu0 0.0
        %6408 = vmatmul.mubr.f32.gmra.mxu0 %v6294
        %v6409 = vpop.f32.mrf.mxu0
        %v6410 = vadd.f32 0.0, %v6409
        %v6411 = vpop.f32.mrf.mxu0
        %6412 = vmatprep.mubr.f32.mxu0 0.0
        %6413 = vmatmul.mubr.f32.gmra.mxu0 %v6295
        %v6414 = vpop.f32.mrf.mxu0
        %v6415 = vadd.f32 0.0, %v6414
        %v6416 = vpop.f32.mrf.mxu0
        %6417 = vdwg.mxu0
        %v6418 = vadd.f32 %v6280, %v6380
        %v6419 = vadd.f32 %v6281, %v6385
        %v6420 = vadd.f32 %v6282, %v6390
        %v6421 = vadd.f32 %v6283, %v6395
        %v6422 = vadd.f32 %v6284, %v6400
        %v6423 = vadd.f32 %v6285, %v6405
        %v6424 = vadd.f32 %v6286, %v6410
        %v6425 = vadd.f32 %v6287, %v6415
        %v6426 = vld [vmem:[%s5873 + $0x4] sm:$0xff]
        %v6427 = vld [vmem:[%s5873 + $0x14] sm:$0xff]
        %v6428 = vld [vmem:[%s5873 + $0x24] sm:$0xff]
        %v6429 = vld [vmem:[%s5873 + $0x34] sm:$0xff]
        %v6430 = vld [vmem:[%s5873 + $0x44] sm:$0xff]
        %v6431 = vld [vmem:[%s5873 + $0x54] sm:$0xff]
        %v6432 = vld [vmem:[%s5873 + $0x64] sm:$0xff]
        %v6433 = vld [vmem:[%s5873 + $0x74] sm:$0xff]
        %s6434 = scalar_lea.vmem [#allocation7], 2432
        %v6435 = vld [vmem:[%s6434] sm:$0xff]
        %v6436 = vld [vmem:[%s6434 + $0x8] sm:$0xff]
        %v6437 = vld [vmem:[%s6434 + $0x10] sm:$0xff]
        %v6438 = vld [vmem:[%s6434 + $0x18] sm:$0xff]
        %v6439 = vld [vmem:[%s6434 + $0x20] sm:$0xff]
        %v6440 = vld [vmem:[%s6434 + $0x28] sm:$0xff]
        %v6441 = vld [vmem:[%s6434 + $0x30] sm:$0xff]
        %v6442 = vld [vmem:[%s6434 + $0x38] sm:$0xff]
        %v6443 = vld [vmem:[%s6434 + $0x40] sm:$0xff]
        %v6444 = vld [vmem:[%s6434 + $0x48] sm:$0xff]
        %v6445 = vld [vmem:[%s6434 + $0x50] sm:$0xff]
        %v6446 = vld [vmem:[%s6434 + $0x58] sm:$0xff]
        %v6447 = vld [vmem:[%s6434 + $0x60] sm:$0xff]
        %v6448 = vld [vmem:[%s6434 + $0x68] sm:$0xff]
        %v6449 = vld [vmem:[%s6434 + $0x70] sm:$0xff]
        %v6450 = vld [vmem:[%s6434 + $0x78] sm:$0xff]
        %6451 = vmatprep.subr.mxu0 0.0
        %6452 = vmatpush1.msra.mxu0 %v6450
        %6453 = vmatprep.subr.mxu0 0.0
        %6454 = vmatpush1.msra.mxu0 %v6449
        %6455 = vmatprep.subr.mxu0 0.0
        %6456 = vmatpush1.msra.mxu0 %v6448
        %6457 = vmatprep.subr.mxu0 0.0
        %6458 = vmatpush1.msra.mxu0 %v6447
        %6459 = vmatprep.subr.mxu0 0.0
        %6460 = vmatpush1.msra.mxu0 %v6446
        %6461 = vmatprep.subr.mxu0 0.0
        %6462 = vmatpush1.msra.mxu0 %v6445
        %6463 = vmatprep.subr.mxu0 0.0
        %6464 = vmatpush1.msra.mxu0 %v6444
        %6465 = vmatprep.subr.mxu0 0.0
        %6466 = vmatpush1.msra.mxu0 %v6443
        %6467 = vmatprep.subr.mxu0 0.0
        %6468 = vmatpush1.msra.mxu0 %v6442
        %6469 = vmatprep.subr.mxu0 0.0
        %6470 = vmatpush1.msra.mxu0 %v6441
        %6471 = vmatprep.subr.mxu0 0.0
        %6472 = vmatpush1.msra.mxu0 %v6440
        %6473 = vmatprep.subr.mxu0 0.0
        %6474 = vmatpush1.msra.mxu0 %v6439
        %6475 = vmatprep.subr.mxu0 0.0
        %6476 = vmatpush1.msra.mxu0 %v6438
        %6477 = vmatprep.subr.mxu0 0.0
        %6478 = vmatpush1.msra.mxu0 %v6437
        %6479 = vmatprep.subr.mxu0 0.0
        %6480 = vmatpush1.msra.mxu0 %v6436
        %6481 = vmatprep.subr.mxu0 0.0
        %6482 = vmatpush1.msra.mxu0 %v6435
        %6483 = vmatprep.subr.mxu0 0.0
        %6484 = vmatpush2.msra.mxu0 0.0
        %6485 = vmatprep.subr.mxu0 0.0
        %6486 = vmatpush2.msra.mxu0 0.0
        %6487 = vmatprep.subr.mxu0 0.0
        %6488 = vmatpush2.msra.mxu0 0.0
        %6489 = vmatprep.subr.mxu0 0.0
        %6490 = vmatpush2.msra.mxu0 0.0
        %6491 = vmatprep.subr.mxu0 0.0
        %6492 = vmatpush2.msra.mxu0 0.0
        %6493 = vmatprep.subr.mxu0 0.0
        %6494 = vmatpush2.msra.mxu0 0.0
        %6495 = vmatprep.subr.mxu0 0.0
        %6496 = vmatpush2.msra.mxu0 0.0
        %6497 = vmatprep.subr.mxu0 0.0
        %6498 = vmatpush2.msra.mxu0 0.0
        %6499 = vmatprep.subr.mxu0 0.0
        %6500 = vmatpush2.msra.mxu0 0.0
        %6501 = vmatprep.subr.mxu0 0.0
        %6502 = vmatpush2.msra.mxu0 0.0
        %6503 = vmatprep.subr.mxu0 0.0
        %6504 = vmatpush2.msra.mxu0 0.0
        %6505 = vmatprep.subr.mxu0 0.0
        %6506 = vmatpush2.msra.mxu0 0.0
        %6507 = vmatprep.subr.mxu0 0.0
        %6508 = vmatpush2.msra.mxu0 0.0
        %6509 = vmatprep.subr.mxu0 0.0
        %6510 = vmatpush2.msra.mxu0 0.0
        %6511 = vmatprep.subr.mxu0 0.0
        %6512 = vmatpush2.msra.mxu0 0.0
        %6513 = vmatprep.subr.mxu0 0.0
        %6514 = vmatpush2.msra.mxu0 0.0
        %6515 = vmatprep.mubr.f32.mxu0 0.0
        %6516 = vmatmul.mubr.f32.gmra.mxu0 %v6426
        %v6517 = vpop.f32.mrf.mxu0
        %v6518 = vadd.f32 0.0, %v6517
        %v6519 = vpop.f32.mrf.mxu0
        %6520 = vmatprep.mubr.f32.mxu0 0.0
        %6521 = vmatmul.mubr.f32.gmra.mxu0 %v6427
        %v6522 = vpop.f32.mrf.mxu0
        %v6523 = vadd.f32 0.0, %v6522
        %v6524 = vpop.f32.mrf.mxu0
        %6525 = vmatprep.mubr.f32.mxu0 0.0
        %6526 = vmatmul.mubr.f32.gmra.mxu0 %v6428
        %v6527 = vpop.f32.mrf.mxu0
        %v6528 = vadd.f32 0.0, %v6527
        %v6529 = vpop.f32.mrf.mxu0
        %6530 = vmatprep.mubr.f32.mxu0 0.0
        %6531 = vmatmul.mubr.f32.gmra.mxu0 %v6429
        %v6532 = vpop.f32.mrf.mxu0
        %v6533 = vadd.f32 0.0, %v6532
        %v6534 = vpop.f32.mrf.mxu0
        %6535 = vmatprep.mubr.f32.mxu0 0.0
        %6536 = vmatmul.mubr.f32.gmra.mxu0 %v6430
        %v6537 = vpop.f32.mrf.mxu0
        %v6538 = vadd.f32 0.0, %v6537
        %v6539 = vpop.f32.mrf.mxu0
        %6540 = vmatprep.mubr.f32.mxu0 0.0
        %6541 = vmatmul.mubr.f32.gmra.mxu0 %v6431
        %v6542 = vpop.f32.mrf.mxu0
        %v6543 = vadd.f32 0.0, %v6542
        %v6544 = vpop.f32.mrf.mxu0
        %6545 = vmatprep.mubr.f32.mxu0 0.0
        %6546 = vmatmul.mubr.f32.gmra.mxu0 %v6432
        %v6547 = vpop.f32.mrf.mxu0
        %v6548 = vadd.f32 0.0, %v6547
        %v6549 = vpop.f32.mrf.mxu0
        %6550 = vmatprep.mubr.f32.mxu0 0.0
        %6551 = vmatmul.mubr.f32.gmra.mxu0 %v6433
        %v6552 = vpop.f32.mrf.mxu0
        %v6553 = vadd.f32 0.0, %v6552
        %v6554 = vpop.f32.mrf.mxu0
        %6555 = vdwg.mxu0
        %v6556 = vadd.f32 %v6418, %v6518
        %v6557 = vadd.f32 %v6419, %v6523
        %v6558 = vadd.f32 %v6420, %v6528
        %v6559 = vadd.f32 %v6421, %v6533
        %v6560 = vadd.f32 %v6422, %v6538
        %v6561 = vadd.f32 %v6423, %v6543
        %v6562 = vadd.f32 %v6424, %v6548
        %v6563 = vadd.f32 %v6425, %v6553
        %s6564 = scalar_lea.vmem [#allocation2], 64
        %v6565 = vld [vmem:[%s6564] sm:$0xff]
        %v6566 = vld [vmem:[%s6564 + $0x10] sm:$0xff]
        %v6567 = vld [vmem:[%s6564 + $0x20] sm:$0xff]
        %v6568 = vld [vmem:[%s6564 + $0x30] sm:$0xff]
        %v6569 = vld [vmem:[%s6564 + $0x40] sm:$0xff]
        %v6570 = vld [vmem:[%s6564 + $0x50] sm:$0xff]
        %v6571 = vld [vmem:[%s6564 + $0x60] sm:$0xff]
        %v6572 = vld [vmem:[%s6564 + $0x70] sm:$0xff]
        %s6573 = scalar_lea.vmem [#allocation7], 2560
        %v6574 = vld [vmem:[%s6573] sm:$0xff]
        %v6575 = vld [vmem:[%s6573 + $0x8] sm:$0xff]
        %v6576 = vld [vmem:[%s6573 + $0x10] sm:$0xff]
        %v6577 = vld [vmem:[%s6573 + $0x18] sm:$0xff]
        %v6578 = vld [vmem:[%s6573 + $0x20] sm:$0xff]
        %v6579 = vld [vmem:[%s6573 + $0x28] sm:$0xff]
        %v6580 = vld [vmem:[%s6573 + $0x30] sm:$0xff]
        %v6581 = vld [vmem:[%s6573 + $0x38] sm:$0xff]
        %v6582 = vld [vmem:[%s6573 + $0x40] sm:$0xff]
        %v6583 = vld [vmem:[%s6573 + $0x48] sm:$0xff]
        %v6584 = vld [vmem:[%s6573 + $0x50] sm:$0xff]
        %v6585 = vld [vmem:[%s6573 + $0x58] sm:$0xff]
        %v6586 = vld [vmem:[%s6573 + $0x60] sm:$0xff]
        %v6587 = vld [vmem:[%s6573 + $0x68] sm:$0xff]
        %v6588 = vld [vmem:[%s6573 + $0x70] sm:$0xff]
        %v6589 = vld [vmem:[%s6573 + $0x78] sm:$0xff]
        %6590 = vmatprep.subr.mxu0 0.0
        %6591 = vmatpush1.msra.mxu0 %v6589
        %6592 = vmatprep.subr.mxu0 0.0
        %6593 = vmatpush1.msra.mxu0 %v6588
        %6594 = vmatprep.subr.mxu0 0.0
        %6595 = vmatpush1.msra.mxu0 %v6587
        %6596 = vmatprep.subr.mxu0 0.0
        %6597 = vmatpush1.msra.mxu0 %v6586
        %6598 = vmatprep.subr.mxu0 0.0
        %6599 = vmatpush1.msra.mxu0 %v6585
        %6600 = vmatprep.subr.mxu0 0.0
        %6601 = vmatpush1.msra.mxu0 %v6584
        %6602 = vmatprep.subr.mxu0 0.0
        %6603 = vmatpush1.msra.mxu0 %v6583
        %6604 = vmatprep.subr.mxu0 0.0
        %6605 = vmatpush1.msra.mxu0 %v6582
        %6606 = vmatprep.subr.mxu0 0.0
        %6607 = vmatpush1.msra.mxu0 %v6581
        %6608 = vmatprep.subr.mxu0 0.0
        %6609 = vmatpush1.msra.mxu0 %v6580
        %6610 = vmatprep.subr.mxu0 0.0
        %6611 = vmatpush1.msra.mxu0 %v6579
        %6612 = vmatprep.subr.mxu0 0.0
        %6613 = vmatpush1.msra.mxu0 %v6578
        %6614 = vmatprep.subr.mxu0 0.0
        %6615 = vmatpush1.msra.mxu0 %v6577
        %6616 = vmatprep.subr.mxu0 0.0
        %6617 = vmatpush1.msra.mxu0 %v6576
        %6618 = vmatprep.subr.mxu0 0.0
        %6619 = vmatpush1.msra.mxu0 %v6575
        %6620 = vmatprep.subr.mxu0 0.0
        %6621 = vmatpush1.msra.mxu0 %v6574
        %6622 = vmatprep.subr.mxu0 0.0
        %6623 = vmatpush2.msra.mxu0 0.0
        %6624 = vmatprep.subr.mxu0 0.0
        %6625 = vmatpush2.msra.mxu0 0.0
        %6626 = vmatprep.subr.mxu0 0.0
        %6627 = vmatpush2.msra.mxu0 0.0
        %6628 = vmatprep.subr.mxu0 0.0
        %6629 = vmatpush2.msra.mxu0 0.0
        %6630 = vmatprep.subr.mxu0 0.0
        %6631 = vmatpush2.msra.mxu0 0.0
        %6632 = vmatprep.subr.mxu0 0.0
        %6633 = vmatpush2.msra.mxu0 0.0
        %6634 = vmatprep.subr.mxu0 0.0
        %6635 = vmatpush2.msra.mxu0 0.0
        %6636 = vmatprep.subr.mxu0 0.0
        %6637 = vmatpush2.msra.mxu0 0.0
        %6638 = vmatprep.subr.mxu0 0.0
        %6639 = vmatpush2.msra.mxu0 0.0
        %6640 = vmatprep.subr.mxu0 0.0
        %6641 = vmatpush2.msra.mxu0 0.0
        %6642 = vmatprep.subr.mxu0 0.0
        %6643 = vmatpush2.msra.mxu0 0.0
        %6644 = vmatprep.subr.mxu0 0.0
        %6645 = vmatpush2.msra.mxu0 0.0
        %6646 = vmatprep.subr.mxu0 0.0
        %6647 = vmatpush2.msra.mxu0 0.0
        %6648 = vmatprep.subr.mxu0 0.0
        %6649 = vmatpush2.msra.mxu0 0.0
        %6650 = vmatprep.subr.mxu0 0.0
        %6651 = vmatpush2.msra.mxu0 0.0
        %6652 = vmatprep.subr.mxu0 0.0
        %6653 = vmatpush2.msra.mxu0 0.0
        %6654 = vmatprep.mubr.f32.mxu0 0.0
        %6655 = vmatmul.mubr.f32.gmra.mxu0 %v6565
        %v6656 = vpop.f32.mrf.mxu0
        %v6657 = vadd.f32 0.0, %v6656
        %v6658 = vpop.f32.mrf.mxu0
        %6659 = vmatprep.mubr.f32.mxu0 0.0
        %6660 = vmatmul.mubr.f32.gmra.mxu0 %v6566
        %v6661 = vpop.f32.mrf.mxu0
        %v6662 = vadd.f32 0.0, %v6661
        %v6663 = vpop.f32.mrf.mxu0
        %6664 = vmatprep.mubr.f32.mxu0 0.0
        %6665 = vmatmul.mubr.f32.gmra.mxu0 %v6567
        %v6666 = vpop.f32.mrf.mxu0
        %v6667 = vadd.f32 0.0, %v6666
        %v6668 = vpop.f32.mrf.mxu0
        %6669 = vmatprep.mubr.f32.mxu0 0.0
        %6670 = vmatmul.mubr.f32.gmra.mxu0 %v6568
        %v6671 = vpop.f32.mrf.mxu0
        %v6672 = vadd.f32 0.0, %v6671
        %v6673 = vpop.f32.mrf.mxu0
        %6674 = vmatprep.mubr.f32.mxu0 0.0
        %6675 = vmatmul.mubr.f32.gmra.mxu0 %v6569
        %v6676 = vpop.f32.mrf.mxu0
        %v6677 = vadd.f32 0.0, %v6676
        %v6678 = vpop.f32.mrf.mxu0
        %6679 = vmatprep.mubr.f32.mxu0 0.0
        %6680 = vmatmul.mubr.f32.gmra.mxu0 %v6570
        %v6681 = vpop.f32.mrf.mxu0
        %v6682 = vadd.f32 0.0, %v6681
        %v6683 = vpop.f32.mrf.mxu0
        %6684 = vmatprep.mubr.f32.mxu0 0.0
        %6685 = vmatmul.mubr.f32.gmra.mxu0 %v6571
        %v6686 = vpop.f32.mrf.mxu0
        %v6687 = vadd.f32 0.0, %v6686
        %v6688 = vpop.f32.mrf.mxu0
        %6689 = vmatprep.mubr.f32.mxu0 0.0
        %6690 = vmatmul.mubr.f32.gmra.mxu0 %v6572
        %v6691 = vpop.f32.mrf.mxu0
        %v6692 = vadd.f32 0.0, %v6691
        %v6693 = vpop.f32.mrf.mxu0
        %6694 = vdwg.mxu0
        %v6695 = vadd.f32 %v6556, %v6657
        %v6696 = vadd.f32 %v6557, %v6662
        %v6697 = vadd.f32 %v6558, %v6667
        %v6698 = vadd.f32 %v6559, %v6672
        %v6699 = vadd.f32 %v6560, %v6677
        %v6700 = vadd.f32 %v6561, %v6682
        %v6701 = vadd.f32 %v6562, %v6687
        %v6702 = vadd.f32 %v6563, %v6692
        %v6703 = vld [vmem:[%s6564 + $0x1] sm:$0xff]
        %v6704 = vld [vmem:[%s6564 + $0x11] sm:$0xff]
        %v6705 = vld [vmem:[%s6564 + $0x21] sm:$0xff]
        %v6706 = vld [vmem:[%s6564 + $0x31] sm:$0xff]
        %v6707 = vld [vmem:[%s6564 + $0x41] sm:$0xff]
        %v6708 = vld [vmem:[%s6564 + $0x51] sm:$0xff]
        %v6709 = vld [vmem:[%s6564 + $0x61] sm:$0xff]
        %v6710 = vld [vmem:[%s6564 + $0x71] sm:$0xff]
        %s6711 = scalar_lea.vmem [#allocation7], 2688
        %v6712 = vld [vmem:[%s6711] sm:$0xff]
        %v6713 = vld [vmem:[%s6711 + $0x8] sm:$0xff]
        %v6714 = vld [vmem:[%s6711 + $0x10] sm:$0xff]
        %v6715 = vld [vmem:[%s6711 + $0x18] sm:$0xff]
        %v6716 = vld [vmem:[%s6711 + $0x20] sm:$0xff]
        %v6717 = vld [vmem:[%s6711 + $0x28] sm:$0xff]
        %v6718 = vld [vmem:[%s6711 + $0x30] sm:$0xff]
        %v6719 = vld [vmem:[%s6711 + $0x38] sm:$0xff]
        %v6720 = vld [vmem:[%s6711 + $0x40] sm:$0xff]
        %v6721 = vld [vmem:[%s6711 + $0x48] sm:$0xff]
        %v6722 = vld [vmem:[%s6711 + $0x50] sm:$0xff]
        %v6723 = vld [vmem:[%s6711 + $0x58] sm:$0xff]
        %v6724 = vld [vmem:[%s6711 + $0x60] sm:$0xff]
        %v6725 = vld [vmem:[%s6711 + $0x68] sm:$0xff]
        %v6726 = vld [vmem:[%s6711 + $0x70] sm:$0xff]
        %v6727 = vld [vmem:[%s6711 + $0x78] sm:$0xff]
        %6728 = vmatprep.subr.mxu0 0.0
        %6729 = vmatpush1.msra.mxu0 %v6727
        %6730 = vmatprep.subr.mxu0 0.0
        %6731 = vmatpush1.msra.mxu0 %v6726
        %6732 = vmatprep.subr.mxu0 0.0
        %6733 = vmatpush1.msra.mxu0 %v6725
        %6734 = vmatprep.subr.mxu0 0.0
        %6735 = vmatpush1.msra.mxu0 %v6724
        %6736 = vmatprep.subr.mxu0 0.0
        %6737 = vmatpush1.msra.mxu0 %v6723
        %6738 = vmatprep.subr.mxu0 0.0
        %6739 = vmatpush1.msra.mxu0 %v6722
        %6740 = vmatprep.subr.mxu0 0.0
        %6741 = vmatpush1.msra.mxu0 %v6721
        %6742 = vmatprep.subr.mxu0 0.0
        %6743 = vmatpush1.msra.mxu0 %v6720
        %6744 = vmatprep.subr.mxu0 0.0
        %6745 = vmatpush1.msra.mxu0 %v6719
        %6746 = vmatprep.subr.mxu0 0.0
        %6747 = vmatpush1.msra.mxu0 %v6718
        %6748 = vmatprep.subr.mxu0 0.0
        %6749 = vmatpush1.msra.mxu0 %v6717
        %6750 = vmatprep.subr.mxu0 0.0
        %6751 = vmatpush1.msra.mxu0 %v6716
        %6752 = vmatprep.subr.mxu0 0.0
        %6753 = vmatpush1.msra.mxu0 %v6715
        %6754 = vmatprep.subr.mxu0 0.0
        %6755 = vmatpush1.msra.mxu0 %v6714
        %6756 = vmatprep.subr.mxu0 0.0
        %6757 = vmatpush1.msra.mxu0 %v6713
        %6758 = vmatprep.subr.mxu0 0.0
        %6759 = vmatpush1.msra.mxu0 %v6712
        %6760 = vmatprep.subr.mxu0 0.0
        %6761 = vmatpush2.msra.mxu0 0.0
        %6762 = vmatprep.subr.mxu0 0.0
        %6763 = vmatpush2.msra.mxu0 0.0
        %6764 = vmatprep.subr.mxu0 0.0
        %6765 = vmatpush2.msra.mxu0 0.0
        %6766 = vmatprep.subr.mxu0 0.0
        %6767 = vmatpush2.msra.mxu0 0.0
        %6768 = vmatprep.subr.mxu0 0.0
        %6769 = vmatpush2.msra.mxu0 0.0
        %6770 = vmatprep.subr.mxu0 0.0
        %6771 = vmatpush2.msra.mxu0 0.0
        %6772 = vmatprep.subr.mxu0 0.0
        %6773 = vmatpush2.msra.mxu0 0.0
        %6774 = vmatprep.subr.mxu0 0.0
        %6775 = vmatpush2.msra.mxu0 0.0
        %6776 = vmatprep.subr.mxu0 0.0
        %6777 = vmatpush2.msra.mxu0 0.0
        %6778 = vmatprep.subr.mxu0 0.0
        %6779 = vmatpush2.msra.mxu0 0.0
        %6780 = vmatprep.subr.mxu0 0.0
        %6781 = vmatpush2.msra.mxu0 0.0
        %6782 = vmatprep.subr.mxu0 0.0
        %6783 = vmatpush2.msra.mxu0 0.0
        %6784 = vmatprep.subr.mxu0 0.0
        %6785 = vmatpush2.msra.mxu0 0.0
        %6786 = vmatprep.subr.mxu0 0.0
        %6787 = vmatpush2.msra.mxu0 0.0
        %6788 = vmatprep.subr.mxu0 0.0
        %6789 = vmatpush2.msra.mxu0 0.0
        %6790 = vmatprep.subr.mxu0 0.0
        %6791 = vmatpush2.msra.mxu0 0.0
        %6792 = vmatprep.mubr.f32.mxu0 0.0
        %6793 = vmatmul.mubr.f32.gmra.mxu0 %v6703
        %v6794 = vpop.f32.mrf.mxu0
        %v6795 = vadd.f32 0.0, %v6794
        %v6796 = vpop.f32.mrf.mxu0
        %6797 = vmatprep.mubr.f32.mxu0 0.0
        %6798 = vmatmul.mubr.f32.gmra.mxu0 %v6704
        %v6799 = vpop.f32.mrf.mxu0
        %v6800 = vadd.f32 0.0, %v6799
        %v6801 = vpop.f32.mrf.mxu0
        %6802 = vmatprep.mubr.f32.mxu0 0.0
        %6803 = vmatmul.mubr.f32.gmra.mxu0 %v6705
        %v6804 = vpop.f32.mrf.mxu0
        %v6805 = vadd.f32 0.0, %v6804
        %v6806 = vpop.f32.mrf.mxu0
        %6807 = vmatprep.mubr.f32.mxu0 0.0
        %6808 = vmatmul.mubr.f32.gmra.mxu0 %v6706
        %v6809 = vpop.f32.mrf.mxu0
        %v6810 = vadd.f32 0.0, %v6809
        %v6811 = vpop.f32.mrf.mxu0
        %6812 = vmatprep.mubr.f32.mxu0 0.0
        %6813 = vmatmul.mubr.f32.gmra.mxu0 %v6707
        %v6814 = vpop.f32.mrf.mxu0
        %v6815 = vadd.f32 0.0, %v6814
        %v6816 = vpop.f32.mrf.mxu0
        %6817 = vmatprep.mubr.f32.mxu0 0.0
        %6818 = vmatmul.mubr.f32.gmra.mxu0 %v6708
        %v6819 = vpop.f32.mrf.mxu0
        %v6820 = vadd.f32 0.0, %v6819
        %v6821 = vpop.f32.mrf.mxu0
        %6822 = vmatprep.mubr.f32.mxu0 0.0
        %6823 = vmatmul.mubr.f32.gmra.mxu0 %v6709
        %v6824 = vpop.f32.mrf.mxu0
        %v6825 = vadd.f32 0.0, %v6824
        %v6826 = vpop.f32.mrf.mxu0
        %6827 = vmatprep.mubr.f32.mxu0 0.0
        %6828 = vmatmul.mubr.f32.gmra.mxu0 %v6710
        %v6829 = vpop.f32.mrf.mxu0
        %v6830 = vadd.f32 0.0, %v6829
        %v6831 = vpop.f32.mrf.mxu0
        %6832 = vdwg.mxu0
        %v6833 = vadd.f32 %v6695, %v6795
        %v6834 = vadd.f32 %v6696, %v6800
        %v6835 = vadd.f32 %v6697, %v6805
        %v6836 = vadd.f32 %v6698, %v6810
        %v6837 = vadd.f32 %v6699, %v6815
        %v6838 = vadd.f32 %v6700, %v6820
        %v6839 = vadd.f32 %v6701, %v6825
        %v6840 = vadd.f32 %v6702, %v6830
        %v6841 = vld [vmem:[%s6564 + $0x2] sm:$0xff]
        %v6842 = vld [vmem:[%s6564 + $0x12] sm:$0xff]
        %v6843 = vld [vmem:[%s6564 + $0x22] sm:$0xff]
        %v6844 = vld [vmem:[%s6564 + $0x32] sm:$0xff]
        %v6845 = vld [vmem:[%s6564 + $0x42] sm:$0xff]
        %v6846 = vld [vmem:[%s6564 + $0x52] sm:$0xff]
        %v6847 = vld [vmem:[%s6564 + $0x62] sm:$0xff]
        %v6848 = vld [vmem:[%s6564 + $0x72] sm:$0xff]
        %s6849 = scalar_lea.vmem [#allocation7], 2816
        %v6850 = vld [vmem:[%s6849] sm:$0xff]
        %v6851 = vld [vmem:[%s6849 + $0x8] sm:$0xff]
        %v6852 = vld [vmem:[%s6849 + $0x10] sm:$0xff]
        %v6853 = vld [vmem:[%s6849 + $0x18] sm:$0xff]
        %v6854 = vld [vmem:[%s6849 + $0x20] sm:$0xff]
        %v6855 = vld [vmem:[%s6849 + $0x28] sm:$0xff]
        %v6856 = vld [vmem:[%s6849 + $0x30] sm:$0xff]
        %v6857 = vld [vmem:[%s6849 + $0x38] sm:$0xff]
        %v6858 = vld [vmem:[%s6849 + $0x40] sm:$0xff]
        %v6859 = vld [vmem:[%s6849 + $0x48] sm:$0xff]
        %v6860 = vld [vmem:[%s6849 + $0x50] sm:$0xff]
        %v6861 = vld [vmem:[%s6849 + $0x58] sm:$0xff]
        %v6862 = vld [vmem:[%s6849 + $0x60] sm:$0xff]
        %v6863 = vld [vmem:[%s6849 + $0x68] sm:$0xff]
        %v6864 = vld [vmem:[%s6849 + $0x70] sm:$0xff]
        %v6865 = vld [vmem:[%s6849 + $0x78] sm:$0xff]
        %6866 = vmatprep.subr.mxu0 0.0
        %6867 = vmatpush1.msra.mxu0 %v6865
        %6868 = vmatprep.subr.mxu0 0.0
        %6869 = vmatpush1.msra.mxu0 %v6864
        %6870 = vmatprep.subr.mxu0 0.0
        %6871 = vmatpush1.msra.mxu0 %v6863
        %6872 = vmatprep.subr.mxu0 0.0
        %6873 = vmatpush1.msra.mxu0 %v6862
        %6874 = vmatprep.subr.mxu0 0.0
        %6875 = vmatpush1.msra.mxu0 %v6861
        %6876 = vmatprep.subr.mxu0 0.0
        %6877 = vmatpush1.msra.mxu0 %v6860
        %6878 = vmatprep.subr.mxu0 0.0
        %6879 = vmatpush1.msra.mxu0 %v6859
        %6880 = vmatprep.subr.mxu0 0.0
        %6881 = vmatpush1.msra.mxu0 %v6858
        %6882 = vmatprep.subr.mxu0 0.0
        %6883 = vmatpush1.msra.mxu0 %v6857
        %6884 = vmatprep.subr.mxu0 0.0
        %6885 = vmatpush1.msra.mxu0 %v6856
        %6886 = vmatprep.subr.mxu0 0.0
        %6887 = vmatpush1.msra.mxu0 %v6855
        %6888 = vmatprep.subr.mxu0 0.0
        %6889 = vmatpush1.msra.mxu0 %v6854
        %6890 = vmatprep.subr.mxu0 0.0
        %6891 = vmatpush1.msra.mxu0 %v6853
        %6892 = vmatprep.subr.mxu0 0.0
        %6893 = vmatpush1.msra.mxu0 %v6852
        %6894 = vmatprep.subr.mxu0 0.0
        %6895 = vmatpush1.msra.mxu0 %v6851
        %6896 = vmatprep.subr.mxu0 0.0
        %6897 = vmatpush1.msra.mxu0 %v6850
        %6898 = vmatprep.subr.mxu0 0.0
        %6899 = vmatpush2.msra.mxu0 0.0
        %6900 = vmatprep.subr.mxu0 0.0
        %6901 = vmatpush2.msra.mxu0 0.0
        %6902 = vmatprep.subr.mxu0 0.0
        %6903 = vmatpush2.msra.mxu0 0.0
        %6904 = vmatprep.subr.mxu0 0.0
        %6905 = vmatpush2.msra.mxu0 0.0
        %6906 = vmatprep.subr.mxu0 0.0
        %6907 = vmatpush2.msra.mxu0 0.0
        %6908 = vmatprep.subr.mxu0 0.0
        %6909 = vmatpush2.msra.mxu0 0.0
        %6910 = vmatprep.subr.mxu0 0.0
        %6911 = vmatpush2.msra.mxu0 0.0
        %6912 = vmatprep.subr.mxu0 0.0
        %6913 = vmatpush2.msra.mxu0 0.0
        %6914 = vmatprep.subr.mxu0 0.0
        %6915 = vmatpush2.msra.mxu0 0.0
        %6916 = vmatprep.subr.mxu0 0.0
        %6917 = vmatpush2.msra.mxu0 0.0
        %6918 = vmatprep.subr.mxu0 0.0
        %6919 = vmatpush2.msra.mxu0 0.0
        %6920 = vmatprep.subr.mxu0 0.0
        %6921 = vmatpush2.msra.mxu0 0.0
        %6922 = vmatprep.subr.mxu0 0.0
        %6923 = vmatpush2.msra.mxu0 0.0
        %6924 = vmatprep.subr.mxu0 0.0
        %6925 = vmatpush2.msra.mxu0 0.0
        %6926 = vmatprep.subr.mxu0 0.0
        %6927 = vmatpush2.msra.mxu0 0.0
        %6928 = vmatprep.subr.mxu0 0.0
        %6929 = vmatpush2.msra.mxu0 0.0
        %6930 = vmatprep.mubr.f32.mxu0 0.0
        %6931 = vmatmul.mubr.f32.gmra.mxu0 %v6841
        %v6932 = vpop.f32.mrf.mxu0
        %v6933 = vadd.f32 0.0, %v6932
        %v6934 = vpop.f32.mrf.mxu0
        %6935 = vmatprep.mubr.f32.mxu0 0.0
        %6936 = vmatmul.mubr.f32.gmra.mxu0 %v6842
        %v6937 = vpop.f32.mrf.mxu0
        %v6938 = vadd.f32 0.0, %v6937
        %v6939 = vpop.f32.mrf.mxu0
        %6940 = vmatprep.mubr.f32.mxu0 0.0
        %6941 = vmatmul.mubr.f32.gmra.mxu0 %v6843
        %v6942 = vpop.f32.mrf.mxu0
        %v6943 = vadd.f32 0.0, %v6942
        %v6944 = vpop.f32.mrf.mxu0
        %6945 = vmatprep.mubr.f32.mxu0 0.0
        %6946 = vmatmul.mubr.f32.gmra.mxu0 %v6844
        %v6947 = vpop.f32.mrf.mxu0
        %v6948 = vadd.f32 0.0, %v6947
        %v6949 = vpop.f32.mrf.mxu0
        %6950 = vmatprep.mubr.f32.mxu0 0.0
        %6951 = vmatmul.mubr.f32.gmra.mxu0 %v6845
        %v6952 = vpop.f32.mrf.mxu0
        %v6953 = vadd.f32 0.0, %v6952
        %v6954 = vpop.f32.mrf.mxu0
        %6955 = vmatprep.mubr.f32.mxu0 0.0
        %6956 = vmatmul.mubr.f32.gmra.mxu0 %v6846
        %v6957 = vpop.f32.mrf.mxu0
        %v6958 = vadd.f32 0.0, %v6957
        %v6959 = vpop.f32.mrf.mxu0
        %6960 = vmatprep.mubr.f32.mxu0 0.0
        %6961 = vmatmul.mubr.f32.gmra.mxu0 %v6847
        %v6962 = vpop.f32.mrf.mxu0
        %v6963 = vadd.f32 0.0, %v6962
        %v6964 = vpop.f32.mrf.mxu0
        %6965 = vmatprep.mubr.f32.mxu0 0.0
        %6966 = vmatmul.mubr.f32.gmra.mxu0 %v6848
        %v6967 = vpop.f32.mrf.mxu0
        %v6968 = vadd.f32 0.0, %v6967
        %v6969 = vpop.f32.mrf.mxu0
        %6970 = vdwg.mxu0
        %v6971 = vadd.f32 %v6833, %v6933
        %v6972 = vadd.f32 %v6834, %v6938
        %v6973 = vadd.f32 %v6835, %v6943
        %v6974 = vadd.f32 %v6836, %v6948
        %v6975 = vadd.f32 %v6837, %v6953
        %v6976 = vadd.f32 %v6838, %v6958
        %v6977 = vadd.f32 %v6839, %v6963
        %v6978 = vadd.f32 %v6840, %v6968
        %v6979 = vld [vmem:[%s6564 + $0x3] sm:$0xff]
        %v6980 = vld [vmem:[%s6564 + $0x13] sm:$0xff]
        %v6981 = vld [vmem:[%s6564 + $0x23] sm:$0xff]
        %v6982 = vld [vmem:[%s6564 + $0x33] sm:$0xff]
        %v6983 = vld [vmem:[%s6564 + $0x43] sm:$0xff]
        %v6984 = vld [vmem:[%s6564 + $0x53] sm:$0xff]
        %v6985 = vld [vmem:[%s6564 + $0x63] sm:$0xff]
        %v6986 = vld [vmem:[%s6564 + $0x73] sm:$0xff]
        %s6987 = scalar_lea.vmem [#allocation7], 2944
        %v6988 = vld [vmem:[%s6987] sm:$0xff]
        %v6989 = vld [vmem:[%s6987 + $0x8] sm:$0xff]
        %v6990 = vld [vmem:[%s6987 + $0x10] sm:$0xff]
        %v6991 = vld [vmem:[%s6987 + $0x18] sm:$0xff]
        %v6992 = vld [vmem:[%s6987 + $0x20] sm:$0xff]
        %v6993 = vld [vmem:[%s6987 + $0x28] sm:$0xff]
        %v6994 = vld [vmem:[%s6987 + $0x30] sm:$0xff]
        %v6995 = vld [vmem:[%s6987 + $0x38] sm:$0xff]
        %v6996 = vld [vmem:[%s6987 + $0x40] sm:$0xff]
        %v6997 = vld [vmem:[%s6987 + $0x48] sm:$0xff]
        %v6998 = vld [vmem:[%s6987 + $0x50] sm:$0xff]
        %v6999 = vld [vmem:[%s6987 + $0x58] sm:$0xff]
        %v7000 = vld [vmem:[%s6987 + $0x60] sm:$0xff]
        %v7001 = vld [vmem:[%s6987 + $0x68] sm:$0xff]
        %v7002 = vld [vmem:[%s6987 + $0x70] sm:$0xff]
        %v7003 = vld [vmem:[%s6987 + $0x78] sm:$0xff]
        %7004 = vmatprep.subr.mxu0 0.0
        %7005 = vmatpush1.msra.mxu0 %v7003
        %7006 = vmatprep.subr.mxu0 0.0
        %7007 = vmatpush1.msra.mxu0 %v7002
        %7008 = vmatprep.subr.mxu0 0.0
        %7009 = vmatpush1.msra.mxu0 %v7001
        %7010 = vmatprep.subr.mxu0 0.0
        %7011 = vmatpush1.msra.mxu0 %v7000
        %7012 = vmatprep.subr.mxu0 0.0
        %7013 = vmatpush1.msra.mxu0 %v6999
        %7014 = vmatprep.subr.mxu0 0.0
        %7015 = vmatpush1.msra.mxu0 %v6998
        %7016 = vmatprep.subr.mxu0 0.0
        %7017 = vmatpush1.msra.mxu0 %v6997
        %7018 = vmatprep.subr.mxu0 0.0
        %7019 = vmatpush1.msra.mxu0 %v6996
        %7020 = vmatprep.subr.mxu0 0.0
        %7021 = vmatpush1.msra.mxu0 %v6995
        %7022 = vmatprep.subr.mxu0 0.0
        %7023 = vmatpush1.msra.mxu0 %v6994
        %7024 = vmatprep.subr.mxu0 0.0
        %7025 = vmatpush1.msra.mxu0 %v6993
        %7026 = vmatprep.subr.mxu0 0.0
        %7027 = vmatpush1.msra.mxu0 %v6992
        %7028 = vmatprep.subr.mxu0 0.0
        %7029 = vmatpush1.msra.mxu0 %v6991
        %7030 = vmatprep.subr.mxu0 0.0
        %7031 = vmatpush1.msra.mxu0 %v6990
        %7032 = vmatprep.subr.mxu0 0.0
        %7033 = vmatpush1.msra.mxu0 %v6989
        %7034 = vmatprep.subr.mxu0 0.0
        %7035 = vmatpush1.msra.mxu0 %v6988
        %7036 = vmatprep.subr.mxu0 0.0
        %7037 = vmatpush2.msra.mxu0 0.0
        %7038 = vmatprep.subr.mxu0 0.0
        %7039 = vmatpush2.msra.mxu0 0.0
        %7040 = vmatprep.subr.mxu0 0.0
        %7041 = vmatpush2.msra.mxu0 0.0
        %7042 = vmatprep.subr.mxu0 0.0
        %7043 = vmatpush2.msra.mxu0 0.0
        %7044 = vmatprep.subr.mxu0 0.0
        %7045 = vmatpush2.msra.mxu0 0.0
        %7046 = vmatprep.subr.mxu0 0.0
        %7047 = vmatpush2.msra.mxu0 0.0
        %7048 = vmatprep.subr.mxu0 0.0
        %7049 = vmatpush2.msra.mxu0 0.0
        %7050 = vmatprep.subr.mxu0 0.0
        %7051 = vmatpush2.msra.mxu0 0.0
        %7052 = vmatprep.subr.mxu0 0.0
        %7053 = vmatpush2.msra.mxu0 0.0
        %7054 = vmatprep.subr.mxu0 0.0
        %7055 = vmatpush2.msra.mxu0 0.0
        %7056 = vmatprep.subr.mxu0 0.0
        %7057 = vmatpush2.msra.mxu0 0.0
        %7058 = vmatprep.subr.mxu0 0.0
        %7059 = vmatpush2.msra.mxu0 0.0
        %7060 = vmatprep.subr.mxu0 0.0
        %7061 = vmatpush2.msra.mxu0 0.0
        %7062 = vmatprep.subr.mxu0 0.0
        %7063 = vmatpush2.msra.mxu0 0.0
        %7064 = vmatprep.subr.mxu0 0.0
        %7065 = vmatpush2.msra.mxu0 0.0
        %7066 = vmatprep.subr.mxu0 0.0
        %7067 = vmatpush2.msra.mxu0 0.0
        %7068 = vmatprep.mubr.f32.mxu0 0.0
        %7069 = vmatmul.mubr.f32.gmra.mxu0 %v6979
        %v7070 = vpop.f32.mrf.mxu0
        %v7071 = vadd.f32 0.0, %v7070
        %v7072 = vpop.f32.mrf.mxu0
        %7073 = vmatprep.mubr.f32.mxu0 0.0
        %7074 = vmatmul.mubr.f32.gmra.mxu0 %v6980
        %v7075 = vpop.f32.mrf.mxu0
        %v7076 = vadd.f32 0.0, %v7075
        %v7077 = vpop.f32.mrf.mxu0
        %7078 = vmatprep.mubr.f32.mxu0 0.0
        %7079 = vmatmul.mubr.f32.gmra.mxu0 %v6981
        %v7080 = vpop.f32.mrf.mxu0
        %v7081 = vadd.f32 0.0, %v7080
        %v7082 = vpop.f32.mrf.mxu0
        %7083 = vmatprep.mubr.f32.mxu0 0.0
        %7084 = vmatmul.mubr.f32.gmra.mxu0 %v6982
        %v7085 = vpop.f32.mrf.mxu0
        %v7086 = vadd.f32 0.0, %v7085
        %v7087 = vpop.f32.mrf.mxu0
        %7088 = vmatprep.mubr.f32.mxu0 0.0
        %7089 = vmatmul.mubr.f32.gmra.mxu0 %v6983
        %v7090 = vpop.f32.mrf.mxu0
        %v7091 = vadd.f32 0.0, %v7090
        %v7092 = vpop.f32.mrf.mxu0
        %7093 = vmatprep.mubr.f32.mxu0 0.0
        %7094 = vmatmul.mubr.f32.gmra.mxu0 %v6984
        %v7095 = vpop.f32.mrf.mxu0
        %v7096 = vadd.f32 0.0, %v7095
        %v7097 = vpop.f32.mrf.mxu0
        %7098 = vmatprep.mubr.f32.mxu0 0.0
        %7099 = vmatmul.mubr.f32.gmra.mxu0 %v6985
        %v7100 = vpop.f32.mrf.mxu0
        %v7101 = vadd.f32 0.0, %v7100
        %v7102 = vpop.f32.mrf.mxu0
        %7103 = vmatprep.mubr.f32.mxu0 0.0
        %7104 = vmatmul.mubr.f32.gmra.mxu0 %v6986
        %v7105 = vpop.f32.mrf.mxu0
        %v7106 = vadd.f32 0.0, %v7105
        %v7107 = vpop.f32.mrf.mxu0
        %7108 = vdwg.mxu0
        %v7109 = vadd.f32 %v6971, %v7071
        %v7110 = vadd.f32 %v6972, %v7076
        %v7111 = vadd.f32 %v6973, %v7081
        %v7112 = vadd.f32 %v6974, %v7086
        %v7113 = vadd.f32 %v6975, %v7091
        %v7114 = vadd.f32 %v6976, %v7096
        %v7115 = vadd.f32 %v6977, %v7101
        %v7116 = vadd.f32 %v6978, %v7106
        %v7117 = vld [vmem:[%s6564 + $0x4] sm:$0xff]
        %v7118 = vld [vmem:[%s6564 + $0x14] sm:$0xff]
        %v7119 = vld [vmem:[%s6564 + $0x24] sm:$0xff]
        %v7120 = vld [vmem:[%s6564 + $0x34] sm:$0xff]
        %v7121 = vld [vmem:[%s6564 + $0x44] sm:$0xff]
        %v7122 = vld [vmem:[%s6564 + $0x54] sm:$0xff]
        %v7123 = vld [vmem:[%s6564 + $0x64] sm:$0xff]
        %v7124 = vld [vmem:[%s6564 + $0x74] sm:$0xff]
        %s7125 = scalar_lea.vmem [#allocation7], 3072
        %v7126 = vld [vmem:[%s7125] sm:$0xff]
        %v7127 = vld [vmem:[%s7125 + $0x8] sm:$0xff]
        %v7128 = vld [vmem:[%s7125 + $0x10] sm:$0xff]
        %v7129 = vld [vmem:[%s7125 + $0x18] sm:$0xff]
        %v7130 = vld [vmem:[%s7125 + $0x20] sm:$0xff]
        %v7131 = vld [vmem:[%s7125 + $0x28] sm:$0xff]
        %v7132 = vld [vmem:[%s7125 + $0x30] sm:$0xff]
        %v7133 = vld [vmem:[%s7125 + $0x38] sm:$0xff]
        %v7134 = vld [vmem:[%s7125 + $0x40] sm:$0xff]
        %v7135 = vld [vmem:[%s7125 + $0x48] sm:$0xff]
        %v7136 = vld [vmem:[%s7125 + $0x50] sm:$0xff]
        %v7137 = vld [vmem:[%s7125 + $0x58] sm:$0xff]
        %v7138 = vld [vmem:[%s7125 + $0x60] sm:$0xff]
        %v7139 = vld [vmem:[%s7125 + $0x68] sm:$0xff]
        %v7140 = vld [vmem:[%s7125 + $0x70] sm:$0xff]
        %v7141 = vld [vmem:[%s7125 + $0x78] sm:$0xff]
        %7142 = vmatprep.subr.mxu0 0.0
        %7143 = vmatpush1.msra.mxu0 %v7141
        %7144 = vmatprep.subr.mxu0 0.0
        %7145 = vmatpush1.msra.mxu0 %v7140
        %7146 = vmatprep.subr.mxu0 0.0
        %7147 = vmatpush1.msra.mxu0 %v7139
        %7148 = vmatprep.subr.mxu0 0.0
        %7149 = vmatpush1.msra.mxu0 %v7138
        %7150 = vmatprep.subr.mxu0 0.0
        %7151 = vmatpush1.msra.mxu0 %v7137
        %7152 = vmatprep.subr.mxu0 0.0
        %7153 = vmatpush1.msra.mxu0 %v7136
        %7154 = vmatprep.subr.mxu0 0.0
        %7155 = vmatpush1.msra.mxu0 %v7135
        %7156 = vmatprep.subr.mxu0 0.0
        %7157 = vmatpush1.msra.mxu0 %v7134
        %7158 = vmatprep.subr.mxu0 0.0
        %7159 = vmatpush1.msra.mxu0 %v7133
        %7160 = vmatprep.subr.mxu0 0.0
        %7161 = vmatpush1.msra.mxu0 %v7132
        %7162 = vmatprep.subr.mxu0 0.0
        %7163 = vmatpush1.msra.mxu0 %v7131
        %7164 = vmatprep.subr.mxu0 0.0
        %7165 = vmatpush1.msra.mxu0 %v7130
        %7166 = vmatprep.subr.mxu0 0.0
        %7167 = vmatpush1.msra.mxu0 %v7129
        %7168 = vmatprep.subr.mxu0 0.0
        %7169 = vmatpush1.msra.mxu0 %v7128
        %7170 = vmatprep.subr.mxu0 0.0
        %7171 = vmatpush1.msra.mxu0 %v7127
        %7172 = vmatprep.subr.mxu0 0.0
        %7173 = vmatpush1.msra.mxu0 %v7126
        %7174 = vmatprep.subr.mxu0 0.0
        %7175 = vmatpush2.msra.mxu0 0.0
        %7176 = vmatprep.subr.mxu0 0.0
        %7177 = vmatpush2.msra.mxu0 0.0
        %7178 = vmatprep.subr.mxu0 0.0
        %7179 = vmatpush2.msra.mxu0 0.0
        %7180 = vmatprep.subr.mxu0 0.0
        %7181 = vmatpush2.msra.mxu0 0.0
        %7182 = vmatprep.subr.mxu0 0.0
        %7183 = vmatpush2.msra.mxu0 0.0
        %7184 = vmatprep.subr.mxu0 0.0
        %7185 = vmatpush2.msra.mxu0 0.0
        %7186 = vmatprep.subr.mxu0 0.0
        %7187 = vmatpush2.msra.mxu0 0.0
        %7188 = vmatprep.subr.mxu0 0.0
        %7189 = vmatpush2.msra.mxu0 0.0
        %7190 = vmatprep.subr.mxu0 0.0
        %7191 = vmatpush2.msra.mxu0 0.0
        %7192 = vmatprep.subr.mxu0 0.0
        %7193 = vmatpush2.msra.mxu0 0.0
        %7194 = vmatprep.subr.mxu0 0.0
        %7195 = vmatpush2.msra.mxu0 0.0
        %7196 = vmatprep.subr.mxu0 0.0
        %7197 = vmatpush2.msra.mxu0 0.0
        %7198 = vmatprep.subr.mxu0 0.0
        %7199 = vmatpush2.msra.mxu0 0.0
        %7200 = vmatprep.subr.mxu0 0.0
        %7201 = vmatpush2.msra.mxu0 0.0
        %7202 = vmatprep.subr.mxu0 0.0
        %7203 = vmatpush2.msra.mxu0 0.0
        %7204 = vmatprep.subr.mxu0 0.0
        %7205 = vmatpush2.msra.mxu0 0.0
        %7206 = vmatprep.mubr.f32.mxu0 0.0
        %7207 = vmatmul.mubr.f32.gmra.mxu0 %v7117
        %v7208 = vpop.f32.mrf.mxu0
        %v7209 = vadd.f32 0.0, %v7208
        %v7210 = vpop.f32.mrf.mxu0
        %7211 = vmatprep.mubr.f32.mxu0 0.0
        %7212 = vmatmul.mubr.f32.gmra.mxu0 %v7118
        %v7213 = vpop.f32.mrf.mxu0
        %v7214 = vadd.f32 0.0, %v7213
        %v7215 = vpop.f32.mrf.mxu0
        %7216 = vmatprep.mubr.f32.mxu0 0.0
        %7217 = vmatmul.mubr.f32.gmra.mxu0 %v7119
        %v7218 = vpop.f32.mrf.mxu0
        %v7219 = vadd.f32 0.0, %v7218
        %v7220 = vpop.f32.mrf.mxu0
        %7221 = vmatprep.mubr.f32.mxu0 0.0
        %7222 = vmatmul.mubr.f32.gmra.mxu0 %v7120
        %v7223 = vpop.f32.mrf.mxu0
        %v7224 = vadd.f32 0.0, %v7223
        %v7225 = vpop.f32.mrf.mxu0
        %7226 = vmatprep.mubr.f32.mxu0 0.0
        %7227 = vmatmul.mubr.f32.gmra.mxu0 %v7121
        %v7228 = vpop.f32.mrf.mxu0
        %v7229 = vadd.f32 0.0, %v7228
        %v7230 = vpop.f32.mrf.mxu0
        %7231 = vmatprep.mubr.f32.mxu0 0.0
        %7232 = vmatmul.mubr.f32.gmra.mxu0 %v7122
        %v7233 = vpop.f32.mrf.mxu0
        %v7234 = vadd.f32 0.0, %v7233
        %v7235 = vpop.f32.mrf.mxu0
        %7236 = vmatprep.mubr.f32.mxu0 0.0
        %7237 = vmatmul.mubr.f32.gmra.mxu0 %v7123
        %v7238 = vpop.f32.mrf.mxu0
        %v7239 = vadd.f32 0.0, %v7238
        %v7240 = vpop.f32.mrf.mxu0
        %7241 = vmatprep.mubr.f32.mxu0 0.0
        %7242 = vmatmul.mubr.f32.gmra.mxu0 %v7124
        %v7243 = vpop.f32.mrf.mxu0
        %v7244 = vadd.f32 0.0, %v7243
        %v7245 = vpop.f32.mrf.mxu0
        %7246 = vdwg.mxu0
        %v7247 = vadd.f32 %v7109, %v7209
        %v7248 = vadd.f32 %v7110, %v7214
        %v7249 = vadd.f32 %v7111, %v7219
        %v7250 = vadd.f32 %v7112, %v7224
        %v7251 = vadd.f32 %v7113, %v7229
        %v7252 = vadd.f32 %v7114, %v7234
        %v7253 = vadd.f32 %v7115, %v7239
        %v7254 = vadd.f32 %v7116, %v7244
        %vm7255 = vcmp.ge.f32.partialorder %v7247, 0.0
        %vm7256 = vcmp.ge.f32.partialorder %v7248, 0.0
        %vm7257 = vcmp.ge.f32.partialorder %v7249, 0.0
        %vm7258 = vcmp.ge.f32.partialorder %v7250, 0.0
        %vm7259 = vcmp.ge.f32.partialorder %v7251, 0.0
        %vm7260 = vcmp.ge.f32.partialorder %v7252, 0.0
        %vm7261 = vcmp.ge.f32.partialorder %v7253, 0.0
        %vm7262 = vcmp.ge.f32.partialorder %v7254, 0.0
        %v7263 = vmul.f32 %v7247, 0.1
        %v7264 = vmul.f32 %v7248, 0.1
        %v7265 = vmul.f32 %v7249, 0.1
        %v7266 = vmul.f32 %v7250, 0.1
        %v7267 = vmul.f32 %v7251, 0.1
        %v7268 = vmul.f32 %v7252, 0.1
        %v7269 = vmul.f32 %v7253, 0.1
        %v7270 = vmul.f32 %v7254, 0.1
        %v7271 = vsel %vm7255, %v7247, %v7263
        %v7272 = vsel %vm7256, %v7248, %v7264
        %v7273 = vsel %vm7257, %v7249, %v7265
        %v7274 = vsel %vm7258, %v7250, %v7266
        %v7275 = vsel %vm7259, %v7251, %v7267
        %v7276 = vsel %vm7260, %v7252, %v7268
        %v7277 = vsel %vm7261, %v7253, %v7269
        %v7278 = vsel %vm7262, %v7254, %v7270
        %v7279 = vld [vmem:[#allocation10] sm:$0xff]
        %v7280 = vld [vmem:[#allocation10 + $0x8] sm:$0xff]
        %v7281 = vld [vmem:[#allocation10 + $0x10] sm:$0xff]
        %v7282 = vld [vmem:[#allocation10 + $0x18] sm:$0xff]
        %v7283 = vld [vmem:[#allocation10 + $0x20] sm:$0xff]
        %v7284 = vld [vmem:[#allocation10 + $0x28] sm:$0xff]
        %v7285 = vld [vmem:[#allocation10 + $0x30] sm:$0xff]
        %v7286 = vld [vmem:[#allocation10 + $0x38] sm:$0xff]
        %vm7287 = vcmask 523264
        %v7289 = vsel %vm7287, %v7279, 0
        %v7292 = vsel %vm7287, %v7280, 0
        %v7295 = vsel %vm7287, %v7281, 0
        %v7298 = vsel %vm7287, %v7282, 0
        %v7301 = vsel %vm7287, %v7283, 0
        %v7304 = vsel %vm7287, %v7284, 0
        %v7307 = vsel %vm7287, %v7285, 0
        %v7310 = vsel %vm7287, %v7286, 0
        %7312 = vmatprep.subr.mxu0 0.0
        %7313 = vmatpush1.msra.mxu0 0.0
        %7314 = vmatprep.subr.mxu0 0.0
        %7315 = vmatpush1.msra.mxu0 0.0
        %7316 = vmatprep.subr.mxu0 0.0
        %7317 = vmatpush1.msra.mxu0 0.0
        %7318 = vmatprep.subr.mxu0 0.0
        %7319 = vmatpush1.msra.mxu0 0.0
        %7320 = vmatprep.subr.mxu0 0.0
        %7321 = vmatpush1.msra.mxu0 0.0
        %7322 = vmatprep.subr.mxu0 0.0
        %7323 = vmatpush1.msra.mxu0 0.0
        %7324 = vmatprep.subr.mxu0 0.0
        %7325 = vmatpush1.msra.mxu0 0.0
        %7326 = vmatprep.subr.mxu0 0.0
        %7327 = vmatpush1.msra.mxu0 0.0
        %7328 = vmatprep.subr.mxu0 0.0
        %7329 = vmatpush1.msra.mxu0 %v7278
        %7330 = vmatprep.subr.mxu0 0.0
        %7331 = vmatpush1.msra.mxu0 %v7277
        %7332 = vmatprep.subr.mxu0 0.0
        %7333 = vmatpush1.msra.mxu0 %v7276
        %7334 = vmatprep.subr.mxu0 0.0
        %7335 = vmatpush1.msra.mxu0 %v7275
        %7336 = vmatprep.subr.mxu0 0.0
        %7337 = vmatpush1.msra.mxu0 %v7274
        %7338 = vmatprep.subr.mxu0 0.0
        %7339 = vmatpush1.msra.mxu0 %v7273
        %7340 = vmatprep.subr.mxu0 0.0
        %7341 = vmatpush1.msra.mxu0 %v7272
        %7342 = vmatprep.subr.mxu0 0.0
        %7343 = vmatpush1.msra.mxu0 %v7271
        %7344 = vmatprep.subr.mxu0 0.0
        %7345 = vmatpush2.msra.mxu0 0.0
        %7346 = vmatprep.subr.mxu0 0.0
        %7347 = vmatpush2.msra.mxu0 0.0
        %7348 = vmatprep.subr.mxu0 0.0
        %7349 = vmatpush2.msra.mxu0 0.0
        %7350 = vmatprep.subr.mxu0 0.0
        %7351 = vmatpush2.msra.mxu0 0.0
        %7352 = vmatprep.subr.mxu0 0.0
        %7353 = vmatpush2.msra.mxu0 0.0
        %7354 = vmatprep.subr.mxu0 0.0
        %7355 = vmatpush2.msra.mxu0 0.0
        %7356 = vmatprep.subr.mxu0 0.0
        %7357 = vmatpush2.msra.mxu0 0.0
        %7358 = vmatprep.subr.mxu0 0.0
        %7359 = vmatpush2.msra.mxu0 0.0
        %7360 = vmatprep.subr.mxu0 0.0
        %7361 = vmatpush2.msra.mxu0 0.0
        %7362 = vmatprep.subr.mxu0 0.0
        %7363 = vmatpush2.msra.mxu0 0.0
        %7364 = vmatprep.subr.mxu0 0.0
        %7365 = vmatpush2.msra.mxu0 0.0
        %7366 = vmatprep.subr.mxu0 0.0
        %7367 = vmatpush2.msra.mxu0 0.0
        %7368 = vmatprep.subr.mxu0 0.0
        %7369 = vmatpush2.msra.mxu0 0.0
        %7370 = vmatprep.subr.mxu0 0.0
        %7371 = vmatpush2.msra.mxu0 0.0
        %7372 = vmatprep.subr.mxu0 0.0
        %7373 = vmatpush2.msra.mxu0 0.0
        %7374 = vmatprep.subr.mxu0 0.0
        %7375 = vmatpush2.msra.mxu0 0.0
        %7376 = vmatprep.mubr.f32.mxu0 0.0
        %7377 = vmatmul.mubr.f32.gmra.mxu0 %v7289
        %v7378 = vpop.f32.mrf.mxu0
        %v7379 = vadd.f32 0.0, %v7378
        %v7380 = vpop.f32.mrf.mxu0
        %7381 = vmatprep.mubr.f32.mxu0 0.0
        %7382 = vmatmul.mubr.f32.gmra.mxu0 %v7292
        %v7383 = vpop.f32.mrf.mxu0
        %v7384 = vadd.f32 0.0, %v7383
        %v7385 = vpop.f32.mrf.mxu0
        %7386 = vmatprep.mubr.f32.mxu0 0.0
        %7387 = vmatmul.mubr.f32.gmra.mxu0 %v7295
        %v7388 = vpop.f32.mrf.mxu0
        %v7389 = vadd.f32 0.0, %v7388
        %v7390 = vpop.f32.mrf.mxu0
        %7391 = vmatprep.mubr.f32.mxu0 0.0
        %7392 = vmatmul.mubr.f32.gmra.mxu0 %v7298
        %v7393 = vpop.f32.mrf.mxu0
        %v7394 = vadd.f32 0.0, %v7393
        %v7395 = vpop.f32.mrf.mxu0
        %7396 = vmatprep.mubr.f32.mxu0 0.0
        %7397 = vmatmul.mubr.f32.gmra.mxu0 %v7301
        %v7398 = vpop.f32.mrf.mxu0
        %v7399 = vadd.f32 0.0, %v7398
        %v7400 = vpop.f32.mrf.mxu0
        %7401 = vmatprep.mubr.f32.mxu0 0.0
        %7402 = vmatmul.mubr.f32.gmra.mxu0 %v7304
        %v7403 = vpop.f32.mrf.mxu0
        %v7404 = vadd.f32 0.0, %v7403
        %v7405 = vpop.f32.mrf.mxu0
        %7406 = vmatprep.mubr.f32.mxu0 0.0
        %7407 = vmatmul.mubr.f32.gmra.mxu0 %v7307
        %v7408 = vpop.f32.mrf.mxu0
        %v7409 = vadd.f32 0.0, %v7408
        %v7410 = vpop.f32.mrf.mxu0
        %7411 = vmatprep.mubr.f32.mxu0 0.0
        %7412 = vmatmul.mubr.f32.gmra.mxu0 %v7310
        %v7413 = vpop.f32.mrf.mxu0
        %v7414 = vadd.f32 0.0, %v7413
        %v7415 = vpop.f32.mrf.mxu0
        %7416 = vdwg.mxu0
        %v7417 = vmax.f32 %v7379, %v7389
        %v7418 = vmax.f32 %v7384, %v7394
        %v7419 = vmax.f32 %v7399, %v7409
        %v7420 = vmax.f32 %v7404, %v7414
        %v7421 = vmax.f32 %v7417, %v7419
        %v7422 = vmax.f32 %v7418, %v7420
        %v7423 = vld [vmem:[#allocation13] sm:$0x1]
        %v7424 = vld [vmem:[#allocation11] sm:$0xff]
        %v7425 = vld [vmem:[#allocation11 + $0x8] sm:$0xff]
        %v7426 = vld [vmem:[#allocation11 + $0x10] sm:$0xff]
        %v7427 = vld [vmem:[#allocation11 + $0x18] sm:$0xff]
        %v7428 = vld [vmem:[#allocation11 + $0x20] sm:$0xff]
        %v7429 = vld [vmem:[#allocation11 + $0x28] sm:$0xff]
        %v7430 = vld [vmem:[#allocation11 + $0x30] sm:$0xff]
        %v7431 = vld [vmem:[#allocation11 + $0x38] sm:$0xff]
        %v7432 = vld [vmem:[#allocation11 + $0x40] sm:$0xff]
        %v7433 = vld [vmem:[#allocation11 + $0x48] sm:$0xff]
        %v7434 = vld [vmem:[#allocation11 + $0x50] sm:$0xff]
        %v7435 = vld [vmem:[#allocation11 + $0x58] sm:$0xff]
        %v7436 = vld [vmem:[#allocation11 + $0x60] sm:$0xff]
        %v7437 = vld [vmem:[#allocation11 + $0x68] sm:$0xff]
        %v7438 = vld [vmem:[#allocation11 + $0x70] sm:$0xff]
        %v7439 = vld [vmem:[#allocation11 + $0x78] sm:$0xff]
        %7440 = vmatprep.subr.mxu0 0.0
        %7441 = vmatpush1.msra.mxu0 %v7439
        %7442 = vmatprep.subr.mxu0 0.0
        %7443 = vmatpush1.msra.mxu0 %v7438
        %7444 = vmatprep.subr.mxu0 0.0
        %7445 = vmatpush1.msra.mxu0 %v7437
        %7446 = vmatprep.subr.mxu0 0.0
        %7447 = vmatpush1.msra.mxu0 %v7436
        %7448 = vmatprep.subr.mxu0 0.0
        %7449 = vmatpush1.msra.mxu0 %v7435
        %7450 = vmatprep.subr.mxu0 0.0
        %7451 = vmatpush1.msra.mxu0 %v7434
        %7452 = vmatprep.subr.mxu0 0.0
        %7453 = vmatpush1.msra.mxu0 %v7433
        %7454 = vmatprep.subr.mxu0 0.0
        %7455 = vmatpush1.msra.mxu0 %v7432
        %7456 = vmatprep.subr.mxu0 0.0
        %7457 = vmatpush1.msra.mxu0 %v7431
        %7458 = vmatprep.subr.mxu0 0.0
        %7459 = vmatpush1.msra.mxu0 %v7430
        %7460 = vmatprep.subr.mxu0 0.0
        %7461 = vmatpush1.msra.mxu0 %v7429
        %7462 = vmatprep.subr.mxu0 0.0
        %7463 = vmatpush1.msra.mxu0 %v7428
        %7464 = vmatprep.subr.mxu0 0.0
        %7465 = vmatpush1.msra.mxu0 %v7427
        %7466 = vmatprep.subr.mxu0 0.0
        %7467 = vmatpush1.msra.mxu0 %v7426
        %7468 = vmatprep.subr.mxu0 0.0
        %7469 = vmatpush1.msra.mxu0 %v7425
        %7470 = vmatprep.subr.mxu0 0.0
        %7471 = vmatpush1.msra.mxu0 %v7424
        %7472 = vmatprep.subr.mxu0 0.0
        %7473 = vmatpush2.msra.mxu0 0.0
        %7474 = vmatprep.subr.mxu0 0.0
        %7475 = vmatpush2.msra.mxu0 0.0
        %7476 = vmatprep.subr.mxu0 0.0
        %7477 = vmatpush2.msra.mxu0 0.0
        %7478 = vmatprep.subr.mxu0 0.0
        %7479 = vmatpush2.msra.mxu0 0.0
        %7480 = vmatprep.subr.mxu0 0.0
        %7481 = vmatpush2.msra.mxu0 0.0
        %7482 = vmatprep.subr.mxu0 0.0
        %7483 = vmatpush2.msra.mxu0 0.0
        %7484 = vmatprep.subr.mxu0 0.0
        %7485 = vmatpush2.msra.mxu0 0.0
        %7486 = vmatprep.subr.mxu0 0.0
        %7487 = vmatpush2.msra.mxu0 0.0
        %7488 = vmatprep.subr.mxu0 0.0
        %7489 = vmatpush2.msra.mxu0 0.0
        %7490 = vmatprep.subr.mxu0 0.0
        %7491 = vmatpush2.msra.mxu0 0.0
        %7492 = vmatprep.subr.mxu0 0.0
        %7493 = vmatpush2.msra.mxu0 0.0
        %7494 = vmatprep.subr.mxu0 0.0
        %7495 = vmatpush2.msra.mxu0 0.0
        %7496 = vmatprep.subr.mxu0 0.0
        %7497 = vmatpush2.msra.mxu0 0.0
        %7498 = vmatprep.subr.mxu0 0.0
        %7499 = vmatpush2.msra.mxu0 0.0
        %7500 = vmatprep.subr.mxu0 0.0
        %7501 = vmatpush2.msra.mxu0 0.0
        %7502 = vmatprep.subr.mxu0 0.0
        %7503 = vmatpush2.msra.mxu0 0.0
        %7504 = vmatprep.mubr.f32.mxu0 0.0
        %7505 = vmatmul.mubr.f32.gmra.mxu0 %v7421
        %v7506 = vpop.f32.mrf.mxu0
        %v7507 = vadd.f32 0.0, %v7506
        %v7508 = vpop.f32.mrf.mxu0
        %7509 = vdwg.mxu0
        %v7510 = vadd.f32 %v7423, %v7507
        %s7511 = scalar_lea.vmem [#allocation11], 128
        %v7512 = vld [vmem:[%s7511] sm:$0xff]
        %v7513 = vld [vmem:[%s7511 + $0x8] sm:$0xff]
        %v7514 = vld [vmem:[%s7511 + $0x10] sm:$0xff]
        %v7515 = vld [vmem:[%s7511 + $0x18] sm:$0xff]
        %v7516 = vld [vmem:[%s7511 + $0x20] sm:$0xff]
        %v7517 = vld [vmem:[%s7511 + $0x28] sm:$0xff]
        %v7518 = vld [vmem:[%s7511 + $0x30] sm:$0xff]
        %v7519 = vld [vmem:[%s7511 + $0x38] sm:$0xff]
        %v7520 = vld [vmem:[%s7511 + $0x40] sm:$0xff]
        %v7521 = vld [vmem:[%s7511 + $0x48] sm:$0xff]
        %v7522 = vld [vmem:[%s7511 + $0x50] sm:$0xff]
        %v7523 = vld [vmem:[%s7511 + $0x58] sm:$0xff]
        %v7524 = vld [vmem:[%s7511 + $0x60] sm:$0xff]
        %v7525 = vld [vmem:[%s7511 + $0x68] sm:$0xff]
        %v7526 = vld [vmem:[%s7511 + $0x70] sm:$0xff]
        %v7527 = vld [vmem:[%s7511 + $0x78] sm:$0xff]
        %v7529 = vrot.slane %v7421, 1
        %7531 = vmatprep.subr.mxu0 0.0
        %7532 = vmatpush1.msra.mxu0 %v7527
        %7533 = vmatprep.subr.mxu0 0.0
        %7534 = vmatpush1.msra.mxu0 %v7526
        %7535 = vmatprep.subr.mxu0 0.0
        %7536 = vmatpush1.msra.mxu0 %v7525
        %7537 = vmatprep.subr.mxu0 0.0
        %7538 = vmatpush1.msra.mxu0 %v7524
        %7539 = vmatprep.subr.mxu0 0.0
        %7540 = vmatpush1.msra.mxu0 %v7523
        %7541 = vmatprep.subr.mxu0 0.0
        %7542 = vmatpush1.msra.mxu0 %v7522
        %7543 = vmatprep.subr.mxu0 0.0
        %7544 = vmatpush1.msra.mxu0 %v7521
        %7545 = vmatprep.subr.mxu0 0.0
        %7546 = vmatpush1.msra.mxu0 %v7520
        %7547 = vmatprep.subr.mxu0 0.0
        %7548 = vmatpush1.msra.mxu0 %v7519
        %7549 = vmatprep.subr.mxu0 0.0
        %7550 = vmatpush1.msra.mxu0 %v7518
        %7551 = vmatprep.subr.mxu0 0.0
        %7552 = vmatpush1.msra.mxu0 %v7517
        %7553 = vmatprep.subr.mxu0 0.0
        %7554 = vmatpush1.msra.mxu0 %v7516
        %7555 = vmatprep.subr.mxu0 0.0
        %7556 = vmatpush1.msra.mxu0 %v7515
        %7557 = vmatprep.subr.mxu0 0.0
        %7558 = vmatpush1.msra.mxu0 %v7514
        %7559 = vmatprep.subr.mxu0 0.0
        %7560 = vmatpush1.msra.mxu0 %v7513
        %7561 = vmatprep.subr.mxu0 0.0
        %7562 = vmatpush1.msra.mxu0 %v7512
        %7563 = vmatprep.subr.mxu0 0.0
        %7564 = vmatpush2.msra.mxu0 0.0
        %7565 = vmatprep.subr.mxu0 0.0
        %7566 = vmatpush2.msra.mxu0 0.0
        %7567 = vmatprep.subr.mxu0 0.0
        %7568 = vmatpush2.msra.mxu0 0.0
        %7569 = vmatprep.subr.mxu0 0.0
        %7570 = vmatpush2.msra.mxu0 0.0
        %7571 = vmatprep.subr.mxu0 0.0
        %7572 = vmatpush2.msra.mxu0 0.0
        %7573 = vmatprep.subr.mxu0 0.0
        %7574 = vmatpush2.msra.mxu0 0.0
        %7575 = vmatprep.subr.mxu0 0.0
        %7576 = vmatpush2.msra.mxu0 0.0
        %7577 = vmatprep.subr.mxu0 0.0
        %7578 = vmatpush2.msra.mxu0 0.0
        %7579 = vmatprep.subr.mxu0 0.0
        %7580 = vmatpush2.msra.mxu0 0.0
        %7581 = vmatprep.subr.mxu0 0.0
        %7582 = vmatpush2.msra.mxu0 0.0
        %7583 = vmatprep.subr.mxu0 0.0
        %7584 = vmatpush2.msra.mxu0 0.0
        %7585 = vmatprep.subr.mxu0 0.0
        %7586 = vmatpush2.msra.mxu0 0.0
        %7587 = vmatprep.subr.mxu0 0.0
        %7588 = vmatpush2.msra.mxu0 0.0
        %7589 = vmatprep.subr.mxu0 0.0
        %7590 = vmatpush2.msra.mxu0 0.0
        %7591 = vmatprep.subr.mxu0 0.0
        %7592 = vmatpush2.msra.mxu0 0.0
        %7593 = vmatprep.subr.mxu0 0.0
        %7594 = vmatpush2.msra.mxu0 0.0
        %7595 = vmatprep.mubr.f32.mxu0 0.0
        %7596 = vmatmul.mubr.f32.gmra.mxu0 %v7529
        %v7597 = vpop.f32.mrf.mxu0
        %v7598 = vadd.f32 0.0, %v7597
        %v7599 = vpop.f32.mrf.mxu0
        %7600 = vdwg.mxu0
        %v7601 = vadd.f32 %v7510, %v7598
        %s7602 = scalar_lea.vmem [#allocation11], 256
        %v7603 = vld [vmem:[%s7602] sm:$0xff]
        %v7604 = vld [vmem:[%s7602 + $0x8] sm:$0xff]
        %v7605 = vld [vmem:[%s7602 + $0x10] sm:$0xff]
        %v7606 = vld [vmem:[%s7602 + $0x18] sm:$0xff]
        %v7607 = vld [vmem:[%s7602 + $0x20] sm:$0xff]
        %v7608 = vld [vmem:[%s7602 + $0x28] sm:$0xff]
        %v7609 = vld [vmem:[%s7602 + $0x30] sm:$0xff]
        %v7610 = vld [vmem:[%s7602 + $0x38] sm:$0xff]
        %v7611 = vld [vmem:[%s7602 + $0x40] sm:$0xff]
        %v7612 = vld [vmem:[%s7602 + $0x48] sm:$0xff]
        %v7613 = vld [vmem:[%s7602 + $0x50] sm:$0xff]
        %v7614 = vld [vmem:[%s7602 + $0x58] sm:$0xff]
        %v7615 = vld [vmem:[%s7602 + $0x60] sm:$0xff]
        %v7616 = vld [vmem:[%s7602 + $0x68] sm:$0xff]
        %v7617 = vld [vmem:[%s7602 + $0x70] sm:$0xff]
        %v7618 = vld [vmem:[%s7602 + $0x78] sm:$0xff]
        %v7619 = vrot.slane %v7421, 2
        %7621 = vmatprep.subr.mxu0 0.0
        %7622 = vmatpush1.msra.mxu0 %v7618
        %7623 = vmatprep.subr.mxu0 0.0
        %7624 = vmatpush1.msra.mxu0 %v7617
        %7625 = vmatprep.subr.mxu0 0.0
        %7626 = vmatpush1.msra.mxu0 %v7616
        %7627 = vmatprep.subr.mxu0 0.0
        %7628 = vmatpush1.msra.mxu0 %v7615
        %7629 = vmatprep.subr.mxu0 0.0
        %7630 = vmatpush1.msra.mxu0 %v7614
        %7631 = vmatprep.subr.mxu0 0.0
        %7632 = vmatpush1.msra.mxu0 %v7613
        %7633 = vmatprep.subr.mxu0 0.0
        %7634 = vmatpush1.msra.mxu0 %v7612
        %7635 = vmatprep.subr.mxu0 0.0
        %7636 = vmatpush1.msra.mxu0 %v7611
        %7637 = vmatprep.subr.mxu0 0.0
        %7638 = vmatpush1.msra.mxu0 %v7610
        %7639 = vmatprep.subr.mxu0 0.0
        %7640 = vmatpush1.msra.mxu0 %v7609
        %7641 = vmatprep.subr.mxu0 0.0
        %7642 = vmatpush1.msra.mxu0 %v7608
        %7643 = vmatprep.subr.mxu0 0.0
        %7644 = vmatpush1.msra.mxu0 %v7607
        %7645 = vmatprep.subr.mxu0 0.0
        %7646 = vmatpush1.msra.mxu0 %v7606
        %7647 = vmatprep.subr.mxu0 0.0
        %7648 = vmatpush1.msra.mxu0 %v7605
        %7649 = vmatprep.subr.mxu0 0.0
        %7650 = vmatpush1.msra.mxu0 %v7604
        %7651 = vmatprep.subr.mxu0 0.0
        %7652 = vmatpush1.msra.mxu0 %v7603
        %7653 = vmatprep.subr.mxu0 0.0
        %7654 = vmatpush2.msra.mxu0 0.0
        %7655 = vmatprep.subr.mxu0 0.0
        %7656 = vmatpush2.msra.mxu0 0.0
        %7657 = vmatprep.subr.mxu0 0.0
        %7658 = vmatpush2.msra.mxu0 0.0
        %7659 = vmatprep.subr.mxu0 0.0
        %7660 = vmatpush2.msra.mxu0 0.0
        %7661 = vmatprep.subr.mxu0 0.0
        %7662 = vmatpush2.msra.mxu0 0.0
        %7663 = vmatprep.subr.mxu0 0.0
        %7664 = vmatpush2.msra.mxu0 0.0
        %7665 = vmatprep.subr.mxu0 0.0
        %7666 = vmatpush2.msra.mxu0 0.0
        %7667 = vmatprep.subr.mxu0 0.0
        %7668 = vmatpush2.msra.mxu0 0.0
        %7669 = vmatprep.subr.mxu0 0.0
        %7670 = vmatpush2.msra.mxu0 0.0
        %7671 = vmatprep.subr.mxu0 0.0
        %7672 = vmatpush2.msra.mxu0 0.0
        %7673 = vmatprep.subr.mxu0 0.0
        %7674 = vmatpush2.msra.mxu0 0.0
        %7675 = vmatprep.subr.mxu0 0.0
        %7676 = vmatpush2.msra.mxu0 0.0
        %7677 = vmatprep.subr.mxu0 0.0
        %7678 = vmatpush2.msra.mxu0 0.0
        %7679 = vmatprep.subr.mxu0 0.0
        %7680 = vmatpush2.msra.mxu0 0.0
        %7681 = vmatprep.subr.mxu0 0.0
        %7682 = vmatpush2.msra.mxu0 0.0
        %7683 = vmatprep.subr.mxu0 0.0
        %7684 = vmatpush2.msra.mxu0 0.0
        %7685 = vmatprep.mubr.f32.mxu0 0.0
        %7686 = vmatmul.mubr.f32.gmra.mxu0 %v7619
        %v7687 = vpop.f32.mrf.mxu0
        %v7688 = vadd.f32 0.0, %v7687
        %v7689 = vpop.f32.mrf.mxu0
        %7690 = vdwg.mxu0
        %v7691 = vadd.f32 %v7601, %v7688
        %s7692 = scalar_lea.vmem [#allocation11], 384
        %v7693 = vld [vmem:[%s7692] sm:$0xff]
        %v7694 = vld [vmem:[%s7692 + $0x8] sm:$0xff]
        %v7695 = vld [vmem:[%s7692 + $0x10] sm:$0xff]
        %v7696 = vld [vmem:[%s7692 + $0x18] sm:$0xff]
        %v7697 = vld [vmem:[%s7692 + $0x20] sm:$0xff]
        %v7698 = vld [vmem:[%s7692 + $0x28] sm:$0xff]
        %v7699 = vld [vmem:[%s7692 + $0x30] sm:$0xff]
        %v7700 = vld [vmem:[%s7692 + $0x38] sm:$0xff]
        %v7701 = vld [vmem:[%s7692 + $0x40] sm:$0xff]
        %v7702 = vld [vmem:[%s7692 + $0x48] sm:$0xff]
        %v7703 = vld [vmem:[%s7692 + $0x50] sm:$0xff]
        %v7704 = vld [vmem:[%s7692 + $0x58] sm:$0xff]
        %v7705 = vld [vmem:[%s7692 + $0x60] sm:$0xff]
        %v7706 = vld [vmem:[%s7692 + $0x68] sm:$0xff]
        %v7707 = vld [vmem:[%s7692 + $0x70] sm:$0xff]
        %v7708 = vld [vmem:[%s7692 + $0x78] sm:$0xff]
        %v7709 = vrot.slane %v7421, 3
        %7711 = vmatprep.subr.mxu0 0.0
        %7712 = vmatpush1.msra.mxu0 %v7708
        %7713 = vmatprep.subr.mxu0 0.0
        %7714 = vmatpush1.msra.mxu0 %v7707
        %7715 = vmatprep.subr.mxu0 0.0
        %7716 = vmatpush1.msra.mxu0 %v7706
        %7717 = vmatprep.subr.mxu0 0.0
        %7718 = vmatpush1.msra.mxu0 %v7705
        %7719 = vmatprep.subr.mxu0 0.0
        %7720 = vmatpush1.msra.mxu0 %v7704
        %7721 = vmatprep.subr.mxu0 0.0
        %7722 = vmatpush1.msra.mxu0 %v7703
        %7723 = vmatprep.subr.mxu0 0.0
        %7724 = vmatpush1.msra.mxu0 %v7702
        %7725 = vmatprep.subr.mxu0 0.0
        %7726 = vmatpush1.msra.mxu0 %v7701
        %7727 = vmatprep.subr.mxu0 0.0
        %7728 = vmatpush1.msra.mxu0 %v7700
        %7729 = vmatprep.subr.mxu0 0.0
        %7730 = vmatpush1.msra.mxu0 %v7699
        %7731 = vmatprep.subr.mxu0 0.0
        %7732 = vmatpush1.msra.mxu0 %v7698
        %7733 = vmatprep.subr.mxu0 0.0
        %7734 = vmatpush1.msra.mxu0 %v7697
        %7735 = vmatprep.subr.mxu0 0.0
        %7736 = vmatpush1.msra.mxu0 %v7696
        %7737 = vmatprep.subr.mxu0 0.0
        %7738 = vmatpush1.msra.mxu0 %v7695
        %7739 = vmatprep.subr.mxu0 0.0
        %7740 = vmatpush1.msra.mxu0 %v7694
        %7741 = vmatprep.subr.mxu0 0.0
        %7742 = vmatpush1.msra.mxu0 %v7693
        %7743 = vmatprep.subr.mxu0 0.0
        %7744 = vmatpush2.msra.mxu0 0.0
        %7745 = vmatprep.subr.mxu0 0.0
        %7746 = vmatpush2.msra.mxu0 0.0
        %7747 = vmatprep.subr.mxu0 0.0
        %7748 = vmatpush2.msra.mxu0 0.0
        %7749 = vmatprep.subr.mxu0 0.0
        %7750 = vmatpush2.msra.mxu0 0.0
        %7751 = vmatprep.subr.mxu0 0.0
        %7752 = vmatpush2.msra.mxu0 0.0
        %7753 = vmatprep.subr.mxu0 0.0
        %7754 = vmatpush2.msra.mxu0 0.0
        %7755 = vmatprep.subr.mxu0 0.0
        %7756 = vmatpush2.msra.mxu0 0.0
        %7757 = vmatprep.subr.mxu0 0.0
        %7758 = vmatpush2.msra.mxu0 0.0
        %7759 = vmatprep.subr.mxu0 0.0
        %7760 = vmatpush2.msra.mxu0 0.0
        %7761 = vmatprep.subr.mxu0 0.0
        %7762 = vmatpush2.msra.mxu0 0.0
        %7763 = vmatprep.subr.mxu0 0.0
        %7764 = vmatpush2.msra.mxu0 0.0
        %7765 = vmatprep.subr.mxu0 0.0
        %7766 = vmatpush2.msra.mxu0 0.0
        %7767 = vmatprep.subr.mxu0 0.0
        %7768 = vmatpush2.msra.mxu0 0.0
        %7769 = vmatprep.subr.mxu0 0.0
        %7770 = vmatpush2.msra.mxu0 0.0
        %7771 = vmatprep.subr.mxu0 0.0
        %7772 = vmatpush2.msra.mxu0 0.0
        %7773 = vmatprep.subr.mxu0 0.0
        %7774 = vmatpush2.msra.mxu0 0.0
        %7775 = vmatprep.mubr.f32.mxu0 0.0
        %7776 = vmatmul.mubr.f32.gmra.mxu0 %v7709
        %v7777 = vpop.f32.mrf.mxu0
        %v7778 = vadd.f32 0.0, %v7777
        %v7779 = vpop.f32.mrf.mxu0
        %7780 = vdwg.mxu0
        %v7781 = vadd.f32 %v7691, %v7778
        %s7782 = scalar_lea.vmem [#allocation11], 512
        %v7783 = vld [vmem:[%s7782] sm:$0xff]
        %v7784 = vld [vmem:[%s7782 + $0x8] sm:$0xff]
        %v7785 = vld [vmem:[%s7782 + $0x10] sm:$0xff]
        %v7786 = vld [vmem:[%s7782 + $0x18] sm:$0xff]
        %v7787 = vld [vmem:[%s7782 + $0x20] sm:$0xff]
        %v7788 = vld [vmem:[%s7782 + $0x28] sm:$0xff]
        %v7789 = vld [vmem:[%s7782 + $0x30] sm:$0xff]
        %v7790 = vld [vmem:[%s7782 + $0x38] sm:$0xff]
        %v7791 = vld [vmem:[%s7782 + $0x40] sm:$0xff]
        %v7792 = vld [vmem:[%s7782 + $0x48] sm:$0xff]
        %v7793 = vld [vmem:[%s7782 + $0x50] sm:$0xff]
        %v7794 = vld [vmem:[%s7782 + $0x58] sm:$0xff]
        %v7795 = vld [vmem:[%s7782 + $0x60] sm:$0xff]
        %v7796 = vld [vmem:[%s7782 + $0x68] sm:$0xff]
        %v7797 = vld [vmem:[%s7782 + $0x70] sm:$0xff]
        %v7798 = vld [vmem:[%s7782 + $0x78] sm:$0xff]
        %v7799 = vrot.slane %v7421, 4
        %7801 = vmatprep.subr.mxu0 0.0
        %7802 = vmatpush1.msra.mxu0 %v7798
        %7803 = vmatprep.subr.mxu0 0.0
        %7804 = vmatpush1.msra.mxu0 %v7797
        %7805 = vmatprep.subr.mxu0 0.0
        %7806 = vmatpush1.msra.mxu0 %v7796
        %7807 = vmatprep.subr.mxu0 0.0
        %7808 = vmatpush1.msra.mxu0 %v7795
        %7809 = vmatprep.subr.mxu0 0.0
        %7810 = vmatpush1.msra.mxu0 %v7794
        %7811 = vmatprep.subr.mxu0 0.0
        %7812 = vmatpush1.msra.mxu0 %v7793
        %7813 = vmatprep.subr.mxu0 0.0
        %7814 = vmatpush1.msra.mxu0 %v7792
        %7815 = vmatprep.subr.mxu0 0.0
        %7816 = vmatpush1.msra.mxu0 %v7791
        %7817 = vmatprep.subr.mxu0 0.0
        %7818 = vmatpush1.msra.mxu0 %v7790
        %7819 = vmatprep.subr.mxu0 0.0
        %7820 = vmatpush1.msra.mxu0 %v7789
        %7821 = vmatprep.subr.mxu0 0.0
        %7822 = vmatpush1.msra.mxu0 %v7788
        %7823 = vmatprep.subr.mxu0 0.0
        %7824 = vmatpush1.msra.mxu0 %v7787
        %7825 = vmatprep.subr.mxu0 0.0
        %7826 = vmatpush1.msra.mxu0 %v7786
        %7827 = vmatprep.subr.mxu0 0.0
        %7828 = vmatpush1.msra.mxu0 %v7785
        %7829 = vmatprep.subr.mxu0 0.0
        %7830 = vmatpush1.msra.mxu0 %v7784
        %7831 = vmatprep.subr.mxu0 0.0
        %7832 = vmatpush1.msra.mxu0 %v7783
        %7833 = vmatprep.subr.mxu0 0.0
        %7834 = vmatpush2.msra.mxu0 0.0
        %7835 = vmatprep.subr.mxu0 0.0
        %7836 = vmatpush2.msra.mxu0 0.0
        %7837 = vmatprep.subr.mxu0 0.0
        %7838 = vmatpush2.msra.mxu0 0.0
        %7839 = vmatprep.subr.mxu0 0.0
        %7840 = vmatpush2.msra.mxu0 0.0
        %7841 = vmatprep.subr.mxu0 0.0
        %7842 = vmatpush2.msra.mxu0 0.0
        %7843 = vmatprep.subr.mxu0 0.0
        %7844 = vmatpush2.msra.mxu0 0.0
        %7845 = vmatprep.subr.mxu0 0.0
        %7846 = vmatpush2.msra.mxu0 0.0
        %7847 = vmatprep.subr.mxu0 0.0
        %7848 = vmatpush2.msra.mxu0 0.0
        %7849 = vmatprep.subr.mxu0 0.0
        %7850 = vmatpush2.msra.mxu0 0.0
        %7851 = vmatprep.subr.mxu0 0.0
        %7852 = vmatpush2.msra.mxu0 0.0
        %7853 = vmatprep.subr.mxu0 0.0
        %7854 = vmatpush2.msra.mxu0 0.0
        %7855 = vmatprep.subr.mxu0 0.0
        %7856 = vmatpush2.msra.mxu0 0.0
        %7857 = vmatprep.subr.mxu0 0.0
        %7858 = vmatpush2.msra.mxu0 0.0
        %7859 = vmatprep.subr.mxu0 0.0
        %7860 = vmatpush2.msra.mxu0 0.0
        %7861 = vmatprep.subr.mxu0 0.0
        %7862 = vmatpush2.msra.mxu0 0.0
        %7863 = vmatprep.subr.mxu0 0.0
        %7864 = vmatpush2.msra.mxu0 0.0
        %7865 = vmatprep.mubr.f32.mxu0 0.0
        %7866 = vmatmul.mubr.f32.gmra.mxu0 %v7799
        %v7867 = vpop.f32.mrf.mxu0
        %v7868 = vadd.f32 0.0, %v7867
        %v7869 = vpop.f32.mrf.mxu0
        %7870 = vdwg.mxu0
        %v7871 = vadd.f32 %v7781, %v7868
        %s7872 = scalar_lea.vmem [#allocation11], 640
        %v7873 = vld [vmem:[%s7872] sm:$0xff]
        %v7874 = vld [vmem:[%s7872 + $0x8] sm:$0xff]
        %v7875 = vld [vmem:[%s7872 + $0x10] sm:$0xff]
        %v7876 = vld [vmem:[%s7872 + $0x18] sm:$0xff]
        %v7877 = vld [vmem:[%s7872 + $0x20] sm:$0xff]
        %v7878 = vld [vmem:[%s7872 + $0x28] sm:$0xff]
        %v7879 = vld [vmem:[%s7872 + $0x30] sm:$0xff]
        %v7880 = vld [vmem:[%s7872 + $0x38] sm:$0xff]
        %v7881 = vld [vmem:[%s7872 + $0x40] sm:$0xff]
        %v7882 = vld [vmem:[%s7872 + $0x48] sm:$0xff]
        %v7883 = vld [vmem:[%s7872 + $0x50] sm:$0xff]
        %v7884 = vld [vmem:[%s7872 + $0x58] sm:$0xff]
        %v7885 = vld [vmem:[%s7872 + $0x60] sm:$0xff]
        %v7886 = vld [vmem:[%s7872 + $0x68] sm:$0xff]
        %v7887 = vld [vmem:[%s7872 + $0x70] sm:$0xff]
        %v7888 = vld [vmem:[%s7872 + $0x78] sm:$0xff]
        %v7889 = vrot.slane %v7421, 5
        %7891 = vmatprep.subr.mxu0 0.0
        %7892 = vmatpush1.msra.mxu0 %v7888
        %7893 = vmatprep.subr.mxu0 0.0
        %7894 = vmatpush1.msra.mxu0 %v7887
        %7895 = vmatprep.subr.mxu0 0.0
        %7896 = vmatpush1.msra.mxu0 %v7886
        %7897 = vmatprep.subr.mxu0 0.0
        %7898 = vmatpush1.msra.mxu0 %v7885
        %7899 = vmatprep.subr.mxu0 0.0
        %7900 = vmatpush1.msra.mxu0 %v7884
        %7901 = vmatprep.subr.mxu0 0.0
        %7902 = vmatpush1.msra.mxu0 %v7883
        %7903 = vmatprep.subr.mxu0 0.0
        %7904 = vmatpush1.msra.mxu0 %v7882
        %7905 = vmatprep.subr.mxu0 0.0
        %7906 = vmatpush1.msra.mxu0 %v7881
        %7907 = vmatprep.subr.mxu0 0.0
        %7908 = vmatpush1.msra.mxu0 %v7880
        %7909 = vmatprep.subr.mxu0 0.0
        %7910 = vmatpush1.msra.mxu0 %v7879
        %7911 = vmatprep.subr.mxu0 0.0
        %7912 = vmatpush1.msra.mxu0 %v7878
        %7913 = vmatprep.subr.mxu0 0.0
        %7914 = vmatpush1.msra.mxu0 %v7877
        %7915 = vmatprep.subr.mxu0 0.0
        %7916 = vmatpush1.msra.mxu0 %v7876
        %7917 = vmatprep.subr.mxu0 0.0
        %7918 = vmatpush1.msra.mxu0 %v7875
        %7919 = vmatprep.subr.mxu0 0.0
        %7920 = vmatpush1.msra.mxu0 %v7874
        %7921 = vmatprep.subr.mxu0 0.0
        %7922 = vmatpush1.msra.mxu0 %v7873
        %7923 = vmatprep.subr.mxu0 0.0
        %7924 = vmatpush2.msra.mxu0 0.0
        %7925 = vmatprep.subr.mxu0 0.0
        %7926 = vmatpush2.msra.mxu0 0.0
        %7927 = vmatprep.subr.mxu0 0.0
        %7928 = vmatpush2.msra.mxu0 0.0
        %7929 = vmatprep.subr.mxu0 0.0
        %7930 = vmatpush2.msra.mxu0 0.0
        %7931 = vmatprep.subr.mxu0 0.0
        %7932 = vmatpush2.msra.mxu0 0.0
        %7933 = vmatprep.subr.mxu0 0.0
        %7934 = vmatpush2.msra.mxu0 0.0
        %7935 = vmatprep.subr.mxu0 0.0
        %7936 = vmatpush2.msra.mxu0 0.0
        %7937 = vmatprep.subr.mxu0 0.0
        %7938 = vmatpush2.msra.mxu0 0.0
        %7939 = vmatprep.subr.mxu0 0.0
        %7940 = vmatpush2.msra.mxu0 0.0
        %7941 = vmatprep.subr.mxu0 0.0
        %7942 = vmatpush2.msra.mxu0 0.0
        %7943 = vmatprep.subr.mxu0 0.0
        %7944 = vmatpush2.msra.mxu0 0.0
        %7945 = vmatprep.subr.mxu0 0.0
        %7946 = vmatpush2.msra.mxu0 0.0
        %7947 = vmatprep.subr.mxu0 0.0
        %7948 = vmatpush2.msra.mxu0 0.0
        %7949 = vmatprep.subr.mxu0 0.0
        %7950 = vmatpush2.msra.mxu0 0.0
        %7951 = vmatprep.subr.mxu0 0.0
        %7952 = vmatpush2.msra.mxu0 0.0
        %7953 = vmatprep.subr.mxu0 0.0
        %7954 = vmatpush2.msra.mxu0 0.0
        %7955 = vmatprep.mubr.f32.mxu0 0.0
        %7956 = vmatmul.mubr.f32.gmra.mxu0 %v7889
        %v7957 = vpop.f32.mrf.mxu0
        %v7958 = vadd.f32 0.0, %v7957
        %v7959 = vpop.f32.mrf.mxu0
        %7960 = vdwg.mxu0
        %v7961 = vadd.f32 %v7871, %v7958
        %s7962 = scalar_lea.vmem [#allocation11], 768
        %v7963 = vld [vmem:[%s7962] sm:$0xff]
        %v7964 = vld [vmem:[%s7962 + $0x8] sm:$0xff]
        %v7965 = vld [vmem:[%s7962 + $0x10] sm:$0xff]
        %v7966 = vld [vmem:[%s7962 + $0x18] sm:$0xff]
        %v7967 = vld [vmem:[%s7962 + $0x20] sm:$0xff]
        %v7968 = vld [vmem:[%s7962 + $0x28] sm:$0xff]
        %v7969 = vld [vmem:[%s7962 + $0x30] sm:$0xff]
        %v7970 = vld [vmem:[%s7962 + $0x38] sm:$0xff]
        %v7971 = vld [vmem:[%s7962 + $0x40] sm:$0xff]
        %v7972 = vld [vmem:[%s7962 + $0x48] sm:$0xff]
        %v7973 = vld [vmem:[%s7962 + $0x50] sm:$0xff]
        %v7974 = vld [vmem:[%s7962 + $0x58] sm:$0xff]
        %v7975 = vld [vmem:[%s7962 + $0x60] sm:$0xff]
        %v7976 = vld [vmem:[%s7962 + $0x68] sm:$0xff]
        %v7977 = vld [vmem:[%s7962 + $0x70] sm:$0xff]
        %v7978 = vld [vmem:[%s7962 + $0x78] sm:$0xff]
        %v7979 = vrot.slane %v7421, 6
        %7981 = vmatprep.subr.mxu0 0.0
        %7982 = vmatpush1.msra.mxu0 %v7978
        %7983 = vmatprep.subr.mxu0 0.0
        %7984 = vmatpush1.msra.mxu0 %v7977
        %7985 = vmatprep.subr.mxu0 0.0
        %7986 = vmatpush1.msra.mxu0 %v7976
        %7987 = vmatprep.subr.mxu0 0.0
        %7988 = vmatpush1.msra.mxu0 %v7975
        %7989 = vmatprep.subr.mxu0 0.0
        %7990 = vmatpush1.msra.mxu0 %v7974
        %7991 = vmatprep.subr.mxu0 0.0
        %7992 = vmatpush1.msra.mxu0 %v7973
        %7993 = vmatprep.subr.mxu0 0.0
        %7994 = vmatpush1.msra.mxu0 %v7972
        %7995 = vmatprep.subr.mxu0 0.0
        %7996 = vmatpush1.msra.mxu0 %v7971
        %7997 = vmatprep.subr.mxu0 0.0
        %7998 = vmatpush1.msra.mxu0 %v7970
        %7999 = vmatprep.subr.mxu0 0.0
        %8000 = vmatpush1.msra.mxu0 %v7969
        %8001 = vmatprep.subr.mxu0 0.0
        %8002 = vmatpush1.msra.mxu0 %v7968
        %8003 = vmatprep.subr.mxu0 0.0
        %8004 = vmatpush1.msra.mxu0 %v7967
        %8005 = vmatprep.subr.mxu0 0.0
        %8006 = vmatpush1.msra.mxu0 %v7966
        %8007 = vmatprep.subr.mxu0 0.0
        %8008 = vmatpush1.msra.mxu0 %v7965
        %8009 = vmatprep.subr.mxu0 0.0
        %8010 = vmatpush1.msra.mxu0 %v7964
        %8011 = vmatprep.subr.mxu0 0.0
        %8012 = vmatpush1.msra.mxu0 %v7963
        %8013 = vmatprep.subr.mxu0 0.0
        %8014 = vmatpush2.msra.mxu0 0.0
        %8015 = vmatprep.subr.mxu0 0.0
        %8016 = vmatpush2.msra.mxu0 0.0
        %8017 = vmatprep.subr.mxu0 0.0
        %8018 = vmatpush2.msra.mxu0 0.0
        %8019 = vmatprep.subr.mxu0 0.0
        %8020 = vmatpush2.msra.mxu0 0.0
        %8021 = vmatprep.subr.mxu0 0.0
        %8022 = vmatpush2.msra.mxu0 0.0
        %8023 = vmatprep.subr.mxu0 0.0
        %8024 = vmatpush2.msra.mxu0 0.0
        %8025 = vmatprep.subr.mxu0 0.0
        %8026 = vmatpush2.msra.mxu0 0.0
        %8027 = vmatprep.subr.mxu0 0.0
        %8028 = vmatpush2.msra.mxu0 0.0
        %8029 = vmatprep.subr.mxu0 0.0
        %8030 = vmatpush2.msra.mxu0 0.0
        %8031 = vmatprep.subr.mxu0 0.0
        %8032 = vmatpush2.msra.mxu0 0.0
        %8033 = vmatprep.subr.mxu0 0.0
        %8034 = vmatpush2.msra.mxu0 0.0
        %8035 = vmatprep.subr.mxu0 0.0
        %8036 = vmatpush2.msra.mxu0 0.0
        %8037 = vmatprep.subr.mxu0 0.0
        %8038 = vmatpush2.msra.mxu0 0.0
        %8039 = vmatprep.subr.mxu0 0.0
        %8040 = vmatpush2.msra.mxu0 0.0
        %8041 = vmatprep.subr.mxu0 0.0
        %8042 = vmatpush2.msra.mxu0 0.0
        %8043 = vmatprep.subr.mxu0 0.0
        %8044 = vmatpush2.msra.mxu0 0.0
        %8045 = vmatprep.mubr.f32.mxu0 0.0
        %8046 = vmatmul.mubr.f32.gmra.mxu0 %v7979
        %v8047 = vpop.f32.mrf.mxu0
        %v8048 = vadd.f32 0.0, %v8047
        %v8049 = vpop.f32.mrf.mxu0
        %8050 = vdwg.mxu0
        %v8051 = vadd.f32 %v7961, %v8048
        %s8052 = scalar_lea.vmem [#allocation11], 896
        %v8053 = vld [vmem:[%s8052] sm:$0xff]
        %v8054 = vld [vmem:[%s8052 + $0x8] sm:$0xff]
        %v8055 = vld [vmem:[%s8052 + $0x10] sm:$0xff]
        %v8056 = vld [vmem:[%s8052 + $0x18] sm:$0xff]
        %v8057 = vld [vmem:[%s8052 + $0x20] sm:$0xff]
        %v8058 = vld [vmem:[%s8052 + $0x28] sm:$0xff]
        %v8059 = vld [vmem:[%s8052 + $0x30] sm:$0xff]
        %v8060 = vld [vmem:[%s8052 + $0x38] sm:$0xff]
        %v8061 = vld [vmem:[%s8052 + $0x40] sm:$0xff]
        %v8062 = vld [vmem:[%s8052 + $0x48] sm:$0xff]
        %v8063 = vld [vmem:[%s8052 + $0x50] sm:$0xff]
        %v8064 = vld [vmem:[%s8052 + $0x58] sm:$0xff]
        %v8065 = vld [vmem:[%s8052 + $0x60] sm:$0xff]
        %v8066 = vld [vmem:[%s8052 + $0x68] sm:$0xff]
        %v8067 = vld [vmem:[%s8052 + $0x70] sm:$0xff]
        %v8068 = vld [vmem:[%s8052 + $0x78] sm:$0xff]
        %v8069 = vrot.slane %v7421, 7
        %8071 = vmatprep.subr.mxu0 0.0
        %8072 = vmatpush1.msra.mxu0 %v8068
        %8073 = vmatprep.subr.mxu0 0.0
        %8074 = vmatpush1.msra.mxu0 %v8067
        %8075 = vmatprep.subr.mxu0 0.0
        %8076 = vmatpush1.msra.mxu0 %v8066
        %8077 = vmatprep.subr.mxu0 0.0
        %8078 = vmatpush1.msra.mxu0 %v8065
        %8079 = vmatprep.subr.mxu0 0.0
        %8080 = vmatpush1.msra.mxu0 %v8064
        %8081 = vmatprep.subr.mxu0 0.0
        %8082 = vmatpush1.msra.mxu0 %v8063
        %8083 = vmatprep.subr.mxu0 0.0
        %8084 = vmatpush1.msra.mxu0 %v8062
        %8085 = vmatprep.subr.mxu0 0.0
        %8086 = vmatpush1.msra.mxu0 %v8061
        %8087 = vmatprep.subr.mxu0 0.0
        %8088 = vmatpush1.msra.mxu0 %v8060
        %8089 = vmatprep.subr.mxu0 0.0
        %8090 = vmatpush1.msra.mxu0 %v8059
        %8091 = vmatprep.subr.mxu0 0.0
        %8092 = vmatpush1.msra.mxu0 %v8058
        %8093 = vmatprep.subr.mxu0 0.0
        %8094 = vmatpush1.msra.mxu0 %v8057
        %8095 = vmatprep.subr.mxu0 0.0
        %8096 = vmatpush1.msra.mxu0 %v8056
        %8097 = vmatprep.subr.mxu0 0.0
        %8098 = vmatpush1.msra.mxu0 %v8055
        %8099 = vmatprep.subr.mxu0 0.0
        %8100 = vmatpush1.msra.mxu0 %v8054
        %8101 = vmatprep.subr.mxu0 0.0
        %8102 = vmatpush1.msra.mxu0 %v8053
        %8103 = vmatprep.subr.mxu0 0.0
        %8104 = vmatpush2.msra.mxu0 0.0
        %8105 = vmatprep.subr.mxu0 0.0
        %8106 = vmatpush2.msra.mxu0 0.0
        %8107 = vmatprep.subr.mxu0 0.0
        %8108 = vmatpush2.msra.mxu0 0.0
        %8109 = vmatprep.subr.mxu0 0.0
        %8110 = vmatpush2.msra.mxu0 0.0
        %8111 = vmatprep.subr.mxu0 0.0
        %8112 = vmatpush2.msra.mxu0 0.0
        %8113 = vmatprep.subr.mxu0 0.0
        %8114 = vmatpush2.msra.mxu0 0.0
        %8115 = vmatprep.subr.mxu0 0.0
        %8116 = vmatpush2.msra.mxu0 0.0
        %8117 = vmatprep.subr.mxu0 0.0
        %8118 = vmatpush2.msra.mxu0 0.0
        %8119 = vmatprep.subr.mxu0 0.0
        %8120 = vmatpush2.msra.mxu0 0.0
        %8121 = vmatprep.subr.mxu0 0.0
        %8122 = vmatpush2.msra.mxu0 0.0
        %8123 = vmatprep.subr.mxu0 0.0
        %8124 = vmatpush2.msra.mxu0 0.0
        %8125 = vmatprep.subr.mxu0 0.0
        %8126 = vmatpush2.msra.mxu0 0.0
        %8127 = vmatprep.subr.mxu0 0.0
        %8128 = vmatpush2.msra.mxu0 0.0
        %8129 = vmatprep.subr.mxu0 0.0
        %8130 = vmatpush2.msra.mxu0 0.0
        %8131 = vmatprep.subr.mxu0 0.0
        %8132 = vmatpush2.msra.mxu0 0.0
        %8133 = vmatprep.subr.mxu0 0.0
        %8134 = vmatpush2.msra.mxu0 0.0
        %8135 = vmatprep.mubr.f32.mxu0 0.0
        %8136 = vmatmul.mubr.f32.gmra.mxu0 %v8069
        %v8137 = vpop.f32.mrf.mxu0
        %v8138 = vadd.f32 0.0, %v8137
        %v8139 = vpop.f32.mrf.mxu0
        %8140 = vdwg.mxu0
        %v8141 = vadd.f32 %v8051, %v8138
        %s8142 = scalar_lea.vmem [#allocation11], 1024
        %v8143 = vld [vmem:[%s8142] sm:$0xff]
        %v8144 = vld [vmem:[%s8142 + $0x8] sm:$0xff]
        %v8145 = vld [vmem:[%s8142 + $0x10] sm:$0xff]
        %v8146 = vld [vmem:[%s8142 + $0x18] sm:$0xff]
        %v8147 = vld [vmem:[%s8142 + $0x20] sm:$0xff]
        %v8148 = vld [vmem:[%s8142 + $0x28] sm:$0xff]
        %v8149 = vld [vmem:[%s8142 + $0x30] sm:$0xff]
        %v8150 = vld [vmem:[%s8142 + $0x38] sm:$0xff]
        %v8151 = vld [vmem:[%s8142 + $0x40] sm:$0xff]
        %v8152 = vld [vmem:[%s8142 + $0x48] sm:$0xff]
        %v8153 = vld [vmem:[%s8142 + $0x50] sm:$0xff]
        %v8154 = vld [vmem:[%s8142 + $0x58] sm:$0xff]
        %v8155 = vld [vmem:[%s8142 + $0x60] sm:$0xff]
        %v8156 = vld [vmem:[%s8142 + $0x68] sm:$0xff]
        %v8157 = vld [vmem:[%s8142 + $0x70] sm:$0xff]
        %v8158 = vld [vmem:[%s8142 + $0x78] sm:$0xff]
        %8159 = vmatprep.subr.mxu0 0.0
        %8160 = vmatpush1.msra.mxu0 %v8158
        %8161 = vmatprep.subr.mxu0 0.0
        %8162 = vmatpush1.msra.mxu0 %v8157
        %8163 = vmatprep.subr.mxu0 0.0
        %8164 = vmatpush1.msra.mxu0 %v8156
        %8165 = vmatprep.subr.mxu0 0.0
        %8166 = vmatpush1.msra.mxu0 %v8155
        %8167 = vmatprep.subr.mxu0 0.0
        %8168 = vmatpush1.msra.mxu0 %v8154
        %8169 = vmatprep.subr.mxu0 0.0
        %8170 = vmatpush1.msra.mxu0 %v8153
        %8171 = vmatprep.subr.mxu0 0.0
        %8172 = vmatpush1.msra.mxu0 %v8152
        %8173 = vmatprep.subr.mxu0 0.0
        %8174 = vmatpush1.msra.mxu0 %v8151
        %8175 = vmatprep.subr.mxu0 0.0
        %8176 = vmatpush1.msra.mxu0 %v8150
        %8177 = vmatprep.subr.mxu0 0.0
        %8178 = vmatpush1.msra.mxu0 %v8149
        %8179 = vmatprep.subr.mxu0 0.0
        %8180 = vmatpush1.msra.mxu0 %v8148
        %8181 = vmatprep.subr.mxu0 0.0
        %8182 = vmatpush1.msra.mxu0 %v8147
        %8183 = vmatprep.subr.mxu0 0.0
        %8184 = vmatpush1.msra.mxu0 %v8146
        %8185 = vmatprep.subr.mxu0 0.0
        %8186 = vmatpush1.msra.mxu0 %v8145
        %8187 = vmatprep.subr.mxu0 0.0
        %8188 = vmatpush1.msra.mxu0 %v8144
        %8189 = vmatprep.subr.mxu0 0.0
        %8190 = vmatpush1.msra.mxu0 %v8143
        %8191 = vmatprep.subr.mxu0 0.0
        %8192 = vmatpush2.msra.mxu0 0.0
        %8193 = vmatprep.subr.mxu0 0.0
        %8194 = vmatpush2.msra.mxu0 0.0
        %8195 = vmatprep.subr.mxu0 0.0
        %8196 = vmatpush2.msra.mxu0 0.0
        %8197 = vmatprep.subr.mxu0 0.0
        %8198 = vmatpush2.msra.mxu0 0.0
        %8199 = vmatprep.subr.mxu0 0.0
        %8200 = vmatpush2.msra.mxu0 0.0
        %8201 = vmatprep.subr.mxu0 0.0
        %8202 = vmatpush2.msra.mxu0 0.0
        %8203 = vmatprep.subr.mxu0 0.0
        %8204 = vmatpush2.msra.mxu0 0.0
        %8205 = vmatprep.subr.mxu0 0.0
        %8206 = vmatpush2.msra.mxu0 0.0
        %8207 = vmatprep.subr.mxu0 0.0
        %8208 = vmatpush2.msra.mxu0 0.0
        %8209 = vmatprep.subr.mxu0 0.0
        %8210 = vmatpush2.msra.mxu0 0.0
        %8211 = vmatprep.subr.mxu0 0.0
        %8212 = vmatpush2.msra.mxu0 0.0
        %8213 = vmatprep.subr.mxu0 0.0
        %8214 = vmatpush2.msra.mxu0 0.0
        %8215 = vmatprep.subr.mxu0 0.0
        %8216 = vmatpush2.msra.mxu0 0.0
        %8217 = vmatprep.subr.mxu0 0.0
        %8218 = vmatpush2.msra.mxu0 0.0
        %8219 = vmatprep.subr.mxu0 0.0
        %8220 = vmatpush2.msra.mxu0 0.0
        %8221 = vmatprep.subr.mxu0 0.0
        %8222 = vmatpush2.msra.mxu0 0.0
        %8223 = vmatprep.mubr.f32.mxu0 0.0
        %8224 = vmatmul.mubr.f32.gmra.mxu0 %v7422
        %v8225 = vpop.f32.mrf.mxu0
        %v8226 = vadd.f32 0.0, %v8225
        %v8227 = vpop.f32.mrf.mxu0
        %8228 = vdwg.mxu0
        %v8229 = vadd.f32 %v8141, %v8226
        %s8230 = scalar_lea.vmem [#allocation11], 1152
        %v8231 = vld [vmem:[%s8230] sm:$0xff]
        %v8232 = vld [vmem:[%s8230 + $0x8] sm:$0xff]
        %v8233 = vld [vmem:[%s8230 + $0x10] sm:$0xff]
        %v8234 = vld [vmem:[%s8230 + $0x18] sm:$0xff]
        %v8235 = vld [vmem:[%s8230 + $0x20] sm:$0xff]
        %v8236 = vld [vmem:[%s8230 + $0x28] sm:$0xff]
        %v8237 = vld [vmem:[%s8230 + $0x30] sm:$0xff]
        %v8238 = vld [vmem:[%s8230 + $0x38] sm:$0xff]
        %v8239 = vld [vmem:[%s8230 + $0x40] sm:$0xff]
        %v8240 = vld [vmem:[%s8230 + $0x48] sm:$0xff]
        %v8241 = vld [vmem:[%s8230 + $0x50] sm:$0xff]
        %v8242 = vld [vmem:[%s8230 + $0x58] sm:$0xff]
        %v8243 = vld [vmem:[%s8230 + $0x60] sm:$0xff]
        %v8244 = vld [vmem:[%s8230 + $0x68] sm:$0xff]
        %v8245 = vld [vmem:[%s8230 + $0x70] sm:$0xff]
        %v8246 = vld [vmem:[%s8230 + $0x78] sm:$0xff]
        %v8248 = vrot.slane %v7422, 1
        %8250 = vmatprep.subr.mxu0 0.0
        %8251 = vmatpush1.msra.mxu0 %v8246
        %8252 = vmatprep.subr.mxu0 0.0
        %8253 = vmatpush1.msra.mxu0 %v8245
        %8254 = vmatprep.subr.mxu0 0.0
        %8255 = vmatpush1.msra.mxu0 %v8244
        %8256 = vmatprep.subr.mxu0 0.0
        %8257 = vmatpush1.msra.mxu0 %v8243
        %8258 = vmatprep.subr.mxu0 0.0
        %8259 = vmatpush1.msra.mxu0 %v8242
        %8260 = vmatprep.subr.mxu0 0.0
        %8261 = vmatpush1.msra.mxu0 %v8241
        %8262 = vmatprep.subr.mxu0 0.0
        %8263 = vmatpush1.msra.mxu0 %v8240
        %8264 = vmatprep.subr.mxu0 0.0
        %8265 = vmatpush1.msra.mxu0 %v8239
        %8266 = vmatprep.subr.mxu0 0.0
        %8267 = vmatpush1.msra.mxu0 %v8238
        %8268 = vmatprep.subr.mxu0 0.0
        %8269 = vmatpush1.msra.mxu0 %v8237
        %8270 = vmatprep.subr.mxu0 0.0
        %8271 = vmatpush1.msra.mxu0 %v8236
        %8272 = vmatprep.subr.mxu0 0.0
        %8273 = vmatpush1.msra.mxu0 %v8235
        %8274 = vmatprep.subr.mxu0 0.0
        %8275 = vmatpush1.msra.mxu0 %v8234
        %8276 = vmatprep.subr.mxu0 0.0
        %8277 = vmatpush1.msra.mxu0 %v8233
        %8278 = vmatprep.subr.mxu0 0.0
        %8279 = vmatpush1.msra.mxu0 %v8232
        %8280 = vmatprep.subr.mxu0 0.0
        %8281 = vmatpush1.msra.mxu0 %v8231
        %8282 = vmatprep.subr.mxu0 0.0
        %8283 = vmatpush2.msra.mxu0 0.0
        %8284 = vmatprep.subr.mxu0 0.0
        %8285 = vmatpush2.msra.mxu0 0.0
        %8286 = vmatprep.subr.mxu0 0.0
        %8287 = vmatpush2.msra.mxu0 0.0
        %8288 = vmatprep.subr.mxu0 0.0
        %8289 = vmatpush2.msra.mxu0 0.0
        %8290 = vmatprep.subr.mxu0 0.0
        %8291 = vmatpush2.msra.mxu0 0.0
        %8292 = vmatprep.subr.mxu0 0.0
        %8293 = vmatpush2.msra.mxu0 0.0
        %8294 = vmatprep.subr.mxu0 0.0
        %8295 = vmatpush2.msra.mxu0 0.0
        %8296 = vmatprep.subr.mxu0 0.0
        %8297 = vmatpush2.msra.mxu0 0.0
        %8298 = vmatprep.subr.mxu0 0.0
        %8299 = vmatpush2.msra.mxu0 0.0
        %8300 = vmatprep.subr.mxu0 0.0
        %8301 = vmatpush2.msra.mxu0 0.0
        %8302 = vmatprep.subr.mxu0 0.0
        %8303 = vmatpush2.msra.mxu0 0.0
        %8304 = vmatprep.subr.mxu0 0.0
        %8305 = vmatpush2.msra.mxu0 0.0
        %8306 = vmatprep.subr.mxu0 0.0
        %8307 = vmatpush2.msra.mxu0 0.0
        %8308 = vmatprep.subr.mxu0 0.0
        %8309 = vmatpush2.msra.mxu0 0.0
        %8310 = vmatprep.subr.mxu0 0.0
        %8311 = vmatpush2.msra.mxu0 0.0
        %8312 = vmatprep.subr.mxu0 0.0
        %8313 = vmatpush2.msra.mxu0 0.0
        %8314 = vmatprep.mubr.f32.mxu0 0.0
        %8315 = vmatmul.mubr.f32.gmra.mxu0 %v8248
        %v8316 = vpop.f32.mrf.mxu0
        %v8317 = vadd.f32 0.0, %v8316
        %v8318 = vpop.f32.mrf.mxu0
        %8319 = vdwg.mxu0
        %v8320 = vadd.f32 %v8229, %v8317
        %s8321 = scalar_lea.vmem [#allocation11], 1280
        %v8322 = vld [vmem:[%s8321] sm:$0xff]
        %v8323 = vld [vmem:[%s8321 + $0x8] sm:$0xff]
        %v8324 = vld [vmem:[%s8321 + $0x10] sm:$0xff]
        %v8325 = vld [vmem:[%s8321 + $0x18] sm:$0xff]
        %v8326 = vld [vmem:[%s8321 + $0x20] sm:$0xff]
        %v8327 = vld [vmem:[%s8321 + $0x28] sm:$0xff]
        %v8328 = vld [vmem:[%s8321 + $0x30] sm:$0xff]
        %v8329 = vld [vmem:[%s8321 + $0x38] sm:$0xff]
        %v8330 = vld [vmem:[%s8321 + $0x40] sm:$0xff]
        %v8331 = vld [vmem:[%s8321 + $0x48] sm:$0xff]
        %v8332 = vld [vmem:[%s8321 + $0x50] sm:$0xff]
        %v8333 = vld [vmem:[%s8321 + $0x58] sm:$0xff]
        %v8334 = vld [vmem:[%s8321 + $0x60] sm:$0xff]
        %v8335 = vld [vmem:[%s8321 + $0x68] sm:$0xff]
        %v8336 = vld [vmem:[%s8321 + $0x70] sm:$0xff]
        %v8337 = vld [vmem:[%s8321 + $0x78] sm:$0xff]
        %v8338 = vrot.slane %v7422, 2
        %8340 = vmatprep.subr.mxu0 0.0
        %8341 = vmatpush1.msra.mxu0 %v8337
        %8342 = vmatprep.subr.mxu0 0.0
        %8343 = vmatpush1.msra.mxu0 %v8336
        %8344 = vmatprep.subr.mxu0 0.0
        %8345 = vmatpush1.msra.mxu0 %v8335
        %8346 = vmatprep.subr.mxu0 0.0
        %8347 = vmatpush1.msra.mxu0 %v8334
        %8348 = vmatprep.subr.mxu0 0.0
        %8349 = vmatpush1.msra.mxu0 %v8333
        %8350 = vmatprep.subr.mxu0 0.0
        %8351 = vmatpush1.msra.mxu0 %v8332
        %8352 = vmatprep.subr.mxu0 0.0
        %8353 = vmatpush1.msra.mxu0 %v8331
        %8354 = vmatprep.subr.mxu0 0.0
        %8355 = vmatpush1.msra.mxu0 %v8330
        %8356 = vmatprep.subr.mxu0 0.0
        %8357 = vmatpush1.msra.mxu0 %v8329
        %8358 = vmatprep.subr.mxu0 0.0
        %8359 = vmatpush1.msra.mxu0 %v8328
        %8360 = vmatprep.subr.mxu0 0.0
        %8361 = vmatpush1.msra.mxu0 %v8327
        %8362 = vmatprep.subr.mxu0 0.0
        %8363 = vmatpush1.msra.mxu0 %v8326
        %8364 = vmatprep.subr.mxu0 0.0
        %8365 = vmatpush1.msra.mxu0 %v8325
        %8366 = vmatprep.subr.mxu0 0.0
        %8367 = vmatpush1.msra.mxu0 %v8324
        %8368 = vmatprep.subr.mxu0 0.0
        %8369 = vmatpush1.msra.mxu0 %v8323
        %8370 = vmatprep.subr.mxu0 0.0
        %8371 = vmatpush1.msra.mxu0 %v8322
        %8372 = vmatprep.subr.mxu0 0.0
        %8373 = vmatpush2.msra.mxu0 0.0
        %8374 = vmatprep.subr.mxu0 0.0
        %8375 = vmatpush2.msra.mxu0 0.0
        %8376 = vmatprep.subr.mxu0 0.0
        %8377 = vmatpush2.msra.mxu0 0.0
        %8378 = vmatprep.subr.mxu0 0.0
        %8379 = vmatpush2.msra.mxu0 0.0
        %8380 = vmatprep.subr.mxu0 0.0
        %8381 = vmatpush2.msra.mxu0 0.0
        %8382 = vmatprep.subr.mxu0 0.0
        %8383 = vmatpush2.msra.mxu0 0.0
        %8384 = vmatprep.subr.mxu0 0.0
        %8385 = vmatpush2.msra.mxu0 0.0
        %8386 = vmatprep.subr.mxu0 0.0
        %8387 = vmatpush2.msra.mxu0 0.0
        %8388 = vmatprep.subr.mxu0 0.0
        %8389 = vmatpush2.msra.mxu0 0.0
        %8390 = vmatprep.subr.mxu0 0.0
        %8391 = vmatpush2.msra.mxu0 0.0
        %8392 = vmatprep.subr.mxu0 0.0
        %8393 = vmatpush2.msra.mxu0 0.0
        %8394 = vmatprep.subr.mxu0 0.0
        %8395 = vmatpush2.msra.mxu0 0.0
        %8396 = vmatprep.subr.mxu0 0.0
        %8397 = vmatpush2.msra.mxu0 0.0
        %8398 = vmatprep.subr.mxu0 0.0
        %8399 = vmatpush2.msra.mxu0 0.0
        %8400 = vmatprep.subr.mxu0 0.0
        %8401 = vmatpush2.msra.mxu0 0.0
        %8402 = vmatprep.subr.mxu0 0.0
        %8403 = vmatpush2.msra.mxu0 0.0
        %8404 = vmatprep.mubr.f32.mxu0 0.0
        %8405 = vmatmul.mubr.f32.gmra.mxu0 %v8338
        %v8406 = vpop.f32.mrf.mxu0
        %v8407 = vadd.f32 0.0, %v8406
        %v8408 = vpop.f32.mrf.mxu0
        %8409 = vdwg.mxu0
        %v8410 = vadd.f32 %v8320, %v8407
        %s8411 = scalar_lea.vmem [#allocation11], 1408
        %v8412 = vld [vmem:[%s8411] sm:$0xff]
        %v8413 = vld [vmem:[%s8411 + $0x8] sm:$0xff]
        %v8414 = vld [vmem:[%s8411 + $0x10] sm:$0xff]
        %v8415 = vld [vmem:[%s8411 + $0x18] sm:$0xff]
        %v8416 = vld [vmem:[%s8411 + $0x20] sm:$0xff]
        %v8417 = vld [vmem:[%s8411 + $0x28] sm:$0xff]
        %v8418 = vld [vmem:[%s8411 + $0x30] sm:$0xff]
        %v8419 = vld [vmem:[%s8411 + $0x38] sm:$0xff]
        %v8420 = vld [vmem:[%s8411 + $0x40] sm:$0xff]
        %v8421 = vld [vmem:[%s8411 + $0x48] sm:$0xff]
        %v8422 = vld [vmem:[%s8411 + $0x50] sm:$0xff]
        %v8423 = vld [vmem:[%s8411 + $0x58] sm:$0xff]
        %v8424 = vld [vmem:[%s8411 + $0x60] sm:$0xff]
        %v8425 = vld [vmem:[%s8411 + $0x68] sm:$0xff]
        %v8426 = vld [vmem:[%s8411 + $0x70] sm:$0xff]
        %v8427 = vld [vmem:[%s8411 + $0x78] sm:$0xff]
        %v8428 = vrot.slane %v7422, 3
        %8430 = vmatprep.subr.mxu0 0.0
        %8431 = vmatpush1.msra.mxu0 %v8427
        %8432 = vmatprep.subr.mxu0 0.0
        %8433 = vmatpush1.msra.mxu0 %v8426
        %8434 = vmatprep.subr.mxu0 0.0
        %8435 = vmatpush1.msra.mxu0 %v8425
        %8436 = vmatprep.subr.mxu0 0.0
        %8437 = vmatpush1.msra.mxu0 %v8424
        %8438 = vmatprep.subr.mxu0 0.0
        %8439 = vmatpush1.msra.mxu0 %v8423
        %8440 = vmatprep.subr.mxu0 0.0
        %8441 = vmatpush1.msra.mxu0 %v8422
        %8442 = vmatprep.subr.mxu0 0.0
        %8443 = vmatpush1.msra.mxu0 %v8421
        %8444 = vmatprep.subr.mxu0 0.0
        %8445 = vmatpush1.msra.mxu0 %v8420
        %8446 = vmatprep.subr.mxu0 0.0
        %8447 = vmatpush1.msra.mxu0 %v8419
        %8448 = vmatprep.subr.mxu0 0.0
        %8449 = vmatpush1.msra.mxu0 %v8418
        %8450 = vmatprep.subr.mxu0 0.0
        %8451 = vmatpush1.msra.mxu0 %v8417
        %8452 = vmatprep.subr.mxu0 0.0
        %8453 = vmatpush1.msra.mxu0 %v8416
        %8454 = vmatprep.subr.mxu0 0.0
        %8455 = vmatpush1.msra.mxu0 %v8415
        %8456 = vmatprep.subr.mxu0 0.0
        %8457 = vmatpush1.msra.mxu0 %v8414
        %8458 = vmatprep.subr.mxu0 0.0
        %8459 = vmatpush1.msra.mxu0 %v8413
        %8460 = vmatprep.subr.mxu0 0.0
        %8461 = vmatpush1.msra.mxu0 %v8412
        %8462 = vmatprep.subr.mxu0 0.0
        %8463 = vmatpush2.msra.mxu0 0.0
        %8464 = vmatprep.subr.mxu0 0.0
        %8465 = vmatpush2.msra.mxu0 0.0
        %8466 = vmatprep.subr.mxu0 0.0
        %8467 = vmatpush2.msra.mxu0 0.0
        %8468 = vmatprep.subr.mxu0 0.0
        %8469 = vmatpush2.msra.mxu0 0.0
        %8470 = vmatprep.subr.mxu0 0.0
        %8471 = vmatpush2.msra.mxu0 0.0
        %8472 = vmatprep.subr.mxu0 0.0
        %8473 = vmatpush2.msra.mxu0 0.0
        %8474 = vmatprep.subr.mxu0 0.0
        %8475 = vmatpush2.msra.mxu0 0.0
        %8476 = vmatprep.subr.mxu0 0.0
        %8477 = vmatpush2.msra.mxu0 0.0
        %8478 = vmatprep.subr.mxu0 0.0
        %8479 = vmatpush2.msra.mxu0 0.0
        %8480 = vmatprep.subr.mxu0 0.0
        %8481 = vmatpush2.msra.mxu0 0.0
        %8482 = vmatprep.subr.mxu0 0.0
        %8483 = vmatpush2.msra.mxu0 0.0
        %8484 = vmatprep.subr.mxu0 0.0
        %8485 = vmatpush2.msra.mxu0 0.0
        %8486 = vmatprep.subr.mxu0 0.0
        %8487 = vmatpush2.msra.mxu0 0.0
        %8488 = vmatprep.subr.mxu0 0.0
        %8489 = vmatpush2.msra.mxu0 0.0
        %8490 = vmatprep.subr.mxu0 0.0
        %8491 = vmatpush2.msra.mxu0 0.0
        %8492 = vmatprep.subr.mxu0 0.0
        %8493 = vmatpush2.msra.mxu0 0.0
        %8494 = vmatprep.mubr.f32.mxu0 0.0
        %8495 = vmatmul.mubr.f32.gmra.mxu0 %v8428
        %v8496 = vpop.f32.mrf.mxu0
        %v8497 = vadd.f32 0.0, %v8496
        %v8498 = vpop.f32.mrf.mxu0
        %8499 = vdwg.mxu0
        %v8500 = vadd.f32 %v8410, %v8497
        %s8501 = scalar_lea.vmem [#allocation11], 1536
        %v8502 = vld [vmem:[%s8501] sm:$0xff]
        %v8503 = vld [vmem:[%s8501 + $0x8] sm:$0xff]
        %v8504 = vld [vmem:[%s8501 + $0x10] sm:$0xff]
        %v8505 = vld [vmem:[%s8501 + $0x18] sm:$0xff]
        %v8506 = vld [vmem:[%s8501 + $0x20] sm:$0xff]
        %v8507 = vld [vmem:[%s8501 + $0x28] sm:$0xff]
        %v8508 = vld [vmem:[%s8501 + $0x30] sm:$0xff]
        %v8509 = vld [vmem:[%s8501 + $0x38] sm:$0xff]
        %v8510 = vld [vmem:[%s8501 + $0x40] sm:$0xff]
        %v8511 = vld [vmem:[%s8501 + $0x48] sm:$0xff]
        %v8512 = vld [vmem:[%s8501 + $0x50] sm:$0xff]
        %v8513 = vld [vmem:[%s8501 + $0x58] sm:$0xff]
        %v8514 = vld [vmem:[%s8501 + $0x60] sm:$0xff]
        %v8515 = vld [vmem:[%s8501 + $0x68] sm:$0xff]
        %v8516 = vld [vmem:[%s8501 + $0x70] sm:$0xff]
        %v8517 = vld [vmem:[%s8501 + $0x78] sm:$0xff]
        %v8518 = vrot.slane %v7422, 4
        %8520 = vmatprep.subr.mxu0 0.0
        %8521 = vmatpush1.msra.mxu0 %v8517
        %8522 = vmatprep.subr.mxu0 0.0
        %8523 = vmatpush1.msra.mxu0 %v8516
        %8524 = vmatprep.subr.mxu0 0.0
        %8525 = vmatpush1.msra.mxu0 %v8515
        %8526 = vmatprep.subr.mxu0 0.0
        %8527 = vmatpush1.msra.mxu0 %v8514
        %8528 = vmatprep.subr.mxu0 0.0
        %8529 = vmatpush1.msra.mxu0 %v8513
        %8530 = vmatprep.subr.mxu0 0.0
        %8531 = vmatpush1.msra.mxu0 %v8512
        %8532 = vmatprep.subr.mxu0 0.0
        %8533 = vmatpush1.msra.mxu0 %v8511
        %8534 = vmatprep.subr.mxu0 0.0
        %8535 = vmatpush1.msra.mxu0 %v8510
        %8536 = vmatprep.subr.mxu0 0.0
        %8537 = vmatpush1.msra.mxu0 %v8509
        %8538 = vmatprep.subr.mxu0 0.0
        %8539 = vmatpush1.msra.mxu0 %v8508
        %8540 = vmatprep.subr.mxu0 0.0
        %8541 = vmatpush1.msra.mxu0 %v8507
        %8542 = vmatprep.subr.mxu0 0.0
        %8543 = vmatpush1.msra.mxu0 %v8506
        %8544 = vmatprep.subr.mxu0 0.0
        %8545 = vmatpush1.msra.mxu0 %v8505
        %8546 = vmatprep.subr.mxu0 0.0
        %8547 = vmatpush1.msra.mxu0 %v8504
        %8548 = vmatprep.subr.mxu0 0.0
        %8549 = vmatpush1.msra.mxu0 %v8503
        %8550 = vmatprep.subr.mxu0 0.0
        %8551 = vmatpush1.msra.mxu0 %v8502
        %8552 = vmatprep.subr.mxu0 0.0
        %8553 = vmatpush2.msra.mxu0 0.0
        %8554 = vmatprep.subr.mxu0 0.0
        %8555 = vmatpush2.msra.mxu0 0.0
        %8556 = vmatprep.subr.mxu0 0.0
        %8557 = vmatpush2.msra.mxu0 0.0
        %8558 = vmatprep.subr.mxu0 0.0
        %8559 = vmatpush2.msra.mxu0 0.0
        %8560 = vmatprep.subr.mxu0 0.0
        %8561 = vmatpush2.msra.mxu0 0.0
        %8562 = vmatprep.subr.mxu0 0.0
        %8563 = vmatpush2.msra.mxu0 0.0
        %8564 = vmatprep.subr.mxu0 0.0
        %8565 = vmatpush2.msra.mxu0 0.0
        %8566 = vmatprep.subr.mxu0 0.0
        %8567 = vmatpush2.msra.mxu0 0.0
        %8568 = vmatprep.subr.mxu0 0.0
        %8569 = vmatpush2.msra.mxu0 0.0
        %8570 = vmatprep.subr.mxu0 0.0
        %8571 = vmatpush2.msra.mxu0 0.0
        %8572 = vmatprep.subr.mxu0 0.0
        %8573 = vmatpush2.msra.mxu0 0.0
        %8574 = vmatprep.subr.mxu0 0.0
        %8575 = vmatpush2.msra.mxu0 0.0
        %8576 = vmatprep.subr.mxu0 0.0
        %8577 = vmatpush2.msra.mxu0 0.0
        %8578 = vmatprep.subr.mxu0 0.0
        %8579 = vmatpush2.msra.mxu0 0.0
        %8580 = vmatprep.subr.mxu0 0.0
        %8581 = vmatpush2.msra.mxu0 0.0
        %8582 = vmatprep.subr.mxu0 0.0
        %8583 = vmatpush2.msra.mxu0 0.0
        %8584 = vmatprep.mubr.f32.mxu0 0.0
        %8585 = vmatmul.mubr.f32.gmra.mxu0 %v8518
        %v8586 = vpop.f32.mrf.mxu0
        %v8587 = vadd.f32 0.0, %v8586
        %v8588 = vpop.f32.mrf.mxu0
        %8589 = vdwg.mxu0
        %v8590 = vadd.f32 %v8500, %v8587
        %s8591 = scalar_lea.vmem [#allocation11], 1664
        %v8592 = vld [vmem:[%s8591] sm:$0xff]
        %v8593 = vld [vmem:[%s8591 + $0x8] sm:$0xff]
        %v8594 = vld [vmem:[%s8591 + $0x10] sm:$0xff]
        %v8595 = vld [vmem:[%s8591 + $0x18] sm:$0xff]
        %v8596 = vld [vmem:[%s8591 + $0x20] sm:$0xff]
        %v8597 = vld [vmem:[%s8591 + $0x28] sm:$0xff]
        %v8598 = vld [vmem:[%s8591 + $0x30] sm:$0xff]
        %v8599 = vld [vmem:[%s8591 + $0x38] sm:$0xff]
        %v8600 = vld [vmem:[%s8591 + $0x40] sm:$0xff]
        %v8601 = vld [vmem:[%s8591 + $0x48] sm:$0xff]
        %v8602 = vld [vmem:[%s8591 + $0x50] sm:$0xff]
        %v8603 = vld [vmem:[%s8591 + $0x58] sm:$0xff]
        %v8604 = vld [vmem:[%s8591 + $0x60] sm:$0xff]
        %v8605 = vld [vmem:[%s8591 + $0x68] sm:$0xff]
        %v8606 = vld [vmem:[%s8591 + $0x70] sm:$0xff]
        %v8607 = vld [vmem:[%s8591 + $0x78] sm:$0xff]
        %v8608 = vrot.slane %v7422, 5
        %8610 = vmatprep.subr.mxu0 0.0
        %8611 = vmatpush1.msra.mxu0 %v8607
        %8612 = vmatprep.subr.mxu0 0.0
        %8613 = vmatpush1.msra.mxu0 %v8606
        %8614 = vmatprep.subr.mxu0 0.0
        %8615 = vmatpush1.msra.mxu0 %v8605
        %8616 = vmatprep.subr.mxu0 0.0
        %8617 = vmatpush1.msra.mxu0 %v8604
        %8618 = vmatprep.subr.mxu0 0.0
        %8619 = vmatpush1.msra.mxu0 %v8603
        %8620 = vmatprep.subr.mxu0 0.0
        %8621 = vmatpush1.msra.mxu0 %v8602
        %8622 = vmatprep.subr.mxu0 0.0
        %8623 = vmatpush1.msra.mxu0 %v8601
        %8624 = vmatprep.subr.mxu0 0.0
        %8625 = vmatpush1.msra.mxu0 %v8600
        %8626 = vmatprep.subr.mxu0 0.0
        %8627 = vmatpush1.msra.mxu0 %v8599
        %8628 = vmatprep.subr.mxu0 0.0
        %8629 = vmatpush1.msra.mxu0 %v8598
        %8630 = vmatprep.subr.mxu0 0.0
        %8631 = vmatpush1.msra.mxu0 %v8597
        %8632 = vmatprep.subr.mxu0 0.0
        %8633 = vmatpush1.msra.mxu0 %v8596
        %8634 = vmatprep.subr.mxu0 0.0
        %8635 = vmatpush1.msra.mxu0 %v8595
        %8636 = vmatprep.subr.mxu0 0.0
        %8637 = vmatpush1.msra.mxu0 %v8594
        %8638 = vmatprep.subr.mxu0 0.0
        %8639 = vmatpush1.msra.mxu0 %v8593
        %8640 = vmatprep.subr.mxu0 0.0
        %8641 = vmatpush1.msra.mxu0 %v8592
        %8642 = vmatprep.subr.mxu0 0.0
        %8643 = vmatpush2.msra.mxu0 0.0
        %8644 = vmatprep.subr.mxu0 0.0
        %8645 = vmatpush2.msra.mxu0 0.0
        %8646 = vmatprep.subr.mxu0 0.0
        %8647 = vmatpush2.msra.mxu0 0.0
        %8648 = vmatprep.subr.mxu0 0.0
        %8649 = vmatpush2.msra.mxu0 0.0
        %8650 = vmatprep.subr.mxu0 0.0
        %8651 = vmatpush2.msra.mxu0 0.0
        %8652 = vmatprep.subr.mxu0 0.0
        %8653 = vmatpush2.msra.mxu0 0.0
        %8654 = vmatprep.subr.mxu0 0.0
        %8655 = vmatpush2.msra.mxu0 0.0
        %8656 = vmatprep.subr.mxu0 0.0
        %8657 = vmatpush2.msra.mxu0 0.0
        %8658 = vmatprep.subr.mxu0 0.0
        %8659 = vmatpush2.msra.mxu0 0.0
        %8660 = vmatprep.subr.mxu0 0.0
        %8661 = vmatpush2.msra.mxu0 0.0
        %8662 = vmatprep.subr.mxu0 0.0
        %8663 = vmatpush2.msra.mxu0 0.0
        %8664 = vmatprep.subr.mxu0 0.0
        %8665 = vmatpush2.msra.mxu0 0.0
        %8666 = vmatprep.subr.mxu0 0.0
        %8667 = vmatpush2.msra.mxu0 0.0
        %8668 = vmatprep.subr.mxu0 0.0
        %8669 = vmatpush2.msra.mxu0 0.0
        %8670 = vmatprep.subr.mxu0 0.0
        %8671 = vmatpush2.msra.mxu0 0.0
        %8672 = vmatprep.subr.mxu0 0.0
        %8673 = vmatpush2.msra.mxu0 0.0
        %8674 = vmatprep.mubr.f32.mxu0 0.0
        %8675 = vmatmul.mubr.f32.gmra.mxu0 %v8608
        %v8676 = vpop.f32.mrf.mxu0
        %v8677 = vadd.f32 0.0, %v8676
        %v8678 = vpop.f32.mrf.mxu0
        %8679 = vdwg.mxu0
        %v8680 = vadd.f32 %v8590, %v8677
        %s8681 = scalar_lea.vmem [#allocation11], 1792
        %v8682 = vld [vmem:[%s8681] sm:$0xff]
        %v8683 = vld [vmem:[%s8681 + $0x8] sm:$0xff]
        %v8684 = vld [vmem:[%s8681 + $0x10] sm:$0xff]
        %v8685 = vld [vmem:[%s8681 + $0x18] sm:$0xff]
        %v8686 = vld [vmem:[%s8681 + $0x20] sm:$0xff]
        %v8687 = vld [vmem:[%s8681 + $0x28] sm:$0xff]
        %v8688 = vld [vmem:[%s8681 + $0x30] sm:$0xff]
        %v8689 = vld [vmem:[%s8681 + $0x38] sm:$0xff]
        %v8690 = vld [vmem:[%s8681 + $0x40] sm:$0xff]
        %v8691 = vld [vmem:[%s8681 + $0x48] sm:$0xff]
        %v8692 = vld [vmem:[%s8681 + $0x50] sm:$0xff]
        %v8693 = vld [vmem:[%s8681 + $0x58] sm:$0xff]
        %v8694 = vld [vmem:[%s8681 + $0x60] sm:$0xff]
        %v8695 = vld [vmem:[%s8681 + $0x68] sm:$0xff]
        %v8696 = vld [vmem:[%s8681 + $0x70] sm:$0xff]
        %v8697 = vld [vmem:[%s8681 + $0x78] sm:$0xff]
        %v8698 = vrot.slane %v7422, 6
        %8700 = vmatprep.subr.mxu0 0.0
        %8701 = vmatpush1.msra.mxu0 %v8697
        %8702 = vmatprep.subr.mxu0 0.0
        %8703 = vmatpush1.msra.mxu0 %v8696
        %8704 = vmatprep.subr.mxu0 0.0
        %8705 = vmatpush1.msra.mxu0 %v8695
        %8706 = vmatprep.subr.mxu0 0.0
        %8707 = vmatpush1.msra.mxu0 %v8694
        %8708 = vmatprep.subr.mxu0 0.0
        %8709 = vmatpush1.msra.mxu0 %v8693
        %8710 = vmatprep.subr.mxu0 0.0
        %8711 = vmatpush1.msra.mxu0 %v8692
        %8712 = vmatprep.subr.mxu0 0.0
        %8713 = vmatpush1.msra.mxu0 %v8691
        %8714 = vmatprep.subr.mxu0 0.0
        %8715 = vmatpush1.msra.mxu0 %v8690
        %8716 = vmatprep.subr.mxu0 0.0
        %8717 = vmatpush1.msra.mxu0 %v8689
        %8718 = vmatprep.subr.mxu0 0.0
        %8719 = vmatpush1.msra.mxu0 %v8688
        %8720 = vmatprep.subr.mxu0 0.0
        %8721 = vmatpush1.msra.mxu0 %v8687
        %8722 = vmatprep.subr.mxu0 0.0
        %8723 = vmatpush1.msra.mxu0 %v8686
        %8724 = vmatprep.subr.mxu0 0.0
        %8725 = vmatpush1.msra.mxu0 %v8685
        %8726 = vmatprep.subr.mxu0 0.0
        %8727 = vmatpush1.msra.mxu0 %v8684
        %8728 = vmatprep.subr.mxu0 0.0
        %8729 = vmatpush1.msra.mxu0 %v8683
        %8730 = vmatprep.subr.mxu0 0.0
        %8731 = vmatpush1.msra.mxu0 %v8682
        %8732 = vmatprep.subr.mxu0 0.0
        %8733 = vmatpush2.msra.mxu0 0.0
        %8734 = vmatprep.subr.mxu0 0.0
        %8735 = vmatpush2.msra.mxu0 0.0
        %8736 = vmatprep.subr.mxu0 0.0
        %8737 = vmatpush2.msra.mxu0 0.0
        %8738 = vmatprep.subr.mxu0 0.0
        %8739 = vmatpush2.msra.mxu0 0.0
        %8740 = vmatprep.subr.mxu0 0.0
        %8741 = vmatpush2.msra.mxu0 0.0
        %8742 = vmatprep.subr.mxu0 0.0
        %8743 = vmatpush2.msra.mxu0 0.0
        %8744 = vmatprep.subr.mxu0 0.0
        %8745 = vmatpush2.msra.mxu0 0.0
        %8746 = vmatprep.subr.mxu0 0.0
        %8747 = vmatpush2.msra.mxu0 0.0
        %8748 = vmatprep.subr.mxu0 0.0
        %8749 = vmatpush2.msra.mxu0 0.0
        %8750 = vmatprep.subr.mxu0 0.0
        %8751 = vmatpush2.msra.mxu0 0.0
        %8752 = vmatprep.subr.mxu0 0.0
        %8753 = vmatpush2.msra.mxu0 0.0
        %8754 = vmatprep.subr.mxu0 0.0
        %8755 = vmatpush2.msra.mxu0 0.0
        %8756 = vmatprep.subr.mxu0 0.0
        %8757 = vmatpush2.msra.mxu0 0.0
        %8758 = vmatprep.subr.mxu0 0.0
        %8759 = vmatpush2.msra.mxu0 0.0
        %8760 = vmatprep.subr.mxu0 0.0
        %8761 = vmatpush2.msra.mxu0 0.0
        %8762 = vmatprep.subr.mxu0 0.0
        %8763 = vmatpush2.msra.mxu0 0.0
        %8764 = vmatprep.mubr.f32.mxu0 0.0
        %8765 = vmatmul.mubr.f32.gmra.mxu0 %v8698
        %v8766 = vpop.f32.mrf.mxu0
        %v8767 = vadd.f32 0.0, %v8766
        %v8768 = vpop.f32.mrf.mxu0
        %8769 = vdwg.mxu0
        %v8770 = vadd.f32 %v8680, %v8767
        %s8771 = scalar_lea.vmem [#allocation11], 1920
        %v8772 = vld [vmem:[%s8771] sm:$0xff]
        %v8773 = vld [vmem:[%s8771 + $0x8] sm:$0xff]
        %v8774 = vld [vmem:[%s8771 + $0x10] sm:$0xff]
        %v8775 = vld [vmem:[%s8771 + $0x18] sm:$0xff]
        %v8776 = vld [vmem:[%s8771 + $0x20] sm:$0xff]
        %v8777 = vld [vmem:[%s8771 + $0x28] sm:$0xff]
        %v8778 = vld [vmem:[%s8771 + $0x30] sm:$0xff]
        %v8779 = vld [vmem:[%s8771 + $0x38] sm:$0xff]
        %v8780 = vld [vmem:[%s8771 + $0x40] sm:$0xff]
        %v8781 = vld [vmem:[%s8771 + $0x48] sm:$0xff]
        %v8782 = vld [vmem:[%s8771 + $0x50] sm:$0xff]
        %v8783 = vld [vmem:[%s8771 + $0x58] sm:$0xff]
        %v8784 = vld [vmem:[%s8771 + $0x60] sm:$0xff]
        %v8785 = vld [vmem:[%s8771 + $0x68] sm:$0xff]
        %v8786 = vld [vmem:[%s8771 + $0x70] sm:$0xff]
        %v8787 = vld [vmem:[%s8771 + $0x78] sm:$0xff]
        %v8788 = vrot.slane %v7422, 7
        %8790 = vmatprep.subr.mxu0 0.0
        %8791 = vmatpush1.msra.mxu0 %v8787
        %8792 = vmatprep.subr.mxu0 0.0
        %8793 = vmatpush1.msra.mxu0 %v8786
        %8794 = vmatprep.subr.mxu0 0.0
        %8795 = vmatpush1.msra.mxu0 %v8785
        %8796 = vmatprep.subr.mxu0 0.0
        %8797 = vmatpush1.msra.mxu0 %v8784
        %8798 = vmatprep.subr.mxu0 0.0
        %8799 = vmatpush1.msra.mxu0 %v8783
        %8800 = vmatprep.subr.mxu0 0.0
        %8801 = vmatpush1.msra.mxu0 %v8782
        %8802 = vmatprep.subr.mxu0 0.0
        %8803 = vmatpush1.msra.mxu0 %v8781
        %8804 = vmatprep.subr.mxu0 0.0
        %8805 = vmatpush1.msra.mxu0 %v8780
        %8806 = vmatprep.subr.mxu0 0.0
        %8807 = vmatpush1.msra.mxu0 %v8779
        %8808 = vmatprep.subr.mxu0 0.0
        %8809 = vmatpush1.msra.mxu0 %v8778
        %8810 = vmatprep.subr.mxu0 0.0
        %8811 = vmatpush1.msra.mxu0 %v8777
        %8812 = vmatprep.subr.mxu0 0.0
        %8813 = vmatpush1.msra.mxu0 %v8776
        %8814 = vmatprep.subr.mxu0 0.0
        %8815 = vmatpush1.msra.mxu0 %v8775
        %8816 = vmatprep.subr.mxu0 0.0
        %8817 = vmatpush1.msra.mxu0 %v8774
        %8818 = vmatprep.subr.mxu0 0.0
        %8819 = vmatpush1.msra.mxu0 %v8773
        %8820 = vmatprep.subr.mxu0 0.0
        %8821 = vmatpush1.msra.mxu0 %v8772
        %8822 = vmatprep.subr.mxu0 0.0
        %8823 = vmatpush2.msra.mxu0 0.0
        %8824 = vmatprep.subr.mxu0 0.0
        %8825 = vmatpush2.msra.mxu0 0.0
        %8826 = vmatprep.subr.mxu0 0.0
        %8827 = vmatpush2.msra.mxu0 0.0
        %8828 = vmatprep.subr.mxu0 0.0
        %8829 = vmatpush2.msra.mxu0 0.0
        %8830 = vmatprep.subr.mxu0 0.0
        %8831 = vmatpush2.msra.mxu0 0.0
        %8832 = vmatprep.subr.mxu0 0.0
        %8833 = vmatpush2.msra.mxu0 0.0
        %8834 = vmatprep.subr.mxu0 0.0
        %8835 = vmatpush2.msra.mxu0 0.0
        %8836 = vmatprep.subr.mxu0 0.0
        %8837 = vmatpush2.msra.mxu0 0.0
        %8838 = vmatprep.subr.mxu0 0.0
        %8839 = vmatpush2.msra.mxu0 0.0
        %8840 = vmatprep.subr.mxu0 0.0
        %8841 = vmatpush2.msra.mxu0 0.0
        %8842 = vmatprep.subr.mxu0 0.0
        %8843 = vmatpush2.msra.mxu0 0.0
        %8844 = vmatprep.subr.mxu0 0.0
        %8845 = vmatpush2.msra.mxu0 0.0
        %8846 = vmatprep.subr.mxu0 0.0
        %8847 = vmatpush2.msra.mxu0 0.0
        %8848 = vmatprep.subr.mxu0 0.0
        %8849 = vmatpush2.msra.mxu0 0.0
        %8850 = vmatprep.subr.mxu0 0.0
        %8851 = vmatpush2.msra.mxu0 0.0
        %8852 = vmatprep.subr.mxu0 0.0
        %8853 = vmatpush2.msra.mxu0 0.0
        %8854 = vmatprep.mubr.f32.mxu0 0.0
        %8855 = vmatmul.mubr.f32.gmra.mxu0 %v8788
        %v8856 = vpop.f32.mrf.mxu0
        %v8857 = vadd.f32 0.0, %v8856
        %v8858 = vpop.f32.mrf.mxu0
        %8859 = vdwg.mxu0
        %v8860 = vadd.f32 %v8770, %v8857
        %v8861 = vld [vmem:[#allocation14] sm:$0xff]
        %v8862 = vld [vmem:[#allocation14 + $0x8] sm:$0xff]
        %v8863 = vld [vmem:[#allocation14 + $0x10] sm:$0xff]
        %v8864 = vld [vmem:[#allocation14 + $0x18] sm:$0xff]
        %v8865 = vld [vmem:[#allocation14 + $0x20] sm:$0xff]
        %v8866 = vld [vmem:[#allocation14 + $0x28] sm:$0xff]
        %v8867 = vld [vmem:[#allocation14 + $0x30] sm:$0xff]
        %v8868 = vld [vmem:[#allocation14 + $0x38] sm:$0xff]
        %v8869 = vld [vmem:[#allocation14 + $0x40] sm:$0xff]
        %v8870 = vld [vmem:[#allocation14 + $0x48] sm:$0xff]
        %v8871 = vld [vmem:[#allocation14 + $0x50] sm:$0xff]
        %v8872 = vld [vmem:[#allocation14 + $0x58] sm:$0xff]
        %v8873 = vld [vmem:[#allocation14 + $0x60] sm:$0xff]
        %v8874 = vld [vmem:[#allocation14 + $0x68] sm:$0xff]
        %v8875 = vld [vmem:[#allocation14 + $0x70] sm:$0xff]
        %v8876 = vld [vmem:[#allocation14 + $0x78] sm:$0xff]
        %v8877 = vld [vmem:[#allocation16] sm:$0x1]
        %8878 = vmatprep.subr.mxu0 0.0
        %8879 = vmatpush1.msra.mxu0 %v8876
        %8880 = vmatprep.subr.mxu0 0.0
        %8881 = vmatpush1.msra.mxu0 %v8875
        %8882 = vmatprep.subr.mxu0 0.0
        %8883 = vmatpush1.msra.mxu0 %v8874
        %8884 = vmatprep.subr.mxu0 0.0
        %8885 = vmatpush1.msra.mxu0 %v8873
        %8886 = vmatprep.subr.mxu0 0.0
        %8887 = vmatpush1.msra.mxu0 %v8872
        %8888 = vmatprep.subr.mxu0 0.0
        %8889 = vmatpush1.msra.mxu0 %v8871
        %8890 = vmatprep.subr.mxu0 0.0
        %8891 = vmatpush1.msra.mxu0 %v8870
        %8892 = vmatprep.subr.mxu0 0.0
        %8893 = vmatpush1.msra.mxu0 %v8869
        %8894 = vmatprep.subr.mxu0 0.0
        %8895 = vmatpush1.msra.mxu0 %v8868
        %8896 = vmatprep.subr.mxu0 0.0
        %8897 = vmatpush1.msra.mxu0 %v8867
        %8898 = vmatprep.subr.mxu0 0.0
        %8899 = vmatpush1.msra.mxu0 %v8866
        %8900 = vmatprep.subr.mxu0 0.0
        %8901 = vmatpush1.msra.mxu0 %v8865
        %8902 = vmatprep.subr.mxu0 0.0
        %8903 = vmatpush1.msra.mxu0 %v8864
        %8904 = vmatprep.subr.mxu0 0.0
        %8905 = vmatpush1.msra.mxu0 %v8863
        %8906 = vmatprep.subr.mxu0 0.0
        %8907 = vmatpush1.msra.mxu0 %v8862
        %8908 = vmatprep.subr.mxu0 0.0
        %8909 = vmatpush1.msra.mxu0 %v8861
        %8910 = vmatprep.subr.mxu0 0.0
        %8911 = vmatpush2.msra.mxu0 0.0
        %8912 = vmatprep.subr.mxu0 0.0
        %8913 = vmatpush2.msra.mxu0 0.0
        %8914 = vmatprep.subr.mxu0 0.0
        %8915 = vmatpush2.msra.mxu0 0.0
        %8916 = vmatprep.subr.mxu0 0.0
        %8917 = vmatpush2.msra.mxu0 0.0
        %8918 = vmatprep.subr.mxu0 0.0
        %8919 = vmatpush2.msra.mxu0 0.0
        %8920 = vmatprep.subr.mxu0 0.0
        %8921 = vmatpush2.msra.mxu0 0.0
        %8922 = vmatprep.subr.mxu0 0.0
        %8923 = vmatpush2.msra.mxu0 0.0
        %8924 = vmatprep.subr.mxu0 0.0
        %8925 = vmatpush2.msra.mxu0 0.0
        %8926 = vmatprep.subr.mxu0 0.0
        %8927 = vmatpush2.msra.mxu0 0.0
        %8928 = vmatprep.subr.mxu0 0.0
        %8929 = vmatpush2.msra.mxu0 0.0
        %8930 = vmatprep.subr.mxu0 0.0
        %8931 = vmatpush2.msra.mxu0 0.0
        %8932 = vmatprep.subr.mxu0 0.0
        %8933 = vmatpush2.msra.mxu0 0.0
        %8934 = vmatprep.subr.mxu0 0.0
        %8935 = vmatpush2.msra.mxu0 0.0
        %8936 = vmatprep.subr.mxu0 0.0
        %8937 = vmatpush2.msra.mxu0 0.0
        %8938 = vmatprep.subr.mxu0 0.0
        %8939 = vmatpush2.msra.mxu0 0.0
        %8940 = vmatprep.subr.mxu0 0.0
        %8941 = vmatpush2.msra.mxu0 0.0
        %8942 = vmatprep.mubr.f32.mxu0 0.0
        %8943 = vmatmul.mubr.f32.gmra.mxu0 %v8860
        %v8944 = vpop.f32.mrf.mxu0
        %v8945 = vadd.f32 %v8877, %v8944
        %v8946 = vpop.f32.mrf.mxu0
        %8947 = vdwg.mxu0
        %v8948 = vlaneseq
        %v8949 = vshrl.u32 %v8948, 7
        %v8950 = vsub.s32 0, %v8949
        %v8951 = vrot.slane %v8945, %v8950
        %8952 = vst [vmem:[%s507] sm:$0xff] %v8951
        %p8953 = scmp.lt.s32.totalorder %s27, 1
        %s8954 = scalar_select %p8953, %s27, 1
        %s8955 = smul.addr %s8954, 8
        %s8956 = scalar_lea.vmem %s11, %s8955
        // Predicated region
        $region101: #{convnet_forward.1} parent=63 // pred_check
          %p8957 = pneg %p281
        $region102: #{convnet_forward.1} parent=63 // pred_check_branch
          %8959 = sbr.rel (%p8957) target = $region104
        $region103: #{convnet_forward.1} parent=63 // pred_region
          _
        $region104: #{convnet_forward.1} parent=63 // pred_fallthru
          _
      $region64: #{convnet_forward.1} parent=5 // pred_fallthru
        _
      %p8960 = scmp.le.s32.totalorder 2, %s22
      // Predicated region
      $region105: #{convnet_forward.1} parent=5 // pred_check
        %p8961 = pneg %p8960
      $region106: #{convnet_forward.1} parent=5 // pred_check_branch
        %8963 = sbr.rel (%p8961) target = $region108
      $region107: #{convnet_forward.1} parent=5 // pred_region
        %s8964 = ssub.s32 %s22, 2
        // Predicated region
        $region109: #{convnet_forward.1} parent=107 // pred_check
          %p8965 = pneg %p287
        $region110: #{convnet_forward.1} parent=107 // pred_check_branch
          %8967 = sbr.rel (%p8965) target = $region112
        $region111: #{convnet_forward.1} parent=107 // pred_region
          %p8968 = scmp.lt.s32.totalorder %s28, 1
          %s8969 = scalar_select %p8968, %s28, 1
          %s8970 = smul.addr %s8969, 8
          %s8971 = scalar_lea.vmem %s11, %s8970
        $region112: #{convnet_forward.1} parent=107 // pred_fallthru
          _
      $region108: #{convnet_forward.1} parent=5 // pred_fallthru
        _
    $region6: #{convnet_forward.1} parent=1 // loop_footer
      %s26 = sadd.s32 1, %s22
    $region7: #{convnet_forward.1} parent=1 // loop_footer_branch
      %21 = sbr.rel target = $region3
    $region8: #{convnet_forward.1} parent=1 // loop_exit
      _
    %8972 = vsyncpa [#allocation4], 1
    %s8973 = scalar_lea.sflag [#allocation4], 1
    %8974 = vsyncpa %s8973, 1
    %8975 = vsyncpa [#allocation6], 1
    %8976 = vsyncpa [#allocation9], 1
    %8977 = vsyncpa [#allocation12], 1
    %8978 = vsyncpa [#allocation15], 1

</llo_original>
